<compile_context>
chip_gen: v5e
topology: v5e:2x2
jax: 0.10.0
libtpu: 0.0.40
codegen_flags: <defaults>
</compile_context>

<pallas_src>
import functools

import numpy as np
import jax
import jax.numpy as jnp
from jax.experimental import pallas as pl
from jax.experimental.pallas import tpu as pltpu

NEG_FILL = -1000.0  # torchsparse pads missing kernel taps with -1000.0


def _round_up(x, m):
    return (x + m - 1) // m * m


def maxpool_kernel(qk_ref, rk_ref, feat_ref, out_ref, acc_ref, *,
                   key_offsets, count_col):
    """Grid = (query tiles [parallel], reference chunks [arbitrary])."""
    k = pl.program_id(1)

    @pl.when(k == 0)
    def _init():
        acc_ref[...] = jnp.zeros_like(acc_ref)

    qk = qk_ref[...]       # (TQ, 1)  int32 packed fine-scale base key per output
    rk = rk_ref[...]       # (1, TK)  int32 packed keys of this reference chunk
    feat = feat_ref[...]   # (TK, Cpad) f32; column `count_col` is the found flag
    # NOTE: if features are natively bf16, keep feat in bf16 and cast `m` to
    # bf16 for ~4x MXU rate on v6e/v7x (bit-exact for a one-hot gather).

    # 8 kernel taps == the 8 fine-scale children of each coarse output voxel.
    # Each tap matches at most one (unique) input row -> one-hot matmul gather.
    for d, off in enumerate(key_offsets):
        match = (qk + off) == rk                         # (TQ, TK), 1 compare
        m = match.astype(feat.dtype)
        acc_ref[d] = acc_ref[d] + jnp.dot(
            m, feat, preferred_element_type=jnp.float32)

    @pl.when(k == pl.num_programs(1) - 1)
    def _finalize():
        def candidate(d):
            g = acc_ref[d]                               # (TQ, Cpad)
            found = g[:, count_col:count_col + 1] > 0.5  # (TQ, 1)
            return jnp.where(found, g, NEG_FILL)

        result = candidate(0)
        for d in range(1, len(key_offsets)):
            result = jnp.maximum(result, candidate(d))
        out_ref[...] = result.astype(out_ref.dtype)


def torchsparse_maxpool(in_coords, in_feats, *, spatial_range, batch_size,
                        tq=256, tk=2048):
    """Sparse stride-2 / kernel-2 max pooling (torchsparse semantics).

    in_coords: (N_in, 4) int32 [b, x, y, z], 0 <= x,y,z < spatial_range.
    in_feats : (N_in, C) float.
    Returns (out_coords (N_out, 4) int32 at the coarse index scale,
             out_feats  (N_out, C)).
    """
    coords_np = np.asarray(in_coords, dtype=np.int64)
    n_in, c = in_feats.shape

    # --- glue: spdownsample == unique coarse parent coordinates --------------
    # TODO(synk): spF.spdownsample / torch.unique has data-dependent output
    # size; it is host-side glue here, not a Pallas kernel.
    parents = np.concatenate([coords_np[:, :1], coords_np[:, 1:4] // 2], axis=1)
    out_coords_np = np.unique(parents, axis=0).astype(np.int32)
    n_out = out_coords_np.shape[0]

    # --- pack (b, x, y, z) into a single int32 key (fine scale) --------------
    # +1 on each extent: a child coordinate can reach == spatial extent when
    # the extent is odd; keep keys collision-free in that case.
    X, Y, Z = (int(s) + 1 for s in spatial_range)
    total = batch_size * X * Y * Z
    assert total < 2 ** 30, "packed coordinate key would overflow int32"
    sx, sy, sz = Y * Z, Z, 1

    def pack(c4):  # (N, 4) int64 [b, x, y, z] at fine scale -> int32 key
        return (((c4[:, 0] * X + c4[:, 1]) * Y + c4[:, 2]) * Z
                + c4[:, 3]).astype(np.int32)

    r_keys = pack(coords_np)
    q_base = out_coords_np.astype(np.int64)
    q_base = np.concatenate([q_base[:, :1], q_base[:, 1:4] * 2], axis=1)
    q_keys = pack(q_base)

    # get_kernel_offsets(2, 1, 1) == {0,1}^3, expressed as packed-key deltas.
    key_offsets = tuple(dx * sx + dy * sy + dz * sz
                        for dx in (0, 1) for dy in (0, 1) for dz in (0, 1))

    # --- pad to tile boundaries ----------------------------------------------
    tq = min(tq, _round_up(n_out, 128))
    tk = min(tk, _round_up(n_in, 128))
    n_out_pad = _round_up(n_out, tq)
    n_in_pad = _round_up(n_in, tk)

    count_col = c
    c_pad = _round_up(c + 1, 128)          # lane-dense output / MXU N dim

    # Padding sentinels: query pad key + any offset > every real key and != -1.
    q_arr = np.full((n_out_pad, 1), np.int32(total), dtype=np.int32)
    q_arr[:n_out, 0] = q_keys
    r_arr = np.full((1, n_in_pad), np.int32(-1), dtype=np.int32)
    r_arr[0, :n_in] = r_keys

    feat_aug = np.zeros((n_in_pad, c_pad), dtype=np.float32)
    feat_aug[:n_in, :c] = np.asarray(in_feats, dtype=np.float32)
    feat_aug[:n_in, count_col] = 1.0       # "found" flag rides on the matmul

    grid = (n_out_pad // tq, n_in_pad // tk)
    kernel = functools.partial(maxpool_kernel, key_offsets=key_offsets,
                               count_col=count_col)

    flops = 2 * len(key_offsets) * n_out_pad * n_in_pad * c_pad
    bytes_accessed = (feat_aug.nbytes + q_arr.nbytes + r_arr.nbytes
                      + n_out_pad * c_pad * 4)

    out = pl.pallas_call(
        kernel,
        out_shape=jax.ShapeDtypeStruct((n_out_pad, c_pad), jnp.float32),
        grid=grid,
        in_specs=[
            pl.BlockSpec((tq, 1), lambda i, k: (i, 0)),       # query keys
            pl.BlockSpec((1, tk), lambda i, k: (0, k)),       # reference keys
            pl.BlockSpec((tk, c_pad), lambda i, k: (k, 0)),   # features chunk
        ],
        out_specs=pl.BlockSpec((tq, c_pad), lambda i, k: (i, 0)),
        scratch_shapes=[pltpu.VMEM((len(key_offsets), tq, c_pad), jnp.float32)],
        compiler_params=pltpu.CompilerParams(
            dimension_semantics=("parallel", "arbitrary"),
            vmem_limit_bytes=32 * 1024 * 1024),
        cost_estimate=pl.CostEstimate(flops=flops, transcendentals=0,
                                      bytes_accessed=bytes_accessed),
    )(jnp.asarray(q_arr), jnp.asarray(r_arr), jnp.asarray(feat_aug))

    out_feats = out[:n_out, :c].astype(in_feats.dtype)
    return jnp.asarray(out_coords_np), out_feats


if __name__ == "__main__":
    key = jax.random.PRNGKey(0)
    kb, kc, kf = jax.random.split(key, 3)

    batch, spatial, channels = 2, 16, 32

    # Random occupied fine-scale voxels, deduplicated (sparse COO layout).
    n_raw = 300
    b_idx = jax.random.randint(kb, (n_raw, 1), 0, batch)
    xyz = jax.random.randint(kc, (n_raw, 3), 0, spatial)
    in_coords_np = np.unique(
        np.concatenate([np.asarray(b_idx), np.asarray(xyz)], axis=1), axis=0
    ).astype(np.int32)
    n_in = in_coords_np.shape[0]

    in_feats = jax.random.normal(kf, (n_in, channels), dtype=jnp.float32)
    in_coords = jnp.asarray(in_coords_np)

    out_coords, out_feats = torchsparse_maxpool(
        in_coords, in_feats,
        spatial_range=(spatial, spatial, spatial), batch_size=batch)
    out_coords, out_feats = jax.block_until_ready((out_coords, out_feats))

    # Pure-numpy reference replicating the torch module exactly:
    # max over 8 kernel taps, missing taps filled with -1000.0.
    feats_np = np.asarray(in_feats)
    out_coords_ref = np.asarray(out_coords)
    lut = {tuple(row): i for i, row in enumerate(in_coords_np.tolist())}
    taps = [(dx, dy, dz) for dx in (0, 1) for dy in (0, 1) for dz in (0, 1)]
    ref = np.empty((out_coords_ref.shape[0], channels), dtype=np.float32)
    for i, (b, x, y, z) in enumerate(out_coords_ref.tolist()):
        cands = []
        for dx, dy, dz in taps:
            j = lut.get((b, 2 * x + dx, 2 * y + dy, 2 * z + dz))
            cands.append(feats_np[j] if j is not None
                         else np.full((channels,), NEG_FILL, np.float32))
        ref[i] = np.max(np.stack(cands), axis=0)

    np.testing.assert_allclose(np.asarray(out_feats), ref, rtol=1e-6, atol=1e-6)
    print("KERNEL_OK")
</pallas_src>

<mosaic_0001>
module attributes {stable_mosaic.version = 11 : i64} {
  func.func @maxpool_kernel(%arg0: i32, %arg1: i32, %arg2: memref<256x1xi32, #tpu.memory_space<vmem>>, %arg3: memref<1x384xi32, #tpu.memory_space<vmem>>, %arg4: memref<384x128xf32, #tpu.memory_space<vmem>>, %arg5: memref<256x128xf32, #tpu.memory_space<vmem>>, %arg6: memref<8x256x128xf32, #tpu.memory_space<vmem>>) attributes {dimension_semantics = [#tpu.dimension_semantics<parallel>, #tpu.dimension_semantics<arbitrary>], iteration_bounds = array<i64: 2, 1>, scalar_prefetch = 0 : i64, scratch_operands = 1 : i64, tpu.core_type = #tpu.core_type<tc>, window_params = [{transform_indices = @transform_0, window_bounds = array<i64: 256, 1>}, {transform_indices = @transform_1, window_bounds = array<i64: 1, 384>}, {transform_indices = @transform_2, window_bounds = array<i64: 384, 128>}, {transform_indices = @transform_3, window_bounds = array<i64: 256, 128>}]} {
    %c0_i32 = arith.constant 0 : i32
    %0 = arith.cmpi eq, %arg1, %c0_i32 : i32
    %1 = arith.extui %0 : i1 to i32
    %c0_i32_0 = arith.constant 0 : i32
    %2 = arith.cmpi ne, %1, %c0_i32_0 : i32
    scf.if %2 {
      %cst_57 = arith.constant 0.000000e+00 : f32
      %121 = vector.broadcast %cst_57 : f32 to vector<8x256x128xf32>
      %c0_58 = arith.constant 0 : index
      %c0_59 = arith.constant 0 : index
      %c0_60 = arith.constant 0 : index
      %122 = vector.load %arg6[%c0_58, %c0_59, %c0_60] : memref<8x256x128xf32, #tpu.memory_space<vmem>>, vector<8x256x128xf32>
      tpu.vector_store %arg6[%c0_58, %c0_59, %c0_60], %121 {strides = array<i32>} : memref<8x256x128xf32, #tpu.memory_space<vmem>>, vector<8x256x128xf32>,
    } else {
    }
    %c0 = arith.constant 0 : index
    %c0_1 = arith.constant 0 : index
    %3 = vector.load %arg2[%c0, %c0_1] : memref<256x1xi32, #tpu.memory_space<vmem>>, vector<256x1xi32>
    %c0_2 = arith.constant 0 : index
    %c0_3 = arith.constant 0 : index
    %4 = vector.load %arg3[%c0_2, %c0_3] : memref<1x384xi32, #tpu.memory_space<vmem>>, vector<1x384xi32>
    %c0_4 = arith.constant 0 : index
    %c0_5 = arith.constant 0 : index
    %5 = vector.load %arg4[%c0_4, %c0_5] : memref<384x128xf32, #tpu.memory_space<vmem>>, vector<384x128xf32>
    %c0_i32_6 = arith.constant 0 : i32
    %6 = vector.broadcast %c0_i32_6 : i32 to vector<256x1xi32>
    %7 = arith.addi %3, %6 : vector<256x1xi32>
    %8 = vector.broadcast %7 : vector<256x1xi32> to vector<256x384xi32>
    %9 = vector.broadcast %4 : vector<1x384xi32> to vector<256x384xi32>
    %10 = arith.cmpi eq, %8, %9 : vector<256x384xi32>
    %11 = arith.extui %10 : vector<256x384xi1> to vector<256x384xi32>
    %12 = arith.sitofp %11 : vector<256x384xi32> to vector<256x384xf32>
    %c0_7 = arith.constant 0 : index
    %c0_8 = arith.constant 0 : index
    %c0_9 = arith.constant 0 : index
    %13 = vector.load %arg6[%c0_7, %c0_8, %c0_9] : memref<8x256x128xf32, #tpu.memory_space<vmem>>, vector<1x256x128xf32>
    %14 = vector.shape_cast %13 : vector<1x256x128xf32> to vector<256x128xf32>
    %cst = arith.constant dense<0.000000e+00> : vector<256x128xf32>
    %15 = tpu.matmul %12, %5, %cst {dimension_numbers = #tpu.dot_dimension_numbers<[1], [0], [0], [1], [0, 0, 1, 1], [], []>} : vector<256x384xf32>, vector<384x128xf32>, vector<256x128xf32> -> vector<256x128xf32>
    %16 = arith.addf %14, %15 : vector<256x128xf32>
    %c0_10 = arith.constant 0 : index
    %c0_11 = arith.constant 0 : index
    %c0_12 = arith.constant 0 : index
    %17 = vector.load %arg6[%c0_10, %c0_11, %c0_12] : memref<8x256x128xf32, #tpu.memory_space<vmem>>, vector<1x256x128xf32>
    %18 = vector.shape_cast %17 : vector<1x256x128xf32> to vector<256x128xf32>
    %19 = vector.shape_cast %16 : vector<256x128xf32> to vector<1x256x128xf32>
    tpu.vector_store %arg6[%c0_10, %c0_11, %c0_12], %19 {strides = array<i32>} : memref<8x256x128xf32, #tpu.memory_space<vmem>>, vector<1x256x128xf32>,
    %c1_i32 = arith.constant 1 : i32
    %20 = vector.broadcast %c1_i32 : i32 to vector<256x1xi32>
    %21 = arith.addi %3, %20 : vector<256x1xi32>
    %22 = vector.broadcast %21 : vector<256x1xi32> to vector<256x384xi32>
    %23 = vector.broadcast %4 : vector<1x384xi32> to vector<256x384xi32>
    %24 = arith.cmpi eq, %22, %23 : vector<256x384xi32>
    %25 = arith.extui %24 : vector<256x384xi1> to vector<256x384xi32>
    %26 = arith.sitofp %25 : vector<256x384xi32> to vector<256x384xf32>
    %c1 = arith.constant 1 : index
    %c0_13 = arith.constant 0 : index
    %c0_14 = arith.constant 0 : index
    %27 = vector.load %arg6[%c1, %c0_13, %c0_14] : memref<8x256x128xf32, #tpu.memory_space<vmem>>, vector<1x256x128xf32>
    %28 = vector.shape_cast %27 : vector<1x256x128xf32> to vector<256x128xf32>
    %cst_15 = arith.constant dense<0.000000e+00> : vector<256x128xf32>
    %29 = tpu.matmul %26, %5, %cst_15 {dimension_numbers = #tpu.dot_dimension_numbers<[1], [0], [0], [1], [0, 0, 1, 1], [], []>} : vector<256x384xf32>, vector<384x128xf32>, vector<256x128xf32> -> vector<256x128xf32>
    %30 = arith.addf %28, %29 : vector<256x128xf32>
    %c1_16 = arith.constant 1 : index
    %c0_17 = arith.constant 0 : index
    %c0_18 = arith.constant 0 : index
    %31 = vector.load %arg6[%c1_16, %c0_17, %c0_18] : memref<8x256x128xf32, #tpu.memory_space<vmem>>, vector<1x256x128xf32>
    %32 = vector.shape_cast %31 : vector<1x256x128xf32> to vector<256x128xf32>
    %33 = vector.shape_cast %30 : vector<256x128xf32> to vector<1x256x128xf32>
    tpu.vector_store %arg6[%c1_16, %c0_17, %c0_18], %33 {strides = array<i32>} : memref<8x256x128xf32, #tpu.memory_space<vmem>>, vector<1x256x128xf32>,
    %c17_i32 = arith.constant 17 : i32
    %34 = vector.broadcast %c17_i32 : i32 to vector<256x1xi32>
    %35 = arith.addi %3, %34 : vector<256x1xi32>
    %36 = vector.broadcast %35 : vector<256x1xi32> to vector<256x384xi32>
    %37 = vector.broadcast %4 : vector<1x384xi32> to vector<256x384xi32>
    %38 = arith.cmpi eq, %36, %37 : vector<256x384xi32>
    %39 = arith.extui %38 : vector<256x384xi1> to vector<256x384xi32>
    %40 = arith.sitofp %39 : vector<256x384xi32> to vector<256x384xf32>
    %c2 = arith.constant 2 : index
    %c0_19 = arith.constant 0 : index
    %c0_20 = arith.constant 0 : index
    %41 = vector.load %arg6[%c2, %c0_19, %c0_20] : memref<8x256x128xf32, #tpu.memory_space<vmem>>, vector<1x256x128xf32>
    %42 = vector.shape_cast %41 : vector<1x256x128xf32> to vector<256x128xf32>
    %cst_21 = arith.constant dense<0.000000e+00> : vector<256x128xf32>
    %43 = tpu.matmul %40, %5, %cst_21 {dimension_numbers = #tpu.dot_dimension_numbers<[1], [0], [0], [1], [0, 0, 1, 1], [], []>} : vector<256x384xf32>, vector<384x128xf32>, vector<256x128xf32> -> vector<256x128xf32>
    %44 = arith.addf %42, %43 : vector<256x128xf32>
    %c2_22 = arith.constant 2 : index
    %c0_23 = arith.constant 0 : index
    %c0_24 = arith.constant 0 : index
    %45 = vector.load %arg6[%c2_22, %c0_23, %c0_24] : memref<8x256x128xf32, #tpu.memory_space<vmem>>, vector<1x256x128xf32>
    %46 = vector.shape_cast %45 : vector<1x256x128xf32> to vector<256x128xf32>
    %47 = vector.shape_cast %44 : vector<256x128xf32> to vector<1x256x128xf32>
    tpu.vector_store %arg6[%c2_22, %c0_23, %c0_24], %47 {strides = array<i32>} : memref<8x256x128xf32, #tpu.memory_space<vmem>>, vector<1x256x128xf32>,
    %c18_i32 = arith.constant 18 : i32
    %48 = vector.broadcast %c18_i32 : i32 to vector<256x1xi32>
    %49 = arith.addi %3, %48 : vector<256x1xi32>
    %50 = vector.broadcast %49 : vector<256x1xi32> to vector<256x384xi32>
    %51 = vector.broadcast %4 : vector<1x384xi32> to vector<256x384xi32>
    %52 = arith.cmpi eq, %50, %51 : vector<256x384xi32>
    %53 = arith.extui %52 : vector<256x384xi1> to vector<256x384xi32>
    %54 = arith.sitofp %53 : vector<256x384xi32> to vector<256x384xf32>
    %c3 = arith.constant 3 : index
    %c0_25 = arith.constant 0 : index
    %c0_26 = arith.constant 0 : index
    %55 = vector.load %arg6[%c3, %c0_25, %c0_26] : memref<8x256x128xf32, #tpu.memory_space<vmem>>, vector<1x256x128xf32>
    %56 = vector.shape_cast %55 : vector<1x256x128xf32> to vector<256x128xf32>
    %cst_27 = arith.constant dense<0.000000e+00> : vector<256x128xf32>
    %57 = tpu.matmul %54, %5, %cst_27 {dimension_numbers = #tpu.dot_dimension_numbers<[1], [0], [0], [1], [0, 0, 1, 1], [], []>} : vector<256x384xf32>, vector<384x128xf32>, vector<256x128xf32> -> vector<256x128xf32>
    %58 = arith.addf %56, %57 : vector<256x128xf32>
    %c3_28 = arith.constant 3 : index
    %c0_29 = arith.constant 0 : index
    %c0_30 = arith.constant 0 : index
    %59 = vector.load %arg6[%c3_28, %c0_29, %c0_30] : memref<8x256x128xf32, #tpu.memory_space<vmem>>, vector<1x256x128xf32>
    %60 = vector.shape_cast %59 : vector<1x256x128xf32> to vector<256x128xf32>
    %61 = vector.shape_cast %58 : vector<256x128xf32> to vector<1x256x128xf32>
    tpu.vector_store %arg6[%c3_28, %c0_29, %c0_30], %61 {strides = array<i32>} : memref<8x256x128xf32, #tpu.memory_space<vmem>>, vector<1x256x128xf32>,
    %c289_i32 = arith.constant 289 : i32
    %62 = vector.broadcast %c289_i32 : i32 to vector<256x1xi32>
    %63 = arith.addi %3, %62 : vector<256x1xi32>
    %64 = vector.broadcast %63 : vector<256x1xi32> to vector<256x384xi32>
    %65 = vector.broadcast %4 : vector<1x384xi32> to vector<256x384xi32>
    %66 = arith.cmpi eq, %64, %65 : vector<256x384xi32>
    %67 = arith.extui %66 : vector<256x384xi1> to vector<256x384xi32>
    %68 = arith.sitofp %67 : vector<256x384xi32> to vector<256x384xf32>
    %c4 = arith.constant 4 : index
    %c0_31 = arith.constant 0 : index
    %c0_32 = arith.constant 0 : index
    %69 = vector.load %arg6[%c4, %c0_31, %c0_32] : memref<8x256x128xf32, #tpu.memory_space<vmem>>, vector<1x256x128xf32>
    %70 = vector.shape_cast %69 : vector<1x256x128xf32> to vector<256x128xf32>
    %cst_33 = arith.constant dense<0.000000e+00> : vector<256x128xf32>
    %71 = tpu.matmul %68, %5, %cst_33 {dimension_numbers = #tpu.dot_dimension_numbers<[1], [0], [0], [1], [0, 0, 1, 1], [], []>} : vector<256x384xf32>, vector<384x128xf32>, vector<256x128xf32> -> vector<256x128xf32>
    %72 = arith.addf %70, %71 : vector<256x128xf32>
    %c4_34 = arith.constant 4 : index
    %c0_35 = arith.constant 0 : index
    %c0_36 = arith.constant 0 : index
    %73 = vector.load %arg6[%c4_34, %c0_35, %c0_36] : memref<8x256x128xf32, #tpu.memory_space<vmem>>, vector<1x256x128xf32>
    %74 = vector.shape_cast %73 : vector<1x256x128xf32> to vector<256x128xf32>
    %75 = vector.shape_cast %72 : vector<256x128xf32> to vector<1x256x128xf32>
    tpu.vector_store %arg6[%c4_34, %c0_35, %c0_36], %75 {strides = array<i32>} : memref<8x256x128xf32, #tpu.memory_space<vmem>>, vector<1x256x128xf32>,
    %c290_i32 = arith.constant 290 : i32
    %76 = vector.broadcast %c290_i32 : i32 to vector<256x1xi32>
    %77 = arith.addi %3, %76 : vector<256x1xi32>
    %78 = vector.broadcast %77 : vector<256x1xi32> to vector<256x384xi32>
    %79 = vector.broadcast %4 : vector<1x384xi32> to vector<256x384xi32>
    %80 = arith.cmpi eq, %78, %79 : vector<256x384xi32>
    %81 = arith.extui %80 : vector<256x384xi1> to vector<256x384xi32>
    %82 = arith.sitofp %81 : vector<256x384xi32> to vector<256x384xf32>
    %c5 = arith.constant 5 : index
    %c0_37 = arith.constant 0 : index
    %c0_38 = arith.constant 0 : index
    %83 = vector.load %arg6[%c5, %c0_37, %c0_38] : memref<8x256x128xf32, #tpu.memory_space<vmem>>, vector<1x256x128xf32>
    %84 = vector.shape_cast %83 : vector<1x256x128xf32> to vector<256x128xf32>
    %cst_39 = arith.constant dense<0.000000e+00> : vector<256x128xf32>
    %85 = tpu.matmul %82, %5, %cst_39 {dimension_numbers = #tpu.dot_dimension_numbers<[1], [0], [0], [1], [0, 0, 1, 1], [], []>} : vector<256x384xf32>, vector<384x128xf32>, vector<256x128xf32> -> vector<256x128xf32>
    %86 = arith.addf %84, %85 : vector<256x128xf32>
    %c5_40 = arith.constant 5 : index
    %c0_41 = arith.constant 0 : index
    %c0_42 = arith.constant 0 : index
    %87 = vector.load %arg6[%c5_40, %c0_41, %c0_42] : memref<8x256x128xf32, #tpu.memory_space<vmem>>, vector<1x256x128xf32>
    %88 = vector.shape_cast %87 : vector<1x256x128xf32> to vector<256x128xf32>
    %89 = vector.shape_cast %86 : vector<256x128xf32> to vector<1x256x128xf32>
    tpu.vector_store %arg6[%c5_40, %c0_41, %c0_42], %89 {strides = array<i32>} : memref<8x256x128xf32, #tpu.memory_space<vmem>>, vector<1x256x128xf32>,
    %c306_i32 = arith.constant 306 : i32
    %90 = vector.broadcast %c306_i32 : i32 to vector<256x1xi32>
    %91 = arith.addi %3, %90 : vector<256x1xi32>
    %92 = vector.broadcast %91 : vector<256x1xi32> to vector<256x384xi32>
    %93 = vector.broadcast %4 : vector<1x384xi32> to vector<256x384xi32>
    %94 = arith.cmpi eq, %92, %93 : vector<256x384xi32>
    %95 = arith.extui %94 : vector<256x384xi1> to vector<256x384xi32>
    %96 = arith.sitofp %95 : vector<256x384xi32> to vector<256x384xf32>
    %c6 = arith.constant 6 : index
    %c0_43 = arith.constant 0 : index
    %c0_44 = arith.constant 0 : index
    %97 = vector.load %arg6[%c6, %c0_43, %c0_44] : memref<8x256x128xf32, #tpu.memory_space<vmem>>, vector<1x256x128xf32>
    %98 = vector.shape_cast %97 : vector<1x256x128xf32> to vector<256x128xf32>
    %cst_45 = arith.constant dense<0.000000e+00> : vector<256x128xf32>
    %99 = tpu.matmul %96, %5, %cst_45 {dimension_numbers = #tpu.dot_dimension_numbers<[1], [0], [0], [1], [0, 0, 1, 1], [], []>} : vector<256x384xf32>, vector<384x128xf32>, vector<256x128xf32> -> vector<256x128xf32>
    %100 = arith.addf %98, %99 : vector<256x128xf32>
    %c6_46 = arith.constant 6 : index
    %c0_47 = arith.constant 0 : index
    %c0_48 = arith.constant 0 : index
    %101 = vector.load %arg6[%c6_46, %c0_47, %c0_48] : memref<8x256x128xf32, #tpu.memory_space<vmem>>, vector<1x256x128xf32>
    %102 = vector.shape_cast %101 : vector<1x256x128xf32> to vector<256x128xf32>
    %103 = vector.shape_cast %100 : vector<256x128xf32> to vector<1x256x128xf32>
    tpu.vector_store %arg6[%c6_46, %c0_47, %c0_48], %103 {strides = array<i32>} : memref<8x256x128xf32, #tpu.memory_space<vmem>>, vector<1x256x128xf32>,
    %c307_i32 = arith.constant 307 : i32
    %104 = vector.broadcast %c307_i32 : i32 to vector<256x1xi32>
    %105 = arith.addi %3, %104 : vector<256x1xi32>
    %106 = vector.broadcast %105 : vector<256x1xi32> to vector<256x384xi32>
    %107 = vector.broadcast %4 : vector<1x384xi32> to vector<256x384xi32>
    %108 = arith.cmpi eq, %106, %107 : vector<256x384xi32>
    %109 = arith.extui %108 : vector<256x384xi1> to vector<256x384xi32>
    %110 = arith.sitofp %109 : vector<256x384xi32> to vector<256x384xf32>
    %c7 = arith.constant 7 : index
    %c0_49 = arith.constant 0 : index
    %c0_50 = arith.constant 0 : index
    %111 = vector.load %arg6[%c7, %c0_49, %c0_50] : memref<8x256x128xf32, #tpu.memory_space<vmem>>, vector<1x256x128xf32>
    %112 = vector.shape_cast %111 : vector<1x256x128xf32> to vector<256x128xf32>
    %cst_51 = arith.constant dense<0.000000e+00> : vector<256x128xf32>
    %113 = tpu.matmul %110, %5, %cst_51 {dimension_numbers = #tpu.dot_dimension_numbers<[1], [0], [0], [1], [0, 0, 1, 1], [], []>} : vector<256x384xf32>, vector<384x128xf32>, vector<256x128xf32> -> vector<256x128xf32>
    %114 = arith.addf %112, %113 : vector<256x128xf32>
    %c7_52 = arith.constant 7 : index
    %c0_53 = arith.constant 0 : index
    %c0_54 = arith.constant 0 : index
    %115 = vector.load %arg6[%c7_52, %c0_53, %c0_54] : memref<8x256x128xf32, #tpu.memory_space<vmem>>, vector<1x256x128xf32>
    %116 = vector.shape_cast %115 : vector<1x256x128xf32> to vector<256x128xf32>
    %117 = vector.shape_cast %114 : vector<256x128xf32> to vector<1x256x128xf32>
    tpu.vector_store %arg6[%c7_52, %c0_53, %c0_54], %117 {strides = array<i32>} : memref<8x256x128xf32, #tpu.memory_space<vmem>>, vector<1x256x128xf32>,
    %c0_i32_55 = arith.constant 0 : i32
    %118 = arith.cmpi eq, %arg1, %c0_i32_55 : i32
    %119 = arith.extui %118 : i1 to i32
    %c0_i32_56 = arith.constant 0 : i32
    %120 = arith.cmpi ne, %119, %c0_i32_56 : i32
    scf.if %120 {
      %c0_57 = arith.constant 0 : index
      %c0_58 = arith.constant 0 : index
      %c0_59 = arith.constant 0 : index
      %121 = vector.load %arg6[%c0_57, %c0_58, %c0_59] : memref<8x256x128xf32, #tpu.memory_space<vmem>>, vector<1x256x128xf32>
      %122 = vector.shape_cast %121 : vector<1x256x128xf32> to vector<256x128xf32>
      %123 = vector.extract_strided_slice %122 {offsets = [0, 32], sizes = [256, 1], strides = [1, 1]} : vector<256x128xf32> to vector<256x1xf32>
      %cst_60 = arith.constant 5.000000e-01 : f32
      %124 = vector.broadcast %cst_60 : f32 to vector<256x1xf32>
      %125 = arith.cmpf ogt, %123, %124 : vector<256x1xf32>
      %cst_61 = arith.constant -1.000000e+03 : f32
      %126 = vector.shape_cast %125 : vector<256x1xi1> to vector<256x1xi1>
      %127 = vector.broadcast %126 : vector<256x1xi1> to vector<256x128xi1>
      %128 = vector.broadcast %cst_61 : f32 to vector<256x128xf32>
      %129 = arith.select %127, %122, %128 : vector<256x128xi1>, vector<256x128xf32>
      %c1_62 = arith.constant 1 : index
      %c0_63 = arith.constant 0 : index
      %c0_64 = arith.constant 0 : index
      %130 = vector.load %arg6[%c1_62, %c0_63, %c0_64] : memref<8x256x128xf32, #tpu.memory_space<vmem>>, vector<1x256x128xf32>
      %131 = vector.shape_cast %130 : vector<1x256x128xf32> to vector<256x128xf32>
      %132 = vector.extract_strided_slice %131 {offsets = [0, 32], sizes = [256, 1], strides = [1, 1]} : vector<256x128xf32> to vector<256x1xf32>
      %cst_65 = arith.constant 5.000000e-01 : f32
      %133 = vector.broadcast %cst_65 : f32 to vector<256x1xf32>
      %134 = arith.cmpf ogt, %132, %133 : vector<256x1xf32>
      %cst_66 = arith.constant -1.000000e+03 : f32
      %135 = vector.shape_cast %134 : vector<256x1xi1> to vector<256x1xi1>
      %136 = vector.broadcast %135 : vector<256x1xi1> to vector<256x128xi1>
      %137 = vector.broadcast %cst_66 : f32 to vector<256x128xf32>
      %138 = arith.select %136, %131, %137 : vector<256x128xi1>, vector<256x128xf32>
      %139 = arith.maximumf %129, %138 : vector<256x128xf32>
      %c2_67 = arith.constant 2 : index
      %c0_68 = arith.constant 0 : index
      %c0_69 = arith.constant 0 : index
      %140 = vector.load %arg6[%c2_67, %c0_68, %c0_69] : memref<8x256x128xf32, #tpu.memory_space<vmem>>, vector<1x256x128xf32>
      %141 = vector.shape_cast %140 : vector<1x256x128xf32> to vector<256x128xf32>
      %142 = vector.extract_strided_slice %141 {offsets = [0, 32], sizes = [256, 1], strides = [1, 1]} : vector<256x128xf32> to vector<256x1xf32>
      %cst_70 = arith.constant 5.000000e-01 : f32
      %143 = vector.broadcast %cst_70 : f32 to vector<256x1xf32>
      %144 = arith.cmpf ogt, %142, %143 : vector<256x1xf32>
      %cst_71 = arith.constant -1.000000e+03 : f32
      %145 = vector.shape_cast %144 : vector<256x1xi1> to vector<256x1xi1>
      %146 = vector.broadcast %145 : vector<256x1xi1> to vector<256x128xi1>
      %147 = vector.broadcast %cst_71 : f32 to vector<256x128xf32>
      %148 = arith.select %146, %141, %147 : vector<256x128xi1>, vector<256x128xf32>
      %149 = arith.maximumf %139, %148 : vector<256x128xf32>
      %c3_72 = arith.constant 3 : index
      %c0_73 = arith.constant 0 : index
      %c0_74 = arith.constant 0 : index
      %150 = vector.load %arg6[%c3_72, %c0_73, %c0_74] : memref<8x256x128xf32, #tpu.memory_space<vmem>>, vector<1x256x128xf32>
      %151 = vector.shape_cast %150 : vector<1x256x128xf32> to vector<256x128xf32>
      %152 = vector.extract_strided_slice %151 {offsets = [0, 32], sizes = [256, 1], strides = [1, 1]} : vector<256x128xf32> to vector<256x1xf32>
      %cst_75 = arith.constant 5.000000e-01 : f32
      %153 = vector.broadcast %cst_75 : f32 to vector<256x1xf32>
      %154 = arith.cmpf ogt, %152, %153 : vector<256x1xf32>
      %cst_76 = arith.constant -1.000000e+03 : f32
      %155 = vector.shape_cast %154 : vector<256x1xi1> to vector<256x1xi1>
      %156 = vector.broadcast %155 : vector<256x1xi1> to vector<256x128xi1>
      %157 = vector.broadcast %cst_76 : f32 to vector<256x128xf32>
      %158 = arith.select %156, %151, %157 : vector<256x128xi1>, vector<256x128xf32>
      %159 = arith.maximumf %149, %158 : vector<256x128xf32>
      %c4_77 = arith.constant 4 : index
      %c0_78 = arith.constant 0 : index
      %c0_79 = arith.constant 0 : index
      %160 = vector.load %arg6[%c4_77, %c0_78, %c0_79] : memref<8x256x128xf32, #tpu.memory_space<vmem>>, vector<1x256x128xf32>
      %161 = vector.shape_cast %160 : vector<1x256x128xf32> to vector<256x128xf32>
      %162 = vector.extract_strided_slice %161 {offsets = [0, 32], sizes = [256, 1], strides = [1, 1]} : vector<256x128xf32> to vector<256x1xf32>
      %cst_80 = arith.constant 5.000000e-01 : f32
      %163 = vector.broadcast %cst_80 : f32 to vector<256x1xf32>
      %164 = arith.cmpf ogt, %162, %163 : vector<256x1xf32>
      %cst_81 = arith.constant -1.000000e+03 : f32
      %165 = vector.shape_cast %164 : vector<256x1xi1> to vector<256x1xi1>
      %166 = vector.broadcast %165 : vector<256x1xi1> to vector<256x128xi1>
      %167 = vector.broadcast %cst_81 : f32 to vector<256x128xf32>
      %168 = arith.select %166, %161, %167 : vector<256x128xi1>, vector<256x128xf32>
      %169 = arith.maximumf %159, %168 : vector<256x128xf32>
      %c5_82 = arith.constant 5 : index
      %c0_83 = arith.constant 0 : index
      %c0_84 = arith.constant 0 : index
      %170 = vector.load %arg6[%c5_82, %c0_83, %c0_84] : memref<8x256x128xf32, #tpu.memory_space<vmem>>, vector<1x256x128xf32>
      %171 = vector.shape_cast %170 : vector<1x256x128xf32> to vector<256x128xf32>
      %172 = vector.extract_strided_slice %171 {offsets = [0, 32], sizes = [256, 1], strides = [1, 1]} : vector<256x128xf32> to vector<256x1xf32>
      %cst_85 = arith.constant 5.000000e-01 : f32
      %173 = vector.broadcast %cst_85 : f32 to vector<256x1xf32>
      %174 = arith.cmpf ogt, %172, %173 : vector<256x1xf32>
      %cst_86 = arith.constant -1.000000e+03 : f32
      %175 = vector.shape_cast %174 : vector<256x1xi1> to vector<256x1xi1>
      %176 = vector.broadcast %175 : vector<256x1xi1> to vector<256x128xi1>
      %177 = vector.broadcast %cst_86 : f32 to vector<256x128xf32>
      %178 = arith.select %176, %171, %177 : vector<256x128xi1>, vector<256x128xf32>
      %179 = arith.maximumf %169, %178 : vector<256x128xf32>
      %c6_87 = arith.constant 6 : index
      %c0_88 = arith.constant 0 : index
      %c0_89 = arith.constant 0 : index
      %180 = vector.load %arg6[%c6_87, %c0_88, %c0_89] : memref<8x256x128xf32, #tpu.memory_space<vmem>>, vector<1x256x128xf32>
      %181 = vector.shape_cast %180 : vector<1x256x128xf32> to vector<256x128xf32>
      %182 = vector.extract_strided_slice %181 {offsets = [0, 32], sizes = [256, 1], strides = [1, 1]} : vector<256x128xf32> to vector<256x1xf32>
      %cst_90 = arith.constant 5.000000e-01 : f32
      %183 = vector.broadcast %cst_90 : f32 to vector<256x1xf32>
      %184 = arith.cmpf ogt, %182, %183 : vector<256x1xf32>
      %cst_91 = arith.constant -1.000000e+03 : f32
      %185 = vector.shape_cast %184 : vector<256x1xi1> to vector<256x1xi1>
      %186 = vector.broadcast %185 : vector<256x1xi1> to vector<256x128xi1>
      %187 = vector.broadcast %cst_91 : f32 to vector<256x128xf32>
      %188 = arith.select %186, %181, %187 : vector<256x128xi1>, vector<256x128xf32>
      %189 = arith.maximumf %179, %188 : vector<256x128xf32>
      %c7_92 = arith.constant 7 : index
      %c0_93 = arith.constant 0 : index
      %c0_94 = arith.constant 0 : index
      %190 = vector.load %arg6[%c7_92, %c0_93, %c0_94] : memref<8x256x128xf32, #tpu.memory_space<vmem>>, vector<1x256x128xf32>
      %191 = vector.shape_cast %190 : vector<1x256x128xf32> to vector<256x128xf32>
      %192 = vector.extract_strided_slice %191 {offsets = [0, 32], sizes = [256, 1], strides = [1, 1]} : vector<256x128xf32> to vector<256x1xf32>
      %cst_95 = arith.constant 5.000000e-01 : f32
      %193 = vector.broadcast %cst_95 : f32 to vector<256x1xf32>
      %194 = arith.cmpf ogt, %192, %193 : vector<256x1xf32>
      %cst_96 = arith.constant -1.000000e+03 : f32
      %195 = vector.shape_cast %194 : vector<256x1xi1> to vector<256x1xi1>
      %196 = vector.broadcast %195 : vector<256x1xi1> to vector<256x128xi1>
      %197 = vector.broadcast %cst_96 : f32 to vector<256x128xf32>
      %198 = arith.select %196, %191, %197 : vector<256x128xi1>, vector<256x128xf32>
      %199 = arith.maximumf %189, %198 : vector<256x128xf32>
      %c0_97 = arith.constant 0 : index
      %c0_98 = arith.constant 0 : index
      %200 = vector.load %arg5[%c0_97, %c0_98] : memref<256x128xf32, #tpu.memory_space<vmem>>, vector<256x128xf32>
      tpu.vector_store %arg5[%c0_97, %c0_98], %199 {strides = array<i32>} : memref<256x128xf32, #tpu.memory_space<vmem>>, vector<256x128xf32>,
    } else {
    }
    return
  }
  func.func @transform_0(%arg0: i32, %arg1: i32) -> (i32, i32) {
    %c0_i32 = arith.constant 0 : i32
    %c0_i32_0 = arith.constant 0 : i32
    return %arg0, %c0_i32 : i32, i32
  }
  func.func @transform_1(%arg0: i32, %arg1: i32) -> (i32, i32) {
    %c0_i32 = arith.constant 0 : i32
    %c0_i32_0 = arith.constant 0 : i32
    return %c0_i32, %arg1 : i32, i32
  }
  func.func @transform_2(%arg0: i32, %arg1: i32) -> (i32, i32) {
    %c0_i32 = arith.constant 0 : i32
    %c0_i32_0 = arith.constant 0 : i32
    return %arg1, %c0_i32 : i32, i32
  }
  func.func @transform_3(%arg0: i32, %arg1: i32) -> (i32, i32) {
    %c0_i32 = arith.constant 0 : i32
    %c0_i32_0 = arith.constant 0 : i32
    return %arg0, %c0_i32 : i32, i32
  }
}

</mosaic_0001>

<llo_original>
// kernel: tpu_custom_call.1
$region0: #{tpu_custom_call.1}
  #allocation0 [shape = 'u32[]', space=smem, size = 0x4, offset = 0x4, fixed_abs, tag = 'smem constant byte address 0x4 - core index']
  #allocation1 [shape = 'u32[72,128]{1,0:T(1,128)}', space=vmem, size = 0x9000, scoped, tag = 'internal scratch']
  #allocation2 [shape = 'f32[8,256,128]{2,1,0:T(8,128)}', space=vmem, size = 0x100000, scoped, tag = 'scratch operand']
  %s0 = inlined_call_operand.vmem [shape: s32[512,1], index: 0, kind: input, shape index: {}]
  %s1 = inlined_call_operand.vmem [shape: s32[1,384], index: 1, kind: input, shape index: {}]
  %s2 = inlined_call_operand.vmem [shape: f32[384,128], index: 2, kind: input, shape index: {}]
  %s3 = inlined_call_operand.hbm [shape: f32[512,128], index: 3, kind: output, shape index: {}]
  %s4 = sld [smem:[#allocation0]]
  $region53: #{tpu_custom_call.1} parent=0
    _
  %s6 = ssub.s32 1, %s4
  %s7 = scalar_select 0, %s6, %s4
  $region1: #{tpu_custom_call.1} parent=0
    #allocation3 [shape = 'u8[262144]{0}', space=vmem, size = 0x40000, scoped, tag = 'output window, operand 0']
    #allocation4 [shape = 's32[2]{0}', space=sflag, size = 0x8, scoped, tag = 'scoped memory for tpu_custom_call.1']
    %8 = vsyncpa [#allocation4], 0
    %s9 = scalar_lea.sflag [#allocation4], 1
    %10 = vsyncpa %s9, 0
    loop: start=0, step=1, limit=4
    $region2: #{tpu_custom_call.1} parent=1 // loop_pre_header
      _
    $region3: #{tpu_custom_call.1} parent=1 // loop_header
      %s12 = sphi 0, %s16
      %p13 = scmp.ge.s32.totalorder %s12, 4
      %s19 = sphi 0, %s31
      %s20 = sphi 0, %s27
      %s21 = sphi 0, %s19
      %s22 = sphi 0, %s20
      %s23 = sphi 0, %s21
      %s24 = sphi 0, %s22
      %s34 = sphi 0, %s36
      %s37 = sphi 0, %s34
      %s38 = sphi 0, %s37
      %s54 = sphi 0, %s38
      %s60 = sphi 0, %s62
      %s63 = sphi 0, %s60
      %s64 = sphi 0, %s63
      %s80 = sphi 0, %s64
      %s86 = sphi 0, %s88
      %s89 = sphi 0, %s86
      %s90 = sphi 0, %s89
      %s106 = sphi 0, %s90
      %s112 = sphi 0, %s114
      %s115 = sphi 0, %s112
      %s116 = sphi 0, %s115
      %s132 = sphi 0, %s116
    $region4: #{tpu_custom_call.1} parent=1 // loop_header_branch
      %15 = sbr.rel (%p13) target = $region8
    $region5: #{tpu_custom_call.1} parent=1 // loop_body
      %s17 = ssub.s32 %s12, 1
      %s18 = ssub.s32 %s12, 2
      %s25 = sadd.s32 1, %s20
      %p26 = scmp.ge.s32.totalorder %s25, 1
      %s27 = scalar_select %p26, 0, %s25
      %s28 = sadd.s32 1, %s19
      %s29 = scalar_select %p26, %s28, %s19
      %p30 = scmp.ge.s32.totalorder %s29, 2
      %s31 = scalar_select %p30, 0, %s29
      %s32 = ssub.s32 %s19, %s31
      %p33 = scmp.eq.s32.totalorder %s32, 0
      %s35 = sadd.s32 %s34, 1
      %s36 = scalar_select %p33, %s34, %s35
      %p39 = pneg %p33
      %p40 = scmp.eq.s32.totalorder %s12, 1
      %p41 = por %p39, %p40
      %p42 = scmp.ne.s32.totalorder %s34, %s37
      %p43 = scmp.eq.s32.totalorder %s12, 0
      %p44 = por %p42, %p43
      %p45 = scmp.ne.s32.totalorder %s34, %s37
      %p46 = scmp.eq.s32.totalorder %s17, 1
      %p47 = por %p45, %p46
      %p48 = scmp.ne.s32.totalorder %s37, %s38
      %p49 = scmp.eq.s32.totalorder %s17, 0
      %p50 = por %p48, %p49
      %p51 = scmp.ne.s32.totalorder %s37, %s38
      %p52 = scmp.eq.s32.totalorder %s18, 1
      %p53 = por %p51, %p52
      %p55 = scmp.ne.s32.totalorder %s38, %s54
      %p56 = scmp.eq.s32.totalorder %s18, 0
      %p57 = por %p55, %p56
      %s58 = ssub.s32 %s20, %s27
      %p59 = scmp.eq.s32.totalorder %s58, 0
      %s61 = sadd.s32 %s60, 1
      %s62 = scalar_select %p59, %s60, %s61
      %p65 = pneg %p59
      %p66 = scmp.eq.s32.totalorder %s12, 1
      %p67 = por %p65, %p66
      %p68 = scmp.ne.s32.totalorder %s60, %s63
      %p69 = scmp.eq.s32.totalorder %s12, 0
      %p70 = por %p68, %p69
      %p71 = scmp.ne.s32.totalorder %s60, %s63
      %p72 = scmp.eq.s32.totalorder %s17, 1
      %p73 = por %p71, %p72
      %p74 = scmp.ne.s32.totalorder %s63, %s64
      %p75 = scmp.eq.s32.totalorder %s17, 0
      %p76 = por %p74, %p75
      %p77 = scmp.ne.s32.totalorder %s63, %s64
      %p78 = scmp.eq.s32.totalorder %s18, 1
      %p79 = por %p77, %p78
      %p81 = scmp.ne.s32.totalorder %s64, %s80
      %p82 = scmp.eq.s32.totalorder %s18, 0
      %p83 = por %p81, %p82
      %s84 = ssub.s32 %s20, %s27
      %p85 = scmp.eq.s32.totalorder %s84, 0
      %s87 = sadd.s32 %s86, 1
      %s88 = scalar_select %p85, %s86, %s87
      %p91 = pneg %p85
      %p92 = scmp.eq.s32.totalorder %s12, 1
      %p93 = por %p91, %p92
      %p94 = scmp.ne.s32.totalorder %s86, %s89
      %p95 = scmp.eq.s32.totalorder %s12, 0
      %p96 = por %p94, %p95
      %p97 = scmp.ne.s32.totalorder %s86, %s89
      %p98 = scmp.eq.s32.totalorder %s17, 1
      %p99 = por %p97, %p98
      %p100 = scmp.ne.s32.totalorder %s89, %s90
      %p101 = scmp.eq.s32.totalorder %s17, 0
      %p102 = por %p100, %p101
      %p103 = scmp.ne.s32.totalorder %s89, %s90
      %p104 = scmp.eq.s32.totalorder %s18, 1
      %p105 = por %p103, %p104
      %p107 = scmp.ne.s32.totalorder %s90, %s106
      %p108 = scmp.eq.s32.totalorder %s18, 0
      %p109 = por %p107, %p108
      %s110 = ssub.s32 %s19, %s31
      %p111 = scmp.eq.s32.totalorder %s110, 0
      %s113 = sadd.s32 %s112, 1
      %s114 = scalar_select %p111, %s112, %s113
      %p117 = pneg %p111
      %p118 = scmp.eq.s32.totalorder %s12, 1
      %p119 = por %p117, %p118
      %p120 = scmp.ne.s32.totalorder %s112, %s115
      %p121 = scmp.eq.s32.totalorder %s12, 0
      %p122 = por %p120, %p121
      %p123 = scmp.ne.s32.totalorder %s112, %s115
      %p124 = scmp.eq.s32.totalorder %s17, 1
      %p125 = por %p123, %p124
      %p126 = scmp.ne.s32.totalorder %s115, %s116
      %p127 = scmp.eq.s32.totalorder %s17, 0
      %p128 = por %p126, %p127
      %p129 = scmp.ne.s32.totalorder %s115, %s116
      %p130 = scmp.eq.s32.totalorder %s18, 1
      %p131 = por %p129, %p130
      %p133 = scmp.ne.s32.totalorder %s116, %s132
      %p134 = scmp.eq.s32.totalorder %s18, 0
      %p135 = por %p133, %p134
      %p136 = scmp.le.s32.totalorder 1, %s12
      %p137 = scmp.lt.s32.totalorder %s12, 3
      %p138 = pnand %p136, %p137
      %p139 = pneg %p138
      // Predicated region
      $region9: #{tpu_custom_call.1} parent=5 // pred_check
        _
      $region10: #{tpu_custom_call.1} parent=5 // pred_check_branch
        %141 = sbr.rel (%p138) target = $region12
      $region11: #{tpu_custom_call.1} parent=5 // pred_region
        %s142 = ssub.s32 %s12, 1
        // Predicated region
        $region13: #{tpu_custom_call.1} parent=11 // pred_check
          %p143 = pneg %p76
        $region14: #{tpu_custom_call.1} parent=11 // pred_check_branch
          %145 = sbr.rel (%p143) target = $region16
        $region15: #{tpu_custom_call.1} parent=11 // pred_region
          %s146 = smul.u32 3, %s22
          %p147 = scmp.lt.s32.totalorder %s146, 2
          %s148 = scalar_select %p147, %s146, 2
          %s149 = scalar_lea.vmem %s1, %s148
          %s150 = smul.u32 3, %s22
        $region16: #{tpu_custom_call.1} parent=11 // pred_fallthru
          _
        // Predicated region
        $region17: #{tpu_custom_call.1} parent=11 // pred_check
          %p151 = pneg %p102
        $region18: #{tpu_custom_call.1} parent=11 // pred_check_branch
          %153 = sbr.rel (%p151) target = $region20
        $region19: #{tpu_custom_call.1} parent=11 // pred_region
          %s154 = smul.u32 48, %s22
          %p155 = scmp.lt.s32.totalorder %s154, 47
          %s156 = scalar_select %p155, %s154, 47
          %s157 = smul.addr %s156, 8
          %s158 = scalar_lea.vmem %s2, %s157
          %s159 = smul.u32 48, %s22
        $region20: #{tpu_custom_call.1} parent=11 // pred_fallthru
          _
      $region12: #{tpu_custom_call.1} parent=5 // pred_fallthru
        _
      %p160 = scmp.lt.s32.totalorder %s12, 2
      // Predicated region
      $region21: #{tpu_custom_call.1} parent=5 // pred_check
        %p161 = pneg %p160
      $region22: #{tpu_custom_call.1} parent=5 // pred_check_branch
        %163 = sbr.rel (%p161) target = $region24
      $region23: #{tpu_custom_call.1} parent=5 // pred_region
        // Predicated region
        $region25: #{tpu_custom_call.1} parent=23 // pred_check
          %p164 = pneg %p44
        $region26: #{tpu_custom_call.1} parent=23 // pred_check_branch
          %166 = sbr.rel (%p164) target = $region28
        $region27: #{tpu_custom_call.1} parent=23 // pred_region
          %s167 = smul.u32 32, %s19
          %p168 = scmp.lt.s32.totalorder %s167, 63
          %s169 = scalar_select %p168, %s167, 63
          %s170 = smul.addr %s169, 8
          %s171 = scalar_lea.vmem %s0, %s170
          %s172 = smul.u32 32, %s19
        $region28: #{tpu_custom_call.1} parent=23 // pred_fallthru
          _
      $region24: #{tpu_custom_call.1} parent=5 // pred_fallthru
        _
      %p173 = scmp.le.s32.totalorder 1, %s12
      %p174 = scmp.lt.s32.totalorder %s12, 3
      %p175 = pnand %p173, %p174
      %p176 = pneg %p175
      // Predicated region
      $region29: #{tpu_custom_call.1} parent=5 // pred_check
        _
      $region30: #{tpu_custom_call.1} parent=5 // pred_check_branch
        %178 = sbr.rel (%p175) target = $region32
      $region31: #{tpu_custom_call.1} parent=5 // pred_region
        %s179 = ssub.s32 %s12, 1
        %s180 = smul.u32 32, %s21
        %p181 = scmp.lt.s32.totalorder %s180, 63
        %s182 = scalar_select %p181, %s180, 63
        %s183 = smul.addr %s182, 8
        %s184 = scalar_lea.vmem %s0, %s183
        %p185 = pneg %p50
        %p186 = pneg %p47
        %s187 = smul.u32 3, %s22
        %p188 = scmp.lt.s32.totalorder %s187, 2
        %s189 = scalar_select %p188, %s187, 2
        %s190 = scalar_lea.vmem %s1, %s189
        %p191 = pneg %p76
        %p192 = pneg %p73
        %s193 = smul.u32 48, %s22
        %p194 = scmp.lt.s32.totalorder %s193, 47
        %s195 = scalar_select %p194, %s193, 47
        %s196 = smul.addr %s195, 8
        %s197 = scalar_lea.vmem %s2, %s196
        %p198 = pneg %p102
        %p199 = pneg %p99
        %p200 = pneg %p128
        %p201 = pneg %p125
        %s202 = sand.u32 %s115, 1
        %s203 = scalar_lea.sflag [#allocation4], %s202
        %s204 = sand.u32 %s115, 1
        %s205 = smul.addr %s204, 256
        %s206 = scalar_lea.vmem [#allocation3], %s205
        %s207 = smul.u32 32, %s21
        %p208 = scmp.lt.s32.totalorder %s207, 63
        %s209 = scalar_select %p208, %s207, 63
        %s210 = smul.addr %s209, 8
        %s211 = scalar_lea.vmem %s0, %s210
        %s212 = smul.u32 32, %s21
        %s213 = smul.u32 3, %s22
        %p214 = scmp.lt.s32.totalorder %s213, 2
        %s215 = scalar_select %p214, %s213, 2
        %s216 = scalar_lea.vmem %s1, %s215
        %s217 = smul.u32 3, %s22
        %s218 = smul.u32 48, %s22
        %p219 = scmp.lt.s32.totalorder %s218, 47
        %s220 = scalar_select %p219, %s218, 47
        %s221 = smul.addr %s220, 8
        %s222 = scalar_lea.vmem %s2, %s221
        %s223 = smul.u32 48, %s22
        %s224 = smul.u32 32, %s21
        %p225 = scmp.eq.s32.totalorder %s22, 0
        // Predicated region
        $region33: #{tpu_custom_call.1} parent=31 // pred_check
          %p226 = pneg %p225
        $region34: #{tpu_custom_call.1} parent=31 // pred_check_branch
          %228 = sbr.rel (%p226) target = $region36
        $region35: #{tpu_custom_call.1} parent=31 // pred_region
          %229 = vst [vmem:[#allocation2] sm:$0xff] 0.0
          %230 = vst [vmem:[#allocation2 + $0x8] sm:$0xff] 0.0
          %231 = vst [vmem:[#allocation2 + $0x10] sm:$0xff] 0.0
          %232 = vst [vmem:[#allocation2 + $0x18] sm:$0xff] 0.0
          %233 = vst [vmem:[#allocation2 + $0x20] sm:$0xff] 0.0
          %234 = vst [vmem:[#allocation2 + $0x28] sm:$0xff] 0.0
          %235 = vst [vmem:[#allocation2 + $0x30] sm:$0xff] 0.0
          %236 = vst [vmem:[#allocation2 + $0x38] sm:$0xff] 0.0
          %237 = vst [vmem:[#allocation2 + $0x40] sm:$0xff] 0.0
          %238 = vst [vmem:[#allocation2 + $0x48] sm:$0xff] 0.0
          %239 = vst [vmem:[#allocation2 + $0x50] sm:$0xff] 0.0
          %240 = vst [vmem:[#allocation2 + $0x58] sm:$0xff] 0.0
          %241 = vst [vmem:[#allocation2 + $0x60] sm:$0xff] 0.0
          %242 = vst [vmem:[#allocation2 + $0x68] sm:$0xff] 0.0
          %243 = vst [vmem:[#allocation2 + $0x70] sm:$0xff] 0.0
          %244 = vst [vmem:[#allocation2 + $0x78] sm:$0xff] 0.0
          %245 = vst [vmem:[#allocation2 + $0x80] sm:$0xff] 0.0
          %246 = vst [vmem:[#allocation2 + $0x88] sm:$0xff] 0.0
          %247 = vst [vmem:[#allocation2 + $0x90] sm:$0xff] 0.0
          %248 = vst [vmem:[#allocation2 + $0x98] sm:$0xff] 0.0
          %249 = vst [vmem:[#allocation2 + $0xa0] sm:$0xff] 0.0
          %250 = vst [vmem:[#allocation2 + $0xa8] sm:$0xff] 0.0
          %251 = vst [vmem:[#allocation2 + $0xb0] sm:$0xff] 0.0
          %252 = vst [vmem:[#allocation2 + $0xb8] sm:$0xff] 0.0
          %253 = vst [vmem:[#allocation2 + $0xc0] sm:$0xff] 0.0
          %254 = vst [vmem:[#allocation2 + $0xc8] sm:$0xff] 0.0
          %255 = vst [vmem:[#allocation2 + $0xd0] sm:$0xff] 0.0
          %256 = vst [vmem:[#allocation2 + $0xd8] sm:$0xff] 0.0
          %257 = vst [vmem:[#allocation2 + $0xe0] sm:$0xff] 0.0
          %258 = vst [vmem:[#allocation2 + $0xe8] sm:$0xff] 0.0
          %259 = vst [vmem:[#allocation2 + $0xf0] sm:$0xff] 0.0
          %260 = vst [vmem:[#allocation2 + $0xf8] sm:$0xff] 0.0
          %261 = vst [vmem:[#allocation2 + $0x100] sm:$0xff] 0.0
          %262 = vst [vmem:[#allocation2 + $0x108] sm:$0xff] 0.0
          %263 = vst [vmem:[#allocation2 + $0x110] sm:$0xff] 0.0
          %264 = vst [vmem:[#allocation2 + $0x118] sm:$0xff] 0.0
          %265 = vst [vmem:[#allocation2 + $0x120] sm:$0xff] 0.0
          %266 = vst [vmem:[#allocation2 + $0x128] sm:$0xff] 0.0
          %267 = vst [vmem:[#allocation2 + $0x130] sm:$0xff] 0.0
          %268 = vst [vmem:[#allocation2 + $0x138] sm:$0xff] 0.0
          %269 = vst [vmem:[#allocation2 + $0x140] sm:$0xff] 0.0
          %270 = vst [vmem:[#allocation2 + $0x148] sm:$0xff] 0.0
          %271 = vst [vmem:[#allocation2 + $0x150] sm:$0xff] 0.0
          %272 = vst [vmem:[#allocation2 + $0x158] sm:$0xff] 0.0
          %273 = vst [vmem:[#allocation2 + $0x160] sm:$0xff] 0.0
          %274 = vst [vmem:[#allocation2 + $0x168] sm:$0xff] 0.0
          %275 = vst [vmem:[#allocation2 + $0x170] sm:$0xff] 0.0
          %276 = vst [vmem:[#allocation2 + $0x178] sm:$0xff] 0.0
          %277 = vst [vmem:[#allocation2 + $0x180] sm:$0xff] 0.0
          %278 = vst [vmem:[#allocation2 + $0x188] sm:$0xff] 0.0
          %279 = vst [vmem:[#allocation2 + $0x190] sm:$0xff] 0.0
          %280 = vst [vmem:[#allocation2 + $0x198] sm:$0xff] 0.0
          %281 = vst [vmem:[#allocation2 + $0x1a0] sm:$0xff] 0.0
          %282 = vst [vmem:[#allocation2 + $0x1a8] sm:$0xff] 0.0
          %283 = vst [vmem:[#allocation2 + $0x1b0] sm:$0xff] 0.0
          %284 = vst [vmem:[#allocation2 + $0x1b8] sm:$0xff] 0.0
          %285 = vst [vmem:[#allocation2 + $0x1c0] sm:$0xff] 0.0
          %286 = vst [vmem:[#allocation2 + $0x1c8] sm:$0xff] 0.0
          %287 = vst [vmem:[#allocation2 + $0x1d0] sm:$0xff] 0.0
          %288 = vst [vmem:[#allocation2 + $0x1d8] sm:$0xff] 0.0
          %289 = vst [vmem:[#allocation2 + $0x1e0] sm:$0xff] 0.0
          %290 = vst [vmem:[#allocation2 + $0x1e8] sm:$0xff] 0.0
          %291 = vst [vmem:[#allocation2 + $0x1f0] sm:$0xff] 0.0
          %292 = vst [vmem:[#allocation2 + $0x1f8] sm:$0xff] 0.0
          %293 = vst [vmem:[#allocation2 + $0x200] sm:$0xff] 0.0
          %294 = vst [vmem:[#allocation2 + $0x208] sm:$0xff] 0.0
          %295 = vst [vmem:[#allocation2 + $0x210] sm:$0xff] 0.0
          %296 = vst [vmem:[#allocation2 + $0x218] sm:$0xff] 0.0
          %297 = vst [vmem:[#allocation2 + $0x220] sm:$0xff] 0.0
          %298 = vst [vmem:[#allocation2 + $0x228] sm:$0xff] 0.0
          %299 = vst [vmem:[#allocation2 + $0x230] sm:$0xff] 0.0
          %300 = vst [vmem:[#allocation2 + $0x238] sm:$0xff] 0.0
          %301 = vst [vmem:[#allocation2 + $0x240] sm:$0xff] 0.0
          %302 = vst [vmem:[#allocation2 + $0x248] sm:$0xff] 0.0
          %303 = vst [vmem:[#allocation2 + $0x250] sm:$0xff] 0.0
          %304 = vst [vmem:[#allocation2 + $0x258] sm:$0xff] 0.0
          %305 = vst [vmem:[#allocation2 + $0x260] sm:$0xff] 0.0
          %306 = vst [vmem:[#allocation2 + $0x268] sm:$0xff] 0.0
          %307 = vst [vmem:[#allocation2 + $0x270] sm:$0xff] 0.0
          %308 = vst [vmem:[#allocation2 + $0x278] sm:$0xff] 0.0
          %309 = vst [vmem:[#allocation2 + $0x280] sm:$0xff] 0.0
          %310 = vst [vmem:[#allocation2 + $0x288] sm:$0xff] 0.0
          %311 = vst [vmem:[#allocation2 + $0x290] sm:$0xff] 0.0
          %312 = vst [vmem:[#allocation2 + $0x298] sm:$0xff] 0.0
          %313 = vst [vmem:[#allocation2 + $0x2a0] sm:$0xff] 0.0
          %314 = vst [vmem:[#allocation2 + $0x2a8] sm:$0xff] 0.0
          %315 = vst [vmem:[#allocation2 + $0x2b0] sm:$0xff] 0.0
          %316 = vst [vmem:[#allocation2 + $0x2b8] sm:$0xff] 0.0
          %317 = vst [vmem:[#allocation2 + $0x2c0] sm:$0xff] 0.0
          %318 = vst [vmem:[#allocation2 + $0x2c8] sm:$0xff] 0.0
          %319 = vst [vmem:[#allocation2 + $0x2d0] sm:$0xff] 0.0
          %320 = vst [vmem:[#allocation2 + $0x2d8] sm:$0xff] 0.0
          %321 = vst [vmem:[#allocation2 + $0x2e0] sm:$0xff] 0.0
          %322 = vst [vmem:[#allocation2 + $0x2e8] sm:$0xff] 0.0
          %323 = vst [vmem:[#allocation2 + $0x2f0] sm:$0xff] 0.0
          %324 = vst [vmem:[#allocation2 + $0x2f8] sm:$0xff] 0.0
          %325 = vst [vmem:[#allocation2 + $0x300] sm:$0xff] 0.0
          %326 = vst [vmem:[#allocation2 + $0x308] sm:$0xff] 0.0
          %327 = vst [vmem:[#allocation2 + $0x310] sm:$0xff] 0.0
          %328 = vst [vmem:[#allocation2 + $0x318] sm:$0xff] 0.0
          %329 = vst [vmem:[#allocation2 + $0x320] sm:$0xff] 0.0
          %330 = vst [vmem:[#allocation2 + $0x328] sm:$0xff] 0.0
          %331 = vst [vmem:[#allocation2 + $0x330] sm:$0xff] 0.0
          %332 = vst [vmem:[#allocation2 + $0x338] sm:$0xff] 0.0
          %333 = vst [vmem:[#allocation2 + $0x340] sm:$0xff] 0.0
          %334 = vst [vmem:[#allocation2 + $0x348] sm:$0xff] 0.0
          %335 = vst [vmem:[#allocation2 + $0x350] sm:$0xff] 0.0
          %336 = vst [vmem:[#allocation2 + $0x358] sm:$0xff] 0.0
          %337 = vst [vmem:[#allocation2 + $0x360] sm:$0xff] 0.0
          %338 = vst [vmem:[#allocation2 + $0x368] sm:$0xff] 0.0
          %339 = vst [vmem:[#allocation2 + $0x370] sm:$0xff] 0.0
          %340 = vst [vmem:[#allocation2 + $0x378] sm:$0xff] 0.0
          %341 = vst [vmem:[#allocation2 + $0x380] sm:$0xff] 0.0
          %342 = vst [vmem:[#allocation2 + $0x388] sm:$0xff] 0.0
          %343 = vst [vmem:[#allocation2 + $0x390] sm:$0xff] 0.0
          %344 = vst [vmem:[#allocation2 + $0x398] sm:$0xff] 0.0
          %345 = vst [vmem:[#allocation2 + $0x3a0] sm:$0xff] 0.0
          %346 = vst [vmem:[#allocation2 + $0x3a8] sm:$0xff] 0.0
          %347 = vst [vmem:[#allocation2 + $0x3b0] sm:$0xff] 0.0
          %348 = vst [vmem:[#allocation2 + $0x3b8] sm:$0xff] 0.0
          %349 = vst [vmem:[#allocation2 + $0x3c0] sm:$0xff] 0.0
          %350 = vst [vmem:[#allocation2 + $0x3c8] sm:$0xff] 0.0
          %351 = vst [vmem:[#allocation2 + $0x3d0] sm:$0xff] 0.0
          %352 = vst [vmem:[#allocation2 + $0x3d8] sm:$0xff] 0.0
          %353 = vst [vmem:[#allocation2 + $0x3e0] sm:$0xff] 0.0
          %354 = vst [vmem:[#allocation2 + $0x3e8] sm:$0xff] 0.0
          %355 = vst [vmem:[#allocation2 + $0x3f0] sm:$0xff] 0.0
          %356 = vst [vmem:[#allocation2 + $0x3f8] sm:$0xff] 0.0
          %357 = vst [vmem:[#allocation2 + $0x400] sm:$0xff] 0.0
          %358 = vst [vmem:[#allocation2 + $0x408] sm:$0xff] 0.0
          %359 = vst [vmem:[#allocation2 + $0x410] sm:$0xff] 0.0
          %360 = vst [vmem:[#allocation2 + $0x418] sm:$0xff] 0.0
          %361 = vst [vmem:[#allocation2 + $0x420] sm:$0xff] 0.0
          %362 = vst [vmem:[#allocation2 + $0x428] sm:$0xff] 0.0
          %363 = vst [vmem:[#allocation2 + $0x430] sm:$0xff] 0.0
          %364 = vst [vmem:[#allocation2 + $0x438] sm:$0xff] 0.0
          %365 = vst [vmem:[#allocation2 + $0x440] sm:$0xff] 0.0
          %366 = vst [vmem:[#allocation2 + $0x448] sm:$0xff] 0.0
          %367 = vst [vmem:[#allocation2 + $0x450] sm:$0xff] 0.0
          %368 = vst [vmem:[#allocation2 + $0x458] sm:$0xff] 0.0
          %369 = vst [vmem:[#allocation2 + $0x460] sm:$0xff] 0.0
          %370 = vst [vmem:[#allocation2 + $0x468] sm:$0xff] 0.0
          %371 = vst [vmem:[#allocation2 + $0x470] sm:$0xff] 0.0
          %372 = vst [vmem:[#allocation2 + $0x478] sm:$0xff] 0.0
          %373 = vst [vmem:[#allocation2 + $0x480] sm:$0xff] 0.0
          %374 = vst [vmem:[#allocation2 + $0x488] sm:$0xff] 0.0
          %375 = vst [vmem:[#allocation2 + $0x490] sm:$0xff] 0.0
          %376 = vst [vmem:[#allocation2 + $0x498] sm:$0xff] 0.0
          %377 = vst [vmem:[#allocation2 + $0x4a0] sm:$0xff] 0.0
          %378 = vst [vmem:[#allocation2 + $0x4a8] sm:$0xff] 0.0
          %379 = vst [vmem:[#allocation2 + $0x4b0] sm:$0xff] 0.0
          %380 = vst [vmem:[#allocation2 + $0x4b8] sm:$0xff] 0.0
          %381 = vst [vmem:[#allocation2 + $0x4c0] sm:$0xff] 0.0
          %382 = vst [vmem:[#allocation2 + $0x4c8] sm:$0xff] 0.0
          %383 = vst [vmem:[#allocation2 + $0x4d0] sm:$0xff] 0.0
          %384 = vst [vmem:[#allocation2 + $0x4d8] sm:$0xff] 0.0
          %385 = vst [vmem:[#allocation2 + $0x4e0] sm:$0xff] 0.0
          %386 = vst [vmem:[#allocation2 + $0x4e8] sm:$0xff] 0.0
          %387 = vst [vmem:[#allocation2 + $0x4f0] sm:$0xff] 0.0
          %388 = vst [vmem:[#allocation2 + $0x4f8] sm:$0xff] 0.0
          %389 = vst [vmem:[#allocation2 + $0x500] sm:$0xff] 0.0
          %390 = vst [vmem:[#allocation2 + $0x508] sm:$0xff] 0.0
          %391 = vst [vmem:[#allocation2 + $0x510] sm:$0xff] 0.0
          %392 = vst [vmem:[#allocation2 + $0x518] sm:$0xff] 0.0
          %393 = vst [vmem:[#allocation2 + $0x520] sm:$0xff] 0.0
          %394 = vst [vmem:[#allocation2 + $0x528] sm:$0xff] 0.0
          %395 = vst [vmem:[#allocation2 + $0x530] sm:$0xff] 0.0
          %396 = vst [vmem:[#allocation2 + $0x538] sm:$0xff] 0.0
          %397 = vst [vmem:[#allocation2 + $0x540] sm:$0xff] 0.0
          %398 = vst [vmem:[#allocation2 + $0x548] sm:$0xff] 0.0
          %399 = vst [vmem:[#allocation2 + $0x550] sm:$0xff] 0.0
          %400 = vst [vmem:[#allocation2 + $0x558] sm:$0xff] 0.0
          %401 = vst [vmem:[#allocation2 + $0x560] sm:$0xff] 0.0
          %402 = vst [vmem:[#allocation2 + $0x568] sm:$0xff] 0.0
          %403 = vst [vmem:[#allocation2 + $0x570] sm:$0xff] 0.0
          %404 = vst [vmem:[#allocation2 + $0x578] sm:$0xff] 0.0
          %405 = vst [vmem:[#allocation2 + $0x580] sm:$0xff] 0.0
          %406 = vst [vmem:[#allocation2 + $0x588] sm:$0xff] 0.0
          %407 = vst [vmem:[#allocation2 + $0x590] sm:$0xff] 0.0
          %408 = vst [vmem:[#allocation2 + $0x598] sm:$0xff] 0.0
          %409 = vst [vmem:[#allocation2 + $0x5a0] sm:$0xff] 0.0
          %410 = vst [vmem:[#allocation2 + $0x5a8] sm:$0xff] 0.0
          %411 = vst [vmem:[#allocation2 + $0x5b0] sm:$0xff] 0.0
          %412 = vst [vmem:[#allocation2 + $0x5b8] sm:$0xff] 0.0
          %413 = vst [vmem:[#allocation2 + $0x5c0] sm:$0xff] 0.0
          %414 = vst [vmem:[#allocation2 + $0x5c8] sm:$0xff] 0.0
          %415 = vst [vmem:[#allocation2 + $0x5d0] sm:$0xff] 0.0
          %416 = vst [vmem:[#allocation2 + $0x5d8] sm:$0xff] 0.0
          %417 = vst [vmem:[#allocation2 + $0x5e0] sm:$0xff] 0.0
          %418 = vst [vmem:[#allocation2 + $0x5e8] sm:$0xff] 0.0
          %419 = vst [vmem:[#allocation2 + $0x5f0] sm:$0xff] 0.0
          %420 = vst [vmem:[#allocation2 + $0x5f8] sm:$0xff] 0.0
          %421 = vst [vmem:[#allocation2 + $0x600] sm:$0xff] 0.0
          %422 = vst [vmem:[#allocation2 + $0x608] sm:$0xff] 0.0
          %423 = vst [vmem:[#allocation2 + $0x610] sm:$0xff] 0.0
          %424 = vst [vmem:[#allocation2 + $0x618] sm:$0xff] 0.0
          %425 = vst [vmem:[#allocation2 + $0x620] sm:$0xff] 0.0
          %426 = vst [vmem:[#allocation2 + $0x628] sm:$0xff] 0.0
          %427 = vst [vmem:[#allocation2 + $0x630] sm:$0xff] 0.0
          %428 = vst [vmem:[#allocation2 + $0x638] sm:$0xff] 0.0
          %429 = vst [vmem:[#allocation2 + $0x640] sm:$0xff] 0.0
          %430 = vst [vmem:[#allocation2 + $0x648] sm:$0xff] 0.0
          %431 = vst [vmem:[#allocation2 + $0x650] sm:$0xff] 0.0
          %432 = vst [vmem:[#allocation2 + $0x658] sm:$0xff] 0.0
          %433 = vst [vmem:[#allocation2 + $0x660] sm:$0xff] 0.0
          %434 = vst [vmem:[#allocation2 + $0x668] sm:$0xff] 0.0
          %435 = vst [vmem:[#allocation2 + $0x670] sm:$0xff] 0.0
          %436 = vst [vmem:[#allocation2 + $0x678] sm:$0xff] 0.0
          %437 = vst [vmem:[#allocation2 + $0x680] sm:$0xff] 0.0
          %438 = vst [vmem:[#allocation2 + $0x688] sm:$0xff] 0.0
          %439 = vst [vmem:[#allocation2 + $0x690] sm:$0xff] 0.0
          %440 = vst [vmem:[#allocation2 + $0x698] sm:$0xff] 0.0
          %441 = vst [vmem:[#allocation2 + $0x6a0] sm:$0xff] 0.0
          %442 = vst [vmem:[#allocation2 + $0x6a8] sm:$0xff] 0.0
          %443 = vst [vmem:[#allocation2 + $0x6b0] sm:$0xff] 0.0
          %444 = vst [vmem:[#allocation2 + $0x6b8] sm:$0xff] 0.0
          %445 = vst [vmem:[#allocation2 + $0x6c0] sm:$0xff] 0.0
          %446 = vst [vmem:[#allocation2 + $0x6c8] sm:$0xff] 0.0
          %447 = vst [vmem:[#allocation2 + $0x6d0] sm:$0xff] 0.0
          %448 = vst [vmem:[#allocation2 + $0x6d8] sm:$0xff] 0.0
          %449 = vst [vmem:[#allocation2 + $0x6e0] sm:$0xff] 0.0
          %450 = vst [vmem:[#allocation2 + $0x6e8] sm:$0xff] 0.0
          %451 = vst [vmem:[#allocation2 + $0x6f0] sm:$0xff] 0.0
          %452 = vst [vmem:[#allocation2 + $0x6f8] sm:$0xff] 0.0
          %453 = vst [vmem:[#allocation2 + $0x700] sm:$0xff] 0.0
          %454 = vst [vmem:[#allocation2 + $0x708] sm:$0xff] 0.0
          %455 = vst [vmem:[#allocation2 + $0x710] sm:$0xff] 0.0
          %456 = vst [vmem:[#allocation2 + $0x718] sm:$0xff] 0.0
          %457 = vst [vmem:[#allocation2 + $0x720] sm:$0xff] 0.0
          %458 = vst [vmem:[#allocation2 + $0x728] sm:$0xff] 0.0
          %459 = vst [vmem:[#allocation2 + $0x730] sm:$0xff] 0.0
          %460 = vst [vmem:[#allocation2 + $0x738] sm:$0xff] 0.0
          %461 = vst [vmem:[#allocation2 + $0x740] sm:$0xff] 0.0
          %462 = vst [vmem:[#allocation2 + $0x748] sm:$0xff] 0.0
          %463 = vst [vmem:[#allocation2 + $0x750] sm:$0xff] 0.0
          %464 = vst [vmem:[#allocation2 + $0x758] sm:$0xff] 0.0
          %465 = vst [vmem:[#allocation2 + $0x760] sm:$0xff] 0.0
          %466 = vst [vmem:[#allocation2 + $0x768] sm:$0xff] 0.0
          %467 = vst [vmem:[#allocation2 + $0x770] sm:$0xff] 0.0
          %468 = vst [vmem:[#allocation2 + $0x778] sm:$0xff] 0.0
          %469 = vst [vmem:[#allocation2 + $0x780] sm:$0xff] 0.0
          %470 = vst [vmem:[#allocation2 + $0x788] sm:$0xff] 0.0
          %471 = vst [vmem:[#allocation2 + $0x790] sm:$0xff] 0.0
          %472 = vst [vmem:[#allocation2 + $0x798] sm:$0xff] 0.0
          %473 = vst [vmem:[#allocation2 + $0x7a0] sm:$0xff] 0.0
          %474 = vst [vmem:[#allocation2 + $0x7a8] sm:$0xff] 0.0
          %475 = vst [vmem:[#allocation2 + $0x7b0] sm:$0xff] 0.0
          %476 = vst [vmem:[#allocation2 + $0x7b8] sm:$0xff] 0.0
          %477 = vst [vmem:[#allocation2 + $0x7c0] sm:$0xff] 0.0
          %478 = vst [vmem:[#allocation2 + $0x7c8] sm:$0xff] 0.0
          %479 = vst [vmem:[#allocation2 + $0x7d0] sm:$0xff] 0.0
          %480 = vst [vmem:[#allocation2 + $0x7d8] sm:$0xff] 0.0
          %481 = vst [vmem:[#allocation2 + $0x7e0] sm:$0xff] 0.0
          %482 = vst [vmem:[#allocation2 + $0x7e8] sm:$0xff] 0.0
          %483 = vst [vmem:[#allocation2 + $0x7f0] sm:$0xff] 0.0
          %484 = vst [vmem:[#allocation2 + $0x7f8] sm:$0xff] 0.0
        $region36: #{tpu_custom_call.1} parent=31 // pred_fallthru
          _
        %v485 = vld [vmem:[%s211] sm:$0xff]
        %v486 = vld [vmem:[%s211 + $0x8] sm:$0xff]
        %v487 = vld [vmem:[%s211 + $0x10] sm:$0xff]
        %v488 = vld [vmem:[%s211 + $0x18] sm:$0xff]
        %v489 = vld [vmem:[%s211 + $0x20] sm:$0xff]
        %v490 = vld [vmem:[%s211 + $0x28] sm:$0xff]
        %v491 = vld [vmem:[%s211 + $0x30] sm:$0xff]
        %v492 = vld [vmem:[%s211 + $0x38] sm:$0xff]
        %v493 = vld [vmem:[%s211 + $0x40] sm:$0xff]
        %v494 = vld [vmem:[%s211 + $0x48] sm:$0xff]
        %v495 = vld [vmem:[%s211 + $0x50] sm:$0xff]
        %v496 = vld [vmem:[%s211 + $0x58] sm:$0xff]
        %v497 = vld [vmem:[%s211 + $0x60] sm:$0xff]
        %v498 = vld [vmem:[%s211 + $0x68] sm:$0xff]
        %v499 = vld [vmem:[%s211 + $0x70] sm:$0xff]
        %v500 = vld [vmem:[%s211 + $0x78] sm:$0xff]
        %v501 = vld [vmem:[%s211 + $0x80] sm:$0xff]
        %v502 = vld [vmem:[%s211 + $0x88] sm:$0xff]
        %v503 = vld [vmem:[%s211 + $0x90] sm:$0xff]
        %v504 = vld [vmem:[%s211 + $0x98] sm:$0xff]
        %v505 = vld [vmem:[%s211 + $0xa0] sm:$0xff]
        %v506 = vld [vmem:[%s211 + $0xa8] sm:$0xff]
        %v507 = vld [vmem:[%s211 + $0xb0] sm:$0xff]
        %v508 = vld [vmem:[%s211 + $0xb8] sm:$0xff]
        %v509 = vld [vmem:[%s211 + $0xc0] sm:$0xff]
        %v510 = vld [vmem:[%s211 + $0xc8] sm:$0xff]
        %v511 = vld [vmem:[%s211 + $0xd0] sm:$0xff]
        %v512 = vld [vmem:[%s211 + $0xd8] sm:$0xff]
        %v513 = vld [vmem:[%s211 + $0xe0] sm:$0xff]
        %v514 = vld [vmem:[%s211 + $0xe8] sm:$0xff]
        %v515 = vld [vmem:[%s211 + $0xf0] sm:$0xff]
        %v516 = vld [vmem:[%s211 + $0xf8] sm:$0xff]
        %v517 = vld [vmem:[%s216] sm:$0x7]
        %v518 = vld [vmem:[%s222] sm:$0xff]
        %v519 = vld [vmem:[%s222 + $0x8] sm:$0xff]
        %v520 = vld [vmem:[%s222 + $0x10] sm:$0xff]
        %v521 = vld [vmem:[%s222 + $0x18] sm:$0xff]
        %v522 = vld [vmem:[%s222 + $0x20] sm:$0xff]
        %v523 = vld [vmem:[%s222 + $0x28] sm:$0xff]
        %v524 = vld [vmem:[%s222 + $0x30] sm:$0xff]
        %v525 = vld [vmem:[%s222 + $0x38] sm:$0xff]
        %v526 = vld [vmem:[%s222 + $0x40] sm:$0xff]
        %v527 = vld [vmem:[%s222 + $0x48] sm:$0xff]
        %v528 = vld [vmem:[%s222 + $0x50] sm:$0xff]
        %v529 = vld [vmem:[%s222 + $0x58] sm:$0xff]
        %v530 = vld [vmem:[%s222 + $0x60] sm:$0xff]
        %v531 = vld [vmem:[%s222 + $0x68] sm:$0xff]
        %v532 = vld [vmem:[%s222 + $0x70] sm:$0xff]
        %v533 = vld [vmem:[%s222 + $0x78] sm:$0xff]
        %v534 = vld [vmem:[%s222 + $0x80] sm:$0xff]
        %v535 = vld [vmem:[%s222 + $0x88] sm:$0xff]
        %v536 = vld [vmem:[%s222 + $0x90] sm:$0xff]
        %v537 = vld [vmem:[%s222 + $0x98] sm:$0xff]
        %v538 = vld [vmem:[%s222 + $0xa0] sm:$0xff]
        %v539 = vld [vmem:[%s222 + $0xa8] sm:$0xff]
        %v540 = vld [vmem:[%s222 + $0xb0] sm:$0xff]
        %v541 = vld [vmem:[%s222 + $0xb8] sm:$0xff]
        %v542 = vld [vmem:[%s222 + $0xc0] sm:$0xff]
        %v543 = vld [vmem:[%s222 + $0xc8] sm:$0xff]
        %v544 = vld [vmem:[%s222 + $0xd0] sm:$0xff]
        %v545 = vld [vmem:[%s222 + $0xd8] sm:$0xff]
        %v546 = vld [vmem:[%s222 + $0xe0] sm:$0xff]
        %v547 = vld [vmem:[%s222 + $0xe8] sm:$0xff]
        %v548 = vld [vmem:[%s222 + $0xf0] sm:$0xff]
        %v549 = vld [vmem:[%s222 + $0xf8] sm:$0xff]
        %v550 = vld [vmem:[%s222 + $0x100] sm:$0xff]
        %v551 = vld [vmem:[%s222 + $0x108] sm:$0xff]
        %v552 = vld [vmem:[%s222 + $0x110] sm:$0xff]
        %v553 = vld [vmem:[%s222 + $0x118] sm:$0xff]
        %v554 = vld [vmem:[%s222 + $0x120] sm:$0xff]
        %v555 = vld [vmem:[%s222 + $0x128] sm:$0xff]
        %v556 = vld [vmem:[%s222 + $0x130] sm:$0xff]
        %v557 = vld [vmem:[%s222 + $0x138] sm:$0xff]
        %v558 = vld [vmem:[%s222 + $0x140] sm:$0xff]
        %v559 = vld [vmem:[%s222 + $0x148] sm:$0xff]
        %v560 = vld [vmem:[%s222 + $0x150] sm:$0xff]
        %v561 = vld [vmem:[%s222 + $0x158] sm:$0xff]
        %v562 = vld [vmem:[%s222 + $0x160] sm:$0xff]
        %v563 = vld [vmem:[%s222 + $0x168] sm:$0xff]
        %v564 = vld [vmem:[%s222 + $0x170] sm:$0xff]
        %v565 = vld [vmem:[%s222 + $0x178] sm:$0xff]
        %566 = vset.pattern.permute.xlu0 0
        %567 = vperm.xlu0 %566, %v485
        %v568 = vpop.permute.xlu0 %567
        %569 = vset.pattern.permute.xlu0 0
        %570 = vperm.xlu0 %569, %v486
        %v571 = vpop.permute.xlu0 %570
        %572 = vset.pattern.permute.xlu0 0
        %573 = vperm.xlu0 %572, %v487
        %v574 = vpop.permute.xlu0 %573
        %575 = vset.pattern.permute.xlu0 0
        %576 = vperm.xlu0 %575, %v488
        %v577 = vpop.permute.xlu0 %576
        %578 = vset.pattern.permute.xlu0 0
        %579 = vperm.xlu0 %578, %v489
        %v580 = vpop.permute.xlu0 %579
        %581 = vset.pattern.permute.xlu0 0
        %582 = vperm.xlu0 %581, %v490
        %v583 = vpop.permute.xlu0 %582
        %584 = vset.pattern.permute.xlu0 0
        %585 = vperm.xlu0 %584, %v491
        %v586 = vpop.permute.xlu0 %585
        %587 = vset.pattern.permute.xlu0 0
        %588 = vperm.xlu0 %587, %v492
        %v589 = vpop.permute.xlu0 %588
        %590 = vset.pattern.permute.xlu0 0
        %591 = vperm.xlu0 %590, %v493
        %v592 = vpop.permute.xlu0 %591
        %593 = vset.pattern.permute.xlu0 0
        %594 = vperm.xlu0 %593, %v494
        %v595 = vpop.permute.xlu0 %594
        %596 = vset.pattern.permute.xlu0 0
        %597 = vperm.xlu0 %596, %v495
        %v598 = vpop.permute.xlu0 %597
        %599 = vset.pattern.permute.xlu0 0
        %600 = vperm.xlu0 %599, %v496
        %v601 = vpop.permute.xlu0 %600
        %602 = vset.pattern.permute.xlu0 0
        %603 = vperm.xlu0 %602, %v497
        %v604 = vpop.permute.xlu0 %603
        %605 = vset.pattern.permute.xlu0 0
        %606 = vperm.xlu0 %605, %v498
        %v607 = vpop.permute.xlu0 %606
        %608 = vset.pattern.permute.xlu0 0
        %609 = vperm.xlu0 %608, %v499
        %v610 = vpop.permute.xlu0 %609
        %611 = vset.pattern.permute.xlu0 0
        %612 = vperm.xlu0 %611, %v500
        %v613 = vpop.permute.xlu0 %612
        %614 = vset.pattern.permute.xlu0 0
        %615 = vperm.xlu0 %614, %v501
        %v616 = vpop.permute.xlu0 %615
        %617 = vset.pattern.permute.xlu0 0
        %618 = vperm.xlu0 %617, %v502
        %v619 = vpop.permute.xlu0 %618
        %620 = vset.pattern.permute.xlu0 0
        %621 = vperm.xlu0 %620, %v503
        %v622 = vpop.permute.xlu0 %621
        %623 = vset.pattern.permute.xlu0 0
        %624 = vperm.xlu0 %623, %v504
        %v625 = vpop.permute.xlu0 %624
        %626 = vset.pattern.permute.xlu0 0
        %627 = vperm.xlu0 %626, %v505
        %v628 = vpop.permute.xlu0 %627
        %629 = vset.pattern.permute.xlu0 0
        %630 = vperm.xlu0 %629, %v506
        %v631 = vpop.permute.xlu0 %630
        %632 = vset.pattern.permute.xlu0 0
        %633 = vperm.xlu0 %632, %v507
        %v634 = vpop.permute.xlu0 %633
        %635 = vset.pattern.permute.xlu0 0
        %636 = vperm.xlu0 %635, %v508
        %v637 = vpop.permute.xlu0 %636
        %638 = vset.pattern.permute.xlu0 0
        %639 = vperm.xlu0 %638, %v509
        %v640 = vpop.permute.xlu0 %639
        %641 = vset.pattern.permute.xlu0 0
        %642 = vperm.xlu0 %641, %v510
        %v643 = vpop.permute.xlu0 %642
        %644 = vset.pattern.permute.xlu0 0
        %645 = vperm.xlu0 %644, %v511
        %v646 = vpop.permute.xlu0 %645
        %647 = vset.pattern.permute.xlu0 0
        %648 = vperm.xlu0 %647, %v512
        %v649 = vpop.permute.xlu0 %648
        %650 = vset.pattern.permute.xlu0 0
        %651 = vperm.xlu0 %650, %v513
        %v652 = vpop.permute.xlu0 %651
        %653 = vset.pattern.permute.xlu0 0
        %654 = vperm.xlu0 %653, %v514
        %v655 = vpop.permute.xlu0 %654
        %656 = vset.pattern.permute.xlu0 0
        %657 = vperm.xlu0 %656, %v515
        %v658 = vpop.permute.xlu0 %657
        %659 = vset.pattern.permute.xlu0 0
        %660 = vperm.xlu0 %659, %v516
        %v661 = vpop.permute.xlu0 %660
        %v662 = vperm.slane %v517, 0
        %v663 = vperm.slane %v517, 1
        %v664 = vperm.slane %v517, 2
        %vm665 = vcmp.eq.s32.totalorder %v568, %v662
        %vm666 = vcmp.eq.s32.totalorder %v568, %v663
        %vm667 = vcmp.eq.s32.totalorder %v568, %v664
        %vm668 = vcmp.eq.s32.totalorder %v571, %v662
        %vm669 = vcmp.eq.s32.totalorder %v571, %v663
        %vm670 = vcmp.eq.s32.totalorder %v571, %v664
        %vm671 = vcmp.eq.s32.totalorder %v574, %v662
        %vm672 = vcmp.eq.s32.totalorder %v574, %v663
        %vm673 = vcmp.eq.s32.totalorder %v574, %v664
        %vm674 = vcmp.eq.s32.totalorder %v577, %v662
        %vm675 = vcmp.eq.s32.totalorder %v577, %v663
        %vm676 = vcmp.eq.s32.totalorder %v577, %v664
        %vm677 = vcmp.eq.s32.totalorder %v580, %v662
        %vm678 = vcmp.eq.s32.totalorder %v580, %v663
        %vm679 = vcmp.eq.s32.totalorder %v580, %v664
        %vm680 = vcmp.eq.s32.totalorder %v583, %v662
        %vm681 = vcmp.eq.s32.totalorder %v583, %v663
        %vm682 = vcmp.eq.s32.totalorder %v583, %v664
        %vm683 = vcmp.eq.s32.totalorder %v586, %v662
        %vm684 = vcmp.eq.s32.totalorder %v586, %v663
        %vm685 = vcmp.eq.s32.totalorder %v586, %v664
        %vm686 = vcmp.eq.s32.totalorder %v589, %v662
        %vm687 = vcmp.eq.s32.totalorder %v589, %v663
        %vm688 = vcmp.eq.s32.totalorder %v589, %v664
        %vm689 = vcmp.eq.s32.totalorder %v592, %v662
        %vm690 = vcmp.eq.s32.totalorder %v592, %v663
        %vm691 = vcmp.eq.s32.totalorder %v592, %v664
        %vm692 = vcmp.eq.s32.totalorder %v595, %v662
        %vm693 = vcmp.eq.s32.totalorder %v595, %v663
        %vm694 = vcmp.eq.s32.totalorder %v595, %v664
        %vm695 = vcmp.eq.s32.totalorder %v598, %v662
        %vm696 = vcmp.eq.s32.totalorder %v598, %v663
        %vm697 = vcmp.eq.s32.totalorder %v598, %v664
        %vm698 = vcmp.eq.s32.totalorder %v601, %v662
        %vm699 = vcmp.eq.s32.totalorder %v601, %v663
        %vm700 = vcmp.eq.s32.totalorder %v601, %v664
        %vm701 = vcmp.eq.s32.totalorder %v604, %v662
        %vm702 = vcmp.eq.s32.totalorder %v604, %v663
        %vm703 = vcmp.eq.s32.totalorder %v604, %v664
        %vm704 = vcmp.eq.s32.totalorder %v607, %v662
        %vm705 = vcmp.eq.s32.totalorder %v607, %v663
        %vm706 = vcmp.eq.s32.totalorder %v607, %v664
        %vm707 = vcmp.eq.s32.totalorder %v610, %v662
        %vm708 = vcmp.eq.s32.totalorder %v610, %v663
        %vm709 = vcmp.eq.s32.totalorder %v610, %v664
        %vm710 = vcmp.eq.s32.totalorder %v613, %v662
        %vm711 = vcmp.eq.s32.totalorder %v613, %v663
        %vm712 = vcmp.eq.s32.totalorder %v613, %v664
        %vm713 = vcmp.eq.s32.totalorder %v616, %v662
        %vm714 = vcmp.eq.s32.totalorder %v616, %v663
        %vm715 = vcmp.eq.s32.totalorder %v616, %v664
        %vm716 = vcmp.eq.s32.totalorder %v619, %v662
        %vm717 = vcmp.eq.s32.totalorder %v619, %v663
        %vm718 = vcmp.eq.s32.totalorder %v619, %v664
        %vm719 = vcmp.eq.s32.totalorder %v622, %v662
        %vm720 = vcmp.eq.s32.totalorder %v622, %v663
        %vm721 = vcmp.eq.s32.totalorder %v622, %v664
        %vm722 = vcmp.eq.s32.totalorder %v625, %v662
        %vm723 = vcmp.eq.s32.totalorder %v625, %v663
        %vm724 = vcmp.eq.s32.totalorder %v625, %v664
        %vm725 = vcmp.eq.s32.totalorder %v628, %v662
        %vm726 = vcmp.eq.s32.totalorder %v628, %v663
        %vm727 = vcmp.eq.s32.totalorder %v628, %v664
        %vm728 = vcmp.eq.s32.totalorder %v631, %v662
        %vm729 = vcmp.eq.s32.totalorder %v631, %v663
        %vm730 = vcmp.eq.s32.totalorder %v631, %v664
        %vm731 = vcmp.eq.s32.totalorder %v634, %v662
        %vm732 = vcmp.eq.s32.totalorder %v634, %v663
        %vm733 = vcmp.eq.s32.totalorder %v634, %v664
        %vm734 = vcmp.eq.s32.totalorder %v637, %v662
        %vm735 = vcmp.eq.s32.totalorder %v637, %v663
        %vm736 = vcmp.eq.s32.totalorder %v637, %v664
        %vm737 = vcmp.eq.s32.totalorder %v640, %v662
        %vm738 = vcmp.eq.s32.totalorder %v640, %v663
        %vm739 = vcmp.eq.s32.totalorder %v640, %v664
        %vm740 = vcmp.eq.s32.totalorder %v643, %v662
        %vm741 = vcmp.eq.s32.totalorder %v643, %v663
        %vm742 = vcmp.eq.s32.totalorder %v643, %v664
        %vm743 = vcmp.eq.s32.totalorder %v646, %v662
        %vm744 = vcmp.eq.s32.totalorder %v646, %v663
        %vm745 = vcmp.eq.s32.totalorder %v646, %v664
        %vm746 = vcmp.eq.s32.totalorder %v649, %v662
        %vm747 = vcmp.eq.s32.totalorder %v649, %v663
        %vm748 = vcmp.eq.s32.totalorder %v649, %v664
        %vm749 = vcmp.eq.s32.totalorder %v652, %v662
        %vm750 = vcmp.eq.s32.totalorder %v652, %v663
        %vm751 = vcmp.eq.s32.totalorder %v652, %v664
        %vm752 = vcmp.eq.s32.totalorder %v655, %v662
        %vm753 = vcmp.eq.s32.totalorder %v655, %v663
        %vm754 = vcmp.eq.s32.totalorder %v655, %v664
        %vm755 = vcmp.eq.s32.totalorder %v658, %v662
        %vm756 = vcmp.eq.s32.totalorder %v658, %v663
        %vm757 = vcmp.eq.s32.totalorder %v658, %v664
        %vm758 = vcmp.eq.s32.totalorder %v661, %v662
        %vm759 = vcmp.eq.s32.totalorder %v661, %v663
        %vm760 = vcmp.eq.s32.totalorder %v661, %v664
        %v761 = vsel %vm665, 1, 0
        %v762 = vsel %vm666, 1, 0
        %v763 = vsel %vm667, 1, 0
        %v764 = vsel %vm668, 1, 0
        %v765 = vsel %vm669, 1, 0
        %v766 = vsel %vm670, 1, 0
        %v767 = vsel %vm671, 1, 0
        %v768 = vsel %vm672, 1, 0
        %v769 = vsel %vm673, 1, 0
        %v770 = vsel %vm674, 1, 0
        %v771 = vsel %vm675, 1, 0
        %v772 = vsel %vm676, 1, 0
        %v773 = vsel %vm677, 1, 0
        %v774 = vsel %vm678, 1, 0
        %v775 = vsel %vm679, 1, 0
        %v776 = vsel %vm680, 1, 0
        %v777 = vsel %vm681, 1, 0
        %v778 = vsel %vm682, 1, 0
        %v779 = vsel %vm683, 1, 0
        %v780 = vsel %vm684, 1, 0
        %v781 = vsel %vm685, 1, 0
        %v782 = vsel %vm686, 1, 0
        %v783 = vsel %vm687, 1, 0
        %v784 = vsel %vm688, 1, 0
        %v785 = vsel %vm689, 1, 0
        %v786 = vsel %vm690, 1, 0
        %v787 = vsel %vm691, 1, 0
        %v788 = vsel %vm692, 1, 0
        %v789 = vsel %vm693, 1, 0
        %v790 = vsel %vm694, 1, 0
        %v791 = vsel %vm695, 1, 0
        %v792 = vsel %vm696, 1, 0
        %v793 = vsel %vm697, 1, 0
        %v794 = vsel %vm698, 1, 0
        %v795 = vsel %vm699, 1, 0
        %v796 = vsel %vm700, 1, 0
        %v797 = vsel %vm701, 1, 0
        %v798 = vsel %vm702, 1, 0
        %v799 = vsel %vm703, 1, 0
        %v800 = vsel %vm704, 1, 0
        %v801 = vsel %vm705, 1, 0
        %v802 = vsel %vm706, 1, 0
        %v803 = vsel %vm707, 1, 0
        %v804 = vsel %vm708, 1, 0
        %v805 = vsel %vm709, 1, 0
        %v806 = vsel %vm710, 1, 0
        %v807 = vsel %vm711, 1, 0
        %v808 = vsel %vm712, 1, 0
        %v809 = vsel %vm713, 1, 0
        %v810 = vsel %vm714, 1, 0
        %v811 = vsel %vm715, 1, 0
        %v812 = vsel %vm716, 1, 0
        %v813 = vsel %vm717, 1, 0
        %v814 = vsel %vm718, 1, 0
        %v815 = vsel %vm719, 1, 0
        %v816 = vsel %vm720, 1, 0
        %v817 = vsel %vm721, 1, 0
        %v818 = vsel %vm722, 1, 0
        %v819 = vsel %vm723, 1, 0
        %v820 = vsel %vm724, 1, 0
        %v821 = vsel %vm725, 1, 0
        %v822 = vsel %vm726, 1, 0
        %v823 = vsel %vm727, 1, 0
        %v824 = vsel %vm728, 1, 0
        %v825 = vsel %vm729, 1, 0
        %v826 = vsel %vm730, 1, 0
        %v827 = vsel %vm731, 1, 0
        %v828 = vsel %vm732, 1, 0
        %v829 = vsel %vm733, 1, 0
        %v830 = vsel %vm734, 1, 0
        %v831 = vsel %vm735, 1, 0
        %v832 = vsel %vm736, 1, 0
        %v833 = vsel %vm737, 1, 0
        %v834 = vsel %vm738, 1, 0
        %v835 = vsel %vm739, 1, 0
        %v836 = vsel %vm740, 1, 0
        %v837 = vsel %vm741, 1, 0
        %v838 = vsel %vm742, 1, 0
        %v839 = vsel %vm743, 1, 0
        %v840 = vsel %vm744, 1, 0
        %v841 = vsel %vm745, 1, 0
        %v842 = vsel %vm746, 1, 0
        %v843 = vsel %vm747, 1, 0
        %v844 = vsel %vm748, 1, 0
        %v845 = vsel %vm749, 1, 0
        %v846 = vsel %vm750, 1, 0
        %v847 = vsel %vm751, 1, 0
        %v848 = vsel %vm752, 1, 0
        %v849 = vsel %vm753, 1, 0
        %v850 = vsel %vm754, 1, 0
        %v851 = vsel %vm755, 1, 0
        %v852 = vsel %vm756, 1, 0
        %v853 = vsel %vm757, 1, 0
        %v854 = vsel %vm758, 1, 0
        %v855 = vsel %vm759, 1, 0
        %v856 = vsel %vm760, 1, 0
        %v857 = vcvt.s32.f32 %v761
        %v858 = vcvt.s32.f32 %v762
        %v859 = vcvt.s32.f32 %v763
        %v860 = vcvt.s32.f32 %v764
        %v861 = vcvt.s32.f32 %v765
        %v862 = vcvt.s32.f32 %v766
        %v863 = vcvt.s32.f32 %v767
        %v864 = vcvt.s32.f32 %v768
        %v865 = vcvt.s32.f32 %v769
        %v866 = vcvt.s32.f32 %v770
        %v867 = vcvt.s32.f32 %v771
        %v868 = vcvt.s32.f32 %v772
        %v869 = vcvt.s32.f32 %v773
        %v870 = vcvt.s32.f32 %v774
        %v871 = vcvt.s32.f32 %v775
        %v872 = vcvt.s32.f32 %v776
        %v873 = vcvt.s32.f32 %v777
        %v874 = vcvt.s32.f32 %v778
        %v875 = vcvt.s32.f32 %v779
        %v876 = vcvt.s32.f32 %v780
        %v877 = vcvt.s32.f32 %v781
        %v878 = vcvt.s32.f32 %v782
        %v879 = vcvt.s32.f32 %v783
        %v880 = vcvt.s32.f32 %v784
        %v881 = vcvt.s32.f32 %v785
        %v882 = vcvt.s32.f32 %v786
        %v883 = vcvt.s32.f32 %v787
        %v884 = vcvt.s32.f32 %v788
        %v885 = vcvt.s32.f32 %v789
        %v886 = vcvt.s32.f32 %v790
        %v887 = vcvt.s32.f32 %v791
        %v888 = vcvt.s32.f32 %v792
        %v889 = vcvt.s32.f32 %v793
        %v890 = vcvt.s32.f32 %v794
        %v891 = vcvt.s32.f32 %v795
        %v892 = vcvt.s32.f32 %v796
        %v893 = vcvt.s32.f32 %v797
        %v894 = vcvt.s32.f32 %v798
        %v895 = vcvt.s32.f32 %v799
        %v896 = vcvt.s32.f32 %v800
        %v897 = vcvt.s32.f32 %v801
        %v898 = vcvt.s32.f32 %v802
        %v899 = vcvt.s32.f32 %v803
        %v900 = vcvt.s32.f32 %v804
        %v901 = vcvt.s32.f32 %v805
        %v902 = vcvt.s32.f32 %v806
        %v903 = vcvt.s32.f32 %v807
        %v904 = vcvt.s32.f32 %v808
        %v905 = vcvt.s32.f32 %v809
        %v906 = vcvt.s32.f32 %v810
        %v907 = vcvt.s32.f32 %v811
        %v908 = vcvt.s32.f32 %v812
        %v909 = vcvt.s32.f32 %v813
        %v910 = vcvt.s32.f32 %v814
        %v911 = vcvt.s32.f32 %v815
        %v912 = vcvt.s32.f32 %v816
        %v913 = vcvt.s32.f32 %v817
        %v914 = vcvt.s32.f32 %v818
        %v915 = vcvt.s32.f32 %v819
        %v916 = vcvt.s32.f32 %v820
        %v917 = vcvt.s32.f32 %v821
        %v918 = vcvt.s32.f32 %v822
        %v919 = vcvt.s32.f32 %v823
        %v920 = vcvt.s32.f32 %v824
        %v921 = vcvt.s32.f32 %v825
        %v922 = vcvt.s32.f32 %v826
        %v923 = vcvt.s32.f32 %v827
        %v924 = vcvt.s32.f32 %v828
        %v925 = vcvt.s32.f32 %v829
        %v926 = vcvt.s32.f32 %v830
        %v927 = vcvt.s32.f32 %v831
        %v928 = vcvt.s32.f32 %v832
        %v929 = vcvt.s32.f32 %v833
        %v930 = vcvt.s32.f32 %v834
        %v931 = vcvt.s32.f32 %v835
        %v932 = vcvt.s32.f32 %v836
        %v933 = vcvt.s32.f32 %v837
        %v934 = vcvt.s32.f32 %v838
        %v935 = vcvt.s32.f32 %v839
        %v936 = vcvt.s32.f32 %v840
        %v937 = vcvt.s32.f32 %v841
        %v938 = vcvt.s32.f32 %v842
        %v939 = vcvt.s32.f32 %v843
        %v940 = vcvt.s32.f32 %v844
        %v941 = vcvt.s32.f32 %v845
        %v942 = vcvt.s32.f32 %v846
        %v943 = vcvt.s32.f32 %v847
        %v944 = vcvt.s32.f32 %v848
        %v945 = vcvt.s32.f32 %v849
        %v946 = vcvt.s32.f32 %v850
        %v947 = vcvt.s32.f32 %v851
        %v948 = vcvt.s32.f32 %v852
        %v949 = vcvt.s32.f32 %v853
        %v950 = vcvt.s32.f32 %v854
        %v951 = vcvt.s32.f32 %v855
        %v952 = vcvt.s32.f32 %v856
        %v953 = vld [vmem:[#allocation2] sm:$0xff]
        %v954 = vld [vmem:[#allocation2 + $0x8] sm:$0xff]
        %v955 = vld [vmem:[#allocation2 + $0x10] sm:$0xff]
        %v956 = vld [vmem:[#allocation2 + $0x18] sm:$0xff]
        %v957 = vld [vmem:[#allocation2 + $0x20] sm:$0xff]
        %v958 = vld [vmem:[#allocation2 + $0x28] sm:$0xff]
        %v959 = vld [vmem:[#allocation2 + $0x30] sm:$0xff]
        %v960 = vld [vmem:[#allocation2 + $0x38] sm:$0xff]
        %v961 = vld [vmem:[#allocation2 + $0x40] sm:$0xff]
        %v962 = vld [vmem:[#allocation2 + $0x48] sm:$0xff]
        %v963 = vld [vmem:[#allocation2 + $0x50] sm:$0xff]
        %v964 = vld [vmem:[#allocation2 + $0x58] sm:$0xff]
        %v965 = vld [vmem:[#allocation2 + $0x60] sm:$0xff]
        %v966 = vld [vmem:[#allocation2 + $0x68] sm:$0xff]
        %v967 = vld [vmem:[#allocation2 + $0x70] sm:$0xff]
        %v968 = vld [vmem:[#allocation2 + $0x78] sm:$0xff]
        %v969 = vld [vmem:[#allocation2 + $0x80] sm:$0xff]
        %v970 = vld [vmem:[#allocation2 + $0x88] sm:$0xff]
        %v971 = vld [vmem:[#allocation2 + $0x90] sm:$0xff]
        %v972 = vld [vmem:[#allocation2 + $0x98] sm:$0xff]
        %v973 = vld [vmem:[#allocation2 + $0xa0] sm:$0xff]
        %v974 = vld [vmem:[#allocation2 + $0xa8] sm:$0xff]
        %v975 = vld [vmem:[#allocation2 + $0xb0] sm:$0xff]
        %v976 = vld [vmem:[#allocation2 + $0xb8] sm:$0xff]
        %v977 = vld [vmem:[#allocation2 + $0xc0] sm:$0xff]
        %v978 = vld [vmem:[#allocation2 + $0xc8] sm:$0xff]
        %v979 = vld [vmem:[#allocation2 + $0xd0] sm:$0xff]
        %v980 = vld [vmem:[#allocation2 + $0xd8] sm:$0xff]
        %v981 = vld [vmem:[#allocation2 + $0xe0] sm:$0xff]
        %v982 = vld [vmem:[#allocation2 + $0xe8] sm:$0xff]
        %v983 = vld [vmem:[#allocation2 + $0xf0] sm:$0xff]
        %v984 = vld [vmem:[#allocation2 + $0xf8] sm:$0xff]
        %985 = vmatpush.msra.mxu0 %v533
        %986 = vmatpush.msra.mxu0 %v532
        %987 = vmatpush.msra.mxu0 %v531
        %988 = vmatpush.msra.mxu0 %v530
        %989 = vmatpush.msra.mxu0 %v529
        %990 = vmatpush.msra.mxu0 %v528
        %991 = vmatpush.msra.mxu0 %v527
        %992 = vmatpush.msra.mxu0 %v526
        %993 = vmatpush.msra.mxu0 %v525
        %994 = vmatpush.msra.mxu0 %v524
        %995 = vmatpush.msra.mxu0 %v523
        %996 = vmatpush.msra.mxu0 %v522
        %997 = vmatpush.msra.mxu0 %v521
        %998 = vmatpush.msra.mxu0 %v520
        %999 = vmatpush.msra.mxu0 %v519
        %1000 = vmatpush.msra.mxu0 %v518
        %1001 = vmatmul.f32.gmra.mxu0 %v857
        %v1002 = vpop.f32.mrf.mxu0
        %v1003 = vadd.f32 0.0, %v1002
        %1004 = vmatmul.f32.gmra.mxu0 %v860
        %v1005 = vpop.f32.mrf.mxu0
        %v1006 = vadd.f32 0.0, %v1005
        %1007 = vmatmul.f32.gmra.mxu0 %v863
        %v1008 = vpop.f32.mrf.mxu0
        %v1009 = vadd.f32 0.0, %v1008
        %1010 = vmatmul.f32.gmra.mxu0 %v866
        %v1011 = vpop.f32.mrf.mxu0
        %v1012 = vadd.f32 0.0, %v1011
        %1013 = vmatmul.f32.gmra.mxu0 %v869
        %v1014 = vpop.f32.mrf.mxu0
        %v1015 = vadd.f32 0.0, %v1014
        %1016 = vmatmul.f32.gmra.mxu0 %v872
        %v1017 = vpop.f32.mrf.mxu0
        %v1018 = vadd.f32 0.0, %v1017
        %1019 = vmatmul.f32.gmra.mxu0 %v875
        %v1020 = vpop.f32.mrf.mxu0
        %v1021 = vadd.f32 0.0, %v1020
        %1022 = vmatmul.f32.gmra.mxu0 %v878
        %v1023 = vpop.f32.mrf.mxu0
        %v1024 = vadd.f32 0.0, %v1023
        %1025 = vmatmul.f32.gmra.mxu0 %v881
        %v1026 = vpop.f32.mrf.mxu0
        %v1027 = vadd.f32 0.0, %v1026
        %1028 = vmatmul.f32.gmra.mxu0 %v884
        %v1029 = vpop.f32.mrf.mxu0
        %v1030 = vadd.f32 0.0, %v1029
        %1031 = vmatmul.f32.gmra.mxu0 %v887
        %v1032 = vpop.f32.mrf.mxu0
        %v1033 = vadd.f32 0.0, %v1032
        %1034 = vmatmul.f32.gmra.mxu0 %v890
        %v1035 = vpop.f32.mrf.mxu0
        %v1036 = vadd.f32 0.0, %v1035
        %1037 = vmatmul.f32.gmra.mxu0 %v893
        %v1038 = vpop.f32.mrf.mxu0
        %v1039 = vadd.f32 0.0, %v1038
        %1040 = vmatmul.f32.gmra.mxu0 %v896
        %v1041 = vpop.f32.mrf.mxu0
        %v1042 = vadd.f32 0.0, %v1041
        %1043 = vmatmul.f32.gmra.mxu0 %v899
        %v1044 = vpop.f32.mrf.mxu0
        %v1045 = vadd.f32 0.0, %v1044
        %1046 = vmatmul.f32.gmra.mxu0 %v902
        %v1047 = vpop.f32.mrf.mxu0
        %v1048 = vadd.f32 0.0, %v1047
        %1049 = vmatmul.f32.gmra.mxu0 %v905
        %v1050 = vpop.f32.mrf.mxu0
        %v1051 = vadd.f32 0.0, %v1050
        %1052 = vmatmul.f32.gmra.mxu0 %v908
        %v1053 = vpop.f32.mrf.mxu0
        %v1054 = vadd.f32 0.0, %v1053
        %1055 = vmatmul.f32.gmra.mxu0 %v911
        %v1056 = vpop.f32.mrf.mxu0
        %v1057 = vadd.f32 0.0, %v1056
        %1058 = vmatmul.f32.gmra.mxu0 %v914
        %v1059 = vpop.f32.mrf.mxu0
        %v1060 = vadd.f32 0.0, %v1059
        %1061 = vmatmul.f32.gmra.mxu0 %v917
        %v1062 = vpop.f32.mrf.mxu0
        %v1063 = vadd.f32 0.0, %v1062
        %1064 = vmatmul.f32.gmra.mxu0 %v920
        %v1065 = vpop.f32.mrf.mxu0
        %v1066 = vadd.f32 0.0, %v1065
        %1067 = vmatmul.f32.gmra.mxu0 %v923
        %v1068 = vpop.f32.mrf.mxu0
        %v1069 = vadd.f32 0.0, %v1068
        %1070 = vmatmul.f32.gmra.mxu0 %v926
        %v1071 = vpop.f32.mrf.mxu0
        %v1072 = vadd.f32 0.0, %v1071
        %1073 = vmatmul.f32.gmra.mxu0 %v929
        %v1074 = vpop.f32.mrf.mxu0
        %v1075 = vadd.f32 0.0, %v1074
        %1076 = vmatmul.f32.gmra.mxu0 %v932
        %v1077 = vpop.f32.mrf.mxu0
        %v1078 = vadd.f32 0.0, %v1077
        %1079 = vmatmul.f32.gmra.mxu0 %v935
        %v1080 = vpop.f32.mrf.mxu0
        %v1081 = vadd.f32 0.0, %v1080
        %1082 = vmatmul.f32.gmra.mxu0 %v938
        %v1083 = vpop.f32.mrf.mxu0
        %v1084 = vadd.f32 0.0, %v1083
        %1085 = vmatmul.f32.gmra.mxu0 %v941
        %v1086 = vpop.f32.mrf.mxu0
        %v1087 = vadd.f32 0.0, %v1086
        %1088 = vmatmul.f32.gmra.mxu0 %v944
        %v1089 = vpop.f32.mrf.mxu0
        %v1090 = vadd.f32 0.0, %v1089
        %1091 = vmatmul.f32.gmra.mxu0 %v947
        %v1092 = vpop.f32.mrf.mxu0
        %v1093 = vadd.f32 0.0, %v1092
        %1094 = vmatmul.f32.gmra.mxu0 %v950
        %v1095 = vpop.f32.mrf.mxu0
        %v1096 = vadd.f32 0.0, %v1095
        %1097 = vdwg.mxu0
        %1098 = vmatpush.msra.mxu0 %v549
        %1099 = vmatpush.msra.mxu0 %v548
        %1100 = vmatpush.msra.mxu0 %v547
        %1101 = vmatpush.msra.mxu0 %v546
        %1102 = vmatpush.msra.mxu0 %v545
        %1103 = vmatpush.msra.mxu0 %v544
        %1104 = vmatpush.msra.mxu0 %v543
        %1105 = vmatpush.msra.mxu0 %v542
        %1106 = vmatpush.msra.mxu0 %v541
        %1107 = vmatpush.msra.mxu0 %v540
        %1108 = vmatpush.msra.mxu0 %v539
        %1109 = vmatpush.msra.mxu0 %v538
        %1110 = vmatpush.msra.mxu0 %v537
        %1111 = vmatpush.msra.mxu0 %v536
        %1112 = vmatpush.msra.mxu0 %v535
        %1113 = vmatpush.msra.mxu0 %v534
        %1114 = vmatmul.f32.gmra.mxu0 %v858
        %v1115 = vpop.f32.mrf.mxu0
        %v1116 = vadd.f32 %v1003, %v1115
        %1117 = vmatmul.f32.gmra.mxu0 %v861
        %v1118 = vpop.f32.mrf.mxu0
        %v1119 = vadd.f32 %v1006, %v1118
        %1120 = vmatmul.f32.gmra.mxu0 %v864
        %v1121 = vpop.f32.mrf.mxu0
        %v1122 = vadd.f32 %v1009, %v1121
        %1123 = vmatmul.f32.gmra.mxu0 %v867
        %v1124 = vpop.f32.mrf.mxu0
        %v1125 = vadd.f32 %v1012, %v1124
        %1126 = vmatmul.f32.gmra.mxu0 %v870
        %v1127 = vpop.f32.mrf.mxu0
        %v1128 = vadd.f32 %v1015, %v1127
        %1129 = vmatmul.f32.gmra.mxu0 %v873
        %v1130 = vpop.f32.mrf.mxu0
        %v1131 = vadd.f32 %v1018, %v1130
        %1132 = vmatmul.f32.gmra.mxu0 %v876
        %v1133 = vpop.f32.mrf.mxu0
        %v1134 = vadd.f32 %v1021, %v1133
        %1135 = vmatmul.f32.gmra.mxu0 %v879
        %v1136 = vpop.f32.mrf.mxu0
        %v1137 = vadd.f32 %v1024, %v1136
        %1138 = vmatmul.f32.gmra.mxu0 %v882
        %v1139 = vpop.f32.mrf.mxu0
        %v1140 = vadd.f32 %v1027, %v1139
        %1141 = vmatmul.f32.gmra.mxu0 %v885
        %v1142 = vpop.f32.mrf.mxu0
        %v1143 = vadd.f32 %v1030, %v1142
        %1144 = vmatmul.f32.gmra.mxu0 %v888
        %v1145 = vpop.f32.mrf.mxu0
        %v1146 = vadd.f32 %v1033, %v1145
        %1147 = vmatmul.f32.gmra.mxu0 %v891
        %v1148 = vpop.f32.mrf.mxu0
        %v1149 = vadd.f32 %v1036, %v1148
        %1150 = vmatmul.f32.gmra.mxu0 %v894
        %v1151 = vpop.f32.mrf.mxu0
        %v1152 = vadd.f32 %v1039, %v1151
        %1153 = vmatmul.f32.gmra.mxu0 %v897
        %v1154 = vpop.f32.mrf.mxu0
        %v1155 = vadd.f32 %v1042, %v1154
        %1156 = vmatmul.f32.gmra.mxu0 %v900
        %v1157 = vpop.f32.mrf.mxu0
        %v1158 = vadd.f32 %v1045, %v1157
        %1159 = vmatmul.f32.gmra.mxu0 %v903
        %v1160 = vpop.f32.mrf.mxu0
        %v1161 = vadd.f32 %v1048, %v1160
        %1162 = vmatmul.f32.gmra.mxu0 %v906
        %v1163 = vpop.f32.mrf.mxu0
        %v1164 = vadd.f32 %v1051, %v1163
        %1165 = vmatmul.f32.gmra.mxu0 %v909
        %v1166 = vpop.f32.mrf.mxu0
        %v1167 = vadd.f32 %v1054, %v1166
        %1168 = vmatmul.f32.gmra.mxu0 %v912
        %v1169 = vpop.f32.mrf.mxu0
        %v1170 = vadd.f32 %v1057, %v1169
        %1171 = vmatmul.f32.gmra.mxu0 %v915
        %v1172 = vpop.f32.mrf.mxu0
        %v1173 = vadd.f32 %v1060, %v1172
        %1174 = vmatmul.f32.gmra.mxu0 %v918
        %v1175 = vpop.f32.mrf.mxu0
        %v1176 = vadd.f32 %v1063, %v1175
        %1177 = vmatmul.f32.gmra.mxu0 %v921
        %v1178 = vpop.f32.mrf.mxu0
        %v1179 = vadd.f32 %v1066, %v1178
        %1180 = vmatmul.f32.gmra.mxu0 %v924
        %v1181 = vpop.f32.mrf.mxu0
        %v1182 = vadd.f32 %v1069, %v1181
        %1183 = vmatmul.f32.gmra.mxu0 %v927
        %v1184 = vpop.f32.mrf.mxu0
        %v1185 = vadd.f32 %v1072, %v1184
        %1186 = vmatmul.f32.gmra.mxu0 %v930
        %v1187 = vpop.f32.mrf.mxu0
        %v1188 = vadd.f32 %v1075, %v1187
        %1189 = vmatmul.f32.gmra.mxu0 %v933
        %v1190 = vpop.f32.mrf.mxu0
        %v1191 = vadd.f32 %v1078, %v1190
        %1192 = vmatmul.f32.gmra.mxu0 %v936
        %v1193 = vpop.f32.mrf.mxu0
        %v1194 = vadd.f32 %v1081, %v1193
        %1195 = vmatmul.f32.gmra.mxu0 %v939
        %v1196 = vpop.f32.mrf.mxu0
        %v1197 = vadd.f32 %v1084, %v1196
        %1198 = vmatmul.f32.gmra.mxu0 %v942
        %v1199 = vpop.f32.mrf.mxu0
        %v1200 = vadd.f32 %v1087, %v1199
        %1201 = vmatmul.f32.gmra.mxu0 %v945
        %v1202 = vpop.f32.mrf.mxu0
        %v1203 = vadd.f32 %v1090, %v1202
        %1204 = vmatmul.f32.gmra.mxu0 %v948
        %v1205 = vpop.f32.mrf.mxu0
        %v1206 = vadd.f32 %v1093, %v1205
        %1207 = vmatmul.f32.gmra.mxu0 %v951
        %v1208 = vpop.f32.mrf.mxu0
        %v1209 = vadd.f32 %v1096, %v1208
        %1210 = vdwg.mxu0
        %1211 = vmatpush.msra.mxu0 %v565
        %1212 = vmatpush.msra.mxu0 %v564
        %1213 = vmatpush.msra.mxu0 %v563
        %1214 = vmatpush.msra.mxu0 %v562
        %1215 = vmatpush.msra.mxu0 %v561
        %1216 = vmatpush.msra.mxu0 %v560
        %1217 = vmatpush.msra.mxu0 %v559
        %1218 = vmatpush.msra.mxu0 %v558
        %1219 = vmatpush.msra.mxu0 %v557
        %1220 = vmatpush.msra.mxu0 %v556
        %1221 = vmatpush.msra.mxu0 %v555
        %1222 = vmatpush.msra.mxu0 %v554
        %1223 = vmatpush.msra.mxu0 %v553
        %1224 = vmatpush.msra.mxu0 %v552
        %1225 = vmatpush.msra.mxu0 %v551
        %1226 = vmatpush.msra.mxu0 %v550
        %1227 = vmatmul.f32.gmra.mxu0 %v859
        %v1228 = vpop.f32.mrf.mxu0
        %v1229 = vadd.f32 %v1116, %v1228
        %1230 = vmatmul.f32.gmra.mxu0 %v862
        %v1231 = vpop.f32.mrf.mxu0
        %v1232 = vadd.f32 %v1119, %v1231
        %1233 = vmatmul.f32.gmra.mxu0 %v865
        %v1234 = vpop.f32.mrf.mxu0
        %v1235 = vadd.f32 %v1122, %v1234
        %1236 = vmatmul.f32.gmra.mxu0 %v868
        %v1237 = vpop.f32.mrf.mxu0
        %v1238 = vadd.f32 %v1125, %v1237
        %1239 = vmatmul.f32.gmra.mxu0 %v871
        %v1240 = vpop.f32.mrf.mxu0
        %v1241 = vadd.f32 %v1128, %v1240
        %1242 = vmatmul.f32.gmra.mxu0 %v874
        %v1243 = vpop.f32.mrf.mxu0
        %v1244 = vadd.f32 %v1131, %v1243
        %1245 = vmatmul.f32.gmra.mxu0 %v877
        %v1246 = vpop.f32.mrf.mxu0
        %v1247 = vadd.f32 %v1134, %v1246
        %1248 = vmatmul.f32.gmra.mxu0 %v880
        %v1249 = vpop.f32.mrf.mxu0
        %v1250 = vadd.f32 %v1137, %v1249
        %1251 = vmatmul.f32.gmra.mxu0 %v883
        %v1252 = vpop.f32.mrf.mxu0
        %v1253 = vadd.f32 %v1140, %v1252
        %1254 = vmatmul.f32.gmra.mxu0 %v886
        %v1255 = vpop.f32.mrf.mxu0
        %v1256 = vadd.f32 %v1143, %v1255
        %1257 = vmatmul.f32.gmra.mxu0 %v889
        %v1258 = vpop.f32.mrf.mxu0
        %v1259 = vadd.f32 %v1146, %v1258
        %1260 = vmatmul.f32.gmra.mxu0 %v892
        %v1261 = vpop.f32.mrf.mxu0
        %v1262 = vadd.f32 %v1149, %v1261
        %1263 = vmatmul.f32.gmra.mxu0 %v895
        %v1264 = vpop.f32.mrf.mxu0
        %v1265 = vadd.f32 %v1152, %v1264
        %1266 = vmatmul.f32.gmra.mxu0 %v898
        %v1267 = vpop.f32.mrf.mxu0
        %v1268 = vadd.f32 %v1155, %v1267
        %1269 = vmatmul.f32.gmra.mxu0 %v901
        %v1270 = vpop.f32.mrf.mxu0
        %v1271 = vadd.f32 %v1158, %v1270
        %1272 = vmatmul.f32.gmra.mxu0 %v904
        %v1273 = vpop.f32.mrf.mxu0
        %v1274 = vadd.f32 %v1161, %v1273
        %1275 = vmatmul.f32.gmra.mxu0 %v907
        %v1276 = vpop.f32.mrf.mxu0
        %v1277 = vadd.f32 %v1164, %v1276
        %1278 = vmatmul.f32.gmra.mxu0 %v910
        %v1279 = vpop.f32.mrf.mxu0
        %v1280 = vadd.f32 %v1167, %v1279
        %1281 = vmatmul.f32.gmra.mxu0 %v913
        %v1282 = vpop.f32.mrf.mxu0
        %v1283 = vadd.f32 %v1170, %v1282
        %1284 = vmatmul.f32.gmra.mxu0 %v916
        %v1285 = vpop.f32.mrf.mxu0
        %v1286 = vadd.f32 %v1173, %v1285
        %1287 = vmatmul.f32.gmra.mxu0 %v919
        %v1288 = vpop.f32.mrf.mxu0
        %v1289 = vadd.f32 %v1176, %v1288
        %1290 = vmatmul.f32.gmra.mxu0 %v922
        %v1291 = vpop.f32.mrf.mxu0
        %v1292 = vadd.f32 %v1179, %v1291
        %1293 = vmatmul.f32.gmra.mxu0 %v925
        %v1294 = vpop.f32.mrf.mxu0
        %v1295 = vadd.f32 %v1182, %v1294
        %1296 = vmatmul.f32.gmra.mxu0 %v928
        %v1297 = vpop.f32.mrf.mxu0
        %v1298 = vadd.f32 %v1185, %v1297
        %1299 = vmatmul.f32.gmra.mxu0 %v931
        %v1300 = vpop.f32.mrf.mxu0
        %v1301 = vadd.f32 %v1188, %v1300
        %1302 = vmatmul.f32.gmra.mxu0 %v934
        %v1303 = vpop.f32.mrf.mxu0
        %v1304 = vadd.f32 %v1191, %v1303
        %1305 = vmatmul.f32.gmra.mxu0 %v937
        %v1306 = vpop.f32.mrf.mxu0
        %v1307 = vadd.f32 %v1194, %v1306
        %1308 = vmatmul.f32.gmra.mxu0 %v940
        %v1309 = vpop.f32.mrf.mxu0
        %v1310 = vadd.f32 %v1197, %v1309
        %1311 = vmatmul.f32.gmra.mxu0 %v943
        %v1312 = vpop.f32.mrf.mxu0
        %v1313 = vadd.f32 %v1200, %v1312
        %1314 = vmatmul.f32.gmra.mxu0 %v946
        %v1315 = vpop.f32.mrf.mxu0
        %v1316 = vadd.f32 %v1203, %v1315
        %1317 = vmatmul.f32.gmra.mxu0 %v949
        %v1318 = vpop.f32.mrf.mxu0
        %v1319 = vadd.f32 %v1206, %v1318
        %1320 = vmatmul.f32.gmra.mxu0 %v952
        %v1321 = vpop.f32.mrf.mxu0
        %v1322 = vadd.f32 %v1209, %v1321
        %1323 = vdwg.mxu0
        %v1324 = vadd.f32 %v953, %v1229
        %v1325 = vadd.f32 %v954, %v1232
        %v1326 = vadd.f32 %v955, %v1235
        %v1327 = vadd.f32 %v956, %v1238
        %v1328 = vadd.f32 %v957, %v1241
        %v1329 = vadd.f32 %v958, %v1244
        %v1330 = vadd.f32 %v959, %v1247
        %v1331 = vadd.f32 %v960, %v1250
        %v1332 = vadd.f32 %v961, %v1253
        %v1333 = vadd.f32 %v962, %v1256
        %v1334 = vadd.f32 %v963, %v1259
        %v1335 = vadd.f32 %v964, %v1262
        %v1336 = vadd.f32 %v965, %v1265
        %v1337 = vadd.f32 %v966, %v1268
        %v1338 = vadd.f32 %v967, %v1271
        %v1339 = vadd.f32 %v968, %v1274
        %v1340 = vadd.f32 %v969, %v1277
        %v1341 = vadd.f32 %v970, %v1280
        %v1342 = vadd.f32 %v971, %v1283
        %v1343 = vadd.f32 %v972, %v1286
        %v1344 = vadd.f32 %v973, %v1289
        %v1345 = vadd.f32 %v974, %v1292
        %v1346 = vadd.f32 %v975, %v1295
        %v1347 = vadd.f32 %v976, %v1298
        %v1348 = vadd.f32 %v977, %v1301
        %v1349 = vadd.f32 %v978, %v1304
        %v1350 = vadd.f32 %v979, %v1307
        %v1351 = vadd.f32 %v980, %v1310
        %v1352 = vadd.f32 %v981, %v1313
        %v1353 = vadd.f32 %v982, %v1316
        %v1354 = vadd.f32 %v983, %v1319
        %v1355 = vadd.f32 %v984, %v1322
        %1356 = vst [vmem:[#allocation2] sm:$0xff] %v1324
        %1357 = vst [vmem:[#allocation2 + $0x8] sm:$0xff] %v1325
        %1358 = vst [vmem:[#allocation2 + $0x10] sm:$0xff] %v1326
        %1359 = vst [vmem:[#allocation2 + $0x18] sm:$0xff] %v1327
        %1360 = vst [vmem:[#allocation2 + $0x20] sm:$0xff] %v1328
        %1361 = vst [vmem:[#allocation2 + $0x28] sm:$0xff] %v1329
        %1362 = vst [vmem:[#allocation2 + $0x30] sm:$0xff] %v1330
        %1363 = vst [vmem:[#allocation2 + $0x38] sm:$0xff] %v1331
        %1364 = vst [vmem:[#allocation2 + $0x40] sm:$0xff] %v1332
        %1365 = vst [vmem:[#allocation2 + $0x48] sm:$0xff] %v1333
        %1366 = vst [vmem:[#allocation2 + $0x50] sm:$0xff] %v1334
        %1367 = vst [vmem:[#allocation2 + $0x58] sm:$0xff] %v1335
        %1368 = vst [vmem:[#allocation2 + $0x60] sm:$0xff] %v1336
        %1369 = vst [vmem:[#allocation2 + $0x68] sm:$0xff] %v1337
        %1370 = vst [vmem:[#allocation2 + $0x70] sm:$0xff] %v1338
        %1371 = vst [vmem:[#allocation2 + $0x78] sm:$0xff] %v1339
        %1372 = vst [vmem:[#allocation2 + $0x80] sm:$0xff] %v1340
        %1373 = vst [vmem:[#allocation2 + $0x88] sm:$0xff] %v1341
        %1374 = vst [vmem:[#allocation2 + $0x90] sm:$0xff] %v1342
        %1375 = vst [vmem:[#allocation2 + $0x98] sm:$0xff] %v1343
        %1376 = vst [vmem:[#allocation2 + $0xa0] sm:$0xff] %v1344
        %1377 = vst [vmem:[#allocation2 + $0xa8] sm:$0xff] %v1345
        %1378 = vst [vmem:[#allocation2 + $0xb0] sm:$0xff] %v1346
        %1379 = vst [vmem:[#allocation2 + $0xb8] sm:$0xff] %v1347
        %1380 = vst [vmem:[#allocation2 + $0xc0] sm:$0xff] %v1348
        %1381 = vst [vmem:[#allocation2 + $0xc8] sm:$0xff] %v1349
        %1382 = vst [vmem:[#allocation2 + $0xd0] sm:$0xff] %v1350
        %1383 = vst [vmem:[#allocation2 + $0xd8] sm:$0xff] %v1351
        %1384 = vst [vmem:[#allocation2 + $0xe0] sm:$0xff] %v1352
        %1385 = vst [vmem:[#allocation2 + $0xe8] sm:$0xff] %v1353
        %1386 = vst [vmem:[#allocation2 + $0xf0] sm:$0xff] %v1354
        %1387 = vst [vmem:[#allocation2 + $0xf8] sm:$0xff] %v1355
        %v1388 = vadd.s32 %v485, 1
        %v1389 = vadd.s32 %v486, 1
        %v1390 = vadd.s32 %v487, 1
        %v1391 = vadd.s32 %v488, 1
        %v1392 = vadd.s32 %v489, 1
        %v1393 = vadd.s32 %v490, 1
        %v1394 = vadd.s32 %v491, 1
        %v1395 = vadd.s32 %v492, 1
        %v1396 = vadd.s32 %v493, 1
        %v1397 = vadd.s32 %v494, 1
        %v1398 = vadd.s32 %v495, 1
        %v1399 = vadd.s32 %v496, 1
        %v1400 = vadd.s32 %v497, 1
        %v1401 = vadd.s32 %v498, 1
        %v1402 = vadd.s32 %v499, 1
        %v1403 = vadd.s32 %v500, 1
        %v1404 = vadd.s32 %v501, 1
        %v1405 = vadd.s32 %v502, 1
        %v1406 = vadd.s32 %v503, 1
        %v1407 = vadd.s32 %v504, 1
        %v1408 = vadd.s32 %v505, 1
        %v1409 = vadd.s32 %v506, 1
        %v1410 = vadd.s32 %v507, 1
        %v1411 = vadd.s32 %v508, 1
        %v1412 = vadd.s32 %v509, 1
        %v1413 = vadd.s32 %v510, 1
        %v1414 = vadd.s32 %v511, 1
        %v1415 = vadd.s32 %v512, 1
        %v1416 = vadd.s32 %v513, 1
        %v1417 = vadd.s32 %v514, 1
        %v1418 = vadd.s32 %v515, 1
        %v1419 = vadd.s32 %v516, 1
        %1420 = vset.pattern.permute.xlu0 0
        %1421 = vperm.xlu0 %1420, %v1388
        %v1422 = vpop.permute.xlu0 %1421
        %1423 = vset.pattern.permute.xlu0 0
        %1424 = vperm.xlu0 %1423, %v1389
        %v1425 = vpop.permute.xlu0 %1424
        %1426 = vset.pattern.permute.xlu0 0
        %1427 = vperm.xlu0 %1426, %v1390
        %v1428 = vpop.permute.xlu0 %1427
        %1429 = vset.pattern.permute.xlu0 0
        %1430 = vperm.xlu0 %1429, %v1391
        %v1431 = vpop.permute.xlu0 %1430
        %1432 = vset.pattern.permute.xlu0 0
        %1433 = vperm.xlu0 %1432, %v1392
        %v1434 = vpop.permute.xlu0 %1433
        %1435 = vset.pattern.permute.xlu0 0
        %1436 = vperm.xlu0 %1435, %v1393
        %v1437 = vpop.permute.xlu0 %1436
        %1438 = vset.pattern.permute.xlu0 0
        %1439 = vperm.xlu0 %1438, %v1394
        %v1440 = vpop.permute.xlu0 %1439
        %1441 = vset.pattern.permute.xlu0 0
        %1442 = vperm.xlu0 %1441, %v1395
        %v1443 = vpop.permute.xlu0 %1442
        %1444 = vset.pattern.permute.xlu0 0
        %1445 = vperm.xlu0 %1444, %v1396
        %v1446 = vpop.permute.xlu0 %1445
        %1447 = vset.pattern.permute.xlu0 0
        %1448 = vperm.xlu0 %1447, %v1397
        %v1449 = vpop.permute.xlu0 %1448
        %1450 = vset.pattern.permute.xlu0 0
        %1451 = vperm.xlu0 %1450, %v1398
        %v1452 = vpop.permute.xlu0 %1451
        %1453 = vset.pattern.permute.xlu0 0
        %1454 = vperm.xlu0 %1453, %v1399
        %v1455 = vpop.permute.xlu0 %1454
        %1456 = vset.pattern.permute.xlu0 0
        %1457 = vperm.xlu0 %1456, %v1400
        %v1458 = vpop.permute.xlu0 %1457
        %1459 = vset.pattern.permute.xlu0 0
        %1460 = vperm.xlu0 %1459, %v1401
        %v1461 = vpop.permute.xlu0 %1460
        %1462 = vset.pattern.permute.xlu0 0
        %1463 = vperm.xlu0 %1462, %v1402
        %v1464 = vpop.permute.xlu0 %1463
        %1465 = vset.pattern.permute.xlu0 0
        %1466 = vperm.xlu0 %1465, %v1403
        %v1467 = vpop.permute.xlu0 %1466
        %1468 = vset.pattern.permute.xlu0 0
        %1469 = vperm.xlu0 %1468, %v1404
        %v1470 = vpop.permute.xlu0 %1469
        %1471 = vset.pattern.permute.xlu0 0
        %1472 = vperm.xlu0 %1471, %v1405
        %v1473 = vpop.permute.xlu0 %1472
        %1474 = vset.pattern.permute.xlu0 0
        %1475 = vperm.xlu0 %1474, %v1406
        %v1476 = vpop.permute.xlu0 %1475
        %1477 = vset.pattern.permute.xlu0 0
        %1478 = vperm.xlu0 %1477, %v1407
        %v1479 = vpop.permute.xlu0 %1478
        %1480 = vset.pattern.permute.xlu0 0
        %1481 = vperm.xlu0 %1480, %v1408
        %v1482 = vpop.permute.xlu0 %1481
        %1483 = vset.pattern.permute.xlu0 0
        %1484 = vperm.xlu0 %1483, %v1409
        %v1485 = vpop.permute.xlu0 %1484
        %1486 = vset.pattern.permute.xlu0 0
        %1487 = vperm.xlu0 %1486, %v1410
        %v1488 = vpop.permute.xlu0 %1487
        %1489 = vset.pattern.permute.xlu0 0
        %1490 = vperm.xlu0 %1489, %v1411
        %v1491 = vpop.permute.xlu0 %1490
        %1492 = vset.pattern.permute.xlu0 0
        %1493 = vperm.xlu0 %1492, %v1412
        %v1494 = vpop.permute.xlu0 %1493
        %1495 = vset.pattern.permute.xlu0 0
        %1496 = vperm.xlu0 %1495, %v1413
        %v1497 = vpop.permute.xlu0 %1496
        %1498 = vset.pattern.permute.xlu0 0
        %1499 = vperm.xlu0 %1498, %v1414
        %v1500 = vpop.permute.xlu0 %1499
        %1501 = vset.pattern.permute.xlu0 0
        %1502 = vperm.xlu0 %1501, %v1415
        %v1503 = vpop.permute.xlu0 %1502
        %1504 = vset.pattern.permute.xlu0 0
        %1505 = vperm.xlu0 %1504, %v1416
        %v1506 = vpop.permute.xlu0 %1505
        %1507 = vset.pattern.permute.xlu0 0
        %1508 = vperm.xlu0 %1507, %v1417
        %v1509 = vpop.permute.xlu0 %1508
        %1510 = vset.pattern.permute.xlu0 0
        %1511 = vperm.xlu0 %1510, %v1418
        %v1512 = vpop.permute.xlu0 %1511
        %1513 = vset.pattern.permute.xlu0 0
        %1514 = vperm.xlu0 %1513, %v1419
        %v1515 = vpop.permute.xlu0 %1514
        %vm1516 = vcmp.eq.s32.totalorder %v1422, %v662
        %vm1517 = vcmp.eq.s32.totalorder %v1422, %v663
        %vm1518 = vcmp.eq.s32.totalorder %v1422, %v664
        %vm1519 = vcmp.eq.s32.totalorder %v1425, %v662
        %vm1520 = vcmp.eq.s32.totalorder %v1425, %v663
        %vm1521 = vcmp.eq.s32.totalorder %v1425, %v664
        %vm1522 = vcmp.eq.s32.totalorder %v1428, %v662
        %vm1523 = vcmp.eq.s32.totalorder %v1428, %v663
        %vm1524 = vcmp.eq.s32.totalorder %v1428, %v664
        %vm1525 = vcmp.eq.s32.totalorder %v1431, %v662
        %vm1526 = vcmp.eq.s32.totalorder %v1431, %v663
        %vm1527 = vcmp.eq.s32.totalorder %v1431, %v664
        %vm1528 = vcmp.eq.s32.totalorder %v1434, %v662
        %vm1529 = vcmp.eq.s32.totalorder %v1434, %v663
        %vm1530 = vcmp.eq.s32.totalorder %v1434, %v664
        %vm1531 = vcmp.eq.s32.totalorder %v1437, %v662
        %vm1532 = vcmp.eq.s32.totalorder %v1437, %v663
        %vm1533 = vcmp.eq.s32.totalorder %v1437, %v664
        %vm1534 = vcmp.eq.s32.totalorder %v1440, %v662
        %vm1535 = vcmp.eq.s32.totalorder %v1440, %v663
        %vm1536 = vcmp.eq.s32.totalorder %v1440, %v664
        %vm1537 = vcmp.eq.s32.totalorder %v1443, %v662
        %vm1538 = vcmp.eq.s32.totalorder %v1443, %v663
        %vm1539 = vcmp.eq.s32.totalorder %v1443, %v664
        %vm1540 = vcmp.eq.s32.totalorder %v1446, %v662
        %vm1541 = vcmp.eq.s32.totalorder %v1446, %v663
        %vm1542 = vcmp.eq.s32.totalorder %v1446, %v664
        %vm1543 = vcmp.eq.s32.totalorder %v1449, %v662
        %vm1544 = vcmp.eq.s32.totalorder %v1449, %v663
        %vm1545 = vcmp.eq.s32.totalorder %v1449, %v664
        %vm1546 = vcmp.eq.s32.totalorder %v1452, %v662
        %vm1547 = vcmp.eq.s32.totalorder %v1452, %v663
        %vm1548 = vcmp.eq.s32.totalorder %v1452, %v664
        %vm1549 = vcmp.eq.s32.totalorder %v1455, %v662
        %vm1550 = vcmp.eq.s32.totalorder %v1455, %v663
        %vm1551 = vcmp.eq.s32.totalorder %v1455, %v664
        %vm1552 = vcmp.eq.s32.totalorder %v1458, %v662
        %vm1553 = vcmp.eq.s32.totalorder %v1458, %v663
        %vm1554 = vcmp.eq.s32.totalorder %v1458, %v664
        %vm1555 = vcmp.eq.s32.totalorder %v1461, %v662
        %vm1556 = vcmp.eq.s32.totalorder %v1461, %v663
        %vm1557 = vcmp.eq.s32.totalorder %v1461, %v664
        %vm1558 = vcmp.eq.s32.totalorder %v1464, %v662
        %vm1559 = vcmp.eq.s32.totalorder %v1464, %v663
        %vm1560 = vcmp.eq.s32.totalorder %v1464, %v664
        %vm1561 = vcmp.eq.s32.totalorder %v1467, %v662
        %vm1562 = vcmp.eq.s32.totalorder %v1467, %v663
        %vm1563 = vcmp.eq.s32.totalorder %v1467, %v664
        %vm1564 = vcmp.eq.s32.totalorder %v1470, %v662
        %vm1565 = vcmp.eq.s32.totalorder %v1470, %v663
        %vm1566 = vcmp.eq.s32.totalorder %v1470, %v664
        %vm1567 = vcmp.eq.s32.totalorder %v1473, %v662
        %vm1568 = vcmp.eq.s32.totalorder %v1473, %v663
        %vm1569 = vcmp.eq.s32.totalorder %v1473, %v664
        %vm1570 = vcmp.eq.s32.totalorder %v1476, %v662
        %vm1571 = vcmp.eq.s32.totalorder %v1476, %v663
        %vm1572 = vcmp.eq.s32.totalorder %v1476, %v664
        %vm1573 = vcmp.eq.s32.totalorder %v1479, %v662
        %vm1574 = vcmp.eq.s32.totalorder %v1479, %v663
        %vm1575 = vcmp.eq.s32.totalorder %v1479, %v664
        %vm1576 = vcmp.eq.s32.totalorder %v1482, %v662
        %vm1577 = vcmp.eq.s32.totalorder %v1482, %v663
        %vm1578 = vcmp.eq.s32.totalorder %v1482, %v664
        %vm1579 = vcmp.eq.s32.totalorder %v1485, %v662
        %vm1580 = vcmp.eq.s32.totalorder %v1485, %v663
        %vm1581 = vcmp.eq.s32.totalorder %v1485, %v664
        %vm1582 = vcmp.eq.s32.totalorder %v1488, %v662
        %vm1583 = vcmp.eq.s32.totalorder %v1488, %v663
        %vm1584 = vcmp.eq.s32.totalorder %v1488, %v664
        %vm1585 = vcmp.eq.s32.totalorder %v1491, %v662
        %vm1586 = vcmp.eq.s32.totalorder %v1491, %v663
        %vm1587 = vcmp.eq.s32.totalorder %v1491, %v664
        %vm1588 = vcmp.eq.s32.totalorder %v1494, %v662
        %vm1589 = vcmp.eq.s32.totalorder %v1494, %v663
        %vm1590 = vcmp.eq.s32.totalorder %v1494, %v664
        %vm1591 = vcmp.eq.s32.totalorder %v1497, %v662
        %vm1592 = vcmp.eq.s32.totalorder %v1497, %v663
        %vm1593 = vcmp.eq.s32.totalorder %v1497, %v664
        %vm1594 = vcmp.eq.s32.totalorder %v1500, %v662
        %vm1595 = vcmp.eq.s32.totalorder %v1500, %v663
        %vm1596 = vcmp.eq.s32.totalorder %v1500, %v664
        %vm1597 = vcmp.eq.s32.totalorder %v1503, %v662
        %vm1598 = vcmp.eq.s32.totalorder %v1503, %v663
        %vm1599 = vcmp.eq.s32.totalorder %v1503, %v664
        %vm1600 = vcmp.eq.s32.totalorder %v1506, %v662
        %vm1601 = vcmp.eq.s32.totalorder %v1506, %v663
        %vm1602 = vcmp.eq.s32.totalorder %v1506, %v664
        %vm1603 = vcmp.eq.s32.totalorder %v1509, %v662
        %vm1604 = vcmp.eq.s32.totalorder %v1509, %v663
        %vm1605 = vcmp.eq.s32.totalorder %v1509, %v664
        %vm1606 = vcmp.eq.s32.totalorder %v1512, %v662
        %vm1607 = vcmp.eq.s32.totalorder %v1512, %v663
        %vm1608 = vcmp.eq.s32.totalorder %v1512, %v664
        %vm1609 = vcmp.eq.s32.totalorder %v1515, %v662
        %vm1610 = vcmp.eq.s32.totalorder %v1515, %v663
        %vm1611 = vcmp.eq.s32.totalorder %v1515, %v664
        %v1612 = vsel %vm1516, 1, 0
        %v1613 = vsel %vm1517, 1, 0
        %v1614 = vsel %vm1518, 1, 0
        %v1615 = vsel %vm1519, 1, 0
        %v1616 = vsel %vm1520, 1, 0
        %v1617 = vsel %vm1521, 1, 0
        %v1618 = vsel %vm1522, 1, 0
        %v1619 = vsel %vm1523, 1, 0
        %v1620 = vsel %vm1524, 1, 0
        %v1621 = vsel %vm1525, 1, 0
        %v1622 = vsel %vm1526, 1, 0
        %v1623 = vsel %vm1527, 1, 0
        %v1624 = vsel %vm1528, 1, 0
        %v1625 = vsel %vm1529, 1, 0
        %v1626 = vsel %vm1530, 1, 0
        %v1627 = vsel %vm1531, 1, 0
        %v1628 = vsel %vm1532, 1, 0
        %v1629 = vsel %vm1533, 1, 0
        %v1630 = vsel %vm1534, 1, 0
        %v1631 = vsel %vm1535, 1, 0
        %v1632 = vsel %vm1536, 1, 0
        %v1633 = vsel %vm1537, 1, 0
        %v1634 = vsel %vm1538, 1, 0
        %v1635 = vsel %vm1539, 1, 0
        %v1636 = vsel %vm1540, 1, 0
        %v1637 = vsel %vm1541, 1, 0
        %v1638 = vsel %vm1542, 1, 0
        %v1639 = vsel %vm1543, 1, 0
        %v1640 = vsel %vm1544, 1, 0
        %v1641 = vsel %vm1545, 1, 0
        %v1642 = vsel %vm1546, 1, 0
        %v1643 = vsel %vm1547, 1, 0
        %v1644 = vsel %vm1548, 1, 0
        %v1645 = vsel %vm1549, 1, 0
        %v1646 = vsel %vm1550, 1, 0
        %v1647 = vsel %vm1551, 1, 0
        %v1648 = vsel %vm1552, 1, 0
        %v1649 = vsel %vm1553, 1, 0
        %v1650 = vsel %vm1554, 1, 0
        %v1651 = vsel %vm1555, 1, 0
        %v1652 = vsel %vm1556, 1, 0
        %v1653 = vsel %vm1557, 1, 0
        %v1654 = vsel %vm1558, 1, 0
        %v1655 = vsel %vm1559, 1, 0
        %v1656 = vsel %vm1560, 1, 0
        %v1657 = vsel %vm1561, 1, 0
        %v1658 = vsel %vm1562, 1, 0
        %v1659 = vsel %vm1563, 1, 0
        %v1660 = vsel %vm1564, 1, 0
        %v1661 = vsel %vm1565, 1, 0
        %v1662 = vsel %vm1566, 1, 0
        %v1663 = vsel %vm1567, 1, 0
        %v1664 = vsel %vm1568, 1, 0
        %v1665 = vsel %vm1569, 1, 0
        %v1666 = vsel %vm1570, 1, 0
        %v1667 = vsel %vm1571, 1, 0
        %v1668 = vsel %vm1572, 1, 0
        %v1669 = vsel %vm1573, 1, 0
        %v1670 = vsel %vm1574, 1, 0
        %v1671 = vsel %vm1575, 1, 0
        %v1672 = vsel %vm1576, 1, 0
        %v1673 = vsel %vm1577, 1, 0
        %v1674 = vsel %vm1578, 1, 0
        %v1675 = vsel %vm1579, 1, 0
        %v1676 = vsel %vm1580, 1, 0
        %v1677 = vsel %vm1581, 1, 0
        %v1678 = vsel %vm1582, 1, 0
        %v1679 = vsel %vm1583, 1, 0
        %v1680 = vsel %vm1584, 1, 0
        %v1681 = vsel %vm1585, 1, 0
        %v1682 = vsel %vm1586, 1, 0
        %v1683 = vsel %vm1587, 1, 0
        %v1684 = vsel %vm1588, 1, 0
        %v1685 = vsel %vm1589, 1, 0
        %v1686 = vsel %vm1590, 1, 0
        %v1687 = vsel %vm1591, 1, 0
        %v1688 = vsel %vm1592, 1, 0
        %v1689 = vsel %vm1593, 1, 0
        %v1690 = vsel %vm1594, 1, 0
        %v1691 = vsel %vm1595, 1, 0
        %v1692 = vsel %vm1596, 1, 0
        %v1693 = vsel %vm1597, 1, 0
        %v1694 = vsel %vm1598, 1, 0
        %v1695 = vsel %vm1599, 1, 0
        %v1696 = vsel %vm1600, 1, 0
        %v1697 = vsel %vm1601, 1, 0
        %v1698 = vsel %vm1602, 1, 0
        %v1699 = vsel %vm1603, 1, 0
        %v1700 = vsel %vm1604, 1, 0
        %v1701 = vsel %vm1605, 1, 0
        %v1702 = vsel %vm1606, 1, 0
        %v1703 = vsel %vm1607, 1, 0
        %v1704 = vsel %vm1608, 1, 0
        %v1705 = vsel %vm1609, 1, 0
        %v1706 = vsel %vm1610, 1, 0
        %v1707 = vsel %vm1611, 1, 0
        %v1708 = vcvt.s32.f32 %v1612
        %v1709 = vcvt.s32.f32 %v1613
        %v1710 = vcvt.s32.f32 %v1614
        %v1711 = vcvt.s32.f32 %v1615
        %v1712 = vcvt.s32.f32 %v1616
        %v1713 = vcvt.s32.f32 %v1617
        %v1714 = vcvt.s32.f32 %v1618
        %v1715 = vcvt.s32.f32 %v1619
        %v1716 = vcvt.s32.f32 %v1620
        %v1717 = vcvt.s32.f32 %v1621
        %v1718 = vcvt.s32.f32 %v1622
        %v1719 = vcvt.s32.f32 %v1623
        %v1720 = vcvt.s32.f32 %v1624
        %v1721 = vcvt.s32.f32 %v1625
        %v1722 = vcvt.s32.f32 %v1626
        %v1723 = vcvt.s32.f32 %v1627
        %v1724 = vcvt.s32.f32 %v1628
        %v1725 = vcvt.s32.f32 %v1629
        %v1726 = vcvt.s32.f32 %v1630
        %v1727 = vcvt.s32.f32 %v1631
        %v1728 = vcvt.s32.f32 %v1632
        %v1729 = vcvt.s32.f32 %v1633
        %v1730 = vcvt.s32.f32 %v1634
        %v1731 = vcvt.s32.f32 %v1635
        %v1732 = vcvt.s32.f32 %v1636
        %v1733 = vcvt.s32.f32 %v1637
        %v1734 = vcvt.s32.f32 %v1638
        %v1735 = vcvt.s32.f32 %v1639
        %v1736 = vcvt.s32.f32 %v1640
        %v1737 = vcvt.s32.f32 %v1641
        %v1738 = vcvt.s32.f32 %v1642
        %v1739 = vcvt.s32.f32 %v1643
        %v1740 = vcvt.s32.f32 %v1644
        %v1741 = vcvt.s32.f32 %v1645
        %v1742 = vcvt.s32.f32 %v1646
        %v1743 = vcvt.s32.f32 %v1647
        %v1744 = vcvt.s32.f32 %v1648
        %v1745 = vcvt.s32.f32 %v1649
        %v1746 = vcvt.s32.f32 %v1650
        %v1747 = vcvt.s32.f32 %v1651
        %v1748 = vcvt.s32.f32 %v1652
        %v1749 = vcvt.s32.f32 %v1653
        %v1750 = vcvt.s32.f32 %v1654
        %v1751 = vcvt.s32.f32 %v1655
        %v1752 = vcvt.s32.f32 %v1656
        %v1753 = vcvt.s32.f32 %v1657
        %v1754 = vcvt.s32.f32 %v1658
        %v1755 = vcvt.s32.f32 %v1659
        %v1756 = vcvt.s32.f32 %v1660
        %v1757 = vcvt.s32.f32 %v1661
        %v1758 = vcvt.s32.f32 %v1662
        %v1759 = vcvt.s32.f32 %v1663
        %v1760 = vcvt.s32.f32 %v1664
        %v1761 = vcvt.s32.f32 %v1665
        %v1762 = vcvt.s32.f32 %v1666
        %v1763 = vcvt.s32.f32 %v1667
        %v1764 = vcvt.s32.f32 %v1668
        %v1765 = vcvt.s32.f32 %v1669
        %v1766 = vcvt.s32.f32 %v1670
        %v1767 = vcvt.s32.f32 %v1671
        %v1768 = vcvt.s32.f32 %v1672
        %v1769 = vcvt.s32.f32 %v1673
        %v1770 = vcvt.s32.f32 %v1674
        %v1771 = vcvt.s32.f32 %v1675
        %v1772 = vcvt.s32.f32 %v1676
        %v1773 = vcvt.s32.f32 %v1677
        %v1774 = vcvt.s32.f32 %v1678
        %v1775 = vcvt.s32.f32 %v1679
        %v1776 = vcvt.s32.f32 %v1680
        %v1777 = vcvt.s32.f32 %v1681
        %v1778 = vcvt.s32.f32 %v1682
        %v1779 = vcvt.s32.f32 %v1683
        %v1780 = vcvt.s32.f32 %v1684
        %v1781 = vcvt.s32.f32 %v1685
        %v1782 = vcvt.s32.f32 %v1686
        %v1783 = vcvt.s32.f32 %v1687
        %v1784 = vcvt.s32.f32 %v1688
        %v1785 = vcvt.s32.f32 %v1689
        %v1786 = vcvt.s32.f32 %v1690
        %v1787 = vcvt.s32.f32 %v1691
        %v1788 = vcvt.s32.f32 %v1692
        %v1789 = vcvt.s32.f32 %v1693
        %v1790 = vcvt.s32.f32 %v1694
        %v1791 = vcvt.s32.f32 %v1695
        %v1792 = vcvt.s32.f32 %v1696
        %v1793 = vcvt.s32.f32 %v1697
        %v1794 = vcvt.s32.f32 %v1698
        %v1795 = vcvt.s32.f32 %v1699
        %v1796 = vcvt.s32.f32 %v1700
        %v1797 = vcvt.s32.f32 %v1701
        %v1798 = vcvt.s32.f32 %v1702
        %v1799 = vcvt.s32.f32 %v1703
        %v1800 = vcvt.s32.f32 %v1704
        %v1801 = vcvt.s32.f32 %v1705
        %v1802 = vcvt.s32.f32 %v1706
        %v1803 = vcvt.s32.f32 %v1707
        %s1804 = scalar_lea.vmem [#allocation2], 256
        %v1805 = vld [vmem:[%s1804] sm:$0xff]
        %v1806 = vld [vmem:[%s1804 + $0x8] sm:$0xff]
        %v1807 = vld [vmem:[%s1804 + $0x10] sm:$0xff]
        %v1808 = vld [vmem:[%s1804 + $0x18] sm:$0xff]
        %v1809 = vld [vmem:[%s1804 + $0x20] sm:$0xff]
        %v1810 = vld [vmem:[%s1804 + $0x28] sm:$0xff]
        %v1811 = vld [vmem:[%s1804 + $0x30] sm:$0xff]
        %v1812 = vld [vmem:[%s1804 + $0x38] sm:$0xff]
        %v1813 = vld [vmem:[%s1804 + $0x40] sm:$0xff]
        %v1814 = vld [vmem:[%s1804 + $0x48] sm:$0xff]
        %v1815 = vld [vmem:[%s1804 + $0x50] sm:$0xff]
        %v1816 = vld [vmem:[%s1804 + $0x58] sm:$0xff]
        %v1817 = vld [vmem:[%s1804 + $0x60] sm:$0xff]
        %v1818 = vld [vmem:[%s1804 + $0x68] sm:$0xff]
        %v1819 = vld [vmem:[%s1804 + $0x70] sm:$0xff]
        %v1820 = vld [vmem:[%s1804 + $0x78] sm:$0xff]
        %v1821 = vld [vmem:[%s1804 + $0x80] sm:$0xff]
        %v1822 = vld [vmem:[%s1804 + $0x88] sm:$0xff]
        %v1823 = vld [vmem:[%s1804 + $0x90] sm:$0xff]
        %v1824 = vld [vmem:[%s1804 + $0x98] sm:$0xff]
        %v1825 = vld [vmem:[%s1804 + $0xa0] sm:$0xff]
        %v1826 = vld [vmem:[%s1804 + $0xa8] sm:$0xff]
        %v1827 = vld [vmem:[%s1804 + $0xb0] sm:$0xff]
        %v1828 = vld [vmem:[%s1804 + $0xb8] sm:$0xff]
        %v1829 = vld [vmem:[%s1804 + $0xc0] sm:$0xff]
        %v1830 = vld [vmem:[%s1804 + $0xc8] sm:$0xff]
        %v1831 = vld [vmem:[%s1804 + $0xd0] sm:$0xff]
        %v1832 = vld [vmem:[%s1804 + $0xd8] sm:$0xff]
        %v1833 = vld [vmem:[%s1804 + $0xe0] sm:$0xff]
        %v1834 = vld [vmem:[%s1804 + $0xe8] sm:$0xff]
        %v1835 = vld [vmem:[%s1804 + $0xf0] sm:$0xff]
        %v1836 = vld [vmem:[%s1804 + $0xf8] sm:$0xff]
        %1837 = vmatpush.msra.mxu0 %v533
        %1838 = vmatpush.msra.mxu0 %v532
        %1839 = vmatpush.msra.mxu0 %v531
        %1840 = vmatpush.msra.mxu0 %v530
        %1841 = vmatpush.msra.mxu0 %v529
        %1842 = vmatpush.msra.mxu0 %v528
        %1843 = vmatpush.msra.mxu0 %v527
        %1844 = vmatpush.msra.mxu0 %v526
        %1845 = vmatpush.msra.mxu0 %v525
        %1846 = vmatpush.msra.mxu0 %v524
        %1847 = vmatpush.msra.mxu0 %v523
        %1848 = vmatpush.msra.mxu0 %v522
        %1849 = vmatpush.msra.mxu0 %v521
        %1850 = vmatpush.msra.mxu0 %v520
        %1851 = vmatpush.msra.mxu0 %v519
        %1852 = vmatpush.msra.mxu0 %v518
        %1853 = vmatmul.f32.gmra.mxu0 %v1708
        %v1854 = vpop.f32.mrf.mxu0
        %v1855 = vadd.f32 0.0, %v1854
        %1856 = vmatmul.f32.gmra.mxu0 %v1711
        %v1857 = vpop.f32.mrf.mxu0
        %v1858 = vadd.f32 0.0, %v1857
        %1859 = vmatmul.f32.gmra.mxu0 %v1714
        %v1860 = vpop.f32.mrf.mxu0
        %v1861 = vadd.f32 0.0, %v1860
        %1862 = vmatmul.f32.gmra.mxu0 %v1717
        %v1863 = vpop.f32.mrf.mxu0
        %v1864 = vadd.f32 0.0, %v1863
        %1865 = vmatmul.f32.gmra.mxu0 %v1720
        %v1866 = vpop.f32.mrf.mxu0
        %v1867 = vadd.f32 0.0, %v1866
        %1868 = vmatmul.f32.gmra.mxu0 %v1723
        %v1869 = vpop.f32.mrf.mxu0
        %v1870 = vadd.f32 0.0, %v1869
        %1871 = vmatmul.f32.gmra.mxu0 %v1726
        %v1872 = vpop.f32.mrf.mxu0
        %v1873 = vadd.f32 0.0, %v1872
        %1874 = vmatmul.f32.gmra.mxu0 %v1729
        %v1875 = vpop.f32.mrf.mxu0
        %v1876 = vadd.f32 0.0, %v1875
        %1877 = vmatmul.f32.gmra.mxu0 %v1732
        %v1878 = vpop.f32.mrf.mxu0
        %v1879 = vadd.f32 0.0, %v1878
        %1880 = vmatmul.f32.gmra.mxu0 %v1735
        %v1881 = vpop.f32.mrf.mxu0
        %v1882 = vadd.f32 0.0, %v1881
        %1883 = vmatmul.f32.gmra.mxu0 %v1738
        %v1884 = vpop.f32.mrf.mxu0
        %v1885 = vadd.f32 0.0, %v1884
        %1886 = vmatmul.f32.gmra.mxu0 %v1741
        %v1887 = vpop.f32.mrf.mxu0
        %v1888 = vadd.f32 0.0, %v1887
        %1889 = vmatmul.f32.gmra.mxu0 %v1744
        %v1890 = vpop.f32.mrf.mxu0
        %v1891 = vadd.f32 0.0, %v1890
        %1892 = vmatmul.f32.gmra.mxu0 %v1747
        %v1893 = vpop.f32.mrf.mxu0
        %v1894 = vadd.f32 0.0, %v1893
        %1895 = vmatmul.f32.gmra.mxu0 %v1750
        %v1896 = vpop.f32.mrf.mxu0
        %v1897 = vadd.f32 0.0, %v1896
        %1898 = vmatmul.f32.gmra.mxu0 %v1753
        %v1899 = vpop.f32.mrf.mxu0
        %v1900 = vadd.f32 0.0, %v1899
        %1901 = vmatmul.f32.gmra.mxu0 %v1756
        %v1902 = vpop.f32.mrf.mxu0
        %v1903 = vadd.f32 0.0, %v1902
        %1904 = vmatmul.f32.gmra.mxu0 %v1759
        %v1905 = vpop.f32.mrf.mxu0
        %v1906 = vadd.f32 0.0, %v1905
        %1907 = vmatmul.f32.gmra.mxu0 %v1762
        %v1908 = vpop.f32.mrf.mxu0
        %v1909 = vadd.f32 0.0, %v1908
        %1910 = vmatmul.f32.gmra.mxu0 %v1765
        %v1911 = vpop.f32.mrf.mxu0
        %v1912 = vadd.f32 0.0, %v1911
        %1913 = vmatmul.f32.gmra.mxu0 %v1768
        %v1914 = vpop.f32.mrf.mxu0
        %v1915 = vadd.f32 0.0, %v1914
        %1916 = vmatmul.f32.gmra.mxu0 %v1771
        %v1917 = vpop.f32.mrf.mxu0
        %v1918 = vadd.f32 0.0, %v1917
        %1919 = vmatmul.f32.gmra.mxu0 %v1774
        %v1920 = vpop.f32.mrf.mxu0
        %v1921 = vadd.f32 0.0, %v1920
        %1922 = vmatmul.f32.gmra.mxu0 %v1777
        %v1923 = vpop.f32.mrf.mxu0
        %v1924 = vadd.f32 0.0, %v1923
        %1925 = vmatmul.f32.gmra.mxu0 %v1780
        %v1926 = vpop.f32.mrf.mxu0
        %v1927 = vadd.f32 0.0, %v1926
        %1928 = vmatmul.f32.gmra.mxu0 %v1783
        %v1929 = vpop.f32.mrf.mxu0
        %v1930 = vadd.f32 0.0, %v1929
        %1931 = vmatmul.f32.gmra.mxu0 %v1786
        %v1932 = vpop.f32.mrf.mxu0
        %v1933 = vadd.f32 0.0, %v1932
        %1934 = vmatmul.f32.gmra.mxu0 %v1789
        %v1935 = vpop.f32.mrf.mxu0
        %v1936 = vadd.f32 0.0, %v1935
        %1937 = vmatmul.f32.gmra.mxu0 %v1792
        %v1938 = vpop.f32.mrf.mxu0
        %v1939 = vadd.f32 0.0, %v1938
        %1940 = vmatmul.f32.gmra.mxu0 %v1795
        %v1941 = vpop.f32.mrf.mxu0
        %v1942 = vadd.f32 0.0, %v1941
        %1943 = vmatmul.f32.gmra.mxu0 %v1798
        %v1944 = vpop.f32.mrf.mxu0
        %v1945 = vadd.f32 0.0, %v1944
        %1946 = vmatmul.f32.gmra.mxu0 %v1801
        %v1947 = vpop.f32.mrf.mxu0
        %v1948 = vadd.f32 0.0, %v1947
        %1949 = vdwg.mxu0
        %1950 = vmatpush.msra.mxu0 %v549
        %1951 = vmatpush.msra.mxu0 %v548
        %1952 = vmatpush.msra.mxu0 %v547
        %1953 = vmatpush.msra.mxu0 %v546
        %1954 = vmatpush.msra.mxu0 %v545
        %1955 = vmatpush.msra.mxu0 %v544
        %1956 = vmatpush.msra.mxu0 %v543
        %1957 = vmatpush.msra.mxu0 %v542
        %1958 = vmatpush.msra.mxu0 %v541
        %1959 = vmatpush.msra.mxu0 %v540
        %1960 = vmatpush.msra.mxu0 %v539
        %1961 = vmatpush.msra.mxu0 %v538
        %1962 = vmatpush.msra.mxu0 %v537
        %1963 = vmatpush.msra.mxu0 %v536
        %1964 = vmatpush.msra.mxu0 %v535
        %1965 = vmatpush.msra.mxu0 %v534
        %1966 = vmatmul.f32.gmra.mxu0 %v1709
        %v1967 = vpop.f32.mrf.mxu0
        %v1968 = vadd.f32 %v1855, %v1967
        %1969 = vmatmul.f32.gmra.mxu0 %v1712
        %v1970 = vpop.f32.mrf.mxu0
        %v1971 = vadd.f32 %v1858, %v1970
        %1972 = vmatmul.f32.gmra.mxu0 %v1715
        %v1973 = vpop.f32.mrf.mxu0
        %v1974 = vadd.f32 %v1861, %v1973
        %1975 = vmatmul.f32.gmra.mxu0 %v1718
        %v1976 = vpop.f32.mrf.mxu0
        %v1977 = vadd.f32 %v1864, %v1976
        %1978 = vmatmul.f32.gmra.mxu0 %v1721
        %v1979 = vpop.f32.mrf.mxu0
        %v1980 = vadd.f32 %v1867, %v1979
        %1981 = vmatmul.f32.gmra.mxu0 %v1724
        %v1982 = vpop.f32.mrf.mxu0
        %v1983 = vadd.f32 %v1870, %v1982
        %1984 = vmatmul.f32.gmra.mxu0 %v1727
        %v1985 = vpop.f32.mrf.mxu0
        %v1986 = vadd.f32 %v1873, %v1985
        %1987 = vmatmul.f32.gmra.mxu0 %v1730
        %v1988 = vpop.f32.mrf.mxu0
        %v1989 = vadd.f32 %v1876, %v1988
        %1990 = vmatmul.f32.gmra.mxu0 %v1733
        %v1991 = vpop.f32.mrf.mxu0
        %v1992 = vadd.f32 %v1879, %v1991
        %1993 = vmatmul.f32.gmra.mxu0 %v1736
        %v1994 = vpop.f32.mrf.mxu0
        %v1995 = vadd.f32 %v1882, %v1994
        %1996 = vmatmul.f32.gmra.mxu0 %v1739
        %v1997 = vpop.f32.mrf.mxu0
        %v1998 = vadd.f32 %v1885, %v1997
        %1999 = vmatmul.f32.gmra.mxu0 %v1742
        %v2000 = vpop.f32.mrf.mxu0
        %v2001 = vadd.f32 %v1888, %v2000
        %2002 = vmatmul.f32.gmra.mxu0 %v1745
        %v2003 = vpop.f32.mrf.mxu0
        %v2004 = vadd.f32 %v1891, %v2003
        %2005 = vmatmul.f32.gmra.mxu0 %v1748
        %v2006 = vpop.f32.mrf.mxu0
        %v2007 = vadd.f32 %v1894, %v2006
        %2008 = vmatmul.f32.gmra.mxu0 %v1751
        %v2009 = vpop.f32.mrf.mxu0
        %v2010 = vadd.f32 %v1897, %v2009
        %2011 = vmatmul.f32.gmra.mxu0 %v1754
        %v2012 = vpop.f32.mrf.mxu0
        %v2013 = vadd.f32 %v1900, %v2012
        %2014 = vmatmul.f32.gmra.mxu0 %v1757
        %v2015 = vpop.f32.mrf.mxu0
        %v2016 = vadd.f32 %v1903, %v2015
        %2017 = vmatmul.f32.gmra.mxu0 %v1760
        %v2018 = vpop.f32.mrf.mxu0
        %v2019 = vadd.f32 %v1906, %v2018
        %2020 = vmatmul.f32.gmra.mxu0 %v1763
        %v2021 = vpop.f32.mrf.mxu0
        %v2022 = vadd.f32 %v1909, %v2021
        %2023 = vmatmul.f32.gmra.mxu0 %v1766
        %v2024 = vpop.f32.mrf.mxu0
        %v2025 = vadd.f32 %v1912, %v2024
        %2026 = vmatmul.f32.gmra.mxu0 %v1769
        %v2027 = vpop.f32.mrf.mxu0
        %v2028 = vadd.f32 %v1915, %v2027
        %2029 = vmatmul.f32.gmra.mxu0 %v1772
        %v2030 = vpop.f32.mrf.mxu0
        %v2031 = vadd.f32 %v1918, %v2030
        %2032 = vmatmul.f32.gmra.mxu0 %v1775
        %v2033 = vpop.f32.mrf.mxu0
        %v2034 = vadd.f32 %v1921, %v2033
        %2035 = vmatmul.f32.gmra.mxu0 %v1778
        %v2036 = vpop.f32.mrf.mxu0
        %v2037 = vadd.f32 %v1924, %v2036
        %2038 = vmatmul.f32.gmra.mxu0 %v1781
        %v2039 = vpop.f32.mrf.mxu0
        %v2040 = vadd.f32 %v1927, %v2039
        %2041 = vmatmul.f32.gmra.mxu0 %v1784
        %v2042 = vpop.f32.mrf.mxu0
        %v2043 = vadd.f32 %v1930, %v2042
        %2044 = vmatmul.f32.gmra.mxu0 %v1787
        %v2045 = vpop.f32.mrf.mxu0
        %v2046 = vadd.f32 %v1933, %v2045
        %2047 = vmatmul.f32.gmra.mxu0 %v1790
        %v2048 = vpop.f32.mrf.mxu0
        %v2049 = vadd.f32 %v1936, %v2048
        %2050 = vmatmul.f32.gmra.mxu0 %v1793
        %v2051 = vpop.f32.mrf.mxu0
        %v2052 = vadd.f32 %v1939, %v2051
        %2053 = vmatmul.f32.gmra.mxu0 %v1796
        %v2054 = vpop.f32.mrf.mxu0
        %v2055 = vadd.f32 %v1942, %v2054
        %2056 = vmatmul.f32.gmra.mxu0 %v1799
        %v2057 = vpop.f32.mrf.mxu0
        %v2058 = vadd.f32 %v1945, %v2057
        %2059 = vmatmul.f32.gmra.mxu0 %v1802
        %v2060 = vpop.f32.mrf.mxu0
        %v2061 = vadd.f32 %v1948, %v2060
        %2062 = vdwg.mxu0
        %2063 = vmatpush.msra.mxu0 %v565
        %2064 = vmatpush.msra.mxu0 %v564
        %2065 = vmatpush.msra.mxu0 %v563
        %2066 = vmatpush.msra.mxu0 %v562
        %2067 = vmatpush.msra.mxu0 %v561
        %2068 = vmatpush.msra.mxu0 %v560
        %2069 = vmatpush.msra.mxu0 %v559
        %2070 = vmatpush.msra.mxu0 %v558
        %2071 = vmatpush.msra.mxu0 %v557
        %2072 = vmatpush.msra.mxu0 %v556
        %2073 = vmatpush.msra.mxu0 %v555
        %2074 = vmatpush.msra.mxu0 %v554
        %2075 = vmatpush.msra.mxu0 %v553
        %2076 = vmatpush.msra.mxu0 %v552
        %2077 = vmatpush.msra.mxu0 %v551
        %2078 = vmatpush.msra.mxu0 %v550
        %2079 = vmatmul.f32.gmra.mxu0 %v1710
        %v2080 = vpop.f32.mrf.mxu0
        %v2081 = vadd.f32 %v1968, %v2080
        %2082 = vmatmul.f32.gmra.mxu0 %v1713
        %v2083 = vpop.f32.mrf.mxu0
        %v2084 = vadd.f32 %v1971, %v2083
        %2085 = vmatmul.f32.gmra.mxu0 %v1716
        %v2086 = vpop.f32.mrf.mxu0
        %v2087 = vadd.f32 %v1974, %v2086
        %2088 = vmatmul.f32.gmra.mxu0 %v1719
        %v2089 = vpop.f32.mrf.mxu0
        %v2090 = vadd.f32 %v1977, %v2089
        %2091 = vmatmul.f32.gmra.mxu0 %v1722
        %v2092 = vpop.f32.mrf.mxu0
        %v2093 = vadd.f32 %v1980, %v2092
        %2094 = vmatmul.f32.gmra.mxu0 %v1725
        %v2095 = vpop.f32.mrf.mxu0
        %v2096 = vadd.f32 %v1983, %v2095
        %2097 = vmatmul.f32.gmra.mxu0 %v1728
        %v2098 = vpop.f32.mrf.mxu0
        %v2099 = vadd.f32 %v1986, %v2098
        %2100 = vmatmul.f32.gmra.mxu0 %v1731
        %v2101 = vpop.f32.mrf.mxu0
        %v2102 = vadd.f32 %v1989, %v2101
        %2103 = vmatmul.f32.gmra.mxu0 %v1734
        %v2104 = vpop.f32.mrf.mxu0
        %v2105 = vadd.f32 %v1992, %v2104
        %2106 = vmatmul.f32.gmra.mxu0 %v1737
        %v2107 = vpop.f32.mrf.mxu0
        %v2108 = vadd.f32 %v1995, %v2107
        %2109 = vmatmul.f32.gmra.mxu0 %v1740
        %v2110 = vpop.f32.mrf.mxu0
        %v2111 = vadd.f32 %v1998, %v2110
        %2112 = vmatmul.f32.gmra.mxu0 %v1743
        %v2113 = vpop.f32.mrf.mxu0
        %v2114 = vadd.f32 %v2001, %v2113
        %2115 = vmatmul.f32.gmra.mxu0 %v1746
        %v2116 = vpop.f32.mrf.mxu0
        %v2117 = vadd.f32 %v2004, %v2116
        %2118 = vmatmul.f32.gmra.mxu0 %v1749
        %v2119 = vpop.f32.mrf.mxu0
        %v2120 = vadd.f32 %v2007, %v2119
        %2121 = vmatmul.f32.gmra.mxu0 %v1752
        %v2122 = vpop.f32.mrf.mxu0
        %v2123 = vadd.f32 %v2010, %v2122
        %2124 = vmatmul.f32.gmra.mxu0 %v1755
        %v2125 = vpop.f32.mrf.mxu0
        %v2126 = vadd.f32 %v2013, %v2125
        %2127 = vmatmul.f32.gmra.mxu0 %v1758
        %v2128 = vpop.f32.mrf.mxu0
        %v2129 = vadd.f32 %v2016, %v2128
        %2130 = vmatmul.f32.gmra.mxu0 %v1761
        %v2131 = vpop.f32.mrf.mxu0
        %v2132 = vadd.f32 %v2019, %v2131
        %2133 = vmatmul.f32.gmra.mxu0 %v1764
        %v2134 = vpop.f32.mrf.mxu0
        %v2135 = vadd.f32 %v2022, %v2134
        %2136 = vmatmul.f32.gmra.mxu0 %v1767
        %v2137 = vpop.f32.mrf.mxu0
        %v2138 = vadd.f32 %v2025, %v2137
        %2139 = vmatmul.f32.gmra.mxu0 %v1770
        %v2140 = vpop.f32.mrf.mxu0
        %v2141 = vadd.f32 %v2028, %v2140
        %2142 = vmatmul.f32.gmra.mxu0 %v1773
        %v2143 = vpop.f32.mrf.mxu0
        %v2144 = vadd.f32 %v2031, %v2143
        %2145 = vmatmul.f32.gmra.mxu0 %v1776
        %v2146 = vpop.f32.mrf.mxu0
        %v2147 = vadd.f32 %v2034, %v2146
        %2148 = vmatmul.f32.gmra.mxu0 %v1779
        %v2149 = vpop.f32.mrf.mxu0
        %v2150 = vadd.f32 %v2037, %v2149
        %2151 = vmatmul.f32.gmra.mxu0 %v1782
        %v2152 = vpop.f32.mrf.mxu0
        %v2153 = vadd.f32 %v2040, %v2152
        %2154 = vmatmul.f32.gmra.mxu0 %v1785
        %v2155 = vpop.f32.mrf.mxu0
        %v2156 = vadd.f32 %v2043, %v2155
        %2157 = vmatmul.f32.gmra.mxu0 %v1788
        %v2158 = vpop.f32.mrf.mxu0
        %v2159 = vadd.f32 %v2046, %v2158
        %2160 = vmatmul.f32.gmra.mxu0 %v1791
        %v2161 = vpop.f32.mrf.mxu0
        %v2162 = vadd.f32 %v2049, %v2161
        %2163 = vmatmul.f32.gmra.mxu0 %v1794
        %v2164 = vpop.f32.mrf.mxu0
        %v2165 = vadd.f32 %v2052, %v2164
        %2166 = vmatmul.f32.gmra.mxu0 %v1797
        %v2167 = vpop.f32.mrf.mxu0
        %v2168 = vadd.f32 %v2055, %v2167
        %2169 = vmatmul.f32.gmra.mxu0 %v1800
        %v2170 = vpop.f32.mrf.mxu0
        %v2171 = vadd.f32 %v2058, %v2170
        %2172 = vmatmul.f32.gmra.mxu0 %v1803
        %v2173 = vpop.f32.mrf.mxu0
        %v2174 = vadd.f32 %v2061, %v2173
        %2175 = vdwg.mxu0
        %v2176 = vadd.f32 %v1805, %v2081
        %v2177 = vadd.f32 %v1806, %v2084
        %v2178 = vadd.f32 %v1807, %v2087
        %v2179 = vadd.f32 %v1808, %v2090
        %v2180 = vadd.f32 %v1809, %v2093
        %v2181 = vadd.f32 %v1810, %v2096
        %v2182 = vadd.f32 %v1811, %v2099
        %v2183 = vadd.f32 %v1812, %v2102
        %v2184 = vadd.f32 %v1813, %v2105
        %v2185 = vadd.f32 %v1814, %v2108
        %v2186 = vadd.f32 %v1815, %v2111
        %v2187 = vadd.f32 %v1816, %v2114
        %v2188 = vadd.f32 %v1817, %v2117
        %v2189 = vadd.f32 %v1818, %v2120
        %v2190 = vadd.f32 %v1819, %v2123
        %v2191 = vadd.f32 %v1820, %v2126
        %v2192 = vadd.f32 %v1821, %v2129
        %v2193 = vadd.f32 %v1822, %v2132
        %v2194 = vadd.f32 %v1823, %v2135
        %v2195 = vadd.f32 %v1824, %v2138
        %v2196 = vadd.f32 %v1825, %v2141
        %v2197 = vadd.f32 %v1826, %v2144
        %v2198 = vadd.f32 %v1827, %v2147
        %v2199 = vadd.f32 %v1828, %v2150
        %v2200 = vadd.f32 %v1829, %v2153
        %v2201 = vadd.f32 %v1830, %v2156
        %v2202 = vadd.f32 %v1831, %v2159
        %v2203 = vadd.f32 %v1832, %v2162
        %v2204 = vadd.f32 %v1833, %v2165
        %v2205 = vadd.f32 %v1834, %v2168
        %v2206 = vadd.f32 %v1835, %v2171
        %v2207 = vadd.f32 %v1836, %v2174
        %2208 = vst [vmem:[%s1804] sm:$0xff] %v2176
        %2209 = vst [vmem:[%s1804 + $0x8] sm:$0xff] %v2177
        %2210 = vst [vmem:[%s1804 + $0x10] sm:$0xff] %v2178
        %2211 = vst [vmem:[%s1804 + $0x18] sm:$0xff] %v2179
        %2212 = vst [vmem:[%s1804 + $0x20] sm:$0xff] %v2180
        %2213 = vst [vmem:[%s1804 + $0x28] sm:$0xff] %v2181
        %2214 = vst [vmem:[%s1804 + $0x30] sm:$0xff] %v2182
        %2215 = vst [vmem:[%s1804 + $0x38] sm:$0xff] %v2183
        %2216 = vst [vmem:[%s1804 + $0x40] sm:$0xff] %v2184
        %2217 = vst [vmem:[%s1804 + $0x48] sm:$0xff] %v2185
        %2218 = vst [vmem:[%s1804 + $0x50] sm:$0xff] %v2186
        %2219 = vst [vmem:[%s1804 + $0x58] sm:$0xff] %v2187
        %2220 = vst [vmem:[%s1804 + $0x60] sm:$0xff] %v2188
        %2221 = vst [vmem:[%s1804 + $0x68] sm:$0xff] %v2189
        %2222 = vst [vmem:[%s1804 + $0x70] sm:$0xff] %v2190
        %2223 = vst [vmem:[%s1804 + $0x78] sm:$0xff] %v2191
        %2224 = vst [vmem:[%s1804 + $0x80] sm:$0xff] %v2192
        %2225 = vst [vmem:[%s1804 + $0x88] sm:$0xff] %v2193
        %2226 = vst [vmem:[%s1804 + $0x90] sm:$0xff] %v2194
        %2227 = vst [vmem:[%s1804 + $0x98] sm:$0xff] %v2195
        %2228 = vst [vmem:[%s1804 + $0xa0] sm:$0xff] %v2196
        %2229 = vst [vmem:[%s1804 + $0xa8] sm:$0xff] %v2197
        %2230 = vst [vmem:[%s1804 + $0xb0] sm:$0xff] %v2198
        %2231 = vst [vmem:[%s1804 + $0xb8] sm:$0xff] %v2199
        %2232 = vst [vmem:[%s1804 + $0xc0] sm:$0xff] %v2200
        %2233 = vst [vmem:[%s1804 + $0xc8] sm:$0xff] %v2201
        %2234 = vst [vmem:[%s1804 + $0xd0] sm:$0xff] %v2202
        %2235 = vst [vmem:[%s1804 + $0xd8] sm:$0xff] %v2203
        %2236 = vst [vmem:[%s1804 + $0xe0] sm:$0xff] %v2204
        %2237 = vst [vmem:[%s1804 + $0xe8] sm:$0xff] %v2205
        %2238 = vst [vmem:[%s1804 + $0xf0] sm:$0xff] %v2206
        %2239 = vst [vmem:[%s1804 + $0xf8] sm:$0xff] %v2207
        %v2240 = vadd.s32 %v485, 17
        %v2241 = vadd.s32 %v486, 17
        %v2242 = vadd.s32 %v487, 17
        %v2243 = vadd.s32 %v488, 17
        %v2244 = vadd.s32 %v489, 17
        %v2245 = vadd.s32 %v490, 17
        %v2246 = vadd.s32 %v491, 17
        %v2247 = vadd.s32 %v492, 17
        %v2248 = vadd.s32 %v493, 17
        %v2249 = vadd.s32 %v494, 17
        %v2250 = vadd.s32 %v495, 17
        %v2251 = vadd.s32 %v496, 17
        %v2252 = vadd.s32 %v497, 17
        %v2253 = vadd.s32 %v498, 17
        %v2254 = vadd.s32 %v499, 17
        %v2255 = vadd.s32 %v500, 17
        %v2256 = vadd.s32 %v501, 17
        %v2257 = vadd.s32 %v502, 17
        %v2258 = vadd.s32 %v503, 17
        %v2259 = vadd.s32 %v504, 17
        %v2260 = vadd.s32 %v505, 17
        %v2261 = vadd.s32 %v506, 17
        %v2262 = vadd.s32 %v507, 17
        %v2263 = vadd.s32 %v508, 17
        %v2264 = vadd.s32 %v509, 17
        %v2265 = vadd.s32 %v510, 17
        %v2266 = vadd.s32 %v511, 17
        %v2267 = vadd.s32 %v512, 17
        %v2268 = vadd.s32 %v513, 17
        %v2269 = vadd.s32 %v514, 17
        %v2270 = vadd.s32 %v515, 17
        %v2271 = vadd.s32 %v516, 17
        %2272 = vset.pattern.permute.xlu0 0
        %2273 = vperm.xlu0 %2272, %v2240
        %v2274 = vpop.permute.xlu0 %2273
        %2275 = vset.pattern.permute.xlu0 0
        %2276 = vperm.xlu0 %2275, %v2241
        %v2277 = vpop.permute.xlu0 %2276
        %2278 = vset.pattern.permute.xlu0 0
        %2279 = vperm.xlu0 %2278, %v2242
        %v2280 = vpop.permute.xlu0 %2279
        %2281 = vset.pattern.permute.xlu0 0
        %2282 = vperm.xlu0 %2281, %v2243
        %v2283 = vpop.permute.xlu0 %2282
        %2284 = vset.pattern.permute.xlu0 0
        %2285 = vperm.xlu0 %2284, %v2244
        %v2286 = vpop.permute.xlu0 %2285
        %2287 = vset.pattern.permute.xlu0 0
        %2288 = vperm.xlu0 %2287, %v2245
        %v2289 = vpop.permute.xlu0 %2288
        %2290 = vset.pattern.permute.xlu0 0
        %2291 = vperm.xlu0 %2290, %v2246
        %v2292 = vpop.permute.xlu0 %2291
        %2293 = vset.pattern.permute.xlu0 0
        %2294 = vperm.xlu0 %2293, %v2247
        %v2295 = vpop.permute.xlu0 %2294
        %2296 = vset.pattern.permute.xlu0 0
        %2297 = vperm.xlu0 %2296, %v2248
        %v2298 = vpop.permute.xlu0 %2297
        %2299 = vset.pattern.permute.xlu0 0
        %2300 = vperm.xlu0 %2299, %v2249
        %v2301 = vpop.permute.xlu0 %2300
        %2302 = vset.pattern.permute.xlu0 0
        %2303 = vperm.xlu0 %2302, %v2250
        %v2304 = vpop.permute.xlu0 %2303
        %2305 = vset.pattern.permute.xlu0 0
        %2306 = vperm.xlu0 %2305, %v2251
        %v2307 = vpop.permute.xlu0 %2306
        %2308 = vset.pattern.permute.xlu0 0
        %2309 = vperm.xlu0 %2308, %v2252
        %v2310 = vpop.permute.xlu0 %2309
        %2311 = vset.pattern.permute.xlu0 0
        %2312 = vperm.xlu0 %2311, %v2253
        %v2313 = vpop.permute.xlu0 %2312
        %2314 = vset.pattern.permute.xlu0 0
        %2315 = vperm.xlu0 %2314, %v2254
        %v2316 = vpop.permute.xlu0 %2315
        %2317 = vset.pattern.permute.xlu0 0
        %2318 = vperm.xlu0 %2317, %v2255
        %v2319 = vpop.permute.xlu0 %2318
        %2320 = vset.pattern.permute.xlu0 0
        %2321 = vperm.xlu0 %2320, %v2256
        %v2322 = vpop.permute.xlu0 %2321
        %2323 = vset.pattern.permute.xlu0 0
        %2324 = vperm.xlu0 %2323, %v2257
        %v2325 = vpop.permute.xlu0 %2324
        %2326 = vset.pattern.permute.xlu0 0
        %2327 = vperm.xlu0 %2326, %v2258
        %v2328 = vpop.permute.xlu0 %2327
        %2329 = vset.pattern.permute.xlu0 0
        %2330 = vperm.xlu0 %2329, %v2259
        %v2331 = vpop.permute.xlu0 %2330
        %2332 = vset.pattern.permute.xlu0 0
        %2333 = vperm.xlu0 %2332, %v2260
        %v2334 = vpop.permute.xlu0 %2333
        %2335 = vset.pattern.permute.xlu0 0
        %2336 = vperm.xlu0 %2335, %v2261
        %v2337 = vpop.permute.xlu0 %2336
        %2338 = vset.pattern.permute.xlu0 0
        %2339 = vperm.xlu0 %2338, %v2262
        %v2340 = vpop.permute.xlu0 %2339
        %2341 = vset.pattern.permute.xlu0 0
        %2342 = vperm.xlu0 %2341, %v2263
        %v2343 = vpop.permute.xlu0 %2342
        %2344 = vset.pattern.permute.xlu0 0
        %2345 = vperm.xlu0 %2344, %v2264
        %v2346 = vpop.permute.xlu0 %2345
        %2347 = vset.pattern.permute.xlu0 0
        %2348 = vperm.xlu0 %2347, %v2265
        %v2349 = vpop.permute.xlu0 %2348
        %2350 = vset.pattern.permute.xlu0 0
        %2351 = vperm.xlu0 %2350, %v2266
        %v2352 = vpop.permute.xlu0 %2351
        %2353 = vset.pattern.permute.xlu0 0
        %2354 = vperm.xlu0 %2353, %v2267
        %v2355 = vpop.permute.xlu0 %2354
        %2356 = vset.pattern.permute.xlu0 0
        %2357 = vperm.xlu0 %2356, %v2268
        %v2358 = vpop.permute.xlu0 %2357
        %2359 = vset.pattern.permute.xlu0 0
        %2360 = vperm.xlu0 %2359, %v2269
        %v2361 = vpop.permute.xlu0 %2360
        %2362 = vset.pattern.permute.xlu0 0
        %2363 = vperm.xlu0 %2362, %v2270
        %v2364 = vpop.permute.xlu0 %2363
        %2365 = vset.pattern.permute.xlu0 0
        %2366 = vperm.xlu0 %2365, %v2271
        %v2367 = vpop.permute.xlu0 %2366
        %vm2368 = vcmp.eq.s32.totalorder %v2274, %v662
        %vm2369 = vcmp.eq.s32.totalorder %v2274, %v663
        %vm2370 = vcmp.eq.s32.totalorder %v2274, %v664
        %vm2371 = vcmp.eq.s32.totalorder %v2277, %v662
        %vm2372 = vcmp.eq.s32.totalorder %v2277, %v663
        %vm2373 = vcmp.eq.s32.totalorder %v2277, %v664
        %vm2374 = vcmp.eq.s32.totalorder %v2280, %v662
        %vm2375 = vcmp.eq.s32.totalorder %v2280, %v663
        %vm2376 = vcmp.eq.s32.totalorder %v2280, %v664
        %vm2377 = vcmp.eq.s32.totalorder %v2283, %v662
        %vm2378 = vcmp.eq.s32.totalorder %v2283, %v663
        %vm2379 = vcmp.eq.s32.totalorder %v2283, %v664
        %vm2380 = vcmp.eq.s32.totalorder %v2286, %v662
        %vm2381 = vcmp.eq.s32.totalorder %v2286, %v663
        %vm2382 = vcmp.eq.s32.totalorder %v2286, %v664
        %vm2383 = vcmp.eq.s32.totalorder %v2289, %v662
        %vm2384 = vcmp.eq.s32.totalorder %v2289, %v663
        %vm2385 = vcmp.eq.s32.totalorder %v2289, %v664
        %vm2386 = vcmp.eq.s32.totalorder %v2292, %v662
        %vm2387 = vcmp.eq.s32.totalorder %v2292, %v663
        %vm2388 = vcmp.eq.s32.totalorder %v2292, %v664
        %vm2389 = vcmp.eq.s32.totalorder %v2295, %v662
        %vm2390 = vcmp.eq.s32.totalorder %v2295, %v663
        %vm2391 = vcmp.eq.s32.totalorder %v2295, %v664
        %vm2392 = vcmp.eq.s32.totalorder %v2298, %v662
        %vm2393 = vcmp.eq.s32.totalorder %v2298, %v663
        %vm2394 = vcmp.eq.s32.totalorder %v2298, %v664
        %vm2395 = vcmp.eq.s32.totalorder %v2301, %v662
        %vm2396 = vcmp.eq.s32.totalorder %v2301, %v663
        %vm2397 = vcmp.eq.s32.totalorder %v2301, %v664
        %vm2398 = vcmp.eq.s32.totalorder %v2304, %v662
        %vm2399 = vcmp.eq.s32.totalorder %v2304, %v663
        %vm2400 = vcmp.eq.s32.totalorder %v2304, %v664
        %vm2401 = vcmp.eq.s32.totalorder %v2307, %v662
        %vm2402 = vcmp.eq.s32.totalorder %v2307, %v663
        %vm2403 = vcmp.eq.s32.totalorder %v2307, %v664
        %vm2404 = vcmp.eq.s32.totalorder %v2310, %v662
        %vm2405 = vcmp.eq.s32.totalorder %v2310, %v663
        %vm2406 = vcmp.eq.s32.totalorder %v2310, %v664
        %vm2407 = vcmp.eq.s32.totalorder %v2313, %v662
        %vm2408 = vcmp.eq.s32.totalorder %v2313, %v663
        %vm2409 = vcmp.eq.s32.totalorder %v2313, %v664
        %vm2410 = vcmp.eq.s32.totalorder %v2316, %v662
        %vm2411 = vcmp.eq.s32.totalorder %v2316, %v663
        %vm2412 = vcmp.eq.s32.totalorder %v2316, %v664
        %vm2413 = vcmp.eq.s32.totalorder %v2319, %v662
        %vm2414 = vcmp.eq.s32.totalorder %v2319, %v663
        %vm2415 = vcmp.eq.s32.totalorder %v2319, %v664
        %vm2416 = vcmp.eq.s32.totalorder %v2322, %v662
        %vm2417 = vcmp.eq.s32.totalorder %v2322, %v663
        %vm2418 = vcmp.eq.s32.totalorder %v2322, %v664
        %vm2419 = vcmp.eq.s32.totalorder %v2325, %v662
        %vm2420 = vcmp.eq.s32.totalorder %v2325, %v663
        %vm2421 = vcmp.eq.s32.totalorder %v2325, %v664
        %vm2422 = vcmp.eq.s32.totalorder %v2328, %v662
        %vm2423 = vcmp.eq.s32.totalorder %v2328, %v663
        %vm2424 = vcmp.eq.s32.totalorder %v2328, %v664
        %vm2425 = vcmp.eq.s32.totalorder %v2331, %v662
        %vm2426 = vcmp.eq.s32.totalorder %v2331, %v663
        %vm2427 = vcmp.eq.s32.totalorder %v2331, %v664
        %vm2428 = vcmp.eq.s32.totalorder %v2334, %v662
        %vm2429 = vcmp.eq.s32.totalorder %v2334, %v663
        %vm2430 = vcmp.eq.s32.totalorder %v2334, %v664
        %vm2431 = vcmp.eq.s32.totalorder %v2337, %v662
        %vm2432 = vcmp.eq.s32.totalorder %v2337, %v663
        %vm2433 = vcmp.eq.s32.totalorder %v2337, %v664
        %vm2434 = vcmp.eq.s32.totalorder %v2340, %v662
        %vm2435 = vcmp.eq.s32.totalorder %v2340, %v663
        %vm2436 = vcmp.eq.s32.totalorder %v2340, %v664
        %vm2437 = vcmp.eq.s32.totalorder %v2343, %v662
        %vm2438 = vcmp.eq.s32.totalorder %v2343, %v663
        %vm2439 = vcmp.eq.s32.totalorder %v2343, %v664
        %vm2440 = vcmp.eq.s32.totalorder %v2346, %v662
        %vm2441 = vcmp.eq.s32.totalorder %v2346, %v663
        %vm2442 = vcmp.eq.s32.totalorder %v2346, %v664
        %vm2443 = vcmp.eq.s32.totalorder %v2349, %v662
        %vm2444 = vcmp.eq.s32.totalorder %v2349, %v663
        %vm2445 = vcmp.eq.s32.totalorder %v2349, %v664
        %vm2446 = vcmp.eq.s32.totalorder %v2352, %v662
        %vm2447 = vcmp.eq.s32.totalorder %v2352, %v663
        %vm2448 = vcmp.eq.s32.totalorder %v2352, %v664
        %vm2449 = vcmp.eq.s32.totalorder %v2355, %v662
        %vm2450 = vcmp.eq.s32.totalorder %v2355, %v663
        %vm2451 = vcmp.eq.s32.totalorder %v2355, %v664
        %vm2452 = vcmp.eq.s32.totalorder %v2358, %v662
        %vm2453 = vcmp.eq.s32.totalorder %v2358, %v663
        %vm2454 = vcmp.eq.s32.totalorder %v2358, %v664
        %vm2455 = vcmp.eq.s32.totalorder %v2361, %v662
        %vm2456 = vcmp.eq.s32.totalorder %v2361, %v663
        %vm2457 = vcmp.eq.s32.totalorder %v2361, %v664
        %vm2458 = vcmp.eq.s32.totalorder %v2364, %v662
        %vm2459 = vcmp.eq.s32.totalorder %v2364, %v663
        %vm2460 = vcmp.eq.s32.totalorder %v2364, %v664
        %vm2461 = vcmp.eq.s32.totalorder %v2367, %v662
        %vm2462 = vcmp.eq.s32.totalorder %v2367, %v663
        %vm2463 = vcmp.eq.s32.totalorder %v2367, %v664
        %v2464 = vsel %vm2368, 1, 0
        %v2465 = vsel %vm2369, 1, 0
        %v2466 = vsel %vm2370, 1, 0
        %v2467 = vsel %vm2371, 1, 0
        %v2468 = vsel %vm2372, 1, 0
        %v2469 = vsel %vm2373, 1, 0
        %v2470 = vsel %vm2374, 1, 0
        %v2471 = vsel %vm2375, 1, 0
        %v2472 = vsel %vm2376, 1, 0
        %v2473 = vsel %vm2377, 1, 0
        %v2474 = vsel %vm2378, 1, 0
        %v2475 = vsel %vm2379, 1, 0
        %v2476 = vsel %vm2380, 1, 0
        %v2477 = vsel %vm2381, 1, 0
        %v2478 = vsel %vm2382, 1, 0
        %v2479 = vsel %vm2383, 1, 0
        %v2480 = vsel %vm2384, 1, 0
        %v2481 = vsel %vm2385, 1, 0
        %v2482 = vsel %vm2386, 1, 0
        %v2483 = vsel %vm2387, 1, 0
        %v2484 = vsel %vm2388, 1, 0
        %v2485 = vsel %vm2389, 1, 0
        %v2486 = vsel %vm2390, 1, 0
        %v2487 = vsel %vm2391, 1, 0
        %v2488 = vsel %vm2392, 1, 0
        %v2489 = vsel %vm2393, 1, 0
        %v2490 = vsel %vm2394, 1, 0
        %v2491 = vsel %vm2395, 1, 0
        %v2492 = vsel %vm2396, 1, 0
        %v2493 = vsel %vm2397, 1, 0
        %v2494 = vsel %vm2398, 1, 0
        %v2495 = vsel %vm2399, 1, 0
        %v2496 = vsel %vm2400, 1, 0
        %v2497 = vsel %vm2401, 1, 0
        %v2498 = vsel %vm2402, 1, 0
        %v2499 = vsel %vm2403, 1, 0
        %v2500 = vsel %vm2404, 1, 0
        %v2501 = vsel %vm2405, 1, 0
        %v2502 = vsel %vm2406, 1, 0
        %v2503 = vsel %vm2407, 1, 0
        %v2504 = vsel %vm2408, 1, 0
        %v2505 = vsel %vm2409, 1, 0
        %v2506 = vsel %vm2410, 1, 0
        %v2507 = vsel %vm2411, 1, 0
        %v2508 = vsel %vm2412, 1, 0
        %v2509 = vsel %vm2413, 1, 0
        %v2510 = vsel %vm2414, 1, 0
        %v2511 = vsel %vm2415, 1, 0
        %v2512 = vsel %vm2416, 1, 0
        %v2513 = vsel %vm2417, 1, 0
        %v2514 = vsel %vm2418, 1, 0
        %v2515 = vsel %vm2419, 1, 0
        %v2516 = vsel %vm2420, 1, 0
        %v2517 = vsel %vm2421, 1, 0
        %v2518 = vsel %vm2422, 1, 0
        %v2519 = vsel %vm2423, 1, 0
        %v2520 = vsel %vm2424, 1, 0
        %v2521 = vsel %vm2425, 1, 0
        %v2522 = vsel %vm2426, 1, 0
        %v2523 = vsel %vm2427, 1, 0
        %v2524 = vsel %vm2428, 1, 0
        %v2525 = vsel %vm2429, 1, 0
        %v2526 = vsel %vm2430, 1, 0
        %v2527 = vsel %vm2431, 1, 0
        %v2528 = vsel %vm2432, 1, 0
        %v2529 = vsel %vm2433, 1, 0
        %v2530 = vsel %vm2434, 1, 0
        %v2531 = vsel %vm2435, 1, 0
        %v2532 = vsel %vm2436, 1, 0
        %v2533 = vsel %vm2437, 1, 0
        %v2534 = vsel %vm2438, 1, 0
        %v2535 = vsel %vm2439, 1, 0
        %v2536 = vsel %vm2440, 1, 0
        %v2537 = vsel %vm2441, 1, 0
        %v2538 = vsel %vm2442, 1, 0
        %v2539 = vsel %vm2443, 1, 0
        %v2540 = vsel %vm2444, 1, 0
        %v2541 = vsel %vm2445, 1, 0
        %v2542 = vsel %vm2446, 1, 0
        %v2543 = vsel %vm2447, 1, 0
        %v2544 = vsel %vm2448, 1, 0
        %v2545 = vsel %vm2449, 1, 0
        %v2546 = vsel %vm2450, 1, 0
        %v2547 = vsel %vm2451, 1, 0
        %v2548 = vsel %vm2452, 1, 0
        %v2549 = vsel %vm2453, 1, 0
        %v2550 = vsel %vm2454, 1, 0
        %v2551 = vsel %vm2455, 1, 0
        %v2552 = vsel %vm2456, 1, 0
        %v2553 = vsel %vm2457, 1, 0
        %v2554 = vsel %vm2458, 1, 0
        %v2555 = vsel %vm2459, 1, 0
        %v2556 = vsel %vm2460, 1, 0
        %v2557 = vsel %vm2461, 1, 0
        %v2558 = vsel %vm2462, 1, 0
        %v2559 = vsel %vm2463, 1, 0
        %v2560 = vcvt.s32.f32 %v2464
        %v2561 = vcvt.s32.f32 %v2465
        %v2562 = vcvt.s32.f32 %v2466
        %v2563 = vcvt.s32.f32 %v2467
        %v2564 = vcvt.s32.f32 %v2468
        %v2565 = vcvt.s32.f32 %v2469
        %v2566 = vcvt.s32.f32 %v2470
        %v2567 = vcvt.s32.f32 %v2471
        %v2568 = vcvt.s32.f32 %v2472
        %v2569 = vcvt.s32.f32 %v2473
        %v2570 = vcvt.s32.f32 %v2474
        %v2571 = vcvt.s32.f32 %v2475
        %v2572 = vcvt.s32.f32 %v2476
        %v2573 = vcvt.s32.f32 %v2477
        %v2574 = vcvt.s32.f32 %v2478
        %v2575 = vcvt.s32.f32 %v2479
        %v2576 = vcvt.s32.f32 %v2480
        %v2577 = vcvt.s32.f32 %v2481
        %v2578 = vcvt.s32.f32 %v2482
        %v2579 = vcvt.s32.f32 %v2483
        %v2580 = vcvt.s32.f32 %v2484
        %v2581 = vcvt.s32.f32 %v2485
        %v2582 = vcvt.s32.f32 %v2486
        %v2583 = vcvt.s32.f32 %v2487
        %v2584 = vcvt.s32.f32 %v2488
        %v2585 = vcvt.s32.f32 %v2489
        %v2586 = vcvt.s32.f32 %v2490
        %v2587 = vcvt.s32.f32 %v2491
        %v2588 = vcvt.s32.f32 %v2492
        %v2589 = vcvt.s32.f32 %v2493
        %v2590 = vcvt.s32.f32 %v2494
        %v2591 = vcvt.s32.f32 %v2495
        %v2592 = vcvt.s32.f32 %v2496
        %v2593 = vcvt.s32.f32 %v2497
        %v2594 = vcvt.s32.f32 %v2498
        %v2595 = vcvt.s32.f32 %v2499
        %v2596 = vcvt.s32.f32 %v2500
        %v2597 = vcvt.s32.f32 %v2501
        %v2598 = vcvt.s32.f32 %v2502
        %v2599 = vcvt.s32.f32 %v2503
        %v2600 = vcvt.s32.f32 %v2504
        %v2601 = vcvt.s32.f32 %v2505
        %v2602 = vcvt.s32.f32 %v2506
        %v2603 = vcvt.s32.f32 %v2507
        %v2604 = vcvt.s32.f32 %v2508
        %v2605 = vcvt.s32.f32 %v2509
        %v2606 = vcvt.s32.f32 %v2510
        %v2607 = vcvt.s32.f32 %v2511
        %v2608 = vcvt.s32.f32 %v2512
        %v2609 = vcvt.s32.f32 %v2513
        %v2610 = vcvt.s32.f32 %v2514
        %v2611 = vcvt.s32.f32 %v2515
        %v2612 = vcvt.s32.f32 %v2516
        %v2613 = vcvt.s32.f32 %v2517
        %v2614 = vcvt.s32.f32 %v2518
        %v2615 = vcvt.s32.f32 %v2519
        %v2616 = vcvt.s32.f32 %v2520
        %v2617 = vcvt.s32.f32 %v2521
        %v2618 = vcvt.s32.f32 %v2522
        %v2619 = vcvt.s32.f32 %v2523
        %v2620 = vcvt.s32.f32 %v2524
        %v2621 = vcvt.s32.f32 %v2525
        %v2622 = vcvt.s32.f32 %v2526
        %v2623 = vcvt.s32.f32 %v2527
        %v2624 = vcvt.s32.f32 %v2528
        %v2625 = vcvt.s32.f32 %v2529
        %v2626 = vcvt.s32.f32 %v2530
        %v2627 = vcvt.s32.f32 %v2531
        %v2628 = vcvt.s32.f32 %v2532
        %v2629 = vcvt.s32.f32 %v2533
        %v2630 = vcvt.s32.f32 %v2534
        %v2631 = vcvt.s32.f32 %v2535
        %v2632 = vcvt.s32.f32 %v2536
        %v2633 = vcvt.s32.f32 %v2537
        %v2634 = vcvt.s32.f32 %v2538
        %v2635 = vcvt.s32.f32 %v2539
        %v2636 = vcvt.s32.f32 %v2540
        %v2637 = vcvt.s32.f32 %v2541
        %v2638 = vcvt.s32.f32 %v2542
        %v2639 = vcvt.s32.f32 %v2543
        %v2640 = vcvt.s32.f32 %v2544
        %v2641 = vcvt.s32.f32 %v2545
        %v2642 = vcvt.s32.f32 %v2546
        %v2643 = vcvt.s32.f32 %v2547
        %v2644 = vcvt.s32.f32 %v2548
        %v2645 = vcvt.s32.f32 %v2549
        %v2646 = vcvt.s32.f32 %v2550
        %v2647 = vcvt.s32.f32 %v2551
        %v2648 = vcvt.s32.f32 %v2552
        %v2649 = vcvt.s32.f32 %v2553
        %v2650 = vcvt.s32.f32 %v2554
        %v2651 = vcvt.s32.f32 %v2555
        %v2652 = vcvt.s32.f32 %v2556
        %v2653 = vcvt.s32.f32 %v2557
        %v2654 = vcvt.s32.f32 %v2558
        %v2655 = vcvt.s32.f32 %v2559
        %s2656 = scalar_lea.vmem [#allocation2], 512
        %v2657 = vld [vmem:[%s2656] sm:$0xff]
        %v2658 = vld [vmem:[%s2656 + $0x8] sm:$0xff]
        %v2659 = vld [vmem:[%s2656 + $0x10] sm:$0xff]
        %v2660 = vld [vmem:[%s2656 + $0x18] sm:$0xff]
        %v2661 = vld [vmem:[%s2656 + $0x20] sm:$0xff]
        %v2662 = vld [vmem:[%s2656 + $0x28] sm:$0xff]
        %v2663 = vld [vmem:[%s2656 + $0x30] sm:$0xff]
        %v2664 = vld [vmem:[%s2656 + $0x38] sm:$0xff]
        %v2665 = vld [vmem:[%s2656 + $0x40] sm:$0xff]
        %v2666 = vld [vmem:[%s2656 + $0x48] sm:$0xff]
        %v2667 = vld [vmem:[%s2656 + $0x50] sm:$0xff]
        %v2668 = vld [vmem:[%s2656 + $0x58] sm:$0xff]
        %v2669 = vld [vmem:[%s2656 + $0x60] sm:$0xff]
        %v2670 = vld [vmem:[%s2656 + $0x68] sm:$0xff]
        %v2671 = vld [vmem:[%s2656 + $0x70] sm:$0xff]
        %v2672 = vld [vmem:[%s2656 + $0x78] sm:$0xff]
        %v2673 = vld [vmem:[%s2656 + $0x80] sm:$0xff]
        %v2674 = vld [vmem:[%s2656 + $0x88] sm:$0xff]
        %v2675 = vld [vmem:[%s2656 + $0x90] sm:$0xff]
        %v2676 = vld [vmem:[%s2656 + $0x98] sm:$0xff]
        %v2677 = vld [vmem:[%s2656 + $0xa0] sm:$0xff]
        %v2678 = vld [vmem:[%s2656 + $0xa8] sm:$0xff]
        %v2679 = vld [vmem:[%s2656 + $0xb0] sm:$0xff]
        %v2680 = vld [vmem:[%s2656 + $0xb8] sm:$0xff]
        %v2681 = vld [vmem:[%s2656 + $0xc0] sm:$0xff]
        %v2682 = vld [vmem:[%s2656 + $0xc8] sm:$0xff]
        %v2683 = vld [vmem:[%s2656 + $0xd0] sm:$0xff]
        %v2684 = vld [vmem:[%s2656 + $0xd8] sm:$0xff]
        %v2685 = vld [vmem:[%s2656 + $0xe0] sm:$0xff]
        %v2686 = vld [vmem:[%s2656 + $0xe8] sm:$0xff]
        %v2687 = vld [vmem:[%s2656 + $0xf0] sm:$0xff]
        %v2688 = vld [vmem:[%s2656 + $0xf8] sm:$0xff]
        %2689 = vmatpush.msra.mxu0 %v533
        %2690 = vmatpush.msra.mxu0 %v532
        %2691 = vmatpush.msra.mxu0 %v531
        %2692 = vmatpush.msra.mxu0 %v530
        %2693 = vmatpush.msra.mxu0 %v529
        %2694 = vmatpush.msra.mxu0 %v528
        %2695 = vmatpush.msra.mxu0 %v527
        %2696 = vmatpush.msra.mxu0 %v526
        %2697 = vmatpush.msra.mxu0 %v525
        %2698 = vmatpush.msra.mxu0 %v524
        %2699 = vmatpush.msra.mxu0 %v523
        %2700 = vmatpush.msra.mxu0 %v522
        %2701 = vmatpush.msra.mxu0 %v521
        %2702 = vmatpush.msra.mxu0 %v520
        %2703 = vmatpush.msra.mxu0 %v519
        %2704 = vmatpush.msra.mxu0 %v518
        %2705 = vmatmul.f32.gmra.mxu0 %v2560
        %v2706 = vpop.f32.mrf.mxu0
        %v2707 = vadd.f32 0.0, %v2706
        %2708 = vmatmul.f32.gmra.mxu0 %v2563
        %v2709 = vpop.f32.mrf.mxu0
        %v2710 = vadd.f32 0.0, %v2709
        %2711 = vmatmul.f32.gmra.mxu0 %v2566
        %v2712 = vpop.f32.mrf.mxu0
        %v2713 = vadd.f32 0.0, %v2712
        %2714 = vmatmul.f32.gmra.mxu0 %v2569
        %v2715 = vpop.f32.mrf.mxu0
        %v2716 = vadd.f32 0.0, %v2715
        %2717 = vmatmul.f32.gmra.mxu0 %v2572
        %v2718 = vpop.f32.mrf.mxu0
        %v2719 = vadd.f32 0.0, %v2718
        %2720 = vmatmul.f32.gmra.mxu0 %v2575
        %v2721 = vpop.f32.mrf.mxu0
        %v2722 = vadd.f32 0.0, %v2721
        %2723 = vmatmul.f32.gmra.mxu0 %v2578
        %v2724 = vpop.f32.mrf.mxu0
        %v2725 = vadd.f32 0.0, %v2724
        %2726 = vmatmul.f32.gmra.mxu0 %v2581
        %v2727 = vpop.f32.mrf.mxu0
        %v2728 = vadd.f32 0.0, %v2727
        %2729 = vmatmul.f32.gmra.mxu0 %v2584
        %v2730 = vpop.f32.mrf.mxu0
        %v2731 = vadd.f32 0.0, %v2730
        %2732 = vmatmul.f32.gmra.mxu0 %v2587
        %v2733 = vpop.f32.mrf.mxu0
        %v2734 = vadd.f32 0.0, %v2733
        %2735 = vmatmul.f32.gmra.mxu0 %v2590
        %v2736 = vpop.f32.mrf.mxu0
        %v2737 = vadd.f32 0.0, %v2736
        %2738 = vmatmul.f32.gmra.mxu0 %v2593
        %v2739 = vpop.f32.mrf.mxu0
        %v2740 = vadd.f32 0.0, %v2739
        %2741 = vmatmul.f32.gmra.mxu0 %v2596
        %v2742 = vpop.f32.mrf.mxu0
        %v2743 = vadd.f32 0.0, %v2742
        %2744 = vmatmul.f32.gmra.mxu0 %v2599
        %v2745 = vpop.f32.mrf.mxu0
        %v2746 = vadd.f32 0.0, %v2745
        %2747 = vmatmul.f32.gmra.mxu0 %v2602
        %v2748 = vpop.f32.mrf.mxu0
        %v2749 = vadd.f32 0.0, %v2748
        %2750 = vmatmul.f32.gmra.mxu0 %v2605
        %v2751 = vpop.f32.mrf.mxu0
        %v2752 = vadd.f32 0.0, %v2751
        %2753 = vmatmul.f32.gmra.mxu0 %v2608
        %v2754 = vpop.f32.mrf.mxu0
        %v2755 = vadd.f32 0.0, %v2754
        %2756 = vmatmul.f32.gmra.mxu0 %v2611
        %v2757 = vpop.f32.mrf.mxu0
        %v2758 = vadd.f32 0.0, %v2757
        %2759 = vmatmul.f32.gmra.mxu0 %v2614
        %v2760 = vpop.f32.mrf.mxu0
        %v2761 = vadd.f32 0.0, %v2760
        %2762 = vmatmul.f32.gmra.mxu0 %v2617
        %v2763 = vpop.f32.mrf.mxu0
        %v2764 = vadd.f32 0.0, %v2763
        %2765 = vmatmul.f32.gmra.mxu0 %v2620
        %v2766 = vpop.f32.mrf.mxu0
        %v2767 = vadd.f32 0.0, %v2766
        %2768 = vmatmul.f32.gmra.mxu0 %v2623
        %v2769 = vpop.f32.mrf.mxu0
        %v2770 = vadd.f32 0.0, %v2769
        %2771 = vmatmul.f32.gmra.mxu0 %v2626
        %v2772 = vpop.f32.mrf.mxu0
        %v2773 = vadd.f32 0.0, %v2772
        %2774 = vmatmul.f32.gmra.mxu0 %v2629
        %v2775 = vpop.f32.mrf.mxu0
        %v2776 = vadd.f32 0.0, %v2775
        %2777 = vmatmul.f32.gmra.mxu0 %v2632
        %v2778 = vpop.f32.mrf.mxu0
        %v2779 = vadd.f32 0.0, %v2778
        %2780 = vmatmul.f32.gmra.mxu0 %v2635
        %v2781 = vpop.f32.mrf.mxu0
        %v2782 = vadd.f32 0.0, %v2781
        %2783 = vmatmul.f32.gmra.mxu0 %v2638
        %v2784 = vpop.f32.mrf.mxu0
        %v2785 = vadd.f32 0.0, %v2784
        %2786 = vmatmul.f32.gmra.mxu0 %v2641
        %v2787 = vpop.f32.mrf.mxu0
        %v2788 = vadd.f32 0.0, %v2787
        %2789 = vmatmul.f32.gmra.mxu0 %v2644
        %v2790 = vpop.f32.mrf.mxu0
        %v2791 = vadd.f32 0.0, %v2790
        %2792 = vmatmul.f32.gmra.mxu0 %v2647
        %v2793 = vpop.f32.mrf.mxu0
        %v2794 = vadd.f32 0.0, %v2793
        %2795 = vmatmul.f32.gmra.mxu0 %v2650
        %v2796 = vpop.f32.mrf.mxu0
        %v2797 = vadd.f32 0.0, %v2796
        %2798 = vmatmul.f32.gmra.mxu0 %v2653
        %v2799 = vpop.f32.mrf.mxu0
        %v2800 = vadd.f32 0.0, %v2799
        %2801 = vdwg.mxu0
        %2802 = vmatpush.msra.mxu0 %v549
        %2803 = vmatpush.msra.mxu0 %v548
        %2804 = vmatpush.msra.mxu0 %v547
        %2805 = vmatpush.msra.mxu0 %v546
        %2806 = vmatpush.msra.mxu0 %v545
        %2807 = vmatpush.msra.mxu0 %v544
        %2808 = vmatpush.msra.mxu0 %v543
        %2809 = vmatpush.msra.mxu0 %v542
        %2810 = vmatpush.msra.mxu0 %v541
        %2811 = vmatpush.msra.mxu0 %v540
        %2812 = vmatpush.msra.mxu0 %v539
        %2813 = vmatpush.msra.mxu0 %v538
        %2814 = vmatpush.msra.mxu0 %v537
        %2815 = vmatpush.msra.mxu0 %v536
        %2816 = vmatpush.msra.mxu0 %v535
        %2817 = vmatpush.msra.mxu0 %v534
        %2818 = vmatmul.f32.gmra.mxu0 %v2561
        %v2819 = vpop.f32.mrf.mxu0
        %v2820 = vadd.f32 %v2707, %v2819
        %2821 = vmatmul.f32.gmra.mxu0 %v2564
        %v2822 = vpop.f32.mrf.mxu0
        %v2823 = vadd.f32 %v2710, %v2822
        %2824 = vmatmul.f32.gmra.mxu0 %v2567
        %v2825 = vpop.f32.mrf.mxu0
        %v2826 = vadd.f32 %v2713, %v2825
        %2827 = vmatmul.f32.gmra.mxu0 %v2570
        %v2828 = vpop.f32.mrf.mxu0
        %v2829 = vadd.f32 %v2716, %v2828
        %2830 = vmatmul.f32.gmra.mxu0 %v2573
        %v2831 = vpop.f32.mrf.mxu0
        %v2832 = vadd.f32 %v2719, %v2831
        %2833 = vmatmul.f32.gmra.mxu0 %v2576
        %v2834 = vpop.f32.mrf.mxu0
        %v2835 = vadd.f32 %v2722, %v2834
        %2836 = vmatmul.f32.gmra.mxu0 %v2579
        %v2837 = vpop.f32.mrf.mxu0
        %v2838 = vadd.f32 %v2725, %v2837
        %2839 = vmatmul.f32.gmra.mxu0 %v2582
        %v2840 = vpop.f32.mrf.mxu0
        %v2841 = vadd.f32 %v2728, %v2840
        %2842 = vmatmul.f32.gmra.mxu0 %v2585
        %v2843 = vpop.f32.mrf.mxu0
        %v2844 = vadd.f32 %v2731, %v2843
        %2845 = vmatmul.f32.gmra.mxu0 %v2588
        %v2846 = vpop.f32.mrf.mxu0
        %v2847 = vadd.f32 %v2734, %v2846
        %2848 = vmatmul.f32.gmra.mxu0 %v2591
        %v2849 = vpop.f32.mrf.mxu0
        %v2850 = vadd.f32 %v2737, %v2849
        %2851 = vmatmul.f32.gmra.mxu0 %v2594
        %v2852 = vpop.f32.mrf.mxu0
        %v2853 = vadd.f32 %v2740, %v2852
        %2854 = vmatmul.f32.gmra.mxu0 %v2597
        %v2855 = vpop.f32.mrf.mxu0
        %v2856 = vadd.f32 %v2743, %v2855
        %2857 = vmatmul.f32.gmra.mxu0 %v2600
        %v2858 = vpop.f32.mrf.mxu0
        %v2859 = vadd.f32 %v2746, %v2858
        %2860 = vmatmul.f32.gmra.mxu0 %v2603
        %v2861 = vpop.f32.mrf.mxu0
        %v2862 = vadd.f32 %v2749, %v2861
        %2863 = vmatmul.f32.gmra.mxu0 %v2606
        %v2864 = vpop.f32.mrf.mxu0
        %v2865 = vadd.f32 %v2752, %v2864
        %2866 = vmatmul.f32.gmra.mxu0 %v2609
        %v2867 = vpop.f32.mrf.mxu0
        %v2868 = vadd.f32 %v2755, %v2867
        %2869 = vmatmul.f32.gmra.mxu0 %v2612
        %v2870 = vpop.f32.mrf.mxu0
        %v2871 = vadd.f32 %v2758, %v2870
        %2872 = vmatmul.f32.gmra.mxu0 %v2615
        %v2873 = vpop.f32.mrf.mxu0
        %v2874 = vadd.f32 %v2761, %v2873
        %2875 = vmatmul.f32.gmra.mxu0 %v2618
        %v2876 = vpop.f32.mrf.mxu0
        %v2877 = vadd.f32 %v2764, %v2876
        %2878 = vmatmul.f32.gmra.mxu0 %v2621
        %v2879 = vpop.f32.mrf.mxu0
        %v2880 = vadd.f32 %v2767, %v2879
        %2881 = vmatmul.f32.gmra.mxu0 %v2624
        %v2882 = vpop.f32.mrf.mxu0
        %v2883 = vadd.f32 %v2770, %v2882
        %2884 = vmatmul.f32.gmra.mxu0 %v2627
        %v2885 = vpop.f32.mrf.mxu0
        %v2886 = vadd.f32 %v2773, %v2885
        %2887 = vmatmul.f32.gmra.mxu0 %v2630
        %v2888 = vpop.f32.mrf.mxu0
        %v2889 = vadd.f32 %v2776, %v2888
        %2890 = vmatmul.f32.gmra.mxu0 %v2633
        %v2891 = vpop.f32.mrf.mxu0
        %v2892 = vadd.f32 %v2779, %v2891
        %2893 = vmatmul.f32.gmra.mxu0 %v2636
        %v2894 = vpop.f32.mrf.mxu0
        %v2895 = vadd.f32 %v2782, %v2894
        %2896 = vmatmul.f32.gmra.mxu0 %v2639
        %v2897 = vpop.f32.mrf.mxu0
        %v2898 = vadd.f32 %v2785, %v2897
        %2899 = vmatmul.f32.gmra.mxu0 %v2642
        %v2900 = vpop.f32.mrf.mxu0
        %v2901 = vadd.f32 %v2788, %v2900
        %2902 = vmatmul.f32.gmra.mxu0 %v2645
        %v2903 = vpop.f32.mrf.mxu0
        %v2904 = vadd.f32 %v2791, %v2903
        %2905 = vmatmul.f32.gmra.mxu0 %v2648
        %v2906 = vpop.f32.mrf.mxu0
        %v2907 = vadd.f32 %v2794, %v2906
        %2908 = vmatmul.f32.gmra.mxu0 %v2651
        %v2909 = vpop.f32.mrf.mxu0
        %v2910 = vadd.f32 %v2797, %v2909
        %2911 = vmatmul.f32.gmra.mxu0 %v2654
        %v2912 = vpop.f32.mrf.mxu0
        %v2913 = vadd.f32 %v2800, %v2912
        %2914 = vdwg.mxu0
        %2915 = vmatpush.msra.mxu0 %v565
        %2916 = vmatpush.msra.mxu0 %v564
        %2917 = vmatpush.msra.mxu0 %v563
        %2918 = vmatpush.msra.mxu0 %v562
        %2919 = vmatpush.msra.mxu0 %v561
        %2920 = vmatpush.msra.mxu0 %v560
        %2921 = vmatpush.msra.mxu0 %v559
        %2922 = vmatpush.msra.mxu0 %v558
        %2923 = vmatpush.msra.mxu0 %v557
        %2924 = vmatpush.msra.mxu0 %v556
        %2925 = vmatpush.msra.mxu0 %v555
        %2926 = vmatpush.msra.mxu0 %v554
        %2927 = vmatpush.msra.mxu0 %v553
        %2928 = vmatpush.msra.mxu0 %v552
        %2929 = vmatpush.msra.mxu0 %v551
        %2930 = vmatpush.msra.mxu0 %v550
        %2931 = vmatmul.f32.gmra.mxu0 %v2562
        %v2932 = vpop.f32.mrf.mxu0
        %v2933 = vadd.f32 %v2820, %v2932
        %2934 = vmatmul.f32.gmra.mxu0 %v2565
        %v2935 = vpop.f32.mrf.mxu0
        %v2936 = vadd.f32 %v2823, %v2935
        %2937 = vmatmul.f32.gmra.mxu0 %v2568
        %v2938 = vpop.f32.mrf.mxu0
        %v2939 = vadd.f32 %v2826, %v2938
        %2940 = vmatmul.f32.gmra.mxu0 %v2571
        %v2941 = vpop.f32.mrf.mxu0
        %v2942 = vadd.f32 %v2829, %v2941
        %2943 = vmatmul.f32.gmra.mxu0 %v2574
        %v2944 = vpop.f32.mrf.mxu0
        %v2945 = vadd.f32 %v2832, %v2944
        %2946 = vmatmul.f32.gmra.mxu0 %v2577
        %v2947 = vpop.f32.mrf.mxu0
        %v2948 = vadd.f32 %v2835, %v2947
        %2949 = vmatmul.f32.gmra.mxu0 %v2580
        %v2950 = vpop.f32.mrf.mxu0
        %v2951 = vadd.f32 %v2838, %v2950
        %2952 = vmatmul.f32.gmra.mxu0 %v2583
        %v2953 = vpop.f32.mrf.mxu0
        %v2954 = vadd.f32 %v2841, %v2953
        %2955 = vmatmul.f32.gmra.mxu0 %v2586
        %v2956 = vpop.f32.mrf.mxu0
        %v2957 = vadd.f32 %v2844, %v2956
        %2958 = vmatmul.f32.gmra.mxu0 %v2589
        %v2959 = vpop.f32.mrf.mxu0
        %v2960 = vadd.f32 %v2847, %v2959
        %2961 = vmatmul.f32.gmra.mxu0 %v2592
        %v2962 = vpop.f32.mrf.mxu0
        %v2963 = vadd.f32 %v2850, %v2962
        %2964 = vmatmul.f32.gmra.mxu0 %v2595
        %v2965 = vpop.f32.mrf.mxu0
        %v2966 = vadd.f32 %v2853, %v2965
        %2967 = vmatmul.f32.gmra.mxu0 %v2598
        %v2968 = vpop.f32.mrf.mxu0
        %v2969 = vadd.f32 %v2856, %v2968
        %2970 = vmatmul.f32.gmra.mxu0 %v2601
        %v2971 = vpop.f32.mrf.mxu0
        %v2972 = vadd.f32 %v2859, %v2971
        %2973 = vmatmul.f32.gmra.mxu0 %v2604
        %v2974 = vpop.f32.mrf.mxu0
        %v2975 = vadd.f32 %v2862, %v2974
        %2976 = vmatmul.f32.gmra.mxu0 %v2607
        %v2977 = vpop.f32.mrf.mxu0
        %v2978 = vadd.f32 %v2865, %v2977
        %2979 = vmatmul.f32.gmra.mxu0 %v2610
        %v2980 = vpop.f32.mrf.mxu0
        %v2981 = vadd.f32 %v2868, %v2980
        %2982 = vmatmul.f32.gmra.mxu0 %v2613
        %v2983 = vpop.f32.mrf.mxu0
        %v2984 = vadd.f32 %v2871, %v2983
        %2985 = vmatmul.f32.gmra.mxu0 %v2616
        %v2986 = vpop.f32.mrf.mxu0
        %v2987 = vadd.f32 %v2874, %v2986
        %2988 = vmatmul.f32.gmra.mxu0 %v2619
        %v2989 = vpop.f32.mrf.mxu0
        %v2990 = vadd.f32 %v2877, %v2989
        %2991 = vmatmul.f32.gmra.mxu0 %v2622
        %v2992 = vpop.f32.mrf.mxu0
        %v2993 = vadd.f32 %v2880, %v2992
        %2994 = vmatmul.f32.gmra.mxu0 %v2625
        %v2995 = vpop.f32.mrf.mxu0
        %v2996 = vadd.f32 %v2883, %v2995
        %2997 = vmatmul.f32.gmra.mxu0 %v2628
        %v2998 = vpop.f32.mrf.mxu0
        %v2999 = vadd.f32 %v2886, %v2998
        %3000 = vmatmul.f32.gmra.mxu0 %v2631
        %v3001 = vpop.f32.mrf.mxu0
        %v3002 = vadd.f32 %v2889, %v3001
        %3003 = vmatmul.f32.gmra.mxu0 %v2634
        %v3004 = vpop.f32.mrf.mxu0
        %v3005 = vadd.f32 %v2892, %v3004
        %3006 = vmatmul.f32.gmra.mxu0 %v2637
        %v3007 = vpop.f32.mrf.mxu0
        %v3008 = vadd.f32 %v2895, %v3007
        %3009 = vmatmul.f32.gmra.mxu0 %v2640
        %v3010 = vpop.f32.mrf.mxu0
        %v3011 = vadd.f32 %v2898, %v3010
        %3012 = vmatmul.f32.gmra.mxu0 %v2643
        %v3013 = vpop.f32.mrf.mxu0
        %v3014 = vadd.f32 %v2901, %v3013
        %3015 = vmatmul.f32.gmra.mxu0 %v2646
        %v3016 = vpop.f32.mrf.mxu0
        %v3017 = vadd.f32 %v2904, %v3016
        %3018 = vmatmul.f32.gmra.mxu0 %v2649
        %v3019 = vpop.f32.mrf.mxu0
        %v3020 = vadd.f32 %v2907, %v3019
        %3021 = vmatmul.f32.gmra.mxu0 %v2652
        %v3022 = vpop.f32.mrf.mxu0
        %v3023 = vadd.f32 %v2910, %v3022
        %3024 = vmatmul.f32.gmra.mxu0 %v2655
        %v3025 = vpop.f32.mrf.mxu0
        %v3026 = vadd.f32 %v2913, %v3025
        %3027 = vdwg.mxu0
        %v3028 = vadd.f32 %v2657, %v2933
        %v3029 = vadd.f32 %v2658, %v2936
        %v3030 = vadd.f32 %v2659, %v2939
        %v3031 = vadd.f32 %v2660, %v2942
        %v3032 = vadd.f32 %v2661, %v2945
        %v3033 = vadd.f32 %v2662, %v2948
        %v3034 = vadd.f32 %v2663, %v2951
        %v3035 = vadd.f32 %v2664, %v2954
        %v3036 = vadd.f32 %v2665, %v2957
        %v3037 = vadd.f32 %v2666, %v2960
        %v3038 = vadd.f32 %v2667, %v2963
        %v3039 = vadd.f32 %v2668, %v2966
        %v3040 = vadd.f32 %v2669, %v2969
        %v3041 = vadd.f32 %v2670, %v2972
        %v3042 = vadd.f32 %v2671, %v2975
        %v3043 = vadd.f32 %v2672, %v2978
        %v3044 = vadd.f32 %v2673, %v2981
        %v3045 = vadd.f32 %v2674, %v2984
        %v3046 = vadd.f32 %v2675, %v2987
        %v3047 = vadd.f32 %v2676, %v2990
        %v3048 = vadd.f32 %v2677, %v2993
        %v3049 = vadd.f32 %v2678, %v2996
        %v3050 = vadd.f32 %v2679, %v2999
        %v3051 = vadd.f32 %v2680, %v3002
        %v3052 = vadd.f32 %v2681, %v3005
        %v3053 = vadd.f32 %v2682, %v3008
        %v3054 = vadd.f32 %v2683, %v3011
        %v3055 = vadd.f32 %v2684, %v3014
        %v3056 = vadd.f32 %v2685, %v3017
        %v3057 = vadd.f32 %v2686, %v3020
        %v3058 = vadd.f32 %v2687, %v3023
        %v3059 = vadd.f32 %v2688, %v3026
        %3060 = vst [vmem:[%s2656] sm:$0xff] %v3028
        %3061 = vst [vmem:[%s2656 + $0x8] sm:$0xff] %v3029
        %3062 = vst [vmem:[%s2656 + $0x10] sm:$0xff] %v3030
        %3063 = vst [vmem:[%s2656 + $0x18] sm:$0xff] %v3031
        %3064 = vst [vmem:[%s2656 + $0x20] sm:$0xff] %v3032
        %3065 = vst [vmem:[%s2656 + $0x28] sm:$0xff] %v3033
        %3066 = vst [vmem:[%s2656 + $0x30] sm:$0xff] %v3034
        %3067 = vst [vmem:[%s2656 + $0x38] sm:$0xff] %v3035
        %3068 = vst [vmem:[%s2656 + $0x40] sm:$0xff] %v3036
        %3069 = vst [vmem:[%s2656 + $0x48] sm:$0xff] %v3037
        %3070 = vst [vmem:[%s2656 + $0x50] sm:$0xff] %v3038
        %3071 = vst [vmem:[%s2656 + $0x58] sm:$0xff] %v3039
        %3072 = vst [vmem:[%s2656 + $0x60] sm:$0xff] %v3040
        %3073 = vst [vmem:[%s2656 + $0x68] sm:$0xff] %v3041
        %3074 = vst [vmem:[%s2656 + $0x70] sm:$0xff] %v3042
        %3075 = vst [vmem:[%s2656 + $0x78] sm:$0xff] %v3043
        %3076 = vst [vmem:[%s2656 + $0x80] sm:$0xff] %v3044
        %3077 = vst [vmem:[%s2656 + $0x88] sm:$0xff] %v3045
        %3078 = vst [vmem:[%s2656 + $0x90] sm:$0xff] %v3046
        %3079 = vst [vmem:[%s2656 + $0x98] sm:$0xff] %v3047
        %3080 = vst [vmem:[%s2656 + $0xa0] sm:$0xff] %v3048
        %3081 = vst [vmem:[%s2656 + $0xa8] sm:$0xff] %v3049
        %3082 = vst [vmem:[%s2656 + $0xb0] sm:$0xff] %v3050
        %3083 = vst [vmem:[%s2656 + $0xb8] sm:$0xff] %v3051
        %3084 = vst [vmem:[%s2656 + $0xc0] sm:$0xff] %v3052
        %3085 = vst [vmem:[%s2656 + $0xc8] sm:$0xff] %v3053
        %3086 = vst [vmem:[%s2656 + $0xd0] sm:$0xff] %v3054
        %3087 = vst [vmem:[%s2656 + $0xd8] sm:$0xff] %v3055
        %3088 = vst [vmem:[%s2656 + $0xe0] sm:$0xff] %v3056
        %3089 = vst [vmem:[%s2656 + $0xe8] sm:$0xff] %v3057
        %3090 = vst [vmem:[%s2656 + $0xf0] sm:$0xff] %v3058
        %3091 = vst [vmem:[%s2656 + $0xf8] sm:$0xff] %v3059
        %v3092 = vadd.s32 %v485, 18
        %v3093 = vadd.s32 %v486, 18
        %v3094 = vadd.s32 %v487, 18
        %v3095 = vadd.s32 %v488, 18
        %v3096 = vadd.s32 %v489, 18
        %v3097 = vadd.s32 %v490, 18
        %v3098 = vadd.s32 %v491, 18
        %v3099 = vadd.s32 %v492, 18
        %v3100 = vadd.s32 %v493, 18
        %v3101 = vadd.s32 %v494, 18
        %v3102 = vadd.s32 %v495, 18
        %v3103 = vadd.s32 %v496, 18
        %v3104 = vadd.s32 %v497, 18
        %v3105 = vadd.s32 %v498, 18
        %v3106 = vadd.s32 %v499, 18
        %v3107 = vadd.s32 %v500, 18
        %v3108 = vadd.s32 %v501, 18
        %v3109 = vadd.s32 %v502, 18
        %v3110 = vadd.s32 %v503, 18
        %v3111 = vadd.s32 %v504, 18
        %v3112 = vadd.s32 %v505, 18
        %v3113 = vadd.s32 %v506, 18
        %v3114 = vadd.s32 %v507, 18
        %v3115 = vadd.s32 %v508, 18
        %v3116 = vadd.s32 %v509, 18
        %v3117 = vadd.s32 %v510, 18
        %v3118 = vadd.s32 %v511, 18
        %v3119 = vadd.s32 %v512, 18
        %v3120 = vadd.s32 %v513, 18
        %v3121 = vadd.s32 %v514, 18
        %v3122 = vadd.s32 %v515, 18
        %v3123 = vadd.s32 %v516, 18
        %3124 = vset.pattern.permute.xlu0 0
        %3125 = vperm.xlu0 %3124, %v3092
        %v3126 = vpop.permute.xlu0 %3125
        %3127 = vset.pattern.permute.xlu0 0
        %3128 = vperm.xlu0 %3127, %v3093
        %v3129 = vpop.permute.xlu0 %3128
        %3130 = vset.pattern.permute.xlu0 0
        %3131 = vperm.xlu0 %3130, %v3094
        %v3132 = vpop.permute.xlu0 %3131
        %3133 = vset.pattern.permute.xlu0 0
        %3134 = vperm.xlu0 %3133, %v3095
        %v3135 = vpop.permute.xlu0 %3134
        %3136 = vset.pattern.permute.xlu0 0
        %3137 = vperm.xlu0 %3136, %v3096
        %v3138 = vpop.permute.xlu0 %3137
        %3139 = vset.pattern.permute.xlu0 0
        %3140 = vperm.xlu0 %3139, %v3097
        %v3141 = vpop.permute.xlu0 %3140
        %3142 = vset.pattern.permute.xlu0 0
        %3143 = vperm.xlu0 %3142, %v3098
        %v3144 = vpop.permute.xlu0 %3143
        %3145 = vset.pattern.permute.xlu0 0
        %3146 = vperm.xlu0 %3145, %v3099
        %v3147 = vpop.permute.xlu0 %3146
        %3148 = vset.pattern.permute.xlu0 0
        %3149 = vperm.xlu0 %3148, %v3100
        %v3150 = vpop.permute.xlu0 %3149
        %3151 = vset.pattern.permute.xlu0 0
        %3152 = vperm.xlu0 %3151, %v3101
        %v3153 = vpop.permute.xlu0 %3152
        %3154 = vset.pattern.permute.xlu0 0
        %3155 = vperm.xlu0 %3154, %v3102
        %v3156 = vpop.permute.xlu0 %3155
        %3157 = vset.pattern.permute.xlu0 0
        %3158 = vperm.xlu0 %3157, %v3103
        %v3159 = vpop.permute.xlu0 %3158
        %3160 = vset.pattern.permute.xlu0 0
        %3161 = vperm.xlu0 %3160, %v3104
        %v3162 = vpop.permute.xlu0 %3161
        %3163 = vset.pattern.permute.xlu0 0
        %3164 = vperm.xlu0 %3163, %v3105
        %v3165 = vpop.permute.xlu0 %3164
        %3166 = vset.pattern.permute.xlu0 0
        %3167 = vperm.xlu0 %3166, %v3106
        %v3168 = vpop.permute.xlu0 %3167
        %3169 = vset.pattern.permute.xlu0 0
        %3170 = vperm.xlu0 %3169, %v3107
        %v3171 = vpop.permute.xlu0 %3170
        %3172 = vset.pattern.permute.xlu0 0
        %3173 = vperm.xlu0 %3172, %v3108
        %v3174 = vpop.permute.xlu0 %3173
        %3175 = vset.pattern.permute.xlu0 0
        %3176 = vperm.xlu0 %3175, %v3109
        %v3177 = vpop.permute.xlu0 %3176
        %3178 = vset.pattern.permute.xlu0 0
        %3179 = vperm.xlu0 %3178, %v3110
        %v3180 = vpop.permute.xlu0 %3179
        %3181 = vset.pattern.permute.xlu0 0
        %3182 = vperm.xlu0 %3181, %v3111
        %v3183 = vpop.permute.xlu0 %3182
        %3184 = vset.pattern.permute.xlu0 0
        %3185 = vperm.xlu0 %3184, %v3112
        %v3186 = vpop.permute.xlu0 %3185
        %3187 = vset.pattern.permute.xlu0 0
        %3188 = vperm.xlu0 %3187, %v3113
        %v3189 = vpop.permute.xlu0 %3188
        %3190 = vset.pattern.permute.xlu0 0
        %3191 = vperm.xlu0 %3190, %v3114
        %v3192 = vpop.permute.xlu0 %3191
        %3193 = vset.pattern.permute.xlu0 0
        %3194 = vperm.xlu0 %3193, %v3115
        %v3195 = vpop.permute.xlu0 %3194
        %3196 = vset.pattern.permute.xlu0 0
        %3197 = vperm.xlu0 %3196, %v3116
        %v3198 = vpop.permute.xlu0 %3197
        %3199 = vset.pattern.permute.xlu0 0
        %3200 = vperm.xlu0 %3199, %v3117
        %v3201 = vpop.permute.xlu0 %3200
        %3202 = vset.pattern.permute.xlu0 0
        %3203 = vperm.xlu0 %3202, %v3118
        %v3204 = vpop.permute.xlu0 %3203
        %3205 = vset.pattern.permute.xlu0 0
        %3206 = vperm.xlu0 %3205, %v3119
        %v3207 = vpop.permute.xlu0 %3206
        %3208 = vset.pattern.permute.xlu0 0
        %3209 = vperm.xlu0 %3208, %v3120
        %v3210 = vpop.permute.xlu0 %3209
        %3211 = vset.pattern.permute.xlu0 0
        %3212 = vperm.xlu0 %3211, %v3121
        %v3213 = vpop.permute.xlu0 %3212
        %3214 = vset.pattern.permute.xlu0 0
        %3215 = vperm.xlu0 %3214, %v3122
        %v3216 = vpop.permute.xlu0 %3215
        %3217 = vset.pattern.permute.xlu0 0
        %3218 = vperm.xlu0 %3217, %v3123
        %v3219 = vpop.permute.xlu0 %3218
        %vm3220 = vcmp.eq.s32.totalorder %v3126, %v662
        %vm3221 = vcmp.eq.s32.totalorder %v3126, %v663
        %vm3222 = vcmp.eq.s32.totalorder %v3126, %v664
        %vm3223 = vcmp.eq.s32.totalorder %v3129, %v662
        %vm3224 = vcmp.eq.s32.totalorder %v3129, %v663
        %vm3225 = vcmp.eq.s32.totalorder %v3129, %v664
        %vm3226 = vcmp.eq.s32.totalorder %v3132, %v662
        %vm3227 = vcmp.eq.s32.totalorder %v3132, %v663
        %vm3228 = vcmp.eq.s32.totalorder %v3132, %v664
        %vm3229 = vcmp.eq.s32.totalorder %v3135, %v662
        %vm3230 = vcmp.eq.s32.totalorder %v3135, %v663
        %vm3231 = vcmp.eq.s32.totalorder %v3135, %v664
        %vm3232 = vcmp.eq.s32.totalorder %v3138, %v662
        %vm3233 = vcmp.eq.s32.totalorder %v3138, %v663
        %vm3234 = vcmp.eq.s32.totalorder %v3138, %v664
        %vm3235 = vcmp.eq.s32.totalorder %v3141, %v662
        %vm3236 = vcmp.eq.s32.totalorder %v3141, %v663
        %vm3237 = vcmp.eq.s32.totalorder %v3141, %v664
        %vm3238 = vcmp.eq.s32.totalorder %v3144, %v662
        %vm3239 = vcmp.eq.s32.totalorder %v3144, %v663
        %vm3240 = vcmp.eq.s32.totalorder %v3144, %v664
        %vm3241 = vcmp.eq.s32.totalorder %v3147, %v662
        %vm3242 = vcmp.eq.s32.totalorder %v3147, %v663
        %vm3243 = vcmp.eq.s32.totalorder %v3147, %v664
        %vm3244 = vcmp.eq.s32.totalorder %v3150, %v662
        %vm3245 = vcmp.eq.s32.totalorder %v3150, %v663
        %vm3246 = vcmp.eq.s32.totalorder %v3150, %v664
        %vm3247 = vcmp.eq.s32.totalorder %v3153, %v662
        %vm3248 = vcmp.eq.s32.totalorder %v3153, %v663
        %vm3249 = vcmp.eq.s32.totalorder %v3153, %v664
        %vm3250 = vcmp.eq.s32.totalorder %v3156, %v662
        %vm3251 = vcmp.eq.s32.totalorder %v3156, %v663
        %vm3252 = vcmp.eq.s32.totalorder %v3156, %v664
        %vm3253 = vcmp.eq.s32.totalorder %v3159, %v662
        %vm3254 = vcmp.eq.s32.totalorder %v3159, %v663
        %vm3255 = vcmp.eq.s32.totalorder %v3159, %v664
        %vm3256 = vcmp.eq.s32.totalorder %v3162, %v662
        %vm3257 = vcmp.eq.s32.totalorder %v3162, %v663
        %vm3258 = vcmp.eq.s32.totalorder %v3162, %v664
        %vm3259 = vcmp.eq.s32.totalorder %v3165, %v662
        %vm3260 = vcmp.eq.s32.totalorder %v3165, %v663
        %vm3261 = vcmp.eq.s32.totalorder %v3165, %v664
        %vm3262 = vcmp.eq.s32.totalorder %v3168, %v662
        %vm3263 = vcmp.eq.s32.totalorder %v3168, %v663
        %vm3264 = vcmp.eq.s32.totalorder %v3168, %v664
        %vm3265 = vcmp.eq.s32.totalorder %v3171, %v662
        %vm3266 = vcmp.eq.s32.totalorder %v3171, %v663
        %vm3267 = vcmp.eq.s32.totalorder %v3171, %v664
        %vm3268 = vcmp.eq.s32.totalorder %v3174, %v662
        %vm3269 = vcmp.eq.s32.totalorder %v3174, %v663
        %vm3270 = vcmp.eq.s32.totalorder %v3174, %v664
        %vm3271 = vcmp.eq.s32.totalorder %v3177, %v662
        %vm3272 = vcmp.eq.s32.totalorder %v3177, %v663
        %vm3273 = vcmp.eq.s32.totalorder %v3177, %v664
        %vm3274 = vcmp.eq.s32.totalorder %v3180, %v662
        %vm3275 = vcmp.eq.s32.totalorder %v3180, %v663
        %vm3276 = vcmp.eq.s32.totalorder %v3180, %v664
        %vm3277 = vcmp.eq.s32.totalorder %v3183, %v662
        %vm3278 = vcmp.eq.s32.totalorder %v3183, %v663
        %vm3279 = vcmp.eq.s32.totalorder %v3183, %v664
        %vm3280 = vcmp.eq.s32.totalorder %v3186, %v662
        %vm3281 = vcmp.eq.s32.totalorder %v3186, %v663
        %vm3282 = vcmp.eq.s32.totalorder %v3186, %v664
        %vm3283 = vcmp.eq.s32.totalorder %v3189, %v662
        %vm3284 = vcmp.eq.s32.totalorder %v3189, %v663
        %vm3285 = vcmp.eq.s32.totalorder %v3189, %v664
        %vm3286 = vcmp.eq.s32.totalorder %v3192, %v662
        %vm3287 = vcmp.eq.s32.totalorder %v3192, %v663
        %vm3288 = vcmp.eq.s32.totalorder %v3192, %v664
        %vm3289 = vcmp.eq.s32.totalorder %v3195, %v662
        %vm3290 = vcmp.eq.s32.totalorder %v3195, %v663
        %vm3291 = vcmp.eq.s32.totalorder %v3195, %v664
        %vm3292 = vcmp.eq.s32.totalorder %v3198, %v662
        %vm3293 = vcmp.eq.s32.totalorder %v3198, %v663
        %vm3294 = vcmp.eq.s32.totalorder %v3198, %v664
        %vm3295 = vcmp.eq.s32.totalorder %v3201, %v662
        %vm3296 = vcmp.eq.s32.totalorder %v3201, %v663
        %vm3297 = vcmp.eq.s32.totalorder %v3201, %v664
        %vm3298 = vcmp.eq.s32.totalorder %v3204, %v662
        %vm3299 = vcmp.eq.s32.totalorder %v3204, %v663
        %vm3300 = vcmp.eq.s32.totalorder %v3204, %v664
        %vm3301 = vcmp.eq.s32.totalorder %v3207, %v662
        %vm3302 = vcmp.eq.s32.totalorder %v3207, %v663
        %vm3303 = vcmp.eq.s32.totalorder %v3207, %v664
        %vm3304 = vcmp.eq.s32.totalorder %v3210, %v662
        %vm3305 = vcmp.eq.s32.totalorder %v3210, %v663
        %vm3306 = vcmp.eq.s32.totalorder %v3210, %v664
        %vm3307 = vcmp.eq.s32.totalorder %v3213, %v662
        %vm3308 = vcmp.eq.s32.totalorder %v3213, %v663
        %vm3309 = vcmp.eq.s32.totalorder %v3213, %v664
        %vm3310 = vcmp.eq.s32.totalorder %v3216, %v662
        %vm3311 = vcmp.eq.s32.totalorder %v3216, %v663
        %vm3312 = vcmp.eq.s32.totalorder %v3216, %v664
        %vm3313 = vcmp.eq.s32.totalorder %v3219, %v662
        %vm3314 = vcmp.eq.s32.totalorder %v3219, %v663
        %vm3315 = vcmp.eq.s32.totalorder %v3219, %v664
        %v3316 = vsel %vm3220, 1, 0
        %v3317 = vsel %vm3221, 1, 0
        %v3318 = vsel %vm3222, 1, 0
        %v3319 = vsel %vm3223, 1, 0
        %v3320 = vsel %vm3224, 1, 0
        %v3321 = vsel %vm3225, 1, 0
        %v3322 = vsel %vm3226, 1, 0
        %v3323 = vsel %vm3227, 1, 0
        %v3324 = vsel %vm3228, 1, 0
        %v3325 = vsel %vm3229, 1, 0
        %v3326 = vsel %vm3230, 1, 0
        %v3327 = vsel %vm3231, 1, 0
        %v3328 = vsel %vm3232, 1, 0
        %v3329 = vsel %vm3233, 1, 0
        %v3330 = vsel %vm3234, 1, 0
        %v3331 = vsel %vm3235, 1, 0
        %v3332 = vsel %vm3236, 1, 0
        %v3333 = vsel %vm3237, 1, 0
        %v3334 = vsel %vm3238, 1, 0
        %v3335 = vsel %vm3239, 1, 0
        %v3336 = vsel %vm3240, 1, 0
        %v3337 = vsel %vm3241, 1, 0
        %v3338 = vsel %vm3242, 1, 0
        %v3339 = vsel %vm3243, 1, 0
        %v3340 = vsel %vm3244, 1, 0
        %v3341 = vsel %vm3245, 1, 0
        %v3342 = vsel %vm3246, 1, 0
        %v3343 = vsel %vm3247, 1, 0
        %v3344 = vsel %vm3248, 1, 0
        %v3345 = vsel %vm3249, 1, 0
        %v3346 = vsel %vm3250, 1, 0
        %v3347 = vsel %vm3251, 1, 0
        %v3348 = vsel %vm3252, 1, 0
        %v3349 = vsel %vm3253, 1, 0
        %v3350 = vsel %vm3254, 1, 0
        %v3351 = vsel %vm3255, 1, 0
        %v3352 = vsel %vm3256, 1, 0
        %v3353 = vsel %vm3257, 1, 0
        %v3354 = vsel %vm3258, 1, 0
        %v3355 = vsel %vm3259, 1, 0
        %v3356 = vsel %vm3260, 1, 0
        %v3357 = vsel %vm3261, 1, 0
        %v3358 = vsel %vm3262, 1, 0
        %v3359 = vsel %vm3263, 1, 0
        %v3360 = vsel %vm3264, 1, 0
        %v3361 = vsel %vm3265, 1, 0
        %v3362 = vsel %vm3266, 1, 0
        %v3363 = vsel %vm3267, 1, 0
        %v3364 = vsel %vm3268, 1, 0
        %v3365 = vsel %vm3269, 1, 0
        %v3366 = vsel %vm3270, 1, 0
        %v3367 = vsel %vm3271, 1, 0
        %v3368 = vsel %vm3272, 1, 0
        %v3369 = vsel %vm3273, 1, 0
        %v3370 = vsel %vm3274, 1, 0
        %v3371 = vsel %vm3275, 1, 0
        %v3372 = vsel %vm3276, 1, 0
        %v3373 = vsel %vm3277, 1, 0
        %v3374 = vsel %vm3278, 1, 0
        %v3375 = vsel %vm3279, 1, 0
        %v3376 = vsel %vm3280, 1, 0
        %v3377 = vsel %vm3281, 1, 0
        %v3378 = vsel %vm3282, 1, 0
        %v3379 = vsel %vm3283, 1, 0
        %v3380 = vsel %vm3284, 1, 0
        %v3381 = vsel %vm3285, 1, 0
        %v3382 = vsel %vm3286, 1, 0
        %v3383 = vsel %vm3287, 1, 0
        %v3384 = vsel %vm3288, 1, 0
        %v3385 = vsel %vm3289, 1, 0
        %v3386 = vsel %vm3290, 1, 0
        %v3387 = vsel %vm3291, 1, 0
        %v3388 = vsel %vm3292, 1, 0
        %v3389 = vsel %vm3293, 1, 0
        %v3390 = vsel %vm3294, 1, 0
        %v3391 = vsel %vm3295, 1, 0
        %v3392 = vsel %vm3296, 1, 0
        %v3393 = vsel %vm3297, 1, 0
        %v3394 = vsel %vm3298, 1, 0
        %v3395 = vsel %vm3299, 1, 0
        %v3396 = vsel %vm3300, 1, 0
        %v3397 = vsel %vm3301, 1, 0
        %v3398 = vsel %vm3302, 1, 0
        %v3399 = vsel %vm3303, 1, 0
        %v3400 = vsel %vm3304, 1, 0
        %v3401 = vsel %vm3305, 1, 0
        %v3402 = vsel %vm3306, 1, 0
        %v3403 = vsel %vm3307, 1, 0
        %v3404 = vsel %vm3308, 1, 0
        %v3405 = vsel %vm3309, 1, 0
        %v3406 = vsel %vm3310, 1, 0
        %v3407 = vsel %vm3311, 1, 0
        %v3408 = vsel %vm3312, 1, 0
        %v3409 = vsel %vm3313, 1, 0
        %v3410 = vsel %vm3314, 1, 0
        %v3411 = vsel %vm3315, 1, 0
        %v3412 = vcvt.s32.f32 %v3316
        %v3413 = vcvt.s32.f32 %v3317
        %v3414 = vcvt.s32.f32 %v3318
        %v3415 = vcvt.s32.f32 %v3319
        %v3416 = vcvt.s32.f32 %v3320
        %v3417 = vcvt.s32.f32 %v3321
        %v3418 = vcvt.s32.f32 %v3322
        %v3419 = vcvt.s32.f32 %v3323
        %v3420 = vcvt.s32.f32 %v3324
        %v3421 = vcvt.s32.f32 %v3325
        %v3422 = vcvt.s32.f32 %v3326
        %v3423 = vcvt.s32.f32 %v3327
        %v3424 = vcvt.s32.f32 %v3328
        %v3425 = vcvt.s32.f32 %v3329
        %v3426 = vcvt.s32.f32 %v3330
        %v3427 = vcvt.s32.f32 %v3331
        %v3428 = vcvt.s32.f32 %v3332
        %v3429 = vcvt.s32.f32 %v3333
        %v3430 = vcvt.s32.f32 %v3334
        %v3431 = vcvt.s32.f32 %v3335
        %v3432 = vcvt.s32.f32 %v3336
        %v3433 = vcvt.s32.f32 %v3337
        %v3434 = vcvt.s32.f32 %v3338
        %v3435 = vcvt.s32.f32 %v3339
        %v3436 = vcvt.s32.f32 %v3340
        %v3437 = vcvt.s32.f32 %v3341
        %v3438 = vcvt.s32.f32 %v3342
        %v3439 = vcvt.s32.f32 %v3343
        %v3440 = vcvt.s32.f32 %v3344
        %v3441 = vcvt.s32.f32 %v3345
        %v3442 = vcvt.s32.f32 %v3346
        %v3443 = vcvt.s32.f32 %v3347
        %v3444 = vcvt.s32.f32 %v3348
        %v3445 = vcvt.s32.f32 %v3349
        %v3446 = vcvt.s32.f32 %v3350
        %v3447 = vcvt.s32.f32 %v3351
        %v3448 = vcvt.s32.f32 %v3352
        %v3449 = vcvt.s32.f32 %v3353
        %v3450 = vcvt.s32.f32 %v3354
        %v3451 = vcvt.s32.f32 %v3355
        %v3452 = vcvt.s32.f32 %v3356
        %v3453 = vcvt.s32.f32 %v3357
        %v3454 = vcvt.s32.f32 %v3358
        %v3455 = vcvt.s32.f32 %v3359
        %v3456 = vcvt.s32.f32 %v3360
        %v3457 = vcvt.s32.f32 %v3361
        %v3458 = vcvt.s32.f32 %v3362
        %v3459 = vcvt.s32.f32 %v3363
        %v3460 = vcvt.s32.f32 %v3364
        %v3461 = vcvt.s32.f32 %v3365
        %v3462 = vcvt.s32.f32 %v3366
        %v3463 = vcvt.s32.f32 %v3367
        %v3464 = vcvt.s32.f32 %v3368
        %v3465 = vcvt.s32.f32 %v3369
        %v3466 = vcvt.s32.f32 %v3370
        %v3467 = vcvt.s32.f32 %v3371
        %v3468 = vcvt.s32.f32 %v3372
        %v3469 = vcvt.s32.f32 %v3373
        %v3470 = vcvt.s32.f32 %v3374
        %v3471 = vcvt.s32.f32 %v3375
        %v3472 = vcvt.s32.f32 %v3376
        %v3473 = vcvt.s32.f32 %v3377
        %v3474 = vcvt.s32.f32 %v3378
        %v3475 = vcvt.s32.f32 %v3379
        %v3476 = vcvt.s32.f32 %v3380
        %v3477 = vcvt.s32.f32 %v3381
        %v3478 = vcvt.s32.f32 %v3382
        %v3479 = vcvt.s32.f32 %v3383
        %v3480 = vcvt.s32.f32 %v3384
        %v3481 = vcvt.s32.f32 %v3385
        %v3482 = vcvt.s32.f32 %v3386
        %v3483 = vcvt.s32.f32 %v3387
        %v3484 = vcvt.s32.f32 %v3388
        %v3485 = vcvt.s32.f32 %v3389
        %v3486 = vcvt.s32.f32 %v3390
        %v3487 = vcvt.s32.f32 %v3391
        %v3488 = vcvt.s32.f32 %v3392
        %v3489 = vcvt.s32.f32 %v3393
        %v3490 = vcvt.s32.f32 %v3394
        %v3491 = vcvt.s32.f32 %v3395
        %v3492 = vcvt.s32.f32 %v3396
        %v3493 = vcvt.s32.f32 %v3397
        %v3494 = vcvt.s32.f32 %v3398
        %v3495 = vcvt.s32.f32 %v3399
        %v3496 = vcvt.s32.f32 %v3400
        %v3497 = vcvt.s32.f32 %v3401
        %v3498 = vcvt.s32.f32 %v3402
        %v3499 = vcvt.s32.f32 %v3403
        %v3500 = vcvt.s32.f32 %v3404
        %v3501 = vcvt.s32.f32 %v3405
        %v3502 = vcvt.s32.f32 %v3406
        %v3503 = vcvt.s32.f32 %v3407
        %v3504 = vcvt.s32.f32 %v3408
        %v3505 = vcvt.s32.f32 %v3409
        %v3506 = vcvt.s32.f32 %v3410
        %v3507 = vcvt.s32.f32 %v3411
        %s3508 = scalar_lea.vmem [#allocation2], 768
        %v3509 = vld [vmem:[%s3508] sm:$0xff]
        %v3510 = vld [vmem:[%s3508 + $0x8] sm:$0xff]
        %v3511 = vld [vmem:[%s3508 + $0x10] sm:$0xff]
        %v3512 = vld [vmem:[%s3508 + $0x18] sm:$0xff]
        %v3513 = vld [vmem:[%s3508 + $0x20] sm:$0xff]
        %v3514 = vld [vmem:[%s3508 + $0x28] sm:$0xff]
        %v3515 = vld [vmem:[%s3508 + $0x30] sm:$0xff]
        %v3516 = vld [vmem:[%s3508 + $0x38] sm:$0xff]
        %v3517 = vld [vmem:[%s3508 + $0x40] sm:$0xff]
        %v3518 = vld [vmem:[%s3508 + $0x48] sm:$0xff]
        %v3519 = vld [vmem:[%s3508 + $0x50] sm:$0xff]
        %v3520 = vld [vmem:[%s3508 + $0x58] sm:$0xff]
        %v3521 = vld [vmem:[%s3508 + $0x60] sm:$0xff]
        %v3522 = vld [vmem:[%s3508 + $0x68] sm:$0xff]
        %v3523 = vld [vmem:[%s3508 + $0x70] sm:$0xff]
        %v3524 = vld [vmem:[%s3508 + $0x78] sm:$0xff]
        %v3525 = vld [vmem:[%s3508 + $0x80] sm:$0xff]
        %v3526 = vld [vmem:[%s3508 + $0x88] sm:$0xff]
        %v3527 = vld [vmem:[%s3508 + $0x90] sm:$0xff]
        %v3528 = vld [vmem:[%s3508 + $0x98] sm:$0xff]
        %v3529 = vld [vmem:[%s3508 + $0xa0] sm:$0xff]
        %v3530 = vld [vmem:[%s3508 + $0xa8] sm:$0xff]
        %v3531 = vld [vmem:[%s3508 + $0xb0] sm:$0xff]
        %v3532 = vld [vmem:[%s3508 + $0xb8] sm:$0xff]
        %v3533 = vld [vmem:[%s3508 + $0xc0] sm:$0xff]
        %v3534 = vld [vmem:[%s3508 + $0xc8] sm:$0xff]
        %v3535 = vld [vmem:[%s3508 + $0xd0] sm:$0xff]
        %v3536 = vld [vmem:[%s3508 + $0xd8] sm:$0xff]
        %v3537 = vld [vmem:[%s3508 + $0xe0] sm:$0xff]
        %v3538 = vld [vmem:[%s3508 + $0xe8] sm:$0xff]
        %v3539 = vld [vmem:[%s3508 + $0xf0] sm:$0xff]
        %v3540 = vld [vmem:[%s3508 + $0xf8] sm:$0xff]
        %3541 = vmatpush.msra.mxu0 %v533
        %3542 = vmatpush.msra.mxu0 %v532
        %3543 = vmatpush.msra.mxu0 %v531
        %3544 = vmatpush.msra.mxu0 %v530
        %3545 = vmatpush.msra.mxu0 %v529
        %3546 = vmatpush.msra.mxu0 %v528
        %3547 = vmatpush.msra.mxu0 %v527
        %3548 = vmatpush.msra.mxu0 %v526
        %3549 = vmatpush.msra.mxu0 %v525
        %3550 = vmatpush.msra.mxu0 %v524
        %3551 = vmatpush.msra.mxu0 %v523
        %3552 = vmatpush.msra.mxu0 %v522
        %3553 = vmatpush.msra.mxu0 %v521
        %3554 = vmatpush.msra.mxu0 %v520
        %3555 = vmatpush.msra.mxu0 %v519
        %3556 = vmatpush.msra.mxu0 %v518
        %3557 = vmatmul.f32.gmra.mxu0 %v3412
        %v3558 = vpop.f32.mrf.mxu0
        %v3559 = vadd.f32 0.0, %v3558
        %3560 = vmatmul.f32.gmra.mxu0 %v3415
        %v3561 = vpop.f32.mrf.mxu0
        %v3562 = vadd.f32 0.0, %v3561
        %3563 = vmatmul.f32.gmra.mxu0 %v3418
        %v3564 = vpop.f32.mrf.mxu0
        %v3565 = vadd.f32 0.0, %v3564
        %3566 = vmatmul.f32.gmra.mxu0 %v3421
        %v3567 = vpop.f32.mrf.mxu0
        %v3568 = vadd.f32 0.0, %v3567
        %3569 = vmatmul.f32.gmra.mxu0 %v3424
        %v3570 = vpop.f32.mrf.mxu0
        %v3571 = vadd.f32 0.0, %v3570
        %3572 = vmatmul.f32.gmra.mxu0 %v3427
        %v3573 = vpop.f32.mrf.mxu0
        %v3574 = vadd.f32 0.0, %v3573
        %3575 = vmatmul.f32.gmra.mxu0 %v3430
        %v3576 = vpop.f32.mrf.mxu0
        %v3577 = vadd.f32 0.0, %v3576
        %3578 = vmatmul.f32.gmra.mxu0 %v3433
        %v3579 = vpop.f32.mrf.mxu0
        %v3580 = vadd.f32 0.0, %v3579
        %3581 = vmatmul.f32.gmra.mxu0 %v3436
        %v3582 = vpop.f32.mrf.mxu0
        %v3583 = vadd.f32 0.0, %v3582
        %3584 = vmatmul.f32.gmra.mxu0 %v3439
        %v3585 = vpop.f32.mrf.mxu0
        %v3586 = vadd.f32 0.0, %v3585
        %3587 = vmatmul.f32.gmra.mxu0 %v3442
        %v3588 = vpop.f32.mrf.mxu0
        %v3589 = vadd.f32 0.0, %v3588
        %3590 = vmatmul.f32.gmra.mxu0 %v3445
        %v3591 = vpop.f32.mrf.mxu0
        %v3592 = vadd.f32 0.0, %v3591
        %3593 = vmatmul.f32.gmra.mxu0 %v3448
        %v3594 = vpop.f32.mrf.mxu0
        %v3595 = vadd.f32 0.0, %v3594
        %3596 = vmatmul.f32.gmra.mxu0 %v3451
        %v3597 = vpop.f32.mrf.mxu0
        %v3598 = vadd.f32 0.0, %v3597
        %3599 = vmatmul.f32.gmra.mxu0 %v3454
        %v3600 = vpop.f32.mrf.mxu0
        %v3601 = vadd.f32 0.0, %v3600
        %3602 = vmatmul.f32.gmra.mxu0 %v3457
        %v3603 = vpop.f32.mrf.mxu0
        %v3604 = vadd.f32 0.0, %v3603
        %3605 = vmatmul.f32.gmra.mxu0 %v3460
        %v3606 = vpop.f32.mrf.mxu0
        %v3607 = vadd.f32 0.0, %v3606
        %3608 = vmatmul.f32.gmra.mxu0 %v3463
        %v3609 = vpop.f32.mrf.mxu0
        %v3610 = vadd.f32 0.0, %v3609
        %3611 = vmatmul.f32.gmra.mxu0 %v3466
        %v3612 = vpop.f32.mrf.mxu0
        %v3613 = vadd.f32 0.0, %v3612
        %3614 = vmatmul.f32.gmra.mxu0 %v3469
        %v3615 = vpop.f32.mrf.mxu0
        %v3616 = vadd.f32 0.0, %v3615
        %3617 = vmatmul.f32.gmra.mxu0 %v3472
        %v3618 = vpop.f32.mrf.mxu0
        %v3619 = vadd.f32 0.0, %v3618
        %3620 = vmatmul.f32.gmra.mxu0 %v3475
        %v3621 = vpop.f32.mrf.mxu0
        %v3622 = vadd.f32 0.0, %v3621
        %3623 = vmatmul.f32.gmra.mxu0 %v3478
        %v3624 = vpop.f32.mrf.mxu0
        %v3625 = vadd.f32 0.0, %v3624
        %3626 = vmatmul.f32.gmra.mxu0 %v3481
        %v3627 = vpop.f32.mrf.mxu0
        %v3628 = vadd.f32 0.0, %v3627
        %3629 = vmatmul.f32.gmra.mxu0 %v3484
        %v3630 = vpop.f32.mrf.mxu0
        %v3631 = vadd.f32 0.0, %v3630
        %3632 = vmatmul.f32.gmra.mxu0 %v3487
        %v3633 = vpop.f32.mrf.mxu0
        %v3634 = vadd.f32 0.0, %v3633
        %3635 = vmatmul.f32.gmra.mxu0 %v3490
        %v3636 = vpop.f32.mrf.mxu0
        %v3637 = vadd.f32 0.0, %v3636
        %3638 = vmatmul.f32.gmra.mxu0 %v3493
        %v3639 = vpop.f32.mrf.mxu0
        %v3640 = vadd.f32 0.0, %v3639
        %3641 = vmatmul.f32.gmra.mxu0 %v3496
        %v3642 = vpop.f32.mrf.mxu0
        %v3643 = vadd.f32 0.0, %v3642
        %3644 = vmatmul.f32.gmra.mxu0 %v3499
        %v3645 = vpop.f32.mrf.mxu0
        %v3646 = vadd.f32 0.0, %v3645
        %3647 = vmatmul.f32.gmra.mxu0 %v3502
        %v3648 = vpop.f32.mrf.mxu0
        %v3649 = vadd.f32 0.0, %v3648
        %3650 = vmatmul.f32.gmra.mxu0 %v3505
        %v3651 = vpop.f32.mrf.mxu0
        %v3652 = vadd.f32 0.0, %v3651
        %3653 = vdwg.mxu0
        %3654 = vmatpush.msra.mxu0 %v549
        %3655 = vmatpush.msra.mxu0 %v548
        %3656 = vmatpush.msra.mxu0 %v547
        %3657 = vmatpush.msra.mxu0 %v546
        %3658 = vmatpush.msra.mxu0 %v545
        %3659 = vmatpush.msra.mxu0 %v544
        %3660 = vmatpush.msra.mxu0 %v543
        %3661 = vmatpush.msra.mxu0 %v542
        %3662 = vmatpush.msra.mxu0 %v541
        %3663 = vmatpush.msra.mxu0 %v540
        %3664 = vmatpush.msra.mxu0 %v539
        %3665 = vmatpush.msra.mxu0 %v538
        %3666 = vmatpush.msra.mxu0 %v537
        %3667 = vmatpush.msra.mxu0 %v536
        %3668 = vmatpush.msra.mxu0 %v535
        %3669 = vmatpush.msra.mxu0 %v534
        %3670 = vmatmul.f32.gmra.mxu0 %v3413
        %v3671 = vpop.f32.mrf.mxu0
        %v3672 = vadd.f32 %v3559, %v3671
        %3673 = vmatmul.f32.gmra.mxu0 %v3416
        %v3674 = vpop.f32.mrf.mxu0
        %v3675 = vadd.f32 %v3562, %v3674
        %3676 = vmatmul.f32.gmra.mxu0 %v3419
        %v3677 = vpop.f32.mrf.mxu0
        %v3678 = vadd.f32 %v3565, %v3677
        %3679 = vmatmul.f32.gmra.mxu0 %v3422
        %v3680 = vpop.f32.mrf.mxu0
        %v3681 = vadd.f32 %v3568, %v3680
        %3682 = vmatmul.f32.gmra.mxu0 %v3425
        %v3683 = vpop.f32.mrf.mxu0
        %v3684 = vadd.f32 %v3571, %v3683
        %3685 = vmatmul.f32.gmra.mxu0 %v3428
        %v3686 = vpop.f32.mrf.mxu0
        %v3687 = vadd.f32 %v3574, %v3686
        %3688 = vmatmul.f32.gmra.mxu0 %v3431
        %v3689 = vpop.f32.mrf.mxu0
        %v3690 = vadd.f32 %v3577, %v3689
        %3691 = vmatmul.f32.gmra.mxu0 %v3434
        %v3692 = vpop.f32.mrf.mxu0
        %v3693 = vadd.f32 %v3580, %v3692
        %3694 = vmatmul.f32.gmra.mxu0 %v3437
        %v3695 = vpop.f32.mrf.mxu0
        %v3696 = vadd.f32 %v3583, %v3695
        %3697 = vmatmul.f32.gmra.mxu0 %v3440
        %v3698 = vpop.f32.mrf.mxu0
        %v3699 = vadd.f32 %v3586, %v3698
        %3700 = vmatmul.f32.gmra.mxu0 %v3443
        %v3701 = vpop.f32.mrf.mxu0
        %v3702 = vadd.f32 %v3589, %v3701
        %3703 = vmatmul.f32.gmra.mxu0 %v3446
        %v3704 = vpop.f32.mrf.mxu0
        %v3705 = vadd.f32 %v3592, %v3704
        %3706 = vmatmul.f32.gmra.mxu0 %v3449
        %v3707 = vpop.f32.mrf.mxu0
        %v3708 = vadd.f32 %v3595, %v3707
        %3709 = vmatmul.f32.gmra.mxu0 %v3452
        %v3710 = vpop.f32.mrf.mxu0
        %v3711 = vadd.f32 %v3598, %v3710
        %3712 = vmatmul.f32.gmra.mxu0 %v3455
        %v3713 = vpop.f32.mrf.mxu0
        %v3714 = vadd.f32 %v3601, %v3713
        %3715 = vmatmul.f32.gmra.mxu0 %v3458
        %v3716 = vpop.f32.mrf.mxu0
        %v3717 = vadd.f32 %v3604, %v3716
        %3718 = vmatmul.f32.gmra.mxu0 %v3461
        %v3719 = vpop.f32.mrf.mxu0
        %v3720 = vadd.f32 %v3607, %v3719
        %3721 = vmatmul.f32.gmra.mxu0 %v3464
        %v3722 = vpop.f32.mrf.mxu0
        %v3723 = vadd.f32 %v3610, %v3722
        %3724 = vmatmul.f32.gmra.mxu0 %v3467
        %v3725 = vpop.f32.mrf.mxu0
        %v3726 = vadd.f32 %v3613, %v3725
        %3727 = vmatmul.f32.gmra.mxu0 %v3470
        %v3728 = vpop.f32.mrf.mxu0
        %v3729 = vadd.f32 %v3616, %v3728
        %3730 = vmatmul.f32.gmra.mxu0 %v3473
        %v3731 = vpop.f32.mrf.mxu0
        %v3732 = vadd.f32 %v3619, %v3731
        %3733 = vmatmul.f32.gmra.mxu0 %v3476
        %v3734 = vpop.f32.mrf.mxu0
        %v3735 = vadd.f32 %v3622, %v3734
        %3736 = vmatmul.f32.gmra.mxu0 %v3479
        %v3737 = vpop.f32.mrf.mxu0
        %v3738 = vadd.f32 %v3625, %v3737
        %3739 = vmatmul.f32.gmra.mxu0 %v3482
        %v3740 = vpop.f32.mrf.mxu0
        %v3741 = vadd.f32 %v3628, %v3740
        %3742 = vmatmul.f32.gmra.mxu0 %v3485
        %v3743 = vpop.f32.mrf.mxu0
        %v3744 = vadd.f32 %v3631, %v3743
        %3745 = vmatmul.f32.gmra.mxu0 %v3488
        %v3746 = vpop.f32.mrf.mxu0
        %v3747 = vadd.f32 %v3634, %v3746
        %3748 = vmatmul.f32.gmra.mxu0 %v3491
        %v3749 = vpop.f32.mrf.mxu0
        %v3750 = vadd.f32 %v3637, %v3749
        %3751 = vmatmul.f32.gmra.mxu0 %v3494
        %v3752 = vpop.f32.mrf.mxu0
        %v3753 = vadd.f32 %v3640, %v3752
        %3754 = vmatmul.f32.gmra.mxu0 %v3497
        %v3755 = vpop.f32.mrf.mxu0
        %v3756 = vadd.f32 %v3643, %v3755
        %3757 = vmatmul.f32.gmra.mxu0 %v3500
        %v3758 = vpop.f32.mrf.mxu0
        %v3759 = vadd.f32 %v3646, %v3758
        %3760 = vmatmul.f32.gmra.mxu0 %v3503
        %v3761 = vpop.f32.mrf.mxu0
        %v3762 = vadd.f32 %v3649, %v3761
        %3763 = vmatmul.f32.gmra.mxu0 %v3506
        %v3764 = vpop.f32.mrf.mxu0
        %v3765 = vadd.f32 %v3652, %v3764
        %3766 = vdwg.mxu0
        %3767 = vmatpush.msra.mxu0 %v565
        %3768 = vmatpush.msra.mxu0 %v564
        %3769 = vmatpush.msra.mxu0 %v563
        %3770 = vmatpush.msra.mxu0 %v562
        %3771 = vmatpush.msra.mxu0 %v561
        %3772 = vmatpush.msra.mxu0 %v560
        %3773 = vmatpush.msra.mxu0 %v559
        %3774 = vmatpush.msra.mxu0 %v558
        %3775 = vmatpush.msra.mxu0 %v557
        %3776 = vmatpush.msra.mxu0 %v556
        %3777 = vmatpush.msra.mxu0 %v555
        %3778 = vmatpush.msra.mxu0 %v554
        %3779 = vmatpush.msra.mxu0 %v553
        %3780 = vmatpush.msra.mxu0 %v552
        %3781 = vmatpush.msra.mxu0 %v551
        %3782 = vmatpush.msra.mxu0 %v550
        %3783 = vmatmul.f32.gmra.mxu0 %v3414
        %v3784 = vpop.f32.mrf.mxu0
        %v3785 = vadd.f32 %v3672, %v3784
        %3786 = vmatmul.f32.gmra.mxu0 %v3417
        %v3787 = vpop.f32.mrf.mxu0
        %v3788 = vadd.f32 %v3675, %v3787
        %3789 = vmatmul.f32.gmra.mxu0 %v3420
        %v3790 = vpop.f32.mrf.mxu0
        %v3791 = vadd.f32 %v3678, %v3790
        %3792 = vmatmul.f32.gmra.mxu0 %v3423
        %v3793 = vpop.f32.mrf.mxu0
        %v3794 = vadd.f32 %v3681, %v3793
        %3795 = vmatmul.f32.gmra.mxu0 %v3426
        %v3796 = vpop.f32.mrf.mxu0
        %v3797 = vadd.f32 %v3684, %v3796
        %3798 = vmatmul.f32.gmra.mxu0 %v3429
        %v3799 = vpop.f32.mrf.mxu0
        %v3800 = vadd.f32 %v3687, %v3799
        %3801 = vmatmul.f32.gmra.mxu0 %v3432
        %v3802 = vpop.f32.mrf.mxu0
        %v3803 = vadd.f32 %v3690, %v3802
        %3804 = vmatmul.f32.gmra.mxu0 %v3435
        %v3805 = vpop.f32.mrf.mxu0
        %v3806 = vadd.f32 %v3693, %v3805
        %3807 = vmatmul.f32.gmra.mxu0 %v3438
        %v3808 = vpop.f32.mrf.mxu0
        %v3809 = vadd.f32 %v3696, %v3808
        %3810 = vmatmul.f32.gmra.mxu0 %v3441
        %v3811 = vpop.f32.mrf.mxu0
        %v3812 = vadd.f32 %v3699, %v3811
        %3813 = vmatmul.f32.gmra.mxu0 %v3444
        %v3814 = vpop.f32.mrf.mxu0
        %v3815 = vadd.f32 %v3702, %v3814
        %3816 = vmatmul.f32.gmra.mxu0 %v3447
        %v3817 = vpop.f32.mrf.mxu0
        %v3818 = vadd.f32 %v3705, %v3817
        %3819 = vmatmul.f32.gmra.mxu0 %v3450
        %v3820 = vpop.f32.mrf.mxu0
        %v3821 = vadd.f32 %v3708, %v3820
        %3822 = vmatmul.f32.gmra.mxu0 %v3453
        %v3823 = vpop.f32.mrf.mxu0
        %v3824 = vadd.f32 %v3711, %v3823
        %3825 = vmatmul.f32.gmra.mxu0 %v3456
        %v3826 = vpop.f32.mrf.mxu0
        %v3827 = vadd.f32 %v3714, %v3826
        %3828 = vmatmul.f32.gmra.mxu0 %v3459
        %v3829 = vpop.f32.mrf.mxu0
        %v3830 = vadd.f32 %v3717, %v3829
        %3831 = vmatmul.f32.gmra.mxu0 %v3462
        %v3832 = vpop.f32.mrf.mxu0
        %v3833 = vadd.f32 %v3720, %v3832
        %3834 = vmatmul.f32.gmra.mxu0 %v3465
        %v3835 = vpop.f32.mrf.mxu0
        %v3836 = vadd.f32 %v3723, %v3835
        %3837 = vmatmul.f32.gmra.mxu0 %v3468
        %v3838 = vpop.f32.mrf.mxu0
        %v3839 = vadd.f32 %v3726, %v3838
        %3840 = vmatmul.f32.gmra.mxu0 %v3471
        %v3841 = vpop.f32.mrf.mxu0
        %v3842 = vadd.f32 %v3729, %v3841
        %3843 = vmatmul.f32.gmra.mxu0 %v3474
        %v3844 = vpop.f32.mrf.mxu0
        %v3845 = vadd.f32 %v3732, %v3844
        %3846 = vmatmul.f32.gmra.mxu0 %v3477
        %v3847 = vpop.f32.mrf.mxu0
        %v3848 = vadd.f32 %v3735, %v3847
        %3849 = vmatmul.f32.gmra.mxu0 %v3480
        %v3850 = vpop.f32.mrf.mxu0
        %v3851 = vadd.f32 %v3738, %v3850
        %3852 = vmatmul.f32.gmra.mxu0 %v3483
        %v3853 = vpop.f32.mrf.mxu0
        %v3854 = vadd.f32 %v3741, %v3853
        %3855 = vmatmul.f32.gmra.mxu0 %v3486
        %v3856 = vpop.f32.mrf.mxu0
        %v3857 = vadd.f32 %v3744, %v3856
        %3858 = vmatmul.f32.gmra.mxu0 %v3489
        %v3859 = vpop.f32.mrf.mxu0
        %v3860 = vadd.f32 %v3747, %v3859
        %3861 = vmatmul.f32.gmra.mxu0 %v3492
        %v3862 = vpop.f32.mrf.mxu0
        %v3863 = vadd.f32 %v3750, %v3862
        %3864 = vmatmul.f32.gmra.mxu0 %v3495
        %v3865 = vpop.f32.mrf.mxu0
        %v3866 = vadd.f32 %v3753, %v3865
        %3867 = vmatmul.f32.gmra.mxu0 %v3498
        %v3868 = vpop.f32.mrf.mxu0
        %v3869 = vadd.f32 %v3756, %v3868
        %3870 = vmatmul.f32.gmra.mxu0 %v3501
        %v3871 = vpop.f32.mrf.mxu0
        %v3872 = vadd.f32 %v3759, %v3871
        %3873 = vmatmul.f32.gmra.mxu0 %v3504
        %v3874 = vpop.f32.mrf.mxu0
        %v3875 = vadd.f32 %v3762, %v3874
        %3876 = vmatmul.f32.gmra.mxu0 %v3507
        %v3877 = vpop.f32.mrf.mxu0
        %v3878 = vadd.f32 %v3765, %v3877
        %3879 = vdwg.mxu0
        %v3880 = vadd.f32 %v3509, %v3785
        %v3881 = vadd.f32 %v3510, %v3788
        %v3882 = vadd.f32 %v3511, %v3791
        %v3883 = vadd.f32 %v3512, %v3794
        %v3884 = vadd.f32 %v3513, %v3797
        %v3885 = vadd.f32 %v3514, %v3800
        %v3886 = vadd.f32 %v3515, %v3803
        %v3887 = vadd.f32 %v3516, %v3806
        %v3888 = vadd.f32 %v3517, %v3809
        %v3889 = vadd.f32 %v3518, %v3812
        %v3890 = vadd.f32 %v3519, %v3815
        %v3891 = vadd.f32 %v3520, %v3818
        %v3892 = vadd.f32 %v3521, %v3821
        %v3893 = vadd.f32 %v3522, %v3824
        %v3894 = vadd.f32 %v3523, %v3827
        %v3895 = vadd.f32 %v3524, %v3830
        %v3896 = vadd.f32 %v3525, %v3833
        %v3897 = vadd.f32 %v3526, %v3836
        %v3898 = vadd.f32 %v3527, %v3839
        %v3899 = vadd.f32 %v3528, %v3842
        %v3900 = vadd.f32 %v3529, %v3845
        %v3901 = vadd.f32 %v3530, %v3848
        %v3902 = vadd.f32 %v3531, %v3851
        %v3903 = vadd.f32 %v3532, %v3854
        %v3904 = vadd.f32 %v3533, %v3857
        %v3905 = vadd.f32 %v3534, %v3860
        %v3906 = vadd.f32 %v3535, %v3863
        %v3907 = vadd.f32 %v3536, %v3866
        %v3908 = vadd.f32 %v3537, %v3869
        %v3909 = vadd.f32 %v3538, %v3872
        %v3910 = vadd.f32 %v3539, %v3875
        %v3911 = vadd.f32 %v3540, %v3878
        %3912 = vst [vmem:[%s3508] sm:$0xff] %v3880
        %3913 = vst [vmem:[%s3508 + $0x8] sm:$0xff] %v3881
        %3914 = vst [vmem:[%s3508 + $0x10] sm:$0xff] %v3882
        %3915 = vst [vmem:[%s3508 + $0x18] sm:$0xff] %v3883
        %3916 = vst [vmem:[%s3508 + $0x20] sm:$0xff] %v3884
        %3917 = vst [vmem:[%s3508 + $0x28] sm:$0xff] %v3885
        %3918 = vst [vmem:[%s3508 + $0x30] sm:$0xff] %v3886
        %3919 = vst [vmem:[%s3508 + $0x38] sm:$0xff] %v3887
        %3920 = vst [vmem:[%s3508 + $0x40] sm:$0xff] %v3888
        %3921 = vst [vmem:[%s3508 + $0x48] sm:$0xff] %v3889
        %3922 = vst [vmem:[%s3508 + $0x50] sm:$0xff] %v3890
        %3923 = vst [vmem:[%s3508 + $0x58] sm:$0xff] %v3891
        %3924 = vst [vmem:[%s3508 + $0x60] sm:$0xff] %v3892
        %3925 = vst [vmem:[%s3508 + $0x68] sm:$0xff] %v3893
        %3926 = vst [vmem:[%s3508 + $0x70] sm:$0xff] %v3894
        %3927 = vst [vmem:[%s3508 + $0x78] sm:$0xff] %v3895
        %3928 = vst [vmem:[%s3508 + $0x80] sm:$0xff] %v3896
        %3929 = vst [vmem:[%s3508 + $0x88] sm:$0xff] %v3897
        %3930 = vst [vmem:[%s3508 + $0x90] sm:$0xff] %v3898
        %3931 = vst [vmem:[%s3508 + $0x98] sm:$0xff] %v3899
        %3932 = vst [vmem:[%s3508 + $0xa0] sm:$0xff] %v3900
        %3933 = vst [vmem:[%s3508 + $0xa8] sm:$0xff] %v3901
        %3934 = vst [vmem:[%s3508 + $0xb0] sm:$0xff] %v3902
        %3935 = vst [vmem:[%s3508 + $0xb8] sm:$0xff] %v3903
        %3936 = vst [vmem:[%s3508 + $0xc0] sm:$0xff] %v3904
        %3937 = vst [vmem:[%s3508 + $0xc8] sm:$0xff] %v3905
        %3938 = vst [vmem:[%s3508 + $0xd0] sm:$0xff] %v3906
        %3939 = vst [vmem:[%s3508 + $0xd8] sm:$0xff] %v3907
        %3940 = vst [vmem:[%s3508 + $0xe0] sm:$0xff] %v3908
        %3941 = vst [vmem:[%s3508 + $0xe8] sm:$0xff] %v3909
        %3942 = vst [vmem:[%s3508 + $0xf0] sm:$0xff] %v3910
        %3943 = vst [vmem:[%s3508 + $0xf8] sm:$0xff] %v3911
        %v3944 = vadd.s32 %v485, 289
        %v3945 = vadd.s32 %v486, 289
        %v3946 = vadd.s32 %v487, 289
        %v3947 = vadd.s32 %v488, 289
        %v3948 = vadd.s32 %v489, 289
        %v3949 = vadd.s32 %v490, 289
        %v3950 = vadd.s32 %v491, 289
        %v3951 = vadd.s32 %v492, 289
        %v3952 = vadd.s32 %v493, 289
        %v3953 = vadd.s32 %v494, 289
        %v3954 = vadd.s32 %v495, 289
        %v3955 = vadd.s32 %v496, 289
        %v3956 = vadd.s32 %v497, 289
        %v3957 = vadd.s32 %v498, 289
        %v3958 = vadd.s32 %v499, 289
        %v3959 = vadd.s32 %v500, 289
        %v3960 = vadd.s32 %v501, 289
        %v3961 = vadd.s32 %v502, 289
        %v3962 = vadd.s32 %v503, 289
        %v3963 = vadd.s32 %v504, 289
        %v3964 = vadd.s32 %v505, 289
        %v3965 = vadd.s32 %v506, 289
        %v3966 = vadd.s32 %v507, 289
        %v3967 = vadd.s32 %v508, 289
        %v3968 = vadd.s32 %v509, 289
        %v3969 = vadd.s32 %v510, 289
        %v3970 = vadd.s32 %v511, 289
        %v3971 = vadd.s32 %v512, 289
        %v3972 = vadd.s32 %v513, 289
        %v3973 = vadd.s32 %v514, 289
        %v3974 = vadd.s32 %v515, 289
        %v3975 = vadd.s32 %v516, 289
        %3976 = vset.pattern.permute.xlu0 0
        %3977 = vperm.xlu0 %3976, %v3944
        %v3978 = vpop.permute.xlu0 %3977
        %3979 = vset.pattern.permute.xlu0 0
        %3980 = vperm.xlu0 %3979, %v3945
        %v3981 = vpop.permute.xlu0 %3980
        %3982 = vset.pattern.permute.xlu0 0
        %3983 = vperm.xlu0 %3982, %v3946
        %v3984 = vpop.permute.xlu0 %3983
        %3985 = vset.pattern.permute.xlu0 0
        %3986 = vperm.xlu0 %3985, %v3947
        %v3987 = vpop.permute.xlu0 %3986
        %3988 = vset.pattern.permute.xlu0 0
        %3989 = vperm.xlu0 %3988, %v3948
        %v3990 = vpop.permute.xlu0 %3989
        %3991 = vset.pattern.permute.xlu0 0
        %3992 = vperm.xlu0 %3991, %v3949
        %v3993 = vpop.permute.xlu0 %3992
        %3994 = vset.pattern.permute.xlu0 0
        %3995 = vperm.xlu0 %3994, %v3950
        %v3996 = vpop.permute.xlu0 %3995
        %3997 = vset.pattern.permute.xlu0 0
        %3998 = vperm.xlu0 %3997, %v3951
        %v3999 = vpop.permute.xlu0 %3998
        %4000 = vset.pattern.permute.xlu0 0
        %4001 = vperm.xlu0 %4000, %v3952
        %v4002 = vpop.permute.xlu0 %4001
        %4003 = vset.pattern.permute.xlu0 0
        %4004 = vperm.xlu0 %4003, %v3953
        %v4005 = vpop.permute.xlu0 %4004
        %4006 = vset.pattern.permute.xlu0 0
        %4007 = vperm.xlu0 %4006, %v3954
        %v4008 = vpop.permute.xlu0 %4007
        %4009 = vset.pattern.permute.xlu0 0
        %4010 = vperm.xlu0 %4009, %v3955
        %v4011 = vpop.permute.xlu0 %4010
        %4012 = vset.pattern.permute.xlu0 0
        %4013 = vperm.xlu0 %4012, %v3956
        %v4014 = vpop.permute.xlu0 %4013
        %4015 = vset.pattern.permute.xlu0 0
        %4016 = vperm.xlu0 %4015, %v3957
        %v4017 = vpop.permute.xlu0 %4016
        %4018 = vset.pattern.permute.xlu0 0
        %4019 = vperm.xlu0 %4018, %v3958
        %v4020 = vpop.permute.xlu0 %4019
        %4021 = vset.pattern.permute.xlu0 0
        %4022 = vperm.xlu0 %4021, %v3959
        %v4023 = vpop.permute.xlu0 %4022
        %4024 = vset.pattern.permute.xlu0 0
        %4025 = vperm.xlu0 %4024, %v3960
        %v4026 = vpop.permute.xlu0 %4025
        %4027 = vset.pattern.permute.xlu0 0
        %4028 = vperm.xlu0 %4027, %v3961
        %v4029 = vpop.permute.xlu0 %4028
        %4030 = vset.pattern.permute.xlu0 0
        %4031 = vperm.xlu0 %4030, %v3962
        %v4032 = vpop.permute.xlu0 %4031
        %4033 = vset.pattern.permute.xlu0 0
        %4034 = vperm.xlu0 %4033, %v3963
        %v4035 = vpop.permute.xlu0 %4034
        %4036 = vset.pattern.permute.xlu0 0
        %4037 = vperm.xlu0 %4036, %v3964
        %v4038 = vpop.permute.xlu0 %4037
        %4039 = vset.pattern.permute.xlu0 0
        %4040 = vperm.xlu0 %4039, %v3965
        %v4041 = vpop.permute.xlu0 %4040
        %4042 = vset.pattern.permute.xlu0 0
        %4043 = vperm.xlu0 %4042, %v3966
        %v4044 = vpop.permute.xlu0 %4043
        %4045 = vset.pattern.permute.xlu0 0
        %4046 = vperm.xlu0 %4045, %v3967
        %v4047 = vpop.permute.xlu0 %4046
        %4048 = vset.pattern.permute.xlu0 0
        %4049 = vperm.xlu0 %4048, %v3968
        %v4050 = vpop.permute.xlu0 %4049
        %4051 = vset.pattern.permute.xlu0 0
        %4052 = vperm.xlu0 %4051, %v3969
        %v4053 = vpop.permute.xlu0 %4052
        %4054 = vset.pattern.permute.xlu0 0
        %4055 = vperm.xlu0 %4054, %v3970
        %v4056 = vpop.permute.xlu0 %4055
        %4057 = vset.pattern.permute.xlu0 0
        %4058 = vperm.xlu0 %4057, %v3971
        %v4059 = vpop.permute.xlu0 %4058
        %4060 = vset.pattern.permute.xlu0 0
        %4061 = vperm.xlu0 %4060, %v3972
        %v4062 = vpop.permute.xlu0 %4061
        %4063 = vset.pattern.permute.xlu0 0
        %4064 = vperm.xlu0 %4063, %v3973
        %v4065 = vpop.permute.xlu0 %4064
        %4066 = vset.pattern.permute.xlu0 0
        %4067 = vperm.xlu0 %4066, %v3974
        %v4068 = vpop.permute.xlu0 %4067
        %4069 = vset.pattern.permute.xlu0 0
        %4070 = vperm.xlu0 %4069, %v3975
        %v4071 = vpop.permute.xlu0 %4070
        %vm4072 = vcmp.eq.s32.totalorder %v3978, %v662
        %vm4073 = vcmp.eq.s32.totalorder %v3978, %v663
        %vm4074 = vcmp.eq.s32.totalorder %v3978, %v664
        %vm4075 = vcmp.eq.s32.totalorder %v3981, %v662
        %vm4076 = vcmp.eq.s32.totalorder %v3981, %v663
        %vm4077 = vcmp.eq.s32.totalorder %v3981, %v664
        %vm4078 = vcmp.eq.s32.totalorder %v3984, %v662
        %vm4079 = vcmp.eq.s32.totalorder %v3984, %v663
        %vm4080 = vcmp.eq.s32.totalorder %v3984, %v664
        %vm4081 = vcmp.eq.s32.totalorder %v3987, %v662
        %vm4082 = vcmp.eq.s32.totalorder %v3987, %v663
        %vm4083 = vcmp.eq.s32.totalorder %v3987, %v664
        %vm4084 = vcmp.eq.s32.totalorder %v3990, %v662
        %vm4085 = vcmp.eq.s32.totalorder %v3990, %v663
        %vm4086 = vcmp.eq.s32.totalorder %v3990, %v664
        %vm4087 = vcmp.eq.s32.totalorder %v3993, %v662
        %vm4088 = vcmp.eq.s32.totalorder %v3993, %v663
        %vm4089 = vcmp.eq.s32.totalorder %v3993, %v664
        %vm4090 = vcmp.eq.s32.totalorder %v3996, %v662
        %vm4091 = vcmp.eq.s32.totalorder %v3996, %v663
        %vm4092 = vcmp.eq.s32.totalorder %v3996, %v664
        %vm4093 = vcmp.eq.s32.totalorder %v3999, %v662
        %vm4094 = vcmp.eq.s32.totalorder %v3999, %v663
        %vm4095 = vcmp.eq.s32.totalorder %v3999, %v664
        %vm4096 = vcmp.eq.s32.totalorder %v4002, %v662
        %vm4097 = vcmp.eq.s32.totalorder %v4002, %v663
        %vm4098 = vcmp.eq.s32.totalorder %v4002, %v664
        %vm4099 = vcmp.eq.s32.totalorder %v4005, %v662
        %vm4100 = vcmp.eq.s32.totalorder %v4005, %v663
        %vm4101 = vcmp.eq.s32.totalorder %v4005, %v664
        %vm4102 = vcmp.eq.s32.totalorder %v4008, %v662
        %vm4103 = vcmp.eq.s32.totalorder %v4008, %v663
        %vm4104 = vcmp.eq.s32.totalorder %v4008, %v664
        %vm4105 = vcmp.eq.s32.totalorder %v4011, %v662
        %vm4106 = vcmp.eq.s32.totalorder %v4011, %v663
        %vm4107 = vcmp.eq.s32.totalorder %v4011, %v664
        %vm4108 = vcmp.eq.s32.totalorder %v4014, %v662
        %vm4109 = vcmp.eq.s32.totalorder %v4014, %v663
        %vm4110 = vcmp.eq.s32.totalorder %v4014, %v664
        %vm4111 = vcmp.eq.s32.totalorder %v4017, %v662
        %vm4112 = vcmp.eq.s32.totalorder %v4017, %v663
        %vm4113 = vcmp.eq.s32.totalorder %v4017, %v664
        %vm4114 = vcmp.eq.s32.totalorder %v4020, %v662
        %vm4115 = vcmp.eq.s32.totalorder %v4020, %v663
        %vm4116 = vcmp.eq.s32.totalorder %v4020, %v664
        %vm4117 = vcmp.eq.s32.totalorder %v4023, %v662
        %vm4118 = vcmp.eq.s32.totalorder %v4023, %v663
        %vm4119 = vcmp.eq.s32.totalorder %v4023, %v664
        %vm4120 = vcmp.eq.s32.totalorder %v4026, %v662
        %vm4121 = vcmp.eq.s32.totalorder %v4026, %v663
        %vm4122 = vcmp.eq.s32.totalorder %v4026, %v664
        %vm4123 = vcmp.eq.s32.totalorder %v4029, %v662
        %vm4124 = vcmp.eq.s32.totalorder %v4029, %v663
        %vm4125 = vcmp.eq.s32.totalorder %v4029, %v664
        %vm4126 = vcmp.eq.s32.totalorder %v4032, %v662
        %vm4127 = vcmp.eq.s32.totalorder %v4032, %v663
        %vm4128 = vcmp.eq.s32.totalorder %v4032, %v664
        %vm4129 = vcmp.eq.s32.totalorder %v4035, %v662
        %vm4130 = vcmp.eq.s32.totalorder %v4035, %v663
        %vm4131 = vcmp.eq.s32.totalorder %v4035, %v664
        %vm4132 = vcmp.eq.s32.totalorder %v4038, %v662
        %vm4133 = vcmp.eq.s32.totalorder %v4038, %v663
        %vm4134 = vcmp.eq.s32.totalorder %v4038, %v664
        %vm4135 = vcmp.eq.s32.totalorder %v4041, %v662
        %vm4136 = vcmp.eq.s32.totalorder %v4041, %v663
        %vm4137 = vcmp.eq.s32.totalorder %v4041, %v664
        %vm4138 = vcmp.eq.s32.totalorder %v4044, %v662
        %vm4139 = vcmp.eq.s32.totalorder %v4044, %v663
        %vm4140 = vcmp.eq.s32.totalorder %v4044, %v664
        %vm4141 = vcmp.eq.s32.totalorder %v4047, %v662
        %vm4142 = vcmp.eq.s32.totalorder %v4047, %v663
        %vm4143 = vcmp.eq.s32.totalorder %v4047, %v664
        %vm4144 = vcmp.eq.s32.totalorder %v4050, %v662
        %vm4145 = vcmp.eq.s32.totalorder %v4050, %v663
        %vm4146 = vcmp.eq.s32.totalorder %v4050, %v664
        %vm4147 = vcmp.eq.s32.totalorder %v4053, %v662
        %vm4148 = vcmp.eq.s32.totalorder %v4053, %v663
        %vm4149 = vcmp.eq.s32.totalorder %v4053, %v664
        %vm4150 = vcmp.eq.s32.totalorder %v4056, %v662
        %vm4151 = vcmp.eq.s32.totalorder %v4056, %v663
        %vm4152 = vcmp.eq.s32.totalorder %v4056, %v664
        %vm4153 = vcmp.eq.s32.totalorder %v4059, %v662
        %vm4154 = vcmp.eq.s32.totalorder %v4059, %v663
        %vm4155 = vcmp.eq.s32.totalorder %v4059, %v664
        %vm4156 = vcmp.eq.s32.totalorder %v4062, %v662
        %vm4157 = vcmp.eq.s32.totalorder %v4062, %v663
        %vm4158 = vcmp.eq.s32.totalorder %v4062, %v664
        %vm4159 = vcmp.eq.s32.totalorder %v4065, %v662
        %vm4160 = vcmp.eq.s32.totalorder %v4065, %v663
        %vm4161 = vcmp.eq.s32.totalorder %v4065, %v664
        %vm4162 = vcmp.eq.s32.totalorder %v4068, %v662
        %vm4163 = vcmp.eq.s32.totalorder %v4068, %v663
        %vm4164 = vcmp.eq.s32.totalorder %v4068, %v664
        %vm4165 = vcmp.eq.s32.totalorder %v4071, %v662
        %vm4166 = vcmp.eq.s32.totalorder %v4071, %v663
        %vm4167 = vcmp.eq.s32.totalorder %v4071, %v664
        %v4168 = vsel %vm4072, 1, 0
        %v4169 = vsel %vm4073, 1, 0
        %v4170 = vsel %vm4074, 1, 0
        %v4171 = vsel %vm4075, 1, 0
        %v4172 = vsel %vm4076, 1, 0
        %v4173 = vsel %vm4077, 1, 0
        %v4174 = vsel %vm4078, 1, 0
        %v4175 = vsel %vm4079, 1, 0
        %v4176 = vsel %vm4080, 1, 0
        %v4177 = vsel %vm4081, 1, 0
        %v4178 = vsel %vm4082, 1, 0
        %v4179 = vsel %vm4083, 1, 0
        %v4180 = vsel %vm4084, 1, 0
        %v4181 = vsel %vm4085, 1, 0
        %v4182 = vsel %vm4086, 1, 0
        %v4183 = vsel %vm4087, 1, 0
        %v4184 = vsel %vm4088, 1, 0
        %v4185 = vsel %vm4089, 1, 0
        %v4186 = vsel %vm4090, 1, 0
        %v4187 = vsel %vm4091, 1, 0
        %v4188 = vsel %vm4092, 1, 0
        %v4189 = vsel %vm4093, 1, 0
        %v4190 = vsel %vm4094, 1, 0
        %v4191 = vsel %vm4095, 1, 0
        %v4192 = vsel %vm4096, 1, 0
        %v4193 = vsel %vm4097, 1, 0
        %v4194 = vsel %vm4098, 1, 0
        %v4195 = vsel %vm4099, 1, 0
        %v4196 = vsel %vm4100, 1, 0
        %v4197 = vsel %vm4101, 1, 0
        %v4198 = vsel %vm4102, 1, 0
        %v4199 = vsel %vm4103, 1, 0
        %v4200 = vsel %vm4104, 1, 0
        %v4201 = vsel %vm4105, 1, 0
        %v4202 = vsel %vm4106, 1, 0
        %v4203 = vsel %vm4107, 1, 0
        %v4204 = vsel %vm4108, 1, 0
        %v4205 = vsel %vm4109, 1, 0
        %v4206 = vsel %vm4110, 1, 0
        %v4207 = vsel %vm4111, 1, 0
        %v4208 = vsel %vm4112, 1, 0
        %v4209 = vsel %vm4113, 1, 0
        %v4210 = vsel %vm4114, 1, 0
        %v4211 = vsel %vm4115, 1, 0
        %v4212 = vsel %vm4116, 1, 0
        %v4213 = vsel %vm4117, 1, 0
        %v4214 = vsel %vm4118, 1, 0
        %v4215 = vsel %vm4119, 1, 0
        %v4216 = vsel %vm4120, 1, 0
        %v4217 = vsel %vm4121, 1, 0
        %v4218 = vsel %vm4122, 1, 0
        %v4219 = vsel %vm4123, 1, 0
        %v4220 = vsel %vm4124, 1, 0
        %v4221 = vsel %vm4125, 1, 0
        %v4222 = vsel %vm4126, 1, 0
        %v4223 = vsel %vm4127, 1, 0
        %v4224 = vsel %vm4128, 1, 0
        %v4225 = vsel %vm4129, 1, 0
        %v4226 = vsel %vm4130, 1, 0
        %v4227 = vsel %vm4131, 1, 0
        %v4228 = vsel %vm4132, 1, 0
        %v4229 = vsel %vm4133, 1, 0
        %v4230 = vsel %vm4134, 1, 0
        %v4231 = vsel %vm4135, 1, 0
        %v4232 = vsel %vm4136, 1, 0
        %v4233 = vsel %vm4137, 1, 0
        %v4234 = vsel %vm4138, 1, 0
        %v4235 = vsel %vm4139, 1, 0
        %v4236 = vsel %vm4140, 1, 0
        %v4237 = vsel %vm4141, 1, 0
        %v4238 = vsel %vm4142, 1, 0
        %v4239 = vsel %vm4143, 1, 0
        %v4240 = vsel %vm4144, 1, 0
        %v4241 = vsel %vm4145, 1, 0
        %v4242 = vsel %vm4146, 1, 0
        %v4243 = vsel %vm4147, 1, 0
        %v4244 = vsel %vm4148, 1, 0
        %v4245 = vsel %vm4149, 1, 0
        %v4246 = vsel %vm4150, 1, 0
        %v4247 = vsel %vm4151, 1, 0
        %v4248 = vsel %vm4152, 1, 0
        %v4249 = vsel %vm4153, 1, 0
        %v4250 = vsel %vm4154, 1, 0
        %v4251 = vsel %vm4155, 1, 0
        %v4252 = vsel %vm4156, 1, 0
        %v4253 = vsel %vm4157, 1, 0
        %v4254 = vsel %vm4158, 1, 0
        %v4255 = vsel %vm4159, 1, 0
        %v4256 = vsel %vm4160, 1, 0
        %v4257 = vsel %vm4161, 1, 0
        %v4258 = vsel %vm4162, 1, 0
        %v4259 = vsel %vm4163, 1, 0
        %v4260 = vsel %vm4164, 1, 0
        %v4261 = vsel %vm4165, 1, 0
        %v4262 = vsel %vm4166, 1, 0
        %v4263 = vsel %vm4167, 1, 0
        %v4264 = vcvt.s32.f32 %v4168
        %v4265 = vcvt.s32.f32 %v4169
        %v4266 = vcvt.s32.f32 %v4170
        %v4267 = vcvt.s32.f32 %v4171
        %v4268 = vcvt.s32.f32 %v4172
        %v4269 = vcvt.s32.f32 %v4173
        %v4270 = vcvt.s32.f32 %v4174
        %v4271 = vcvt.s32.f32 %v4175
        %v4272 = vcvt.s32.f32 %v4176
        %v4273 = vcvt.s32.f32 %v4177
        %v4274 = vcvt.s32.f32 %v4178
        %v4275 = vcvt.s32.f32 %v4179
        %v4276 = vcvt.s32.f32 %v4180
        %v4277 = vcvt.s32.f32 %v4181
        %v4278 = vcvt.s32.f32 %v4182
        %v4279 = vcvt.s32.f32 %v4183
        %v4280 = vcvt.s32.f32 %v4184
        %v4281 = vcvt.s32.f32 %v4185
        %v4282 = vcvt.s32.f32 %v4186
        %v4283 = vcvt.s32.f32 %v4187
        %v4284 = vcvt.s32.f32 %v4188
        %v4285 = vcvt.s32.f32 %v4189
        %v4286 = vcvt.s32.f32 %v4190
        %v4287 = vcvt.s32.f32 %v4191
        %v4288 = vcvt.s32.f32 %v4192
        %v4289 = vcvt.s32.f32 %v4193
        %v4290 = vcvt.s32.f32 %v4194
        %v4291 = vcvt.s32.f32 %v4195
        %v4292 = vcvt.s32.f32 %v4196
        %v4293 = vcvt.s32.f32 %v4197
        %v4294 = vcvt.s32.f32 %v4198
        %v4295 = vcvt.s32.f32 %v4199
        %v4296 = vcvt.s32.f32 %v4200
        %v4297 = vcvt.s32.f32 %v4201
        %v4298 = vcvt.s32.f32 %v4202
        %v4299 = vcvt.s32.f32 %v4203
        %v4300 = vcvt.s32.f32 %v4204
        %v4301 = vcvt.s32.f32 %v4205
        %v4302 = vcvt.s32.f32 %v4206
        %v4303 = vcvt.s32.f32 %v4207
        %v4304 = vcvt.s32.f32 %v4208
        %v4305 = vcvt.s32.f32 %v4209
        %v4306 = vcvt.s32.f32 %v4210
        %v4307 = vcvt.s32.f32 %v4211
        %v4308 = vcvt.s32.f32 %v4212
        %v4309 = vcvt.s32.f32 %v4213
        %v4310 = vcvt.s32.f32 %v4214
        %v4311 = vcvt.s32.f32 %v4215
        %v4312 = vcvt.s32.f32 %v4216
        %v4313 = vcvt.s32.f32 %v4217
        %v4314 = vcvt.s32.f32 %v4218
        %v4315 = vcvt.s32.f32 %v4219
        %v4316 = vcvt.s32.f32 %v4220
        %v4317 = vcvt.s32.f32 %v4221
        %v4318 = vcvt.s32.f32 %v4222
        %v4319 = vcvt.s32.f32 %v4223
        %v4320 = vcvt.s32.f32 %v4224
        %v4321 = vcvt.s32.f32 %v4225
        %v4322 = vcvt.s32.f32 %v4226
        %v4323 = vcvt.s32.f32 %v4227
        %v4324 = vcvt.s32.f32 %v4228
        %v4325 = vcvt.s32.f32 %v4229
        %v4326 = vcvt.s32.f32 %v4230
        %v4327 = vcvt.s32.f32 %v4231
        %v4328 = vcvt.s32.f32 %v4232
        %v4329 = vcvt.s32.f32 %v4233
        %v4330 = vcvt.s32.f32 %v4234
        %v4331 = vcvt.s32.f32 %v4235
        %v4332 = vcvt.s32.f32 %v4236
        %v4333 = vcvt.s32.f32 %v4237
        %v4334 = vcvt.s32.f32 %v4238
        %v4335 = vcvt.s32.f32 %v4239
        %v4336 = vcvt.s32.f32 %v4240
        %v4337 = vcvt.s32.f32 %v4241
        %v4338 = vcvt.s32.f32 %v4242
        %v4339 = vcvt.s32.f32 %v4243
        %v4340 = vcvt.s32.f32 %v4244
        %v4341 = vcvt.s32.f32 %v4245
        %v4342 = vcvt.s32.f32 %v4246
        %v4343 = vcvt.s32.f32 %v4247
        %v4344 = vcvt.s32.f32 %v4248
        %v4345 = vcvt.s32.f32 %v4249
        %v4346 = vcvt.s32.f32 %v4250
        %v4347 = vcvt.s32.f32 %v4251
        %v4348 = vcvt.s32.f32 %v4252
        %v4349 = vcvt.s32.f32 %v4253
        %v4350 = vcvt.s32.f32 %v4254
        %v4351 = vcvt.s32.f32 %v4255
        %v4352 = vcvt.s32.f32 %v4256
        %v4353 = vcvt.s32.f32 %v4257
        %v4354 = vcvt.s32.f32 %v4258
        %v4355 = vcvt.s32.f32 %v4259
        %v4356 = vcvt.s32.f32 %v4260
        %v4357 = vcvt.s32.f32 %v4261
        %v4358 = vcvt.s32.f32 %v4262
        %v4359 = vcvt.s32.f32 %v4263
        %s4360 = scalar_lea.vmem [#allocation2], 1024
        %v4361 = vld [vmem:[%s4360] sm:$0xff]
        %v4362 = vld [vmem:[%s4360 + $0x8] sm:$0xff]
        %v4363 = vld [vmem:[%s4360 + $0x10] sm:$0xff]
        %v4364 = vld [vmem:[%s4360 + $0x18] sm:$0xff]
        %v4365 = vld [vmem:[%s4360 + $0x20] sm:$0xff]
        %v4366 = vld [vmem:[%s4360 + $0x28] sm:$0xff]
        %v4367 = vld [vmem:[%s4360 + $0x30] sm:$0xff]
        %v4368 = vld [vmem:[%s4360 + $0x38] sm:$0xff]
        %v4369 = vld [vmem:[%s4360 + $0x40] sm:$0xff]
        %v4370 = vld [vmem:[%s4360 + $0x48] sm:$0xff]
        %v4371 = vld [vmem:[%s4360 + $0x50] sm:$0xff]
        %v4372 = vld [vmem:[%s4360 + $0x58] sm:$0xff]
        %v4373 = vld [vmem:[%s4360 + $0x60] sm:$0xff]
        %v4374 = vld [vmem:[%s4360 + $0x68] sm:$0xff]
        %v4375 = vld [vmem:[%s4360 + $0x70] sm:$0xff]
        %v4376 = vld [vmem:[%s4360 + $0x78] sm:$0xff]
        %v4377 = vld [vmem:[%s4360 + $0x80] sm:$0xff]
        %v4378 = vld [vmem:[%s4360 + $0x88] sm:$0xff]
        %v4379 = vld [vmem:[%s4360 + $0x90] sm:$0xff]
        %v4380 = vld [vmem:[%s4360 + $0x98] sm:$0xff]
        %v4381 = vld [vmem:[%s4360 + $0xa0] sm:$0xff]
        %v4382 = vld [vmem:[%s4360 + $0xa8] sm:$0xff]
        %v4383 = vld [vmem:[%s4360 + $0xb0] sm:$0xff]
        %v4384 = vld [vmem:[%s4360 + $0xb8] sm:$0xff]
        %v4385 = vld [vmem:[%s4360 + $0xc0] sm:$0xff]
        %v4386 = vld [vmem:[%s4360 + $0xc8] sm:$0xff]
        %v4387 = vld [vmem:[%s4360 + $0xd0] sm:$0xff]
        %v4388 = vld [vmem:[%s4360 + $0xd8] sm:$0xff]
        %v4389 = vld [vmem:[%s4360 + $0xe0] sm:$0xff]
        %v4390 = vld [vmem:[%s4360 + $0xe8] sm:$0xff]
        %v4391 = vld [vmem:[%s4360 + $0xf0] sm:$0xff]
        %v4392 = vld [vmem:[%s4360 + $0xf8] sm:$0xff]
        %4393 = vmatpush.msra.mxu0 %v533
        %4394 = vmatpush.msra.mxu0 %v532
        %4395 = vmatpush.msra.mxu0 %v531
        %4396 = vmatpush.msra.mxu0 %v530
        %4397 = vmatpush.msra.mxu0 %v529
        %4398 = vmatpush.msra.mxu0 %v528
        %4399 = vmatpush.msra.mxu0 %v527
        %4400 = vmatpush.msra.mxu0 %v526
        %4401 = vmatpush.msra.mxu0 %v525
        %4402 = vmatpush.msra.mxu0 %v524
        %4403 = vmatpush.msra.mxu0 %v523
        %4404 = vmatpush.msra.mxu0 %v522
        %4405 = vmatpush.msra.mxu0 %v521
        %4406 = vmatpush.msra.mxu0 %v520
        %4407 = vmatpush.msra.mxu0 %v519
        %4408 = vmatpush.msra.mxu0 %v518
        %4409 = vmatmul.f32.gmra.mxu0 %v4264
        %v4410 = vpop.f32.mrf.mxu0
        %v4411 = vadd.f32 0.0, %v4410
        %4412 = vmatmul.f32.gmra.mxu0 %v4267
        %v4413 = vpop.f32.mrf.mxu0
        %v4414 = vadd.f32 0.0, %v4413
        %4415 = vmatmul.f32.gmra.mxu0 %v4270
        %v4416 = vpop.f32.mrf.mxu0
        %v4417 = vadd.f32 0.0, %v4416
        %4418 = vmatmul.f32.gmra.mxu0 %v4273
        %v4419 = vpop.f32.mrf.mxu0
        %v4420 = vadd.f32 0.0, %v4419
        %4421 = vmatmul.f32.gmra.mxu0 %v4276
        %v4422 = vpop.f32.mrf.mxu0
        %v4423 = vadd.f32 0.0, %v4422
        %4424 = vmatmul.f32.gmra.mxu0 %v4279
        %v4425 = vpop.f32.mrf.mxu0
        %v4426 = vadd.f32 0.0, %v4425
        %4427 = vmatmul.f32.gmra.mxu0 %v4282
        %v4428 = vpop.f32.mrf.mxu0
        %v4429 = vadd.f32 0.0, %v4428
        %4430 = vmatmul.f32.gmra.mxu0 %v4285
        %v4431 = vpop.f32.mrf.mxu0
        %v4432 = vadd.f32 0.0, %v4431
        %4433 = vmatmul.f32.gmra.mxu0 %v4288
        %v4434 = vpop.f32.mrf.mxu0
        %v4435 = vadd.f32 0.0, %v4434
        %4436 = vmatmul.f32.gmra.mxu0 %v4291
        %v4437 = vpop.f32.mrf.mxu0
        %v4438 = vadd.f32 0.0, %v4437
        %4439 = vmatmul.f32.gmra.mxu0 %v4294
        %v4440 = vpop.f32.mrf.mxu0
        %v4441 = vadd.f32 0.0, %v4440
        %4442 = vmatmul.f32.gmra.mxu0 %v4297
        %v4443 = vpop.f32.mrf.mxu0
        %v4444 = vadd.f32 0.0, %v4443
        %4445 = vmatmul.f32.gmra.mxu0 %v4300
        %v4446 = vpop.f32.mrf.mxu0
        %v4447 = vadd.f32 0.0, %v4446
        %4448 = vmatmul.f32.gmra.mxu0 %v4303
        %v4449 = vpop.f32.mrf.mxu0
        %v4450 = vadd.f32 0.0, %v4449
        %4451 = vmatmul.f32.gmra.mxu0 %v4306
        %v4452 = vpop.f32.mrf.mxu0
        %v4453 = vadd.f32 0.0, %v4452
        %4454 = vmatmul.f32.gmra.mxu0 %v4309
        %v4455 = vpop.f32.mrf.mxu0
        %v4456 = vadd.f32 0.0, %v4455
        %4457 = vmatmul.f32.gmra.mxu0 %v4312
        %v4458 = vpop.f32.mrf.mxu0
        %v4459 = vadd.f32 0.0, %v4458
        %4460 = vmatmul.f32.gmra.mxu0 %v4315
        %v4461 = vpop.f32.mrf.mxu0
        %v4462 = vadd.f32 0.0, %v4461
        %4463 = vmatmul.f32.gmra.mxu0 %v4318
        %v4464 = vpop.f32.mrf.mxu0
        %v4465 = vadd.f32 0.0, %v4464
        %4466 = vmatmul.f32.gmra.mxu0 %v4321
        %v4467 = vpop.f32.mrf.mxu0
        %v4468 = vadd.f32 0.0, %v4467
        %4469 = vmatmul.f32.gmra.mxu0 %v4324
        %v4470 = vpop.f32.mrf.mxu0
        %v4471 = vadd.f32 0.0, %v4470
        %4472 = vmatmul.f32.gmra.mxu0 %v4327
        %v4473 = vpop.f32.mrf.mxu0
        %v4474 = vadd.f32 0.0, %v4473
        %4475 = vmatmul.f32.gmra.mxu0 %v4330
        %v4476 = vpop.f32.mrf.mxu0
        %v4477 = vadd.f32 0.0, %v4476
        %4478 = vmatmul.f32.gmra.mxu0 %v4333
        %v4479 = vpop.f32.mrf.mxu0
        %v4480 = vadd.f32 0.0, %v4479
        %4481 = vmatmul.f32.gmra.mxu0 %v4336
        %v4482 = vpop.f32.mrf.mxu0
        %v4483 = vadd.f32 0.0, %v4482
        %4484 = vmatmul.f32.gmra.mxu0 %v4339
        %v4485 = vpop.f32.mrf.mxu0
        %v4486 = vadd.f32 0.0, %v4485
        %4487 = vmatmul.f32.gmra.mxu0 %v4342
        %v4488 = vpop.f32.mrf.mxu0
        %v4489 = vadd.f32 0.0, %v4488
        %4490 = vmatmul.f32.gmra.mxu0 %v4345
        %v4491 = vpop.f32.mrf.mxu0
        %v4492 = vadd.f32 0.0, %v4491
        %4493 = vmatmul.f32.gmra.mxu0 %v4348
        %v4494 = vpop.f32.mrf.mxu0
        %v4495 = vadd.f32 0.0, %v4494
        %4496 = vmatmul.f32.gmra.mxu0 %v4351
        %v4497 = vpop.f32.mrf.mxu0
        %v4498 = vadd.f32 0.0, %v4497
        %4499 = vmatmul.f32.gmra.mxu0 %v4354
        %v4500 = vpop.f32.mrf.mxu0
        %v4501 = vadd.f32 0.0, %v4500
        %4502 = vmatmul.f32.gmra.mxu0 %v4357
        %v4503 = vpop.f32.mrf.mxu0
        %v4504 = vadd.f32 0.0, %v4503
        %4505 = vdwg.mxu0
        %4506 = vmatpush.msra.mxu0 %v549
        %4507 = vmatpush.msra.mxu0 %v548
        %4508 = vmatpush.msra.mxu0 %v547
        %4509 = vmatpush.msra.mxu0 %v546
        %4510 = vmatpush.msra.mxu0 %v545
        %4511 = vmatpush.msra.mxu0 %v544
        %4512 = vmatpush.msra.mxu0 %v543
        %4513 = vmatpush.msra.mxu0 %v542
        %4514 = vmatpush.msra.mxu0 %v541
        %4515 = vmatpush.msra.mxu0 %v540
        %4516 = vmatpush.msra.mxu0 %v539
        %4517 = vmatpush.msra.mxu0 %v538
        %4518 = vmatpush.msra.mxu0 %v537
        %4519 = vmatpush.msra.mxu0 %v536
        %4520 = vmatpush.msra.mxu0 %v535
        %4521 = vmatpush.msra.mxu0 %v534
        %4522 = vmatmul.f32.gmra.mxu0 %v4265
        %v4523 = vpop.f32.mrf.mxu0
        %v4524 = vadd.f32 %v4411, %v4523
        %4525 = vmatmul.f32.gmra.mxu0 %v4268
        %v4526 = vpop.f32.mrf.mxu0
        %v4527 = vadd.f32 %v4414, %v4526
        %4528 = vmatmul.f32.gmra.mxu0 %v4271
        %v4529 = vpop.f32.mrf.mxu0
        %v4530 = vadd.f32 %v4417, %v4529
        %4531 = vmatmul.f32.gmra.mxu0 %v4274
        %v4532 = vpop.f32.mrf.mxu0
        %v4533 = vadd.f32 %v4420, %v4532
        %4534 = vmatmul.f32.gmra.mxu0 %v4277
        %v4535 = vpop.f32.mrf.mxu0
        %v4536 = vadd.f32 %v4423, %v4535
        %4537 = vmatmul.f32.gmra.mxu0 %v4280
        %v4538 = vpop.f32.mrf.mxu0
        %v4539 = vadd.f32 %v4426, %v4538
        %4540 = vmatmul.f32.gmra.mxu0 %v4283
        %v4541 = vpop.f32.mrf.mxu0
        %v4542 = vadd.f32 %v4429, %v4541
        %4543 = vmatmul.f32.gmra.mxu0 %v4286
        %v4544 = vpop.f32.mrf.mxu0
        %v4545 = vadd.f32 %v4432, %v4544
        %4546 = vmatmul.f32.gmra.mxu0 %v4289
        %v4547 = vpop.f32.mrf.mxu0
        %v4548 = vadd.f32 %v4435, %v4547
        %4549 = vmatmul.f32.gmra.mxu0 %v4292
        %v4550 = vpop.f32.mrf.mxu0
        %v4551 = vadd.f32 %v4438, %v4550
        %4552 = vmatmul.f32.gmra.mxu0 %v4295
        %v4553 = vpop.f32.mrf.mxu0
        %v4554 = vadd.f32 %v4441, %v4553
        %4555 = vmatmul.f32.gmra.mxu0 %v4298
        %v4556 = vpop.f32.mrf.mxu0
        %v4557 = vadd.f32 %v4444, %v4556
        %4558 = vmatmul.f32.gmra.mxu0 %v4301
        %v4559 = vpop.f32.mrf.mxu0
        %v4560 = vadd.f32 %v4447, %v4559
        %4561 = vmatmul.f32.gmra.mxu0 %v4304
        %v4562 = vpop.f32.mrf.mxu0
        %v4563 = vadd.f32 %v4450, %v4562
        %4564 = vmatmul.f32.gmra.mxu0 %v4307
        %v4565 = vpop.f32.mrf.mxu0
        %v4566 = vadd.f32 %v4453, %v4565
        %4567 = vmatmul.f32.gmra.mxu0 %v4310
        %v4568 = vpop.f32.mrf.mxu0
        %v4569 = vadd.f32 %v4456, %v4568
        %4570 = vmatmul.f32.gmra.mxu0 %v4313
        %v4571 = vpop.f32.mrf.mxu0
        %v4572 = vadd.f32 %v4459, %v4571
        %4573 = vmatmul.f32.gmra.mxu0 %v4316
        %v4574 = vpop.f32.mrf.mxu0
        %v4575 = vadd.f32 %v4462, %v4574
        %4576 = vmatmul.f32.gmra.mxu0 %v4319
        %v4577 = vpop.f32.mrf.mxu0
        %v4578 = vadd.f32 %v4465, %v4577
        %4579 = vmatmul.f32.gmra.mxu0 %v4322
        %v4580 = vpop.f32.mrf.mxu0
        %v4581 = vadd.f32 %v4468, %v4580
        %4582 = vmatmul.f32.gmra.mxu0 %v4325
        %v4583 = vpop.f32.mrf.mxu0
        %v4584 = vadd.f32 %v4471, %v4583
        %4585 = vmatmul.f32.gmra.mxu0 %v4328
        %v4586 = vpop.f32.mrf.mxu0
        %v4587 = vadd.f32 %v4474, %v4586
        %4588 = vmatmul.f32.gmra.mxu0 %v4331
        %v4589 = vpop.f32.mrf.mxu0
        %v4590 = vadd.f32 %v4477, %v4589
        %4591 = vmatmul.f32.gmra.mxu0 %v4334
        %v4592 = vpop.f32.mrf.mxu0
        %v4593 = vadd.f32 %v4480, %v4592
        %4594 = vmatmul.f32.gmra.mxu0 %v4337
        %v4595 = vpop.f32.mrf.mxu0
        %v4596 = vadd.f32 %v4483, %v4595
        %4597 = vmatmul.f32.gmra.mxu0 %v4340
        %v4598 = vpop.f32.mrf.mxu0
        %v4599 = vadd.f32 %v4486, %v4598
        %4600 = vmatmul.f32.gmra.mxu0 %v4343
        %v4601 = vpop.f32.mrf.mxu0
        %v4602 = vadd.f32 %v4489, %v4601
        %4603 = vmatmul.f32.gmra.mxu0 %v4346
        %v4604 = vpop.f32.mrf.mxu0
        %v4605 = vadd.f32 %v4492, %v4604
        %4606 = vmatmul.f32.gmra.mxu0 %v4349
        %v4607 = vpop.f32.mrf.mxu0
        %v4608 = vadd.f32 %v4495, %v4607
        %4609 = vmatmul.f32.gmra.mxu0 %v4352
        %v4610 = vpop.f32.mrf.mxu0
        %v4611 = vadd.f32 %v4498, %v4610
        %4612 = vmatmul.f32.gmra.mxu0 %v4355
        %v4613 = vpop.f32.mrf.mxu0
        %v4614 = vadd.f32 %v4501, %v4613
        %4615 = vmatmul.f32.gmra.mxu0 %v4358
        %v4616 = vpop.f32.mrf.mxu0
        %v4617 = vadd.f32 %v4504, %v4616
        %4618 = vdwg.mxu0
        %4619 = vmatpush.msra.mxu0 %v565
        %4620 = vmatpush.msra.mxu0 %v564
        %4621 = vmatpush.msra.mxu0 %v563
        %4622 = vmatpush.msra.mxu0 %v562
        %4623 = vmatpush.msra.mxu0 %v561
        %4624 = vmatpush.msra.mxu0 %v560
        %4625 = vmatpush.msra.mxu0 %v559
        %4626 = vmatpush.msra.mxu0 %v558
        %4627 = vmatpush.msra.mxu0 %v557
        %4628 = vmatpush.msra.mxu0 %v556
        %4629 = vmatpush.msra.mxu0 %v555
        %4630 = vmatpush.msra.mxu0 %v554
        %4631 = vmatpush.msra.mxu0 %v553
        %4632 = vmatpush.msra.mxu0 %v552
        %4633 = vmatpush.msra.mxu0 %v551
        %4634 = vmatpush.msra.mxu0 %v550
        %4635 = vmatmul.f32.gmra.mxu0 %v4266
        %v4636 = vpop.f32.mrf.mxu0
        %v4637 = vadd.f32 %v4524, %v4636
        %4638 = vmatmul.f32.gmra.mxu0 %v4269
        %v4639 = vpop.f32.mrf.mxu0
        %v4640 = vadd.f32 %v4527, %v4639
        %4641 = vmatmul.f32.gmra.mxu0 %v4272
        %v4642 = vpop.f32.mrf.mxu0
        %v4643 = vadd.f32 %v4530, %v4642
        %4644 = vmatmul.f32.gmra.mxu0 %v4275
        %v4645 = vpop.f32.mrf.mxu0
        %v4646 = vadd.f32 %v4533, %v4645
        %4647 = vmatmul.f32.gmra.mxu0 %v4278
        %v4648 = vpop.f32.mrf.mxu0
        %v4649 = vadd.f32 %v4536, %v4648
        %4650 = vmatmul.f32.gmra.mxu0 %v4281
        %v4651 = vpop.f32.mrf.mxu0
        %v4652 = vadd.f32 %v4539, %v4651
        %4653 = vmatmul.f32.gmra.mxu0 %v4284
        %v4654 = vpop.f32.mrf.mxu0
        %v4655 = vadd.f32 %v4542, %v4654
        %4656 = vmatmul.f32.gmra.mxu0 %v4287
        %v4657 = vpop.f32.mrf.mxu0
        %v4658 = vadd.f32 %v4545, %v4657
        %4659 = vmatmul.f32.gmra.mxu0 %v4290
        %v4660 = vpop.f32.mrf.mxu0
        %v4661 = vadd.f32 %v4548, %v4660
        %4662 = vmatmul.f32.gmra.mxu0 %v4293
        %v4663 = vpop.f32.mrf.mxu0
        %v4664 = vadd.f32 %v4551, %v4663
        %4665 = vmatmul.f32.gmra.mxu0 %v4296
        %v4666 = vpop.f32.mrf.mxu0
        %v4667 = vadd.f32 %v4554, %v4666
        %4668 = vmatmul.f32.gmra.mxu0 %v4299
        %v4669 = vpop.f32.mrf.mxu0
        %v4670 = vadd.f32 %v4557, %v4669
        %4671 = vmatmul.f32.gmra.mxu0 %v4302
        %v4672 = vpop.f32.mrf.mxu0
        %v4673 = vadd.f32 %v4560, %v4672
        %4674 = vmatmul.f32.gmra.mxu0 %v4305
        %v4675 = vpop.f32.mrf.mxu0
        %v4676 = vadd.f32 %v4563, %v4675
        %4677 = vmatmul.f32.gmra.mxu0 %v4308
        %v4678 = vpop.f32.mrf.mxu0
        %v4679 = vadd.f32 %v4566, %v4678
        %4680 = vmatmul.f32.gmra.mxu0 %v4311
        %v4681 = vpop.f32.mrf.mxu0
        %v4682 = vadd.f32 %v4569, %v4681
        %4683 = vmatmul.f32.gmra.mxu0 %v4314
        %v4684 = vpop.f32.mrf.mxu0
        %v4685 = vadd.f32 %v4572, %v4684
        %4686 = vmatmul.f32.gmra.mxu0 %v4317
        %v4687 = vpop.f32.mrf.mxu0
        %v4688 = vadd.f32 %v4575, %v4687
        %4689 = vmatmul.f32.gmra.mxu0 %v4320
        %v4690 = vpop.f32.mrf.mxu0
        %v4691 = vadd.f32 %v4578, %v4690
        %4692 = vmatmul.f32.gmra.mxu0 %v4323
        %v4693 = vpop.f32.mrf.mxu0
        %v4694 = vadd.f32 %v4581, %v4693
        %4695 = vmatmul.f32.gmra.mxu0 %v4326
        %v4696 = vpop.f32.mrf.mxu0
        %v4697 = vadd.f32 %v4584, %v4696
        %4698 = vmatmul.f32.gmra.mxu0 %v4329
        %v4699 = vpop.f32.mrf.mxu0
        %v4700 = vadd.f32 %v4587, %v4699
        %4701 = vmatmul.f32.gmra.mxu0 %v4332
        %v4702 = vpop.f32.mrf.mxu0
        %v4703 = vadd.f32 %v4590, %v4702
        %4704 = vmatmul.f32.gmra.mxu0 %v4335
        %v4705 = vpop.f32.mrf.mxu0
        %v4706 = vadd.f32 %v4593, %v4705
        %4707 = vmatmul.f32.gmra.mxu0 %v4338
        %v4708 = vpop.f32.mrf.mxu0
        %v4709 = vadd.f32 %v4596, %v4708
        %4710 = vmatmul.f32.gmra.mxu0 %v4341
        %v4711 = vpop.f32.mrf.mxu0
        %v4712 = vadd.f32 %v4599, %v4711
        %4713 = vmatmul.f32.gmra.mxu0 %v4344
        %v4714 = vpop.f32.mrf.mxu0
        %v4715 = vadd.f32 %v4602, %v4714
        %4716 = vmatmul.f32.gmra.mxu0 %v4347
        %v4717 = vpop.f32.mrf.mxu0
        %v4718 = vadd.f32 %v4605, %v4717
        %4719 = vmatmul.f32.gmra.mxu0 %v4350
        %v4720 = vpop.f32.mrf.mxu0
        %v4721 = vadd.f32 %v4608, %v4720
        %4722 = vmatmul.f32.gmra.mxu0 %v4353
        %v4723 = vpop.f32.mrf.mxu0
        %v4724 = vadd.f32 %v4611, %v4723
        %4725 = vmatmul.f32.gmra.mxu0 %v4356
        %v4726 = vpop.f32.mrf.mxu0
        %v4727 = vadd.f32 %v4614, %v4726
        %4728 = vmatmul.f32.gmra.mxu0 %v4359
        %v4729 = vpop.f32.mrf.mxu0
        %v4730 = vadd.f32 %v4617, %v4729
        %4731 = vdwg.mxu0
        %v4732 = vadd.f32 %v4361, %v4637
        %v4733 = vadd.f32 %v4362, %v4640
        %v4734 = vadd.f32 %v4363, %v4643
        %v4735 = vadd.f32 %v4364, %v4646
        %v4736 = vadd.f32 %v4365, %v4649
        %v4737 = vadd.f32 %v4366, %v4652
        %v4738 = vadd.f32 %v4367, %v4655
        %v4739 = vadd.f32 %v4368, %v4658
        %v4740 = vadd.f32 %v4369, %v4661
        %v4741 = vadd.f32 %v4370, %v4664
        %v4742 = vadd.f32 %v4371, %v4667
        %v4743 = vadd.f32 %v4372, %v4670
        %v4744 = vadd.f32 %v4373, %v4673
        %v4745 = vadd.f32 %v4374, %v4676
        %v4746 = vadd.f32 %v4375, %v4679
        %v4747 = vadd.f32 %v4376, %v4682
        %v4748 = vadd.f32 %v4377, %v4685
        %v4749 = vadd.f32 %v4378, %v4688
        %v4750 = vadd.f32 %v4379, %v4691
        %v4751 = vadd.f32 %v4380, %v4694
        %v4752 = vadd.f32 %v4381, %v4697
        %v4753 = vadd.f32 %v4382, %v4700
        %v4754 = vadd.f32 %v4383, %v4703
        %v4755 = vadd.f32 %v4384, %v4706
        %v4756 = vadd.f32 %v4385, %v4709
        %v4757 = vadd.f32 %v4386, %v4712
        %v4758 = vadd.f32 %v4387, %v4715
        %v4759 = vadd.f32 %v4388, %v4718
        %v4760 = vadd.f32 %v4389, %v4721
        %v4761 = vadd.f32 %v4390, %v4724
        %v4762 = vadd.f32 %v4391, %v4727
        %v4763 = vadd.f32 %v4392, %v4730
        %4764 = vst [vmem:[%s4360] sm:$0xff] %v4732
        %4765 = vst [vmem:[%s4360 + $0x8] sm:$0xff] %v4733
        %4766 = vst [vmem:[%s4360 + $0x10] sm:$0xff] %v4734
        %4767 = vst [vmem:[%s4360 + $0x18] sm:$0xff] %v4735
        %4768 = vst [vmem:[%s4360 + $0x20] sm:$0xff] %v4736
        %4769 = vst [vmem:[%s4360 + $0x28] sm:$0xff] %v4737
        %4770 = vst [vmem:[%s4360 + $0x30] sm:$0xff] %v4738
        %4771 = vst [vmem:[%s4360 + $0x38] sm:$0xff] %v4739
        %4772 = vst [vmem:[%s4360 + $0x40] sm:$0xff] %v4740
        %4773 = vst [vmem:[%s4360 + $0x48] sm:$0xff] %v4741
        %4774 = vst [vmem:[%s4360 + $0x50] sm:$0xff] %v4742
        %4775 = vst [vmem:[%s4360 + $0x58] sm:$0xff] %v4743
        %4776 = vst [vmem:[%s4360 + $0x60] sm:$0xff] %v4744
        %4777 = vst [vmem:[%s4360 + $0x68] sm:$0xff] %v4745
        %4778 = vst [vmem:[%s4360 + $0x70] sm:$0xff] %v4746
        %4779 = vst [vmem:[%s4360 + $0x78] sm:$0xff] %v4747
        %4780 = vst [vmem:[%s4360 + $0x80] sm:$0xff] %v4748
        %4781 = vst [vmem:[%s4360 + $0x88] sm:$0xff] %v4749
        %4782 = vst [vmem:[%s4360 + $0x90] sm:$0xff] %v4750
        %4783 = vst [vmem:[%s4360 + $0x98] sm:$0xff] %v4751
        %4784 = vst [vmem:[%s4360 + $0xa0] sm:$0xff] %v4752
        %4785 = vst [vmem:[%s4360 + $0xa8] sm:$0xff] %v4753
        %4786 = vst [vmem:[%s4360 + $0xb0] sm:$0xff] %v4754
        %4787 = vst [vmem:[%s4360 + $0xb8] sm:$0xff] %v4755
        %4788 = vst [vmem:[%s4360 + $0xc0] sm:$0xff] %v4756
        %4789 = vst [vmem:[%s4360 + $0xc8] sm:$0xff] %v4757
        %4790 = vst [vmem:[%s4360 + $0xd0] sm:$0xff] %v4758
        %4791 = vst [vmem:[%s4360 + $0xd8] sm:$0xff] %v4759
        %4792 = vst [vmem:[%s4360 + $0xe0] sm:$0xff] %v4760
        %4793 = vst [vmem:[%s4360 + $0xe8] sm:$0xff] %v4761
        %4794 = vst [vmem:[%s4360 + $0xf0] sm:$0xff] %v4762
        %4795 = vst [vmem:[%s4360 + $0xf8] sm:$0xff] %v4763
        %v4796 = vadd.s32 %v485, 290
        %v4797 = vadd.s32 %v486, 290
        %v4798 = vadd.s32 %v487, 290
        %v4799 = vadd.s32 %v488, 290
        %v4800 = vadd.s32 %v489, 290
        %v4801 = vadd.s32 %v490, 290
        %v4802 = vadd.s32 %v491, 290
        %v4803 = vadd.s32 %v492, 290
        %v4804 = vadd.s32 %v493, 290
        %v4805 = vadd.s32 %v494, 290
        %v4806 = vadd.s32 %v495, 290
        %v4807 = vadd.s32 %v496, 290
        %v4808 = vadd.s32 %v497, 290
        %v4809 = vadd.s32 %v498, 290
        %v4810 = vadd.s32 %v499, 290
        %v4811 = vadd.s32 %v500, 290
        %v4812 = vadd.s32 %v501, 290
        %v4813 = vadd.s32 %v502, 290
        %v4814 = vadd.s32 %v503, 290
        %v4815 = vadd.s32 %v504, 290
        %v4816 = vadd.s32 %v505, 290
        %v4817 = vadd.s32 %v506, 290
        %v4818 = vadd.s32 %v507, 290
        %v4819 = vadd.s32 %v508, 290
        %v4820 = vadd.s32 %v509, 290
        %v4821 = vadd.s32 %v510, 290
        %v4822 = vadd.s32 %v511, 290
        %v4823 = vadd.s32 %v512, 290
        %v4824 = vadd.s32 %v513, 290
        %v4825 = vadd.s32 %v514, 290
        %v4826 = vadd.s32 %v515, 290
        %v4827 = vadd.s32 %v516, 290
        %4828 = vset.pattern.permute.xlu0 0
        %4829 = vperm.xlu0 %4828, %v4796
        %v4830 = vpop.permute.xlu0 %4829
        %4831 = vset.pattern.permute.xlu0 0
        %4832 = vperm.xlu0 %4831, %v4797
        %v4833 = vpop.permute.xlu0 %4832
        %4834 = vset.pattern.permute.xlu0 0
        %4835 = vperm.xlu0 %4834, %v4798
        %v4836 = vpop.permute.xlu0 %4835
        %4837 = vset.pattern.permute.xlu0 0
        %4838 = vperm.xlu0 %4837, %v4799
        %v4839 = vpop.permute.xlu0 %4838
        %4840 = vset.pattern.permute.xlu0 0
        %4841 = vperm.xlu0 %4840, %v4800
        %v4842 = vpop.permute.xlu0 %4841
        %4843 = vset.pattern.permute.xlu0 0
        %4844 = vperm.xlu0 %4843, %v4801
        %v4845 = vpop.permute.xlu0 %4844
        %4846 = vset.pattern.permute.xlu0 0
        %4847 = vperm.xlu0 %4846, %v4802
        %v4848 = vpop.permute.xlu0 %4847
        %4849 = vset.pattern.permute.xlu0 0
        %4850 = vperm.xlu0 %4849, %v4803
        %v4851 = vpop.permute.xlu0 %4850
        %4852 = vset.pattern.permute.xlu0 0
        %4853 = vperm.xlu0 %4852, %v4804
        %v4854 = vpop.permute.xlu0 %4853
        %4855 = vset.pattern.permute.xlu0 0
        %4856 = vperm.xlu0 %4855, %v4805
        %v4857 = vpop.permute.xlu0 %4856
        %4858 = vset.pattern.permute.xlu0 0
        %4859 = vperm.xlu0 %4858, %v4806
        %v4860 = vpop.permute.xlu0 %4859
        %4861 = vset.pattern.permute.xlu0 0
        %4862 = vperm.xlu0 %4861, %v4807
        %v4863 = vpop.permute.xlu0 %4862
        %4864 = vset.pattern.permute.xlu0 0
        %4865 = vperm.xlu0 %4864, %v4808
        %v4866 = vpop.permute.xlu0 %4865
        %4867 = vset.pattern.permute.xlu0 0
        %4868 = vperm.xlu0 %4867, %v4809
        %v4869 = vpop.permute.xlu0 %4868
        %4870 = vset.pattern.permute.xlu0 0
        %4871 = vperm.xlu0 %4870, %v4810
        %v4872 = vpop.permute.xlu0 %4871
        %4873 = vset.pattern.permute.xlu0 0
        %4874 = vperm.xlu0 %4873, %v4811
        %v4875 = vpop.permute.xlu0 %4874
        %4876 = vset.pattern.permute.xlu0 0
        %4877 = vperm.xlu0 %4876, %v4812
        %v4878 = vpop.permute.xlu0 %4877
        %4879 = vset.pattern.permute.xlu0 0
        %4880 = vperm.xlu0 %4879, %v4813
        %v4881 = vpop.permute.xlu0 %4880
        %4882 = vset.pattern.permute.xlu0 0
        %4883 = vperm.xlu0 %4882, %v4814
        %v4884 = vpop.permute.xlu0 %4883
        %4885 = vset.pattern.permute.xlu0 0
        %4886 = vperm.xlu0 %4885, %v4815
        %v4887 = vpop.permute.xlu0 %4886
        %4888 = vset.pattern.permute.xlu0 0
        %4889 = vperm.xlu0 %4888, %v4816
        %v4890 = vpop.permute.xlu0 %4889
        %4891 = vset.pattern.permute.xlu0 0
        %4892 = vperm.xlu0 %4891, %v4817
        %v4893 = vpop.permute.xlu0 %4892
        %4894 = vset.pattern.permute.xlu0 0
        %4895 = vperm.xlu0 %4894, %v4818
        %v4896 = vpop.permute.xlu0 %4895
        %4897 = vset.pattern.permute.xlu0 0
        %4898 = vperm.xlu0 %4897, %v4819
        %v4899 = vpop.permute.xlu0 %4898
        %4900 = vset.pattern.permute.xlu0 0
        %4901 = vperm.xlu0 %4900, %v4820
        %v4902 = vpop.permute.xlu0 %4901
        %4903 = vset.pattern.permute.xlu0 0
        %4904 = vperm.xlu0 %4903, %v4821
        %v4905 = vpop.permute.xlu0 %4904
        %4906 = vset.pattern.permute.xlu0 0
        %4907 = vperm.xlu0 %4906, %v4822
        %v4908 = vpop.permute.xlu0 %4907
        %4909 = vset.pattern.permute.xlu0 0
        %4910 = vperm.xlu0 %4909, %v4823
        %v4911 = vpop.permute.xlu0 %4910
        %4912 = vset.pattern.permute.xlu0 0
        %4913 = vperm.xlu0 %4912, %v4824
        %v4914 = vpop.permute.xlu0 %4913
        %4915 = vset.pattern.permute.xlu0 0
        %4916 = vperm.xlu0 %4915, %v4825
        %v4917 = vpop.permute.xlu0 %4916
        %4918 = vset.pattern.permute.xlu0 0
        %4919 = vperm.xlu0 %4918, %v4826
        %v4920 = vpop.permute.xlu0 %4919
        %4921 = vset.pattern.permute.xlu0 0
        %4922 = vperm.xlu0 %4921, %v4827
        %v4923 = vpop.permute.xlu0 %4922
        %vm4924 = vcmp.eq.s32.totalorder %v4830, %v662
        %vm4925 = vcmp.eq.s32.totalorder %v4830, %v663
        %vm4926 = vcmp.eq.s32.totalorder %v4830, %v664
        %vm4927 = vcmp.eq.s32.totalorder %v4833, %v662
        %vm4928 = vcmp.eq.s32.totalorder %v4833, %v663
        %vm4929 = vcmp.eq.s32.totalorder %v4833, %v664
        %vm4930 = vcmp.eq.s32.totalorder %v4836, %v662
        %vm4931 = vcmp.eq.s32.totalorder %v4836, %v663
        %vm4932 = vcmp.eq.s32.totalorder %v4836, %v664
        %vm4933 = vcmp.eq.s32.totalorder %v4839, %v662
        %vm4934 = vcmp.eq.s32.totalorder %v4839, %v663
        %vm4935 = vcmp.eq.s32.totalorder %v4839, %v664
        %vm4936 = vcmp.eq.s32.totalorder %v4842, %v662
        %vm4937 = vcmp.eq.s32.totalorder %v4842, %v663
        %vm4938 = vcmp.eq.s32.totalorder %v4842, %v664
        %vm4939 = vcmp.eq.s32.totalorder %v4845, %v662
        %vm4940 = vcmp.eq.s32.totalorder %v4845, %v663
        %vm4941 = vcmp.eq.s32.totalorder %v4845, %v664
        %vm4942 = vcmp.eq.s32.totalorder %v4848, %v662
        %vm4943 = vcmp.eq.s32.totalorder %v4848, %v663
        %vm4944 = vcmp.eq.s32.totalorder %v4848, %v664
        %vm4945 = vcmp.eq.s32.totalorder %v4851, %v662
        %vm4946 = vcmp.eq.s32.totalorder %v4851, %v663
        %vm4947 = vcmp.eq.s32.totalorder %v4851, %v664
        %vm4948 = vcmp.eq.s32.totalorder %v4854, %v662
        %vm4949 = vcmp.eq.s32.totalorder %v4854, %v663
        %vm4950 = vcmp.eq.s32.totalorder %v4854, %v664
        %vm4951 = vcmp.eq.s32.totalorder %v4857, %v662
        %vm4952 = vcmp.eq.s32.totalorder %v4857, %v663
        %vm4953 = vcmp.eq.s32.totalorder %v4857, %v664
        %vm4954 = vcmp.eq.s32.totalorder %v4860, %v662
        %vm4955 = vcmp.eq.s32.totalorder %v4860, %v663
        %vm4956 = vcmp.eq.s32.totalorder %v4860, %v664
        %vm4957 = vcmp.eq.s32.totalorder %v4863, %v662
        %vm4958 = vcmp.eq.s32.totalorder %v4863, %v663
        %vm4959 = vcmp.eq.s32.totalorder %v4863, %v664
        %vm4960 = vcmp.eq.s32.totalorder %v4866, %v662
        %vm4961 = vcmp.eq.s32.totalorder %v4866, %v663
        %vm4962 = vcmp.eq.s32.totalorder %v4866, %v664
        %vm4963 = vcmp.eq.s32.totalorder %v4869, %v662
        %vm4964 = vcmp.eq.s32.totalorder %v4869, %v663
        %vm4965 = vcmp.eq.s32.totalorder %v4869, %v664
        %vm4966 = vcmp.eq.s32.totalorder %v4872, %v662
        %vm4967 = vcmp.eq.s32.totalorder %v4872, %v663
        %vm4968 = vcmp.eq.s32.totalorder %v4872, %v664
        %vm4969 = vcmp.eq.s32.totalorder %v4875, %v662
        %vm4970 = vcmp.eq.s32.totalorder %v4875, %v663
        %vm4971 = vcmp.eq.s32.totalorder %v4875, %v664
        %vm4972 = vcmp.eq.s32.totalorder %v4878, %v662
        %vm4973 = vcmp.eq.s32.totalorder %v4878, %v663
        %vm4974 = vcmp.eq.s32.totalorder %v4878, %v664
        %vm4975 = vcmp.eq.s32.totalorder %v4881, %v662
        %vm4976 = vcmp.eq.s32.totalorder %v4881, %v663
        %vm4977 = vcmp.eq.s32.totalorder %v4881, %v664
        %vm4978 = vcmp.eq.s32.totalorder %v4884, %v662
        %vm4979 = vcmp.eq.s32.totalorder %v4884, %v663
        %vm4980 = vcmp.eq.s32.totalorder %v4884, %v664
        %vm4981 = vcmp.eq.s32.totalorder %v4887, %v662
        %vm4982 = vcmp.eq.s32.totalorder %v4887, %v663
        %vm4983 = vcmp.eq.s32.totalorder %v4887, %v664
        %vm4984 = vcmp.eq.s32.totalorder %v4890, %v662
        %vm4985 = vcmp.eq.s32.totalorder %v4890, %v663
        %vm4986 = vcmp.eq.s32.totalorder %v4890, %v664
        %vm4987 = vcmp.eq.s32.totalorder %v4893, %v662
        %vm4988 = vcmp.eq.s32.totalorder %v4893, %v663
        %vm4989 = vcmp.eq.s32.totalorder %v4893, %v664
        %vm4990 = vcmp.eq.s32.totalorder %v4896, %v662
        %vm4991 = vcmp.eq.s32.totalorder %v4896, %v663
        %vm4992 = vcmp.eq.s32.totalorder %v4896, %v664
        %vm4993 = vcmp.eq.s32.totalorder %v4899, %v662
        %vm4994 = vcmp.eq.s32.totalorder %v4899, %v663
        %vm4995 = vcmp.eq.s32.totalorder %v4899, %v664
        %vm4996 = vcmp.eq.s32.totalorder %v4902, %v662
        %vm4997 = vcmp.eq.s32.totalorder %v4902, %v663
        %vm4998 = vcmp.eq.s32.totalorder %v4902, %v664
        %vm4999 = vcmp.eq.s32.totalorder %v4905, %v662
        %vm5000 = vcmp.eq.s32.totalorder %v4905, %v663
        %vm5001 = vcmp.eq.s32.totalorder %v4905, %v664
        %vm5002 = vcmp.eq.s32.totalorder %v4908, %v662
        %vm5003 = vcmp.eq.s32.totalorder %v4908, %v663
        %vm5004 = vcmp.eq.s32.totalorder %v4908, %v664
        %vm5005 = vcmp.eq.s32.totalorder %v4911, %v662
        %vm5006 = vcmp.eq.s32.totalorder %v4911, %v663
        %vm5007 = vcmp.eq.s32.totalorder %v4911, %v664
        %vm5008 = vcmp.eq.s32.totalorder %v4914, %v662
        %vm5009 = vcmp.eq.s32.totalorder %v4914, %v663
        %vm5010 = vcmp.eq.s32.totalorder %v4914, %v664
        %vm5011 = vcmp.eq.s32.totalorder %v4917, %v662
        %vm5012 = vcmp.eq.s32.totalorder %v4917, %v663
        %vm5013 = vcmp.eq.s32.totalorder %v4917, %v664
        %vm5014 = vcmp.eq.s32.totalorder %v4920, %v662
        %vm5015 = vcmp.eq.s32.totalorder %v4920, %v663
        %vm5016 = vcmp.eq.s32.totalorder %v4920, %v664
        %vm5017 = vcmp.eq.s32.totalorder %v4923, %v662
        %vm5018 = vcmp.eq.s32.totalorder %v4923, %v663
        %vm5019 = vcmp.eq.s32.totalorder %v4923, %v664
        %v5020 = vsel %vm4924, 1, 0
        %v5021 = vsel %vm4925, 1, 0
        %v5022 = vsel %vm4926, 1, 0
        %v5023 = vsel %vm4927, 1, 0
        %v5024 = vsel %vm4928, 1, 0
        %v5025 = vsel %vm4929, 1, 0
        %v5026 = vsel %vm4930, 1, 0
        %v5027 = vsel %vm4931, 1, 0
        %v5028 = vsel %vm4932, 1, 0
        %v5029 = vsel %vm4933, 1, 0
        %v5030 = vsel %vm4934, 1, 0
        %v5031 = vsel %vm4935, 1, 0
        %v5032 = vsel %vm4936, 1, 0
        %v5033 = vsel %vm4937, 1, 0
        %v5034 = vsel %vm4938, 1, 0
        %v5035 = vsel %vm4939, 1, 0
        %v5036 = vsel %vm4940, 1, 0
        %v5037 = vsel %vm4941, 1, 0
        %v5038 = vsel %vm4942, 1, 0
        %v5039 = vsel %vm4943, 1, 0
        %v5040 = vsel %vm4944, 1, 0
        %v5041 = vsel %vm4945, 1, 0
        %v5042 = vsel %vm4946, 1, 0
        %v5043 = vsel %vm4947, 1, 0
        %v5044 = vsel %vm4948, 1, 0
        %v5045 = vsel %vm4949, 1, 0
        %v5046 = vsel %vm4950, 1, 0
        %v5047 = vsel %vm4951, 1, 0
        %v5048 = vsel %vm4952, 1, 0
        %v5049 = vsel %vm4953, 1, 0
        %v5050 = vsel %vm4954, 1, 0
        %v5051 = vsel %vm4955, 1, 0
        %v5052 = vsel %vm4956, 1, 0
        %v5053 = vsel %vm4957, 1, 0
        %v5054 = vsel %vm4958, 1, 0
        %v5055 = vsel %vm4959, 1, 0
        %v5056 = vsel %vm4960, 1, 0
        %v5057 = vsel %vm4961, 1, 0
        %v5058 = vsel %vm4962, 1, 0
        %v5059 = vsel %vm4963, 1, 0
        %v5060 = vsel %vm4964, 1, 0
        %v5061 = vsel %vm4965, 1, 0
        %v5062 = vsel %vm4966, 1, 0
        %v5063 = vsel %vm4967, 1, 0
        %v5064 = vsel %vm4968, 1, 0
        %v5065 = vsel %vm4969, 1, 0
        %v5066 = vsel %vm4970, 1, 0
        %v5067 = vsel %vm4971, 1, 0
        %v5068 = vsel %vm4972, 1, 0
        %v5069 = vsel %vm4973, 1, 0
        %v5070 = vsel %vm4974, 1, 0
        %v5071 = vsel %vm4975, 1, 0
        %v5072 = vsel %vm4976, 1, 0
        %v5073 = vsel %vm4977, 1, 0
        %v5074 = vsel %vm4978, 1, 0
        %v5075 = vsel %vm4979, 1, 0
        %v5076 = vsel %vm4980, 1, 0
        %v5077 = vsel %vm4981, 1, 0
        %v5078 = vsel %vm4982, 1, 0
        %v5079 = vsel %vm4983, 1, 0
        %v5080 = vsel %vm4984, 1, 0
        %v5081 = vsel %vm4985, 1, 0
        %v5082 = vsel %vm4986, 1, 0
        %v5083 = vsel %vm4987, 1, 0
        %v5084 = vsel %vm4988, 1, 0
        %v5085 = vsel %vm4989, 1, 0
        %v5086 = vsel %vm4990, 1, 0
        %v5087 = vsel %vm4991, 1, 0
        %v5088 = vsel %vm4992, 1, 0
        %v5089 = vsel %vm4993, 1, 0
        %v5090 = vsel %vm4994, 1, 0
        %v5091 = vsel %vm4995, 1, 0
        %v5092 = vsel %vm4996, 1, 0
        %v5093 = vsel %vm4997, 1, 0
        %v5094 = vsel %vm4998, 1, 0
        %v5095 = vsel %vm4999, 1, 0
        %v5096 = vsel %vm5000, 1, 0
        %v5097 = vsel %vm5001, 1, 0
        %v5098 = vsel %vm5002, 1, 0
        %v5099 = vsel %vm5003, 1, 0
        %v5100 = vsel %vm5004, 1, 0
        %v5101 = vsel %vm5005, 1, 0
        %v5102 = vsel %vm5006, 1, 0
        %v5103 = vsel %vm5007, 1, 0
        %v5104 = vsel %vm5008, 1, 0
        %v5105 = vsel %vm5009, 1, 0
        %v5106 = vsel %vm5010, 1, 0
        %v5107 = vsel %vm5011, 1, 0
        %v5108 = vsel %vm5012, 1, 0
        %v5109 = vsel %vm5013, 1, 0
        %v5110 = vsel %vm5014, 1, 0
        %v5111 = vsel %vm5015, 1, 0
        %v5112 = vsel %vm5016, 1, 0
        %v5113 = vsel %vm5017, 1, 0
        %v5114 = vsel %vm5018, 1, 0
        %v5115 = vsel %vm5019, 1, 0
        %v5116 = vcvt.s32.f32 %v5020
        %v5117 = vcvt.s32.f32 %v5021
        %v5118 = vcvt.s32.f32 %v5022
        %v5119 = vcvt.s32.f32 %v5023
        %v5120 = vcvt.s32.f32 %v5024
        %v5121 = vcvt.s32.f32 %v5025
        %v5122 = vcvt.s32.f32 %v5026
        %v5123 = vcvt.s32.f32 %v5027
        %v5124 = vcvt.s32.f32 %v5028
        %v5125 = vcvt.s32.f32 %v5029
        %v5126 = vcvt.s32.f32 %v5030
        %v5127 = vcvt.s32.f32 %v5031
        %v5128 = vcvt.s32.f32 %v5032
        %v5129 = vcvt.s32.f32 %v5033
        %v5130 = vcvt.s32.f32 %v5034
        %v5131 = vcvt.s32.f32 %v5035
        %v5132 = vcvt.s32.f32 %v5036
        %v5133 = vcvt.s32.f32 %v5037
        %v5134 = vcvt.s32.f32 %v5038
        %v5135 = vcvt.s32.f32 %v5039
        %v5136 = vcvt.s32.f32 %v5040
        %v5137 = vcvt.s32.f32 %v5041
        %v5138 = vcvt.s32.f32 %v5042
        %v5139 = vcvt.s32.f32 %v5043
        %v5140 = vcvt.s32.f32 %v5044
        %v5141 = vcvt.s32.f32 %v5045
        %v5142 = vcvt.s32.f32 %v5046
        %v5143 = vcvt.s32.f32 %v5047
        %v5144 = vcvt.s32.f32 %v5048
        %v5145 = vcvt.s32.f32 %v5049
        %v5146 = vcvt.s32.f32 %v5050
        %v5147 = vcvt.s32.f32 %v5051
        %v5148 = vcvt.s32.f32 %v5052
        %v5149 = vcvt.s32.f32 %v5053
        %v5150 = vcvt.s32.f32 %v5054
        %v5151 = vcvt.s32.f32 %v5055
        %v5152 = vcvt.s32.f32 %v5056
        %v5153 = vcvt.s32.f32 %v5057
        %v5154 = vcvt.s32.f32 %v5058
        %v5155 = vcvt.s32.f32 %v5059
        %v5156 = vcvt.s32.f32 %v5060
        %v5157 = vcvt.s32.f32 %v5061
        %v5158 = vcvt.s32.f32 %v5062
        %v5159 = vcvt.s32.f32 %v5063
        %v5160 = vcvt.s32.f32 %v5064
        %v5161 = vcvt.s32.f32 %v5065
        %v5162 = vcvt.s32.f32 %v5066
        %v5163 = vcvt.s32.f32 %v5067
        %v5164 = vcvt.s32.f32 %v5068
        %v5165 = vcvt.s32.f32 %v5069
        %v5166 = vcvt.s32.f32 %v5070
        %v5167 = vcvt.s32.f32 %v5071
        %v5168 = vcvt.s32.f32 %v5072
        %v5169 = vcvt.s32.f32 %v5073
        %v5170 = vcvt.s32.f32 %v5074
        %v5171 = vcvt.s32.f32 %v5075
        %v5172 = vcvt.s32.f32 %v5076
        %v5173 = vcvt.s32.f32 %v5077
        %v5174 = vcvt.s32.f32 %v5078
        %v5175 = vcvt.s32.f32 %v5079
        %v5176 = vcvt.s32.f32 %v5080
        %v5177 = vcvt.s32.f32 %v5081
        %v5178 = vcvt.s32.f32 %v5082
        %v5179 = vcvt.s32.f32 %v5083
        %v5180 = vcvt.s32.f32 %v5084
        %v5181 = vcvt.s32.f32 %v5085
        %v5182 = vcvt.s32.f32 %v5086
        %v5183 = vcvt.s32.f32 %v5087
        %v5184 = vcvt.s32.f32 %v5088
        %v5185 = vcvt.s32.f32 %v5089
        %v5186 = vcvt.s32.f32 %v5090
        %v5187 = vcvt.s32.f32 %v5091
        %v5188 = vcvt.s32.f32 %v5092
        %v5189 = vcvt.s32.f32 %v5093
        %v5190 = vcvt.s32.f32 %v5094
        %v5191 = vcvt.s32.f32 %v5095
        %v5192 = vcvt.s32.f32 %v5096
        %v5193 = vcvt.s32.f32 %v5097
        %v5194 = vcvt.s32.f32 %v5098
        %v5195 = vcvt.s32.f32 %v5099
        %v5196 = vcvt.s32.f32 %v5100
        %v5197 = vcvt.s32.f32 %v5101
        %v5198 = vcvt.s32.f32 %v5102
        %v5199 = vcvt.s32.f32 %v5103
        %v5200 = vcvt.s32.f32 %v5104
        %v5201 = vcvt.s32.f32 %v5105
        %v5202 = vcvt.s32.f32 %v5106
        %v5203 = vcvt.s32.f32 %v5107
        %v5204 = vcvt.s32.f32 %v5108
        %v5205 = vcvt.s32.f32 %v5109
        %v5206 = vcvt.s32.f32 %v5110
        %v5207 = vcvt.s32.f32 %v5111
        %v5208 = vcvt.s32.f32 %v5112
        %v5209 = vcvt.s32.f32 %v5113
        %v5210 = vcvt.s32.f32 %v5114
        %v5211 = vcvt.s32.f32 %v5115
        %s5212 = scalar_lea.vmem [#allocation2], 1280
        %v5213 = vld [vmem:[%s5212] sm:$0xff]
        %v5214 = vld [vmem:[%s5212 + $0x8] sm:$0xff]
        %v5215 = vld [vmem:[%s5212 + $0x10] sm:$0xff]
        %v5216 = vld [vmem:[%s5212 + $0x18] sm:$0xff]
        %v5217 = vld [vmem:[%s5212 + $0x20] sm:$0xff]
        %v5218 = vld [vmem:[%s5212 + $0x28] sm:$0xff]
        %v5219 = vld [vmem:[%s5212 + $0x30] sm:$0xff]
        %v5220 = vld [vmem:[%s5212 + $0x38] sm:$0xff]
        %v5221 = vld [vmem:[%s5212 + $0x40] sm:$0xff]
        %v5222 = vld [vmem:[%s5212 + $0x48] sm:$0xff]
        %v5223 = vld [vmem:[%s5212 + $0x50] sm:$0xff]
        %v5224 = vld [vmem:[%s5212 + $0x58] sm:$0xff]
        %v5225 = vld [vmem:[%s5212 + $0x60] sm:$0xff]
        %v5226 = vld [vmem:[%s5212 + $0x68] sm:$0xff]
        %v5227 = vld [vmem:[%s5212 + $0x70] sm:$0xff]
        %v5228 = vld [vmem:[%s5212 + $0x78] sm:$0xff]
        %v5229 = vld [vmem:[%s5212 + $0x80] sm:$0xff]
        %v5230 = vld [vmem:[%s5212 + $0x88] sm:$0xff]
        %v5231 = vld [vmem:[%s5212 + $0x90] sm:$0xff]
        %v5232 = vld [vmem:[%s5212 + $0x98] sm:$0xff]
        %v5233 = vld [vmem:[%s5212 + $0xa0] sm:$0xff]
        %v5234 = vld [vmem:[%s5212 + $0xa8] sm:$0xff]
        %v5235 = vld [vmem:[%s5212 + $0xb0] sm:$0xff]
        %v5236 = vld [vmem:[%s5212 + $0xb8] sm:$0xff]
        %v5237 = vld [vmem:[%s5212 + $0xc0] sm:$0xff]
        %v5238 = vld [vmem:[%s5212 + $0xc8] sm:$0xff]
        %v5239 = vld [vmem:[%s5212 + $0xd0] sm:$0xff]
        %v5240 = vld [vmem:[%s5212 + $0xd8] sm:$0xff]
        %v5241 = vld [vmem:[%s5212 + $0xe0] sm:$0xff]
        %v5242 = vld [vmem:[%s5212 + $0xe8] sm:$0xff]
        %v5243 = vld [vmem:[%s5212 + $0xf0] sm:$0xff]
        %v5244 = vld [vmem:[%s5212 + $0xf8] sm:$0xff]
        %5245 = vmatpush.msra.mxu0 %v533
        %5246 = vmatpush.msra.mxu0 %v532
        %5247 = vmatpush.msra.mxu0 %v531
        %5248 = vmatpush.msra.mxu0 %v530
        %5249 = vmatpush.msra.mxu0 %v529
        %5250 = vmatpush.msra.mxu0 %v528
        %5251 = vmatpush.msra.mxu0 %v527
        %5252 = vmatpush.msra.mxu0 %v526
        %5253 = vmatpush.msra.mxu0 %v525
        %5254 = vmatpush.msra.mxu0 %v524
        %5255 = vmatpush.msra.mxu0 %v523
        %5256 = vmatpush.msra.mxu0 %v522
        %5257 = vmatpush.msra.mxu0 %v521
        %5258 = vmatpush.msra.mxu0 %v520
        %5259 = vmatpush.msra.mxu0 %v519
        %5260 = vmatpush.msra.mxu0 %v518
        %5261 = vmatmul.f32.gmra.mxu0 %v5116
        %v5262 = vpop.f32.mrf.mxu0
        %v5263 = vadd.f32 0.0, %v5262
        %5264 = vmatmul.f32.gmra.mxu0 %v5119
        %v5265 = vpop.f32.mrf.mxu0
        %v5266 = vadd.f32 0.0, %v5265
        %5267 = vmatmul.f32.gmra.mxu0 %v5122
        %v5268 = vpop.f32.mrf.mxu0
        %v5269 = vadd.f32 0.0, %v5268
        %5270 = vmatmul.f32.gmra.mxu0 %v5125
        %v5271 = vpop.f32.mrf.mxu0
        %v5272 = vadd.f32 0.0, %v5271
        %5273 = vmatmul.f32.gmra.mxu0 %v5128
        %v5274 = vpop.f32.mrf.mxu0
        %v5275 = vadd.f32 0.0, %v5274
        %5276 = vmatmul.f32.gmra.mxu0 %v5131
        %v5277 = vpop.f32.mrf.mxu0
        %v5278 = vadd.f32 0.0, %v5277
        %5279 = vmatmul.f32.gmra.mxu0 %v5134
        %v5280 = vpop.f32.mrf.mxu0
        %v5281 = vadd.f32 0.0, %v5280
        %5282 = vmatmul.f32.gmra.mxu0 %v5137
        %v5283 = vpop.f32.mrf.mxu0
        %v5284 = vadd.f32 0.0, %v5283
        %5285 = vmatmul.f32.gmra.mxu0 %v5140
        %v5286 = vpop.f32.mrf.mxu0
        %v5287 = vadd.f32 0.0, %v5286
        %5288 = vmatmul.f32.gmra.mxu0 %v5143
        %v5289 = vpop.f32.mrf.mxu0
        %v5290 = vadd.f32 0.0, %v5289
        %5291 = vmatmul.f32.gmra.mxu0 %v5146
        %v5292 = vpop.f32.mrf.mxu0
        %v5293 = vadd.f32 0.0, %v5292
        %5294 = vmatmul.f32.gmra.mxu0 %v5149
        %v5295 = vpop.f32.mrf.mxu0
        %v5296 = vadd.f32 0.0, %v5295
        %5297 = vmatmul.f32.gmra.mxu0 %v5152
        %v5298 = vpop.f32.mrf.mxu0
        %v5299 = vadd.f32 0.0, %v5298
        %5300 = vmatmul.f32.gmra.mxu0 %v5155
        %v5301 = vpop.f32.mrf.mxu0
        %v5302 = vadd.f32 0.0, %v5301
        %5303 = vmatmul.f32.gmra.mxu0 %v5158
        %v5304 = vpop.f32.mrf.mxu0
        %v5305 = vadd.f32 0.0, %v5304
        %5306 = vmatmul.f32.gmra.mxu0 %v5161
        %v5307 = vpop.f32.mrf.mxu0
        %v5308 = vadd.f32 0.0, %v5307
        %5309 = vmatmul.f32.gmra.mxu0 %v5164
        %v5310 = vpop.f32.mrf.mxu0
        %v5311 = vadd.f32 0.0, %v5310
        %5312 = vmatmul.f32.gmra.mxu0 %v5167
        %v5313 = vpop.f32.mrf.mxu0
        %v5314 = vadd.f32 0.0, %v5313
        %5315 = vmatmul.f32.gmra.mxu0 %v5170
        %v5316 = vpop.f32.mrf.mxu0
        %v5317 = vadd.f32 0.0, %v5316
        %5318 = vmatmul.f32.gmra.mxu0 %v5173
        %v5319 = vpop.f32.mrf.mxu0
        %v5320 = vadd.f32 0.0, %v5319
        %5321 = vmatmul.f32.gmra.mxu0 %v5176
        %v5322 = vpop.f32.mrf.mxu0
        %v5323 = vadd.f32 0.0, %v5322
        %5324 = vmatmul.f32.gmra.mxu0 %v5179
        %v5325 = vpop.f32.mrf.mxu0
        %v5326 = vadd.f32 0.0, %v5325
        %5327 = vmatmul.f32.gmra.mxu0 %v5182
        %v5328 = vpop.f32.mrf.mxu0
        %v5329 = vadd.f32 0.0, %v5328
        %5330 = vmatmul.f32.gmra.mxu0 %v5185
        %v5331 = vpop.f32.mrf.mxu0
        %v5332 = vadd.f32 0.0, %v5331
        %5333 = vmatmul.f32.gmra.mxu0 %v5188
        %v5334 = vpop.f32.mrf.mxu0
        %v5335 = vadd.f32 0.0, %v5334
        %5336 = vmatmul.f32.gmra.mxu0 %v5191
        %v5337 = vpop.f32.mrf.mxu0
        %v5338 = vadd.f32 0.0, %v5337
        %5339 = vmatmul.f32.gmra.mxu0 %v5194
        %v5340 = vpop.f32.mrf.mxu0
        %v5341 = vadd.f32 0.0, %v5340
        %5342 = vmatmul.f32.gmra.mxu0 %v5197
        %v5343 = vpop.f32.mrf.mxu0
        %v5344 = vadd.f32 0.0, %v5343
        %5345 = vmatmul.f32.gmra.mxu0 %v5200
        %v5346 = vpop.f32.mrf.mxu0
        %v5347 = vadd.f32 0.0, %v5346
        %5348 = vmatmul.f32.gmra.mxu0 %v5203
        %v5349 = vpop.f32.mrf.mxu0
        %v5350 = vadd.f32 0.0, %v5349
        %5351 = vmatmul.f32.gmra.mxu0 %v5206
        %v5352 = vpop.f32.mrf.mxu0
        %v5353 = vadd.f32 0.0, %v5352
        %5354 = vmatmul.f32.gmra.mxu0 %v5209
        %v5355 = vpop.f32.mrf.mxu0
        %v5356 = vadd.f32 0.0, %v5355
        %5357 = vdwg.mxu0
        %5358 = vmatpush.msra.mxu0 %v549
        %5359 = vmatpush.msra.mxu0 %v548
        %5360 = vmatpush.msra.mxu0 %v547
        %5361 = vmatpush.msra.mxu0 %v546
        %5362 = vmatpush.msra.mxu0 %v545
        %5363 = vmatpush.msra.mxu0 %v544
        %5364 = vmatpush.msra.mxu0 %v543
        %5365 = vmatpush.msra.mxu0 %v542
        %5366 = vmatpush.msra.mxu0 %v541
        %5367 = vmatpush.msra.mxu0 %v540
        %5368 = vmatpush.msra.mxu0 %v539
        %5369 = vmatpush.msra.mxu0 %v538
        %5370 = vmatpush.msra.mxu0 %v537
        %5371 = vmatpush.msra.mxu0 %v536
        %5372 = vmatpush.msra.mxu0 %v535
        %5373 = vmatpush.msra.mxu0 %v534
        %5374 = vmatmul.f32.gmra.mxu0 %v5117
        %v5375 = vpop.f32.mrf.mxu0
        %v5376 = vadd.f32 %v5263, %v5375
        %5377 = vmatmul.f32.gmra.mxu0 %v5120
        %v5378 = vpop.f32.mrf.mxu0
        %v5379 = vadd.f32 %v5266, %v5378
        %5380 = vmatmul.f32.gmra.mxu0 %v5123
        %v5381 = vpop.f32.mrf.mxu0
        %v5382 = vadd.f32 %v5269, %v5381
        %5383 = vmatmul.f32.gmra.mxu0 %v5126
        %v5384 = vpop.f32.mrf.mxu0
        %v5385 = vadd.f32 %v5272, %v5384
        %5386 = vmatmul.f32.gmra.mxu0 %v5129
        %v5387 = vpop.f32.mrf.mxu0
        %v5388 = vadd.f32 %v5275, %v5387
        %5389 = vmatmul.f32.gmra.mxu0 %v5132
        %v5390 = vpop.f32.mrf.mxu0
        %v5391 = vadd.f32 %v5278, %v5390
        %5392 = vmatmul.f32.gmra.mxu0 %v5135
        %v5393 = vpop.f32.mrf.mxu0
        %v5394 = vadd.f32 %v5281, %v5393
        %5395 = vmatmul.f32.gmra.mxu0 %v5138
        %v5396 = vpop.f32.mrf.mxu0
        %v5397 = vadd.f32 %v5284, %v5396
        %5398 = vmatmul.f32.gmra.mxu0 %v5141
        %v5399 = vpop.f32.mrf.mxu0
        %v5400 = vadd.f32 %v5287, %v5399
        %5401 = vmatmul.f32.gmra.mxu0 %v5144
        %v5402 = vpop.f32.mrf.mxu0
        %v5403 = vadd.f32 %v5290, %v5402
        %5404 = vmatmul.f32.gmra.mxu0 %v5147
        %v5405 = vpop.f32.mrf.mxu0
        %v5406 = vadd.f32 %v5293, %v5405
        %5407 = vmatmul.f32.gmra.mxu0 %v5150
        %v5408 = vpop.f32.mrf.mxu0
        %v5409 = vadd.f32 %v5296, %v5408
        %5410 = vmatmul.f32.gmra.mxu0 %v5153
        %v5411 = vpop.f32.mrf.mxu0
        %v5412 = vadd.f32 %v5299, %v5411
        %5413 = vmatmul.f32.gmra.mxu0 %v5156
        %v5414 = vpop.f32.mrf.mxu0
        %v5415 = vadd.f32 %v5302, %v5414
        %5416 = vmatmul.f32.gmra.mxu0 %v5159
        %v5417 = vpop.f32.mrf.mxu0
        %v5418 = vadd.f32 %v5305, %v5417
        %5419 = vmatmul.f32.gmra.mxu0 %v5162
        %v5420 = vpop.f32.mrf.mxu0
        %v5421 = vadd.f32 %v5308, %v5420
        %5422 = vmatmul.f32.gmra.mxu0 %v5165
        %v5423 = vpop.f32.mrf.mxu0
        %v5424 = vadd.f32 %v5311, %v5423
        %5425 = vmatmul.f32.gmra.mxu0 %v5168
        %v5426 = vpop.f32.mrf.mxu0
        %v5427 = vadd.f32 %v5314, %v5426
        %5428 = vmatmul.f32.gmra.mxu0 %v5171
        %v5429 = vpop.f32.mrf.mxu0
        %v5430 = vadd.f32 %v5317, %v5429
        %5431 = vmatmul.f32.gmra.mxu0 %v5174
        %v5432 = vpop.f32.mrf.mxu0
        %v5433 = vadd.f32 %v5320, %v5432
        %5434 = vmatmul.f32.gmra.mxu0 %v5177
        %v5435 = vpop.f32.mrf.mxu0
        %v5436 = vadd.f32 %v5323, %v5435
        %5437 = vmatmul.f32.gmra.mxu0 %v5180
        %v5438 = vpop.f32.mrf.mxu0
        %v5439 = vadd.f32 %v5326, %v5438
        %5440 = vmatmul.f32.gmra.mxu0 %v5183
        %v5441 = vpop.f32.mrf.mxu0
        %v5442 = vadd.f32 %v5329, %v5441
        %5443 = vmatmul.f32.gmra.mxu0 %v5186
        %v5444 = vpop.f32.mrf.mxu0
        %v5445 = vadd.f32 %v5332, %v5444
        %5446 = vmatmul.f32.gmra.mxu0 %v5189
        %v5447 = vpop.f32.mrf.mxu0
        %v5448 = vadd.f32 %v5335, %v5447
        %5449 = vmatmul.f32.gmra.mxu0 %v5192
        %v5450 = vpop.f32.mrf.mxu0
        %v5451 = vadd.f32 %v5338, %v5450
        %5452 = vmatmul.f32.gmra.mxu0 %v5195
        %v5453 = vpop.f32.mrf.mxu0
        %v5454 = vadd.f32 %v5341, %v5453
        %5455 = vmatmul.f32.gmra.mxu0 %v5198
        %v5456 = vpop.f32.mrf.mxu0
        %v5457 = vadd.f32 %v5344, %v5456
        %5458 = vmatmul.f32.gmra.mxu0 %v5201
        %v5459 = vpop.f32.mrf.mxu0
        %v5460 = vadd.f32 %v5347, %v5459
        %5461 = vmatmul.f32.gmra.mxu0 %v5204
        %v5462 = vpop.f32.mrf.mxu0
        %v5463 = vadd.f32 %v5350, %v5462
        %5464 = vmatmul.f32.gmra.mxu0 %v5207
        %v5465 = vpop.f32.mrf.mxu0
        %v5466 = vadd.f32 %v5353, %v5465
        %5467 = vmatmul.f32.gmra.mxu0 %v5210
        %v5468 = vpop.f32.mrf.mxu0
        %v5469 = vadd.f32 %v5356, %v5468
        %5470 = vdwg.mxu0
        %5471 = vmatpush.msra.mxu0 %v565
        %5472 = vmatpush.msra.mxu0 %v564
        %5473 = vmatpush.msra.mxu0 %v563
        %5474 = vmatpush.msra.mxu0 %v562
        %5475 = vmatpush.msra.mxu0 %v561
        %5476 = vmatpush.msra.mxu0 %v560
        %5477 = vmatpush.msra.mxu0 %v559
        %5478 = vmatpush.msra.mxu0 %v558
        %5479 = vmatpush.msra.mxu0 %v557
        %5480 = vmatpush.msra.mxu0 %v556
        %5481 = vmatpush.msra.mxu0 %v555
        %5482 = vmatpush.msra.mxu0 %v554
        %5483 = vmatpush.msra.mxu0 %v553
        %5484 = vmatpush.msra.mxu0 %v552
        %5485 = vmatpush.msra.mxu0 %v551
        %5486 = vmatpush.msra.mxu0 %v550
        %5487 = vmatmul.f32.gmra.mxu0 %v5118
        %v5488 = vpop.f32.mrf.mxu0
        %v5489 = vadd.f32 %v5376, %v5488
        %5490 = vmatmul.f32.gmra.mxu0 %v5121
        %v5491 = vpop.f32.mrf.mxu0
        %v5492 = vadd.f32 %v5379, %v5491
        %5493 = vmatmul.f32.gmra.mxu0 %v5124
        %v5494 = vpop.f32.mrf.mxu0
        %v5495 = vadd.f32 %v5382, %v5494
        %5496 = vmatmul.f32.gmra.mxu0 %v5127
        %v5497 = vpop.f32.mrf.mxu0
        %v5498 = vadd.f32 %v5385, %v5497
        %5499 = vmatmul.f32.gmra.mxu0 %v5130
        %v5500 = vpop.f32.mrf.mxu0
        %v5501 = vadd.f32 %v5388, %v5500
        %5502 = vmatmul.f32.gmra.mxu0 %v5133
        %v5503 = vpop.f32.mrf.mxu0
        %v5504 = vadd.f32 %v5391, %v5503
        %5505 = vmatmul.f32.gmra.mxu0 %v5136
        %v5506 = vpop.f32.mrf.mxu0
        %v5507 = vadd.f32 %v5394, %v5506
        %5508 = vmatmul.f32.gmra.mxu0 %v5139
        %v5509 = vpop.f32.mrf.mxu0
        %v5510 = vadd.f32 %v5397, %v5509
        %5511 = vmatmul.f32.gmra.mxu0 %v5142
        %v5512 = vpop.f32.mrf.mxu0
        %v5513 = vadd.f32 %v5400, %v5512
        %5514 = vmatmul.f32.gmra.mxu0 %v5145
        %v5515 = vpop.f32.mrf.mxu0
        %v5516 = vadd.f32 %v5403, %v5515
        %5517 = vmatmul.f32.gmra.mxu0 %v5148
        %v5518 = vpop.f32.mrf.mxu0
        %v5519 = vadd.f32 %v5406, %v5518
        %5520 = vmatmul.f32.gmra.mxu0 %v5151
        %v5521 = vpop.f32.mrf.mxu0
        %v5522 = vadd.f32 %v5409, %v5521
        %5523 = vmatmul.f32.gmra.mxu0 %v5154
        %v5524 = vpop.f32.mrf.mxu0
        %v5525 = vadd.f32 %v5412, %v5524
        %5526 = vmatmul.f32.gmra.mxu0 %v5157
        %v5527 = vpop.f32.mrf.mxu0
        %v5528 = vadd.f32 %v5415, %v5527
        %5529 = vmatmul.f32.gmra.mxu0 %v5160
        %v5530 = vpop.f32.mrf.mxu0
        %v5531 = vadd.f32 %v5418, %v5530
        %5532 = vmatmul.f32.gmra.mxu0 %v5163
        %v5533 = vpop.f32.mrf.mxu0
        %v5534 = vadd.f32 %v5421, %v5533
        %5535 = vmatmul.f32.gmra.mxu0 %v5166
        %v5536 = vpop.f32.mrf.mxu0
        %v5537 = vadd.f32 %v5424, %v5536
        %5538 = vmatmul.f32.gmra.mxu0 %v5169
        %v5539 = vpop.f32.mrf.mxu0
        %v5540 = vadd.f32 %v5427, %v5539
        %5541 = vmatmul.f32.gmra.mxu0 %v5172
        %v5542 = vpop.f32.mrf.mxu0
        %v5543 = vadd.f32 %v5430, %v5542
        %5544 = vmatmul.f32.gmra.mxu0 %v5175
        %v5545 = vpop.f32.mrf.mxu0
        %v5546 = vadd.f32 %v5433, %v5545
        %5547 = vmatmul.f32.gmra.mxu0 %v5178
        %v5548 = vpop.f32.mrf.mxu0
        %v5549 = vadd.f32 %v5436, %v5548
        %5550 = vmatmul.f32.gmra.mxu0 %v5181
        %v5551 = vpop.f32.mrf.mxu0
        %v5552 = vadd.f32 %v5439, %v5551
        %5553 = vmatmul.f32.gmra.mxu0 %v5184
        %v5554 = vpop.f32.mrf.mxu0
        %v5555 = vadd.f32 %v5442, %v5554
        %5556 = vmatmul.f32.gmra.mxu0 %v5187
        %v5557 = vpop.f32.mrf.mxu0
        %v5558 = vadd.f32 %v5445, %v5557
        %5559 = vmatmul.f32.gmra.mxu0 %v5190
        %v5560 = vpop.f32.mrf.mxu0
        %v5561 = vadd.f32 %v5448, %v5560
        %5562 = vmatmul.f32.gmra.mxu0 %v5193
        %v5563 = vpop.f32.mrf.mxu0
        %v5564 = vadd.f32 %v5451, %v5563
        %5565 = vmatmul.f32.gmra.mxu0 %v5196
        %v5566 = vpop.f32.mrf.mxu0
        %v5567 = vadd.f32 %v5454, %v5566
        %5568 = vmatmul.f32.gmra.mxu0 %v5199
        %v5569 = vpop.f32.mrf.mxu0
        %v5570 = vadd.f32 %v5457, %v5569
        %5571 = vmatmul.f32.gmra.mxu0 %v5202
        %v5572 = vpop.f32.mrf.mxu0
        %v5573 = vadd.f32 %v5460, %v5572
        %5574 = vmatmul.f32.gmra.mxu0 %v5205
        %v5575 = vpop.f32.mrf.mxu0
        %v5576 = vadd.f32 %v5463, %v5575
        %5577 = vmatmul.f32.gmra.mxu0 %v5208
        %v5578 = vpop.f32.mrf.mxu0
        %v5579 = vadd.f32 %v5466, %v5578
        %5580 = vmatmul.f32.gmra.mxu0 %v5211
        %v5581 = vpop.f32.mrf.mxu0
        %v5582 = vadd.f32 %v5469, %v5581
        %5583 = vdwg.mxu0
        %v5584 = vadd.f32 %v5213, %v5489
        %v5585 = vadd.f32 %v5214, %v5492
        %v5586 = vadd.f32 %v5215, %v5495
        %v5587 = vadd.f32 %v5216, %v5498
        %v5588 = vadd.f32 %v5217, %v5501
        %v5589 = vadd.f32 %v5218, %v5504
        %v5590 = vadd.f32 %v5219, %v5507
        %v5591 = vadd.f32 %v5220, %v5510
        %v5592 = vadd.f32 %v5221, %v5513
        %v5593 = vadd.f32 %v5222, %v5516
        %v5594 = vadd.f32 %v5223, %v5519
        %v5595 = vadd.f32 %v5224, %v5522
        %v5596 = vadd.f32 %v5225, %v5525
        %v5597 = vadd.f32 %v5226, %v5528
        %v5598 = vadd.f32 %v5227, %v5531
        %v5599 = vadd.f32 %v5228, %v5534
        %v5600 = vadd.f32 %v5229, %v5537
        %v5601 = vadd.f32 %v5230, %v5540
        %v5602 = vadd.f32 %v5231, %v5543
        %v5603 = vadd.f32 %v5232, %v5546
        %v5604 = vadd.f32 %v5233, %v5549
        %v5605 = vadd.f32 %v5234, %v5552
        %v5606 = vadd.f32 %v5235, %v5555
        %v5607 = vadd.f32 %v5236, %v5558
        %v5608 = vadd.f32 %v5237, %v5561
        %v5609 = vadd.f32 %v5238, %v5564
        %v5610 = vadd.f32 %v5239, %v5567
        %v5611 = vadd.f32 %v5240, %v5570
        %v5612 = vadd.f32 %v5241, %v5573
        %v5613 = vadd.f32 %v5242, %v5576
        %v5614 = vadd.f32 %v5243, %v5579
        %v5615 = vadd.f32 %v5244, %v5582
        %5616 = vst [vmem:[%s5212] sm:$0xff] %v5584
        %5617 = vst [vmem:[%s5212 + $0x8] sm:$0xff] %v5585
        %5618 = vst [vmem:[%s5212 + $0x10] sm:$0xff] %v5586
        %5619 = vst [vmem:[%s5212 + $0x18] sm:$0xff] %v5587
        %5620 = vst [vmem:[%s5212 + $0x20] sm:$0xff] %v5588
        %5621 = vst [vmem:[%s5212 + $0x28] sm:$0xff] %v5589
        %5622 = vst [vmem:[%s5212 + $0x30] sm:$0xff] %v5590
        %5623 = vst [vmem:[%s5212 + $0x38] sm:$0xff] %v5591
        %5624 = vst [vmem:[%s5212 + $0x40] sm:$0xff] %v5592
        %5625 = vst [vmem:[%s5212 + $0x48] sm:$0xff] %v5593
        %5626 = vst [vmem:[%s5212 + $0x50] sm:$0xff] %v5594
        %5627 = vst [vmem:[%s5212 + $0x58] sm:$0xff] %v5595
        %5628 = vst [vmem:[%s5212 + $0x60] sm:$0xff] %v5596
        %5629 = vst [vmem:[%s5212 + $0x68] sm:$0xff] %v5597
        %5630 = vst [vmem:[%s5212 + $0x70] sm:$0xff] %v5598
        %5631 = vst [vmem:[%s5212 + $0x78] sm:$0xff] %v5599
        %5632 = vst [vmem:[%s5212 + $0x80] sm:$0xff] %v5600
        %5633 = vst [vmem:[%s5212 + $0x88] sm:$0xff] %v5601
        %5634 = vst [vmem:[%s5212 + $0x90] sm:$0xff] %v5602
        %5635 = vst [vmem:[%s5212 + $0x98] sm:$0xff] %v5603
        %5636 = vst [vmem:[%s5212 + $0xa0] sm:$0xff] %v5604
        %5637 = vst [vmem:[%s5212 + $0xa8] sm:$0xff] %v5605
        %5638 = vst [vmem:[%s5212 + $0xb0] sm:$0xff] %v5606
        %5639 = vst [vmem:[%s5212 + $0xb8] sm:$0xff] %v5607
        %5640 = vst [vmem:[%s5212 + $0xc0] sm:$0xff] %v5608
        %5641 = vst [vmem:[%s5212 + $0xc8] sm:$0xff] %v5609
        %5642 = vst [vmem:[%s5212 + $0xd0] sm:$0xff] %v5610
        %5643 = vst [vmem:[%s5212 + $0xd8] sm:$0xff] %v5611
        %5644 = vst [vmem:[%s5212 + $0xe0] sm:$0xff] %v5612
        %5645 = vst [vmem:[%s5212 + $0xe8] sm:$0xff] %v5613
        %5646 = vst [vmem:[%s5212 + $0xf0] sm:$0xff] %v5614
        %5647 = vst [vmem:[%s5212 + $0xf8] sm:$0xff] %v5615
        %v5648 = vadd.s32 %v485, 306
        %v5649 = vadd.s32 %v486, 306
        %v5650 = vadd.s32 %v487, 306
        %v5651 = vadd.s32 %v488, 306
        %v5652 = vadd.s32 %v489, 306
        %v5653 = vadd.s32 %v490, 306
        %v5654 = vadd.s32 %v491, 306
        %v5655 = vadd.s32 %v492, 306
        %v5656 = vadd.s32 %v493, 306
        %v5657 = vadd.s32 %v494, 306
        %v5658 = vadd.s32 %v495, 306
        %v5659 = vadd.s32 %v496, 306
        %v5660 = vadd.s32 %v497, 306
        %v5661 = vadd.s32 %v498, 306
        %v5662 = vadd.s32 %v499, 306
        %v5663 = vadd.s32 %v500, 306
        %v5664 = vadd.s32 %v501, 306
        %v5665 = vadd.s32 %v502, 306
        %v5666 = vadd.s32 %v503, 306
        %v5667 = vadd.s32 %v504, 306
        %v5668 = vadd.s32 %v505, 306
        %v5669 = vadd.s32 %v506, 306
        %v5670 = vadd.s32 %v507, 306
        %v5671 = vadd.s32 %v508, 306
        %v5672 = vadd.s32 %v509, 306
        %v5673 = vadd.s32 %v510, 306
        %v5674 = vadd.s32 %v511, 306
        %v5675 = vadd.s32 %v512, 306
        %v5676 = vadd.s32 %v513, 306
        %v5677 = vadd.s32 %v514, 306
        %v5678 = vadd.s32 %v515, 306
        %v5679 = vadd.s32 %v516, 306
        %5680 = vset.pattern.permute.xlu0 0
        %5681 = vperm.xlu0 %5680, %v5648
        %v5682 = vpop.permute.xlu0 %5681
        %5683 = vset.pattern.permute.xlu0 0
        %5684 = vperm.xlu0 %5683, %v5649
        %v5685 = vpop.permute.xlu0 %5684
        %5686 = vset.pattern.permute.xlu0 0
        %5687 = vperm.xlu0 %5686, %v5650
        %v5688 = vpop.permute.xlu0 %5687
        %5689 = vset.pattern.permute.xlu0 0
        %5690 = vperm.xlu0 %5689, %v5651
        %v5691 = vpop.permute.xlu0 %5690
        %5692 = vset.pattern.permute.xlu0 0
        %5693 = vperm.xlu0 %5692, %v5652
        %v5694 = vpop.permute.xlu0 %5693
        %5695 = vset.pattern.permute.xlu0 0
        %5696 = vperm.xlu0 %5695, %v5653
        %v5697 = vpop.permute.xlu0 %5696
        %5698 = vset.pattern.permute.xlu0 0
        %5699 = vperm.xlu0 %5698, %v5654
        %v5700 = vpop.permute.xlu0 %5699
        %5701 = vset.pattern.permute.xlu0 0
        %5702 = vperm.xlu0 %5701, %v5655
        %v5703 = vpop.permute.xlu0 %5702
        %5704 = vset.pattern.permute.xlu0 0
        %5705 = vperm.xlu0 %5704, %v5656
        %v5706 = vpop.permute.xlu0 %5705
        %5707 = vset.pattern.permute.xlu0 0
        %5708 = vperm.xlu0 %5707, %v5657
        %v5709 = vpop.permute.xlu0 %5708
        %5710 = vset.pattern.permute.xlu0 0
        %5711 = vperm.xlu0 %5710, %v5658
        %v5712 = vpop.permute.xlu0 %5711
        %5713 = vset.pattern.permute.xlu0 0
        %5714 = vperm.xlu0 %5713, %v5659
        %v5715 = vpop.permute.xlu0 %5714
        %5716 = vset.pattern.permute.xlu0 0
        %5717 = vperm.xlu0 %5716, %v5660
        %v5718 = vpop.permute.xlu0 %5717
        %5719 = vset.pattern.permute.xlu0 0
        %5720 = vperm.xlu0 %5719, %v5661
        %v5721 = vpop.permute.xlu0 %5720
        %5722 = vset.pattern.permute.xlu0 0
        %5723 = vperm.xlu0 %5722, %v5662
        %v5724 = vpop.permute.xlu0 %5723
        %5725 = vset.pattern.permute.xlu0 0
        %5726 = vperm.xlu0 %5725, %v5663
        %v5727 = vpop.permute.xlu0 %5726
        %5728 = vset.pattern.permute.xlu0 0
        %5729 = vperm.xlu0 %5728, %v5664
        %v5730 = vpop.permute.xlu0 %5729
        %5731 = vset.pattern.permute.xlu0 0
        %5732 = vperm.xlu0 %5731, %v5665
        %v5733 = vpop.permute.xlu0 %5732
        %5734 = vset.pattern.permute.xlu0 0
        %5735 = vperm.xlu0 %5734, %v5666
        %v5736 = vpop.permute.xlu0 %5735
        %5737 = vset.pattern.permute.xlu0 0
        %5738 = vperm.xlu0 %5737, %v5667
        %v5739 = vpop.permute.xlu0 %5738
        %5740 = vset.pattern.permute.xlu0 0
        %5741 = vperm.xlu0 %5740, %v5668
        %v5742 = vpop.permute.xlu0 %5741
        %5743 = vset.pattern.permute.xlu0 0
        %5744 = vperm.xlu0 %5743, %v5669
        %v5745 = vpop.permute.xlu0 %5744
        %5746 = vset.pattern.permute.xlu0 0
        %5747 = vperm.xlu0 %5746, %v5670
        %v5748 = vpop.permute.xlu0 %5747
        %5749 = vset.pattern.permute.xlu0 0
        %5750 = vperm.xlu0 %5749, %v5671
        %v5751 = vpop.permute.xlu0 %5750
        %5752 = vset.pattern.permute.xlu0 0
        %5753 = vperm.xlu0 %5752, %v5672
        %v5754 = vpop.permute.xlu0 %5753
        %5755 = vset.pattern.permute.xlu0 0
        %5756 = vperm.xlu0 %5755, %v5673
        %v5757 = vpop.permute.xlu0 %5756
        %5758 = vset.pattern.permute.xlu0 0
        %5759 = vperm.xlu0 %5758, %v5674
        %v5760 = vpop.permute.xlu0 %5759
        %5761 = vset.pattern.permute.xlu0 0
        %5762 = vperm.xlu0 %5761, %v5675
        %v5763 = vpop.permute.xlu0 %5762
        %5764 = vset.pattern.permute.xlu0 0
        %5765 = vperm.xlu0 %5764, %v5676
        %v5766 = vpop.permute.xlu0 %5765
        %5767 = vset.pattern.permute.xlu0 0
        %5768 = vperm.xlu0 %5767, %v5677
        %v5769 = vpop.permute.xlu0 %5768
        %5770 = vset.pattern.permute.xlu0 0
        %5771 = vperm.xlu0 %5770, %v5678
        %v5772 = vpop.permute.xlu0 %5771
        %5773 = vset.pattern.permute.xlu0 0
        %5774 = vperm.xlu0 %5773, %v5679
        %v5775 = vpop.permute.xlu0 %5774
        %vm5776 = vcmp.eq.s32.totalorder %v5682, %v662
        %vm5777 = vcmp.eq.s32.totalorder %v5682, %v663
        %vm5778 = vcmp.eq.s32.totalorder %v5682, %v664
        %vm5779 = vcmp.eq.s32.totalorder %v5685, %v662
        %vm5780 = vcmp.eq.s32.totalorder %v5685, %v663
        %vm5781 = vcmp.eq.s32.totalorder %v5685, %v664
        %vm5782 = vcmp.eq.s32.totalorder %v5688, %v662
        %vm5783 = vcmp.eq.s32.totalorder %v5688, %v663
        %vm5784 = vcmp.eq.s32.totalorder %v5688, %v664
        %vm5785 = vcmp.eq.s32.totalorder %v5691, %v662
        %vm5786 = vcmp.eq.s32.totalorder %v5691, %v663
        %vm5787 = vcmp.eq.s32.totalorder %v5691, %v664
        %vm5788 = vcmp.eq.s32.totalorder %v5694, %v662
        %vm5789 = vcmp.eq.s32.totalorder %v5694, %v663
        %vm5790 = vcmp.eq.s32.totalorder %v5694, %v664
        %vm5791 = vcmp.eq.s32.totalorder %v5697, %v662
        %vm5792 = vcmp.eq.s32.totalorder %v5697, %v663
        %vm5793 = vcmp.eq.s32.totalorder %v5697, %v664
        %vm5794 = vcmp.eq.s32.totalorder %v5700, %v662
        %vm5795 = vcmp.eq.s32.totalorder %v5700, %v663
        %vm5796 = vcmp.eq.s32.totalorder %v5700, %v664
        %vm5797 = vcmp.eq.s32.totalorder %v5703, %v662
        %vm5798 = vcmp.eq.s32.totalorder %v5703, %v663
        %vm5799 = vcmp.eq.s32.totalorder %v5703, %v664
        %vm5800 = vcmp.eq.s32.totalorder %v5706, %v662
        %vm5801 = vcmp.eq.s32.totalorder %v5706, %v663
        %vm5802 = vcmp.eq.s32.totalorder %v5706, %v664
        %vm5803 = vcmp.eq.s32.totalorder %v5709, %v662
        %vm5804 = vcmp.eq.s32.totalorder %v5709, %v663
        %vm5805 = vcmp.eq.s32.totalorder %v5709, %v664
        %vm5806 = vcmp.eq.s32.totalorder %v5712, %v662
        %vm5807 = vcmp.eq.s32.totalorder %v5712, %v663
        %vm5808 = vcmp.eq.s32.totalorder %v5712, %v664
        %vm5809 = vcmp.eq.s32.totalorder %v5715, %v662
        %vm5810 = vcmp.eq.s32.totalorder %v5715, %v663
        %vm5811 = vcmp.eq.s32.totalorder %v5715, %v664
        %vm5812 = vcmp.eq.s32.totalorder %v5718, %v662
        %vm5813 = vcmp.eq.s32.totalorder %v5718, %v663
        %vm5814 = vcmp.eq.s32.totalorder %v5718, %v664
        %vm5815 = vcmp.eq.s32.totalorder %v5721, %v662
        %vm5816 = vcmp.eq.s32.totalorder %v5721, %v663
        %vm5817 = vcmp.eq.s32.totalorder %v5721, %v664
        %vm5818 = vcmp.eq.s32.totalorder %v5724, %v662
        %vm5819 = vcmp.eq.s32.totalorder %v5724, %v663
        %vm5820 = vcmp.eq.s32.totalorder %v5724, %v664
        %vm5821 = vcmp.eq.s32.totalorder %v5727, %v662
        %vm5822 = vcmp.eq.s32.totalorder %v5727, %v663
        %vm5823 = vcmp.eq.s32.totalorder %v5727, %v664
        %vm5824 = vcmp.eq.s32.totalorder %v5730, %v662
        %vm5825 = vcmp.eq.s32.totalorder %v5730, %v663
        %vm5826 = vcmp.eq.s32.totalorder %v5730, %v664
        %vm5827 = vcmp.eq.s32.totalorder %v5733, %v662
        %vm5828 = vcmp.eq.s32.totalorder %v5733, %v663
        %vm5829 = vcmp.eq.s32.totalorder %v5733, %v664
        %vm5830 = vcmp.eq.s32.totalorder %v5736, %v662
        %vm5831 = vcmp.eq.s32.totalorder %v5736, %v663
        %vm5832 = vcmp.eq.s32.totalorder %v5736, %v664
        %vm5833 = vcmp.eq.s32.totalorder %v5739, %v662
        %vm5834 = vcmp.eq.s32.totalorder %v5739, %v663
        %vm5835 = vcmp.eq.s32.totalorder %v5739, %v664
        %vm5836 = vcmp.eq.s32.totalorder %v5742, %v662
        %vm5837 = vcmp.eq.s32.totalorder %v5742, %v663
        %vm5838 = vcmp.eq.s32.totalorder %v5742, %v664
        %vm5839 = vcmp.eq.s32.totalorder %v5745, %v662
        %vm5840 = vcmp.eq.s32.totalorder %v5745, %v663
        %vm5841 = vcmp.eq.s32.totalorder %v5745, %v664
        %vm5842 = vcmp.eq.s32.totalorder %v5748, %v662
        %vm5843 = vcmp.eq.s32.totalorder %v5748, %v663
        %vm5844 = vcmp.eq.s32.totalorder %v5748, %v664
        %vm5845 = vcmp.eq.s32.totalorder %v5751, %v662
        %vm5846 = vcmp.eq.s32.totalorder %v5751, %v663
        %vm5847 = vcmp.eq.s32.totalorder %v5751, %v664
        %vm5848 = vcmp.eq.s32.totalorder %v5754, %v662
        %vm5849 = vcmp.eq.s32.totalorder %v5754, %v663
        %vm5850 = vcmp.eq.s32.totalorder %v5754, %v664
        %vm5851 = vcmp.eq.s32.totalorder %v5757, %v662
        %vm5852 = vcmp.eq.s32.totalorder %v5757, %v663
        %vm5853 = vcmp.eq.s32.totalorder %v5757, %v664
        %vm5854 = vcmp.eq.s32.totalorder %v5760, %v662
        %vm5855 = vcmp.eq.s32.totalorder %v5760, %v663
        %vm5856 = vcmp.eq.s32.totalorder %v5760, %v664
        %vm5857 = vcmp.eq.s32.totalorder %v5763, %v662
        %vm5858 = vcmp.eq.s32.totalorder %v5763, %v663
        %vm5859 = vcmp.eq.s32.totalorder %v5763, %v664
        %vm5860 = vcmp.eq.s32.totalorder %v5766, %v662
        %vm5861 = vcmp.eq.s32.totalorder %v5766, %v663
        %vm5862 = vcmp.eq.s32.totalorder %v5766, %v664
        %vm5863 = vcmp.eq.s32.totalorder %v5769, %v662
        %vm5864 = vcmp.eq.s32.totalorder %v5769, %v663
        %vm5865 = vcmp.eq.s32.totalorder %v5769, %v664
        %vm5866 = vcmp.eq.s32.totalorder %v5772, %v662
        %vm5867 = vcmp.eq.s32.totalorder %v5772, %v663
        %vm5868 = vcmp.eq.s32.totalorder %v5772, %v664
        %vm5869 = vcmp.eq.s32.totalorder %v5775, %v662
        %vm5870 = vcmp.eq.s32.totalorder %v5775, %v663
        %vm5871 = vcmp.eq.s32.totalorder %v5775, %v664
        %v5872 = vsel %vm5776, 1, 0
        %v5873 = vsel %vm5777, 1, 0
        %v5874 = vsel %vm5778, 1, 0
        %v5875 = vsel %vm5779, 1, 0
        %v5876 = vsel %vm5780, 1, 0
        %v5877 = vsel %vm5781, 1, 0
        %v5878 = vsel %vm5782, 1, 0
        %v5879 = vsel %vm5783, 1, 0
        %v5880 = vsel %vm5784, 1, 0
        %v5881 = vsel %vm5785, 1, 0
        %v5882 = vsel %vm5786, 1, 0
        %v5883 = vsel %vm5787, 1, 0
        %v5884 = vsel %vm5788, 1, 0
        %v5885 = vsel %vm5789, 1, 0
        %v5886 = vsel %vm5790, 1, 0
        %v5887 = vsel %vm5791, 1, 0
        %v5888 = vsel %vm5792, 1, 0
        %v5889 = vsel %vm5793, 1, 0
        %v5890 = vsel %vm5794, 1, 0
        %v5891 = vsel %vm5795, 1, 0
        %v5892 = vsel %vm5796, 1, 0
        %v5893 = vsel %vm5797, 1, 0
        %v5894 = vsel %vm5798, 1, 0
        %v5895 = vsel %vm5799, 1, 0
        %v5896 = vsel %vm5800, 1, 0
        %v5897 = vsel %vm5801, 1, 0
        %v5898 = vsel %vm5802, 1, 0
        %v5899 = vsel %vm5803, 1, 0
        %v5900 = vsel %vm5804, 1, 0
        %v5901 = vsel %vm5805, 1, 0
        %v5902 = vsel %vm5806, 1, 0
        %v5903 = vsel %vm5807, 1, 0
        %v5904 = vsel %vm5808, 1, 0
        %v5905 = vsel %vm5809, 1, 0
        %v5906 = vsel %vm5810, 1, 0
        %v5907 = vsel %vm5811, 1, 0
        %v5908 = vsel %vm5812, 1, 0
        %v5909 = vsel %vm5813, 1, 0
        %v5910 = vsel %vm5814, 1, 0
        %v5911 = vsel %vm5815, 1, 0
        %v5912 = vsel %vm5816, 1, 0
        %v5913 = vsel %vm5817, 1, 0
        %v5914 = vsel %vm5818, 1, 0
        %v5915 = vsel %vm5819, 1, 0
        %v5916 = vsel %vm5820, 1, 0
        %v5917 = vsel %vm5821, 1, 0
        %v5918 = vsel %vm5822, 1, 0
        %v5919 = vsel %vm5823, 1, 0
        %v5920 = vsel %vm5824, 1, 0
        %v5921 = vsel %vm5825, 1, 0
        %v5922 = vsel %vm5826, 1, 0
        %v5923 = vsel %vm5827, 1, 0
        %v5924 = vsel %vm5828, 1, 0
        %v5925 = vsel %vm5829, 1, 0
        %v5926 = vsel %vm5830, 1, 0
        %v5927 = vsel %vm5831, 1, 0
        %v5928 = vsel %vm5832, 1, 0
        %v5929 = vsel %vm5833, 1, 0
        %v5930 = vsel %vm5834, 1, 0
        %v5931 = vsel %vm5835, 1, 0
        %v5932 = vsel %vm5836, 1, 0
        %v5933 = vsel %vm5837, 1, 0
        %v5934 = vsel %vm5838, 1, 0
        %v5935 = vsel %vm5839, 1, 0
        %v5936 = vsel %vm5840, 1, 0
        %v5937 = vsel %vm5841, 1, 0
        %v5938 = vsel %vm5842, 1, 0
        %v5939 = vsel %vm5843, 1, 0
        %v5940 = vsel %vm5844, 1, 0
        %v5941 = vsel %vm5845, 1, 0
        %v5942 = vsel %vm5846, 1, 0
        %v5943 = vsel %vm5847, 1, 0
        %v5944 = vsel %vm5848, 1, 0
        %v5945 = vsel %vm5849, 1, 0
        %v5946 = vsel %vm5850, 1, 0
        %v5947 = vsel %vm5851, 1, 0
        %v5948 = vsel %vm5852, 1, 0
        %v5949 = vsel %vm5853, 1, 0
        %v5950 = vsel %vm5854, 1, 0
        %v5951 = vsel %vm5855, 1, 0
        %v5952 = vsel %vm5856, 1, 0
        %v5953 = vsel %vm5857, 1, 0
        %v5954 = vsel %vm5858, 1, 0
        %v5955 = vsel %vm5859, 1, 0
        %v5956 = vsel %vm5860, 1, 0
        %v5957 = vsel %vm5861, 1, 0
        %v5958 = vsel %vm5862, 1, 0
        %v5959 = vsel %vm5863, 1, 0
        %v5960 = vsel %vm5864, 1, 0
        %v5961 = vsel %vm5865, 1, 0
        %v5962 = vsel %vm5866, 1, 0
        %v5963 = vsel %vm5867, 1, 0
        %v5964 = vsel %vm5868, 1, 0
        %v5965 = vsel %vm5869, 1, 0
        %v5966 = vsel %vm5870, 1, 0
        %v5967 = vsel %vm5871, 1, 0
        %v5968 = vcvt.s32.f32 %v5872
        %v5969 = vcvt.s32.f32 %v5873
        %v5970 = vcvt.s32.f32 %v5874
        %v5971 = vcvt.s32.f32 %v5875
        %v5972 = vcvt.s32.f32 %v5876
        %v5973 = vcvt.s32.f32 %v5877
        %v5974 = vcvt.s32.f32 %v5878
        %v5975 = vcvt.s32.f32 %v5879
        %v5976 = vcvt.s32.f32 %v5880
        %v5977 = vcvt.s32.f32 %v5881
        %v5978 = vcvt.s32.f32 %v5882
        %v5979 = vcvt.s32.f32 %v5883
        %v5980 = vcvt.s32.f32 %v5884
        %v5981 = vcvt.s32.f32 %v5885
        %v5982 = vcvt.s32.f32 %v5886
        %v5983 = vcvt.s32.f32 %v5887
        %v5984 = vcvt.s32.f32 %v5888
        %v5985 = vcvt.s32.f32 %v5889
        %v5986 = vcvt.s32.f32 %v5890
        %v5987 = vcvt.s32.f32 %v5891
        %v5988 = vcvt.s32.f32 %v5892
        %v5989 = vcvt.s32.f32 %v5893
        %v5990 = vcvt.s32.f32 %v5894
        %v5991 = vcvt.s32.f32 %v5895
        %v5992 = vcvt.s32.f32 %v5896
        %v5993 = vcvt.s32.f32 %v5897
        %v5994 = vcvt.s32.f32 %v5898
        %v5995 = vcvt.s32.f32 %v5899
        %v5996 = vcvt.s32.f32 %v5900
        %v5997 = vcvt.s32.f32 %v5901
        %v5998 = vcvt.s32.f32 %v5902
        %v5999 = vcvt.s32.f32 %v5903
        %v6000 = vcvt.s32.f32 %v5904
        %v6001 = vcvt.s32.f32 %v5905
        %v6002 = vcvt.s32.f32 %v5906
        %v6003 = vcvt.s32.f32 %v5907
        %v6004 = vcvt.s32.f32 %v5908
        %v6005 = vcvt.s32.f32 %v5909
        %v6006 = vcvt.s32.f32 %v5910
        %v6007 = vcvt.s32.f32 %v5911
        %v6008 = vcvt.s32.f32 %v5912
        %v6009 = vcvt.s32.f32 %v5913
        %v6010 = vcvt.s32.f32 %v5914
        %v6011 = vcvt.s32.f32 %v5915
        %v6012 = vcvt.s32.f32 %v5916
        %v6013 = vcvt.s32.f32 %v5917
        %v6014 = vcvt.s32.f32 %v5918
        %v6015 = vcvt.s32.f32 %v5919
        %v6016 = vcvt.s32.f32 %v5920
        %v6017 = vcvt.s32.f32 %v5921
        %v6018 = vcvt.s32.f32 %v5922
        %v6019 = vcvt.s32.f32 %v5923
        %v6020 = vcvt.s32.f32 %v5924
        %v6021 = vcvt.s32.f32 %v5925
        %v6022 = vcvt.s32.f32 %v5926
        %v6023 = vcvt.s32.f32 %v5927
        %v6024 = vcvt.s32.f32 %v5928
        %v6025 = vcvt.s32.f32 %v5929
        %v6026 = vcvt.s32.f32 %v5930
        %v6027 = vcvt.s32.f32 %v5931
        %v6028 = vcvt.s32.f32 %v5932
        %v6029 = vcvt.s32.f32 %v5933
        %v6030 = vcvt.s32.f32 %v5934
        %v6031 = vcvt.s32.f32 %v5935
        %v6032 = vcvt.s32.f32 %v5936
        %v6033 = vcvt.s32.f32 %v5937
        %v6034 = vcvt.s32.f32 %v5938
        %v6035 = vcvt.s32.f32 %v5939
        %v6036 = vcvt.s32.f32 %v5940
        %v6037 = vcvt.s32.f32 %v5941
        %v6038 = vcvt.s32.f32 %v5942
        %v6039 = vcvt.s32.f32 %v5943
        %v6040 = vcvt.s32.f32 %v5944
        %v6041 = vcvt.s32.f32 %v5945
        %v6042 = vcvt.s32.f32 %v5946
        %v6043 = vcvt.s32.f32 %v5947
        %v6044 = vcvt.s32.f32 %v5948
        %v6045 = vcvt.s32.f32 %v5949
        %v6046 = vcvt.s32.f32 %v5950
        %v6047 = vcvt.s32.f32 %v5951
        %v6048 = vcvt.s32.f32 %v5952
        %v6049 = vcvt.s32.f32 %v5953
        %v6050 = vcvt.s32.f32 %v5954
        %v6051 = vcvt.s32.f32 %v5955
        %v6052 = vcvt.s32.f32 %v5956
        %v6053 = vcvt.s32.f32 %v5957
        %v6054 = vcvt.s32.f32 %v5958
        %v6055 = vcvt.s32.f32 %v5959
        %v6056 = vcvt.s32.f32 %v5960
        %v6057 = vcvt.s32.f32 %v5961
        %v6058 = vcvt.s32.f32 %v5962
        %v6059 = vcvt.s32.f32 %v5963
        %v6060 = vcvt.s32.f32 %v5964
        %v6061 = vcvt.s32.f32 %v5965
        %v6062 = vcvt.s32.f32 %v5966
        %v6063 = vcvt.s32.f32 %v5967
        %s6064 = scalar_lea.vmem [#allocation2], 1536
        %v6065 = vld [vmem:[%s6064] sm:$0xff]
        %v6066 = vld [vmem:[%s6064 + $0x8] sm:$0xff]
        %v6067 = vld [vmem:[%s6064 + $0x10] sm:$0xff]
        %v6068 = vld [vmem:[%s6064 + $0x18] sm:$0xff]
        %v6069 = vld [vmem:[%s6064 + $0x20] sm:$0xff]
        %v6070 = vld [vmem:[%s6064 + $0x28] sm:$0xff]
        %v6071 = vld [vmem:[%s6064 + $0x30] sm:$0xff]
        %v6072 = vld [vmem:[%s6064 + $0x38] sm:$0xff]
        %v6073 = vld [vmem:[%s6064 + $0x40] sm:$0xff]
        %v6074 = vld [vmem:[%s6064 + $0x48] sm:$0xff]
        %v6075 = vld [vmem:[%s6064 + $0x50] sm:$0xff]
        %v6076 = vld [vmem:[%s6064 + $0x58] sm:$0xff]
        %v6077 = vld [vmem:[%s6064 + $0x60] sm:$0xff]
        %v6078 = vld [vmem:[%s6064 + $0x68] sm:$0xff]
        %v6079 = vld [vmem:[%s6064 + $0x70] sm:$0xff]
        %v6080 = vld [vmem:[%s6064 + $0x78] sm:$0xff]
        %v6081 = vld [vmem:[%s6064 + $0x80] sm:$0xff]
        %v6082 = vld [vmem:[%s6064 + $0x88] sm:$0xff]
        %v6083 = vld [vmem:[%s6064 + $0x90] sm:$0xff]
        %v6084 = vld [vmem:[%s6064 + $0x98] sm:$0xff]
        %v6085 = vld [vmem:[%s6064 + $0xa0] sm:$0xff]
        %v6086 = vld [vmem:[%s6064 + $0xa8] sm:$0xff]
        %v6087 = vld [vmem:[%s6064 + $0xb0] sm:$0xff]
        %v6088 = vld [vmem:[%s6064 + $0xb8] sm:$0xff]
        %v6089 = vld [vmem:[%s6064 + $0xc0] sm:$0xff]
        %v6090 = vld [vmem:[%s6064 + $0xc8] sm:$0xff]
        %v6091 = vld [vmem:[%s6064 + $0xd0] sm:$0xff]
        %v6092 = vld [vmem:[%s6064 + $0xd8] sm:$0xff]
        %v6093 = vld [vmem:[%s6064 + $0xe0] sm:$0xff]
        %v6094 = vld [vmem:[%s6064 + $0xe8] sm:$0xff]
        %v6095 = vld [vmem:[%s6064 + $0xf0] sm:$0xff]
        %v6096 = vld [vmem:[%s6064 + $0xf8] sm:$0xff]
        %6097 = vmatpush.msra.mxu0 %v533
        %6098 = vmatpush.msra.mxu0 %v532
        %6099 = vmatpush.msra.mxu0 %v531
        %6100 = vmatpush.msra.mxu0 %v530
        %6101 = vmatpush.msra.mxu0 %v529
        %6102 = vmatpush.msra.mxu0 %v528
        %6103 = vmatpush.msra.mxu0 %v527
        %6104 = vmatpush.msra.mxu0 %v526
        %6105 = vmatpush.msra.mxu0 %v525
        %6106 = vmatpush.msra.mxu0 %v524
        %6107 = vmatpush.msra.mxu0 %v523
        %6108 = vmatpush.msra.mxu0 %v522
        %6109 = vmatpush.msra.mxu0 %v521
        %6110 = vmatpush.msra.mxu0 %v520
        %6111 = vmatpush.msra.mxu0 %v519
        %6112 = vmatpush.msra.mxu0 %v518
        %6113 = vmatmul.f32.gmra.mxu0 %v5968
        %v6114 = vpop.f32.mrf.mxu0
        %v6115 = vadd.f32 0.0, %v6114
        %6116 = vmatmul.f32.gmra.mxu0 %v5971
        %v6117 = vpop.f32.mrf.mxu0
        %v6118 = vadd.f32 0.0, %v6117
        %6119 = vmatmul.f32.gmra.mxu0 %v5974
        %v6120 = vpop.f32.mrf.mxu0
        %v6121 = vadd.f32 0.0, %v6120
        %6122 = vmatmul.f32.gmra.mxu0 %v5977
        %v6123 = vpop.f32.mrf.mxu0
        %v6124 = vadd.f32 0.0, %v6123
        %6125 = vmatmul.f32.gmra.mxu0 %v5980
        %v6126 = vpop.f32.mrf.mxu0
        %v6127 = vadd.f32 0.0, %v6126
        %6128 = vmatmul.f32.gmra.mxu0 %v5983
        %v6129 = vpop.f32.mrf.mxu0
        %v6130 = vadd.f32 0.0, %v6129
        %6131 = vmatmul.f32.gmra.mxu0 %v5986
        %v6132 = vpop.f32.mrf.mxu0
        %v6133 = vadd.f32 0.0, %v6132
        %6134 = vmatmul.f32.gmra.mxu0 %v5989
        %v6135 = vpop.f32.mrf.mxu0
        %v6136 = vadd.f32 0.0, %v6135
        %6137 = vmatmul.f32.gmra.mxu0 %v5992
        %v6138 = vpop.f32.mrf.mxu0
        %v6139 = vadd.f32 0.0, %v6138
        %6140 = vmatmul.f32.gmra.mxu0 %v5995
        %v6141 = vpop.f32.mrf.mxu0
        %v6142 = vadd.f32 0.0, %v6141
        %6143 = vmatmul.f32.gmra.mxu0 %v5998
        %v6144 = vpop.f32.mrf.mxu0
        %v6145 = vadd.f32 0.0, %v6144
        %6146 = vmatmul.f32.gmra.mxu0 %v6001
        %v6147 = vpop.f32.mrf.mxu0
        %v6148 = vadd.f32 0.0, %v6147
        %6149 = vmatmul.f32.gmra.mxu0 %v6004
        %v6150 = vpop.f32.mrf.mxu0
        %v6151 = vadd.f32 0.0, %v6150
        %6152 = vmatmul.f32.gmra.mxu0 %v6007
        %v6153 = vpop.f32.mrf.mxu0
        %v6154 = vadd.f32 0.0, %v6153
        %6155 = vmatmul.f32.gmra.mxu0 %v6010
        %v6156 = vpop.f32.mrf.mxu0
        %v6157 = vadd.f32 0.0, %v6156
        %6158 = vmatmul.f32.gmra.mxu0 %v6013
        %v6159 = vpop.f32.mrf.mxu0
        %v6160 = vadd.f32 0.0, %v6159
        %6161 = vmatmul.f32.gmra.mxu0 %v6016
        %v6162 = vpop.f32.mrf.mxu0
        %v6163 = vadd.f32 0.0, %v6162
        %6164 = vmatmul.f32.gmra.mxu0 %v6019
        %v6165 = vpop.f32.mrf.mxu0
        %v6166 = vadd.f32 0.0, %v6165
        %6167 = vmatmul.f32.gmra.mxu0 %v6022
        %v6168 = vpop.f32.mrf.mxu0
        %v6169 = vadd.f32 0.0, %v6168
        %6170 = vmatmul.f32.gmra.mxu0 %v6025
        %v6171 = vpop.f32.mrf.mxu0
        %v6172 = vadd.f32 0.0, %v6171
        %6173 = vmatmul.f32.gmra.mxu0 %v6028
        %v6174 = vpop.f32.mrf.mxu0
        %v6175 = vadd.f32 0.0, %v6174
        %6176 = vmatmul.f32.gmra.mxu0 %v6031
        %v6177 = vpop.f32.mrf.mxu0
        %v6178 = vadd.f32 0.0, %v6177
        %6179 = vmatmul.f32.gmra.mxu0 %v6034
        %v6180 = vpop.f32.mrf.mxu0
        %v6181 = vadd.f32 0.0, %v6180
        %6182 = vmatmul.f32.gmra.mxu0 %v6037
        %v6183 = vpop.f32.mrf.mxu0
        %v6184 = vadd.f32 0.0, %v6183
        %6185 = vmatmul.f32.gmra.mxu0 %v6040
        %v6186 = vpop.f32.mrf.mxu0
        %v6187 = vadd.f32 0.0, %v6186
        %6188 = vmatmul.f32.gmra.mxu0 %v6043
        %v6189 = vpop.f32.mrf.mxu0
        %v6190 = vadd.f32 0.0, %v6189
        %6191 = vmatmul.f32.gmra.mxu0 %v6046
        %v6192 = vpop.f32.mrf.mxu0
        %v6193 = vadd.f32 0.0, %v6192
        %6194 = vmatmul.f32.gmra.mxu0 %v6049
        %v6195 = vpop.f32.mrf.mxu0
        %v6196 = vadd.f32 0.0, %v6195
        %6197 = vmatmul.f32.gmra.mxu0 %v6052
        %v6198 = vpop.f32.mrf.mxu0
        %v6199 = vadd.f32 0.0, %v6198
        %6200 = vmatmul.f32.gmra.mxu0 %v6055
        %v6201 = vpop.f32.mrf.mxu0
        %v6202 = vadd.f32 0.0, %v6201
        %6203 = vmatmul.f32.gmra.mxu0 %v6058
        %v6204 = vpop.f32.mrf.mxu0
        %v6205 = vadd.f32 0.0, %v6204
        %6206 = vmatmul.f32.gmra.mxu0 %v6061
        %v6207 = vpop.f32.mrf.mxu0
        %v6208 = vadd.f32 0.0, %v6207
        %6209 = vdwg.mxu0
        %6210 = vmatpush.msra.mxu0 %v549
        %6211 = vmatpush.msra.mxu0 %v548
        %6212 = vmatpush.msra.mxu0 %v547
        %6213 = vmatpush.msra.mxu0 %v546
        %6214 = vmatpush.msra.mxu0 %v545
        %6215 = vmatpush.msra.mxu0 %v544
        %6216 = vmatpush.msra.mxu0 %v543
        %6217 = vmatpush.msra.mxu0 %v542
        %6218 = vmatpush.msra.mxu0 %v541
        %6219 = vmatpush.msra.mxu0 %v540
        %6220 = vmatpush.msra.mxu0 %v539
        %6221 = vmatpush.msra.mxu0 %v538
        %6222 = vmatpush.msra.mxu0 %v537
        %6223 = vmatpush.msra.mxu0 %v536
        %6224 = vmatpush.msra.mxu0 %v535
        %6225 = vmatpush.msra.mxu0 %v534
        %6226 = vmatmul.f32.gmra.mxu0 %v5969
        %v6227 = vpop.f32.mrf.mxu0
        %v6228 = vadd.f32 %v6115, %v6227
        %6229 = vmatmul.f32.gmra.mxu0 %v5972
        %v6230 = vpop.f32.mrf.mxu0
        %v6231 = vadd.f32 %v6118, %v6230
        %6232 = vmatmul.f32.gmra.mxu0 %v5975
        %v6233 = vpop.f32.mrf.mxu0
        %v6234 = vadd.f32 %v6121, %v6233
        %6235 = vmatmul.f32.gmra.mxu0 %v5978
        %v6236 = vpop.f32.mrf.mxu0
        %v6237 = vadd.f32 %v6124, %v6236
        %6238 = vmatmul.f32.gmra.mxu0 %v5981
        %v6239 = vpop.f32.mrf.mxu0
        %v6240 = vadd.f32 %v6127, %v6239
        %6241 = vmatmul.f32.gmra.mxu0 %v5984
        %v6242 = vpop.f32.mrf.mxu0
        %v6243 = vadd.f32 %v6130, %v6242
        %6244 = vmatmul.f32.gmra.mxu0 %v5987
        %v6245 = vpop.f32.mrf.mxu0
        %v6246 = vadd.f32 %v6133, %v6245
        %6247 = vmatmul.f32.gmra.mxu0 %v5990
        %v6248 = vpop.f32.mrf.mxu0
        %v6249 = vadd.f32 %v6136, %v6248
        %6250 = vmatmul.f32.gmra.mxu0 %v5993
        %v6251 = vpop.f32.mrf.mxu0
        %v6252 = vadd.f32 %v6139, %v6251
        %6253 = vmatmul.f32.gmra.mxu0 %v5996
        %v6254 = vpop.f32.mrf.mxu0
        %v6255 = vadd.f32 %v6142, %v6254
        %6256 = vmatmul.f32.gmra.mxu0 %v5999
        %v6257 = vpop.f32.mrf.mxu0
        %v6258 = vadd.f32 %v6145, %v6257
        %6259 = vmatmul.f32.gmra.mxu0 %v6002
        %v6260 = vpop.f32.mrf.mxu0
        %v6261 = vadd.f32 %v6148, %v6260
        %6262 = vmatmul.f32.gmra.mxu0 %v6005
        %v6263 = vpop.f32.mrf.mxu0
        %v6264 = vadd.f32 %v6151, %v6263
        %6265 = vmatmul.f32.gmra.mxu0 %v6008
        %v6266 = vpop.f32.mrf.mxu0
        %v6267 = vadd.f32 %v6154, %v6266
        %6268 = vmatmul.f32.gmra.mxu0 %v6011
        %v6269 = vpop.f32.mrf.mxu0
        %v6270 = vadd.f32 %v6157, %v6269
        %6271 = vmatmul.f32.gmra.mxu0 %v6014
        %v6272 = vpop.f32.mrf.mxu0
        %v6273 = vadd.f32 %v6160, %v6272
        %6274 = vmatmul.f32.gmra.mxu0 %v6017
        %v6275 = vpop.f32.mrf.mxu0
        %v6276 = vadd.f32 %v6163, %v6275
        %6277 = vmatmul.f32.gmra.mxu0 %v6020
        %v6278 = vpop.f32.mrf.mxu0
        %v6279 = vadd.f32 %v6166, %v6278
        %6280 = vmatmul.f32.gmra.mxu0 %v6023
        %v6281 = vpop.f32.mrf.mxu0
        %v6282 = vadd.f32 %v6169, %v6281
        %6283 = vmatmul.f32.gmra.mxu0 %v6026
        %v6284 = vpop.f32.mrf.mxu0
        %v6285 = vadd.f32 %v6172, %v6284
        %6286 = vmatmul.f32.gmra.mxu0 %v6029
        %v6287 = vpop.f32.mrf.mxu0
        %v6288 = vadd.f32 %v6175, %v6287
        %6289 = vmatmul.f32.gmra.mxu0 %v6032
        %v6290 = vpop.f32.mrf.mxu0
        %v6291 = vadd.f32 %v6178, %v6290
        %6292 = vmatmul.f32.gmra.mxu0 %v6035
        %v6293 = vpop.f32.mrf.mxu0
        %v6294 = vadd.f32 %v6181, %v6293
        %6295 = vmatmul.f32.gmra.mxu0 %v6038
        %v6296 = vpop.f32.mrf.mxu0
        %v6297 = vadd.f32 %v6184, %v6296
        %6298 = vmatmul.f32.gmra.mxu0 %v6041
        %v6299 = vpop.f32.mrf.mxu0
        %v6300 = vadd.f32 %v6187, %v6299
        %6301 = vmatmul.f32.gmra.mxu0 %v6044
        %v6302 = vpop.f32.mrf.mxu0
        %v6303 = vadd.f32 %v6190, %v6302
        %6304 = vmatmul.f32.gmra.mxu0 %v6047
        %v6305 = vpop.f32.mrf.mxu0
        %v6306 = vadd.f32 %v6193, %v6305
        %6307 = vmatmul.f32.gmra.mxu0 %v6050
        %v6308 = vpop.f32.mrf.mxu0
        %v6309 = vadd.f32 %v6196, %v6308
        %6310 = vmatmul.f32.gmra.mxu0 %v6053
        %v6311 = vpop.f32.mrf.mxu0
        %v6312 = vadd.f32 %v6199, %v6311
        %6313 = vmatmul.f32.gmra.mxu0 %v6056
        %v6314 = vpop.f32.mrf.mxu0
        %v6315 = vadd.f32 %v6202, %v6314
        %6316 = vmatmul.f32.gmra.mxu0 %v6059
        %v6317 = vpop.f32.mrf.mxu0
        %v6318 = vadd.f32 %v6205, %v6317
        %6319 = vmatmul.f32.gmra.mxu0 %v6062
        %v6320 = vpop.f32.mrf.mxu0
        %v6321 = vadd.f32 %v6208, %v6320
        %6322 = vdwg.mxu0
        %6323 = vmatpush.msra.mxu0 %v565
        %6324 = vmatpush.msra.mxu0 %v564
        %6325 = vmatpush.msra.mxu0 %v563
        %6326 = vmatpush.msra.mxu0 %v562
        %6327 = vmatpush.msra.mxu0 %v561
        %6328 = vmatpush.msra.mxu0 %v560
        %6329 = vmatpush.msra.mxu0 %v559
        %6330 = vmatpush.msra.mxu0 %v558
        %6331 = vmatpush.msra.mxu0 %v557
        %6332 = vmatpush.msra.mxu0 %v556
        %6333 = vmatpush.msra.mxu0 %v555
        %6334 = vmatpush.msra.mxu0 %v554
        %6335 = vmatpush.msra.mxu0 %v553
        %6336 = vmatpush.msra.mxu0 %v552
        %6337 = vmatpush.msra.mxu0 %v551
        %6338 = vmatpush.msra.mxu0 %v550
        %6339 = vmatmul.f32.gmra.mxu0 %v5970
        %v6340 = vpop.f32.mrf.mxu0
        %v6341 = vadd.f32 %v6228, %v6340
        %6342 = vmatmul.f32.gmra.mxu0 %v5973
        %v6343 = vpop.f32.mrf.mxu0
        %v6344 = vadd.f32 %v6231, %v6343
        %6345 = vmatmul.f32.gmra.mxu0 %v5976
        %v6346 = vpop.f32.mrf.mxu0
        %v6347 = vadd.f32 %v6234, %v6346
        %6348 = vmatmul.f32.gmra.mxu0 %v5979
        %v6349 = vpop.f32.mrf.mxu0
        %v6350 = vadd.f32 %v6237, %v6349
        %6351 = vmatmul.f32.gmra.mxu0 %v5982
        %v6352 = vpop.f32.mrf.mxu0
        %v6353 = vadd.f32 %v6240, %v6352
        %6354 = vmatmul.f32.gmra.mxu0 %v5985
        %v6355 = vpop.f32.mrf.mxu0
        %v6356 = vadd.f32 %v6243, %v6355
        %6357 = vmatmul.f32.gmra.mxu0 %v5988
        %v6358 = vpop.f32.mrf.mxu0
        %v6359 = vadd.f32 %v6246, %v6358
        %6360 = vmatmul.f32.gmra.mxu0 %v5991
        %v6361 = vpop.f32.mrf.mxu0
        %v6362 = vadd.f32 %v6249, %v6361
        %6363 = vmatmul.f32.gmra.mxu0 %v5994
        %v6364 = vpop.f32.mrf.mxu0
        %v6365 = vadd.f32 %v6252, %v6364
        %6366 = vmatmul.f32.gmra.mxu0 %v5997
        %v6367 = vpop.f32.mrf.mxu0
        %v6368 = vadd.f32 %v6255, %v6367
        %6369 = vmatmul.f32.gmra.mxu0 %v6000
        %v6370 = vpop.f32.mrf.mxu0
        %v6371 = vadd.f32 %v6258, %v6370
        %6372 = vmatmul.f32.gmra.mxu0 %v6003
        %v6373 = vpop.f32.mrf.mxu0
        %v6374 = vadd.f32 %v6261, %v6373
        %6375 = vmatmul.f32.gmra.mxu0 %v6006
        %v6376 = vpop.f32.mrf.mxu0
        %v6377 = vadd.f32 %v6264, %v6376
        %6378 = vmatmul.f32.gmra.mxu0 %v6009
        %v6379 = vpop.f32.mrf.mxu0
        %v6380 = vadd.f32 %v6267, %v6379
        %6381 = vmatmul.f32.gmra.mxu0 %v6012
        %v6382 = vpop.f32.mrf.mxu0
        %v6383 = vadd.f32 %v6270, %v6382
        %6384 = vmatmul.f32.gmra.mxu0 %v6015
        %v6385 = vpop.f32.mrf.mxu0
        %v6386 = vadd.f32 %v6273, %v6385
        %6387 = vmatmul.f32.gmra.mxu0 %v6018
        %v6388 = vpop.f32.mrf.mxu0
        %v6389 = vadd.f32 %v6276, %v6388
        %6390 = vmatmul.f32.gmra.mxu0 %v6021
        %v6391 = vpop.f32.mrf.mxu0
        %v6392 = vadd.f32 %v6279, %v6391
        %6393 = vmatmul.f32.gmra.mxu0 %v6024
        %v6394 = vpop.f32.mrf.mxu0
        %v6395 = vadd.f32 %v6282, %v6394
        %6396 = vmatmul.f32.gmra.mxu0 %v6027
        %v6397 = vpop.f32.mrf.mxu0
        %v6398 = vadd.f32 %v6285, %v6397
        %6399 = vmatmul.f32.gmra.mxu0 %v6030
        %v6400 = vpop.f32.mrf.mxu0
        %v6401 = vadd.f32 %v6288, %v6400
        %6402 = vmatmul.f32.gmra.mxu0 %v6033
        %v6403 = vpop.f32.mrf.mxu0
        %v6404 = vadd.f32 %v6291, %v6403
        %6405 = vmatmul.f32.gmra.mxu0 %v6036
        %v6406 = vpop.f32.mrf.mxu0
        %v6407 = vadd.f32 %v6294, %v6406
        %6408 = vmatmul.f32.gmra.mxu0 %v6039
        %v6409 = vpop.f32.mrf.mxu0
        %v6410 = vadd.f32 %v6297, %v6409
        %6411 = vmatmul.f32.gmra.mxu0 %v6042
        %v6412 = vpop.f32.mrf.mxu0
        %v6413 = vadd.f32 %v6300, %v6412
        %6414 = vmatmul.f32.gmra.mxu0 %v6045
        %v6415 = vpop.f32.mrf.mxu0
        %v6416 = vadd.f32 %v6303, %v6415
        %6417 = vmatmul.f32.gmra.mxu0 %v6048
        %v6418 = vpop.f32.mrf.mxu0
        %v6419 = vadd.f32 %v6306, %v6418
        %6420 = vmatmul.f32.gmra.mxu0 %v6051
        %v6421 = vpop.f32.mrf.mxu0
        %v6422 = vadd.f32 %v6309, %v6421
        %6423 = vmatmul.f32.gmra.mxu0 %v6054
        %v6424 = vpop.f32.mrf.mxu0
        %v6425 = vadd.f32 %v6312, %v6424
        %6426 = vmatmul.f32.gmra.mxu0 %v6057
        %v6427 = vpop.f32.mrf.mxu0
        %v6428 = vadd.f32 %v6315, %v6427
        %6429 = vmatmul.f32.gmra.mxu0 %v6060
        %v6430 = vpop.f32.mrf.mxu0
        %v6431 = vadd.f32 %v6318, %v6430
        %6432 = vmatmul.f32.gmra.mxu0 %v6063
        %v6433 = vpop.f32.mrf.mxu0
        %v6434 = vadd.f32 %v6321, %v6433
        %6435 = vdwg.mxu0
        %v6436 = vadd.f32 %v6065, %v6341
        %v6437 = vadd.f32 %v6066, %v6344
        %v6438 = vadd.f32 %v6067, %v6347
        %v6439 = vadd.f32 %v6068, %v6350
        %v6440 = vadd.f32 %v6069, %v6353
        %v6441 = vadd.f32 %v6070, %v6356
        %v6442 = vadd.f32 %v6071, %v6359
        %v6443 = vadd.f32 %v6072, %v6362
        %v6444 = vadd.f32 %v6073, %v6365
        %v6445 = vadd.f32 %v6074, %v6368
        %v6446 = vadd.f32 %v6075, %v6371
        %v6447 = vadd.f32 %v6076, %v6374
        %v6448 = vadd.f32 %v6077, %v6377
        %v6449 = vadd.f32 %v6078, %v6380
        %v6450 = vadd.f32 %v6079, %v6383
        %v6451 = vadd.f32 %v6080, %v6386
        %v6452 = vadd.f32 %v6081, %v6389
        %v6453 = vadd.f32 %v6082, %v6392
        %v6454 = vadd.f32 %v6083, %v6395
        %v6455 = vadd.f32 %v6084, %v6398
        %v6456 = vadd.f32 %v6085, %v6401
        %v6457 = vadd.f32 %v6086, %v6404
        %v6458 = vadd.f32 %v6087, %v6407
        %v6459 = vadd.f32 %v6088, %v6410
        %v6460 = vadd.f32 %v6089, %v6413
        %v6461 = vadd.f32 %v6090, %v6416
        %v6462 = vadd.f32 %v6091, %v6419
        %v6463 = vadd.f32 %v6092, %v6422
        %v6464 = vadd.f32 %v6093, %v6425
        %v6465 = vadd.f32 %v6094, %v6428
        %v6466 = vadd.f32 %v6095, %v6431
        %v6467 = vadd.f32 %v6096, %v6434
        %6468 = vst [vmem:[%s6064] sm:$0xff] %v6436
        %6469 = vst [vmem:[%s6064 + $0x8] sm:$0xff] %v6437
        %6470 = vst [vmem:[%s6064 + $0x10] sm:$0xff] %v6438
        %6471 = vst [vmem:[%s6064 + $0x18] sm:$0xff] %v6439
        %6472 = vst [vmem:[%s6064 + $0x20] sm:$0xff] %v6440
        %6473 = vst [vmem:[%s6064 + $0x28] sm:$0xff] %v6441
        %6474 = vst [vmem:[%s6064 + $0x30] sm:$0xff] %v6442
        %6475 = vst [vmem:[%s6064 + $0x38] sm:$0xff] %v6443
        %6476 = vst [vmem:[%s6064 + $0x40] sm:$0xff] %v6444
        %6477 = vst [vmem:[%s6064 + $0x48] sm:$0xff] %v6445
        %6478 = vst [vmem:[%s6064 + $0x50] sm:$0xff] %v6446
        %6479 = vst [vmem:[%s6064 + $0x58] sm:$0xff] %v6447
        %6480 = vst [vmem:[%s6064 + $0x60] sm:$0xff] %v6448
        %6481 = vst [vmem:[%s6064 + $0x68] sm:$0xff] %v6449
        %6482 = vst [vmem:[%s6064 + $0x70] sm:$0xff] %v6450
        %6483 = vst [vmem:[%s6064 + $0x78] sm:$0xff] %v6451
        %6484 = vst [vmem:[%s6064 + $0x80] sm:$0xff] %v6452
        %6485 = vst [vmem:[%s6064 + $0x88] sm:$0xff] %v6453
        %6486 = vst [vmem:[%s6064 + $0x90] sm:$0xff] %v6454
        %6487 = vst [vmem:[%s6064 + $0x98] sm:$0xff] %v6455
        %6488 = vst [vmem:[%s6064 + $0xa0] sm:$0xff] %v6456
        %6489 = vst [vmem:[%s6064 + $0xa8] sm:$0xff] %v6457
        %6490 = vst [vmem:[%s6064 + $0xb0] sm:$0xff] %v6458
        %6491 = vst [vmem:[%s6064 + $0xb8] sm:$0xff] %v6459
        %6492 = vst [vmem:[%s6064 + $0xc0] sm:$0xff] %v6460
        %6493 = vst [vmem:[%s6064 + $0xc8] sm:$0xff] %v6461
        %6494 = vst [vmem:[%s6064 + $0xd0] sm:$0xff] %v6462
        %6495 = vst [vmem:[%s6064 + $0xd8] sm:$0xff] %v6463
        %6496 = vst [vmem:[%s6064 + $0xe0] sm:$0xff] %v6464
        %6497 = vst [vmem:[%s6064 + $0xe8] sm:$0xff] %v6465
        %6498 = vst [vmem:[%s6064 + $0xf0] sm:$0xff] %v6466
        %6499 = vst [vmem:[%s6064 + $0xf8] sm:$0xff] %v6467
        %v6500 = vadd.s32 %v485, 307
        %v6501 = vadd.s32 %v486, 307
        %v6502 = vadd.s32 %v487, 307
        %v6503 = vadd.s32 %v488, 307
        %v6504 = vadd.s32 %v489, 307
        %v6505 = vadd.s32 %v490, 307
        %v6506 = vadd.s32 %v491, 307
        %v6507 = vadd.s32 %v492, 307
        %v6508 = vadd.s32 %v493, 307
        %v6509 = vadd.s32 %v494, 307
        %v6510 = vadd.s32 %v495, 307
        %v6511 = vadd.s32 %v496, 307
        %v6512 = vadd.s32 %v497, 307
        %v6513 = vadd.s32 %v498, 307
        %v6514 = vadd.s32 %v499, 307
        %v6515 = vadd.s32 %v500, 307
        %v6516 = vadd.s32 %v501, 307
        %v6517 = vadd.s32 %v502, 307
        %v6518 = vadd.s32 %v503, 307
        %v6519 = vadd.s32 %v504, 307
        %v6520 = vadd.s32 %v505, 307
        %v6521 = vadd.s32 %v506, 307
        %v6522 = vadd.s32 %v507, 307
        %v6523 = vadd.s32 %v508, 307
        %v6524 = vadd.s32 %v509, 307
        %v6525 = vadd.s32 %v510, 307
        %v6526 = vadd.s32 %v511, 307
        %v6527 = vadd.s32 %v512, 307
        %v6528 = vadd.s32 %v513, 307
        %v6529 = vadd.s32 %v514, 307
        %v6530 = vadd.s32 %v515, 307
        %v6531 = vadd.s32 %v516, 307
        %6532 = vset.pattern.permute.xlu0 0
        %6533 = vperm.xlu0 %6532, %v6500
        %v6534 = vpop.permute.xlu0 %6533
        %6535 = vset.pattern.permute.xlu0 0
        %6536 = vperm.xlu0 %6535, %v6501
        %v6537 = vpop.permute.xlu0 %6536
        %6538 = vset.pattern.permute.xlu0 0
        %6539 = vperm.xlu0 %6538, %v6502
        %v6540 = vpop.permute.xlu0 %6539
        %6541 = vset.pattern.permute.xlu0 0
        %6542 = vperm.xlu0 %6541, %v6503
        %v6543 = vpop.permute.xlu0 %6542
        %6544 = vset.pattern.permute.xlu0 0
        %6545 = vperm.xlu0 %6544, %v6504
        %v6546 = vpop.permute.xlu0 %6545
        %6547 = vset.pattern.permute.xlu0 0
        %6548 = vperm.xlu0 %6547, %v6505
        %v6549 = vpop.permute.xlu0 %6548
        %6550 = vset.pattern.permute.xlu0 0
        %6551 = vperm.xlu0 %6550, %v6506
        %v6552 = vpop.permute.xlu0 %6551
        %6553 = vset.pattern.permute.xlu0 0
        %6554 = vperm.xlu0 %6553, %v6507
        %v6555 = vpop.permute.xlu0 %6554
        %6556 = vset.pattern.permute.xlu0 0
        %6557 = vperm.xlu0 %6556, %v6508
        %v6558 = vpop.permute.xlu0 %6557
        %6559 = vset.pattern.permute.xlu0 0
        %6560 = vperm.xlu0 %6559, %v6509
        %v6561 = vpop.permute.xlu0 %6560
        %6562 = vset.pattern.permute.xlu0 0
        %6563 = vperm.xlu0 %6562, %v6510
        %v6564 = vpop.permute.xlu0 %6563
        %6565 = vset.pattern.permute.xlu0 0
        %6566 = vperm.xlu0 %6565, %v6511
        %v6567 = vpop.permute.xlu0 %6566
        %6568 = vset.pattern.permute.xlu0 0
        %6569 = vperm.xlu0 %6568, %v6512
        %v6570 = vpop.permute.xlu0 %6569
        %6571 = vset.pattern.permute.xlu0 0
        %6572 = vperm.xlu0 %6571, %v6513
        %v6573 = vpop.permute.xlu0 %6572
        %6574 = vset.pattern.permute.xlu0 0
        %6575 = vperm.xlu0 %6574, %v6514
        %v6576 = vpop.permute.xlu0 %6575
        %6577 = vset.pattern.permute.xlu0 0
        %6578 = vperm.xlu0 %6577, %v6515
        %v6579 = vpop.permute.xlu0 %6578
        %6580 = vset.pattern.permute.xlu0 0
        %6581 = vperm.xlu0 %6580, %v6516
        %v6582 = vpop.permute.xlu0 %6581
        %6583 = vset.pattern.permute.xlu0 0
        %6584 = vperm.xlu0 %6583, %v6517
        %v6585 = vpop.permute.xlu0 %6584
        %6586 = vset.pattern.permute.xlu0 0
        %6587 = vperm.xlu0 %6586, %v6518
        %v6588 = vpop.permute.xlu0 %6587
        %6589 = vset.pattern.permute.xlu0 0
        %6590 = vperm.xlu0 %6589, %v6519
        %v6591 = vpop.permute.xlu0 %6590
        %6592 = vset.pattern.permute.xlu0 0
        %6593 = vperm.xlu0 %6592, %v6520
        %v6594 = vpop.permute.xlu0 %6593
        %6595 = vset.pattern.permute.xlu0 0
        %6596 = vperm.xlu0 %6595, %v6521
        %v6597 = vpop.permute.xlu0 %6596
        %6598 = vset.pattern.permute.xlu0 0
        %6599 = vperm.xlu0 %6598, %v6522
        %v6600 = vpop.permute.xlu0 %6599
        %6601 = vset.pattern.permute.xlu0 0
        %6602 = vperm.xlu0 %6601, %v6523
        %v6603 = vpop.permute.xlu0 %6602
        %6604 = vset.pattern.permute.xlu0 0
        %6605 = vperm.xlu0 %6604, %v6524
        %v6606 = vpop.permute.xlu0 %6605
        %6607 = vset.pattern.permute.xlu0 0
        %6608 = vperm.xlu0 %6607, %v6525
        %v6609 = vpop.permute.xlu0 %6608
        %6610 = vset.pattern.permute.xlu0 0
        %6611 = vperm.xlu0 %6610, %v6526
        %v6612 = vpop.permute.xlu0 %6611
        %6613 = vset.pattern.permute.xlu0 0
        %6614 = vperm.xlu0 %6613, %v6527
        %v6615 = vpop.permute.xlu0 %6614
        %6616 = vset.pattern.permute.xlu0 0
        %6617 = vperm.xlu0 %6616, %v6528
        %v6618 = vpop.permute.xlu0 %6617
        %6619 = vset.pattern.permute.xlu0 0
        %6620 = vperm.xlu0 %6619, %v6529
        %v6621 = vpop.permute.xlu0 %6620
        %6622 = vset.pattern.permute.xlu0 0
        %6623 = vperm.xlu0 %6622, %v6530
        %v6624 = vpop.permute.xlu0 %6623
        %6625 = vset.pattern.permute.xlu0 0
        %6626 = vperm.xlu0 %6625, %v6531
        %v6627 = vpop.permute.xlu0 %6626
        %vm6628 = vcmp.eq.s32.totalorder %v6534, %v662
        %vm6629 = vcmp.eq.s32.totalorder %v6534, %v663
        %vm6630 = vcmp.eq.s32.totalorder %v6534, %v664
        %vm6631 = vcmp.eq.s32.totalorder %v6537, %v662
        %vm6632 = vcmp.eq.s32.totalorder %v6537, %v663
        %vm6633 = vcmp.eq.s32.totalorder %v6537, %v664
        %vm6634 = vcmp.eq.s32.totalorder %v6540, %v662
        %vm6635 = vcmp.eq.s32.totalorder %v6540, %v663
        %vm6636 = vcmp.eq.s32.totalorder %v6540, %v664
        %vm6637 = vcmp.eq.s32.totalorder %v6543, %v662
        %vm6638 = vcmp.eq.s32.totalorder %v6543, %v663
        %vm6639 = vcmp.eq.s32.totalorder %v6543, %v664
        %vm6640 = vcmp.eq.s32.totalorder %v6546, %v662
        %vm6641 = vcmp.eq.s32.totalorder %v6546, %v663
        %vm6642 = vcmp.eq.s32.totalorder %v6546, %v664
        %vm6643 = vcmp.eq.s32.totalorder %v6549, %v662
        %vm6644 = vcmp.eq.s32.totalorder %v6549, %v663
        %vm6645 = vcmp.eq.s32.totalorder %v6549, %v664
        %vm6646 = vcmp.eq.s32.totalorder %v6552, %v662
        %vm6647 = vcmp.eq.s32.totalorder %v6552, %v663
        %vm6648 = vcmp.eq.s32.totalorder %v6552, %v664
        %vm6649 = vcmp.eq.s32.totalorder %v6555, %v662
        %vm6650 = vcmp.eq.s32.totalorder %v6555, %v663
        %vm6651 = vcmp.eq.s32.totalorder %v6555, %v664
        %vm6652 = vcmp.eq.s32.totalorder %v6558, %v662
        %vm6653 = vcmp.eq.s32.totalorder %v6558, %v663
        %vm6654 = vcmp.eq.s32.totalorder %v6558, %v664
        %vm6655 = vcmp.eq.s32.totalorder %v6561, %v662
        %vm6656 = vcmp.eq.s32.totalorder %v6561, %v663
        %vm6657 = vcmp.eq.s32.totalorder %v6561, %v664
        %vm6658 = vcmp.eq.s32.totalorder %v6564, %v662
        %vm6659 = vcmp.eq.s32.totalorder %v6564, %v663
        %vm6660 = vcmp.eq.s32.totalorder %v6564, %v664
        %vm6661 = vcmp.eq.s32.totalorder %v6567, %v662
        %vm6662 = vcmp.eq.s32.totalorder %v6567, %v663
        %vm6663 = vcmp.eq.s32.totalorder %v6567, %v664
        %vm6664 = vcmp.eq.s32.totalorder %v6570, %v662
        %vm6665 = vcmp.eq.s32.totalorder %v6570, %v663
        %vm6666 = vcmp.eq.s32.totalorder %v6570, %v664
        %vm6667 = vcmp.eq.s32.totalorder %v6573, %v662
        %vm6668 = vcmp.eq.s32.totalorder %v6573, %v663
        %vm6669 = vcmp.eq.s32.totalorder %v6573, %v664
        %vm6670 = vcmp.eq.s32.totalorder %v6576, %v662
        %vm6671 = vcmp.eq.s32.totalorder %v6576, %v663
        %vm6672 = vcmp.eq.s32.totalorder %v6576, %v664
        %vm6673 = vcmp.eq.s32.totalorder %v6579, %v662
        %vm6674 = vcmp.eq.s32.totalorder %v6579, %v663
        %vm6675 = vcmp.eq.s32.totalorder %v6579, %v664
        %vm6676 = vcmp.eq.s32.totalorder %v6582, %v662
        %vm6677 = vcmp.eq.s32.totalorder %v6582, %v663
        %vm6678 = vcmp.eq.s32.totalorder %v6582, %v664
        %vm6679 = vcmp.eq.s32.totalorder %v6585, %v662
        %vm6680 = vcmp.eq.s32.totalorder %v6585, %v663
        %vm6681 = vcmp.eq.s32.totalorder %v6585, %v664
        %vm6682 = vcmp.eq.s32.totalorder %v6588, %v662
        %vm6683 = vcmp.eq.s32.totalorder %v6588, %v663
        %vm6684 = vcmp.eq.s32.totalorder %v6588, %v664
        %vm6685 = vcmp.eq.s32.totalorder %v6591, %v662
        %vm6686 = vcmp.eq.s32.totalorder %v6591, %v663
        %vm6687 = vcmp.eq.s32.totalorder %v6591, %v664
        %vm6688 = vcmp.eq.s32.totalorder %v6594, %v662
        %vm6689 = vcmp.eq.s32.totalorder %v6594, %v663
        %vm6690 = vcmp.eq.s32.totalorder %v6594, %v664
        %vm6691 = vcmp.eq.s32.totalorder %v6597, %v662
        %vm6692 = vcmp.eq.s32.totalorder %v6597, %v663
        %vm6693 = vcmp.eq.s32.totalorder %v6597, %v664
        %vm6694 = vcmp.eq.s32.totalorder %v6600, %v662
        %vm6695 = vcmp.eq.s32.totalorder %v6600, %v663
        %vm6696 = vcmp.eq.s32.totalorder %v6600, %v664
        %vm6697 = vcmp.eq.s32.totalorder %v6603, %v662
        %vm6698 = vcmp.eq.s32.totalorder %v6603, %v663
        %vm6699 = vcmp.eq.s32.totalorder %v6603, %v664
        %vm6700 = vcmp.eq.s32.totalorder %v6606, %v662
        %vm6701 = vcmp.eq.s32.totalorder %v6606, %v663
        %vm6702 = vcmp.eq.s32.totalorder %v6606, %v664
        %vm6703 = vcmp.eq.s32.totalorder %v6609, %v662
        %vm6704 = vcmp.eq.s32.totalorder %v6609, %v663
        %vm6705 = vcmp.eq.s32.totalorder %v6609, %v664
        %vm6706 = vcmp.eq.s32.totalorder %v6612, %v662
        %vm6707 = vcmp.eq.s32.totalorder %v6612, %v663
        %vm6708 = vcmp.eq.s32.totalorder %v6612, %v664
        %vm6709 = vcmp.eq.s32.totalorder %v6615, %v662
        %vm6710 = vcmp.eq.s32.totalorder %v6615, %v663
        %vm6711 = vcmp.eq.s32.totalorder %v6615, %v664
        %vm6712 = vcmp.eq.s32.totalorder %v6618, %v662
        %vm6713 = vcmp.eq.s32.totalorder %v6618, %v663
        %vm6714 = vcmp.eq.s32.totalorder %v6618, %v664
        %vm6715 = vcmp.eq.s32.totalorder %v6621, %v662
        %vm6716 = vcmp.eq.s32.totalorder %v6621, %v663
        %vm6717 = vcmp.eq.s32.totalorder %v6621, %v664
        %vm6718 = vcmp.eq.s32.totalorder %v6624, %v662
        %vm6719 = vcmp.eq.s32.totalorder %v6624, %v663
        %vm6720 = vcmp.eq.s32.totalorder %v6624, %v664
        %vm6721 = vcmp.eq.s32.totalorder %v6627, %v662
        %vm6722 = vcmp.eq.s32.totalorder %v6627, %v663
        %vm6723 = vcmp.eq.s32.totalorder %v6627, %v664
        %v6724 = vsel %vm6628, 1, 0
        %v6725 = vsel %vm6629, 1, 0
        %v6726 = vsel %vm6630, 1, 0
        %v6727 = vsel %vm6631, 1, 0
        %v6728 = vsel %vm6632, 1, 0
        %v6729 = vsel %vm6633, 1, 0
        %v6730 = vsel %vm6634, 1, 0
        %v6731 = vsel %vm6635, 1, 0
        %v6732 = vsel %vm6636, 1, 0
        %v6733 = vsel %vm6637, 1, 0
        %v6734 = vsel %vm6638, 1, 0
        %v6735 = vsel %vm6639, 1, 0
        %v6736 = vsel %vm6640, 1, 0
        %v6737 = vsel %vm6641, 1, 0
        %v6738 = vsel %vm6642, 1, 0
        %v6739 = vsel %vm6643, 1, 0
        %v6740 = vsel %vm6644, 1, 0
        %v6741 = vsel %vm6645, 1, 0
        %v6742 = vsel %vm6646, 1, 0
        %v6743 = vsel %vm6647, 1, 0
        %v6744 = vsel %vm6648, 1, 0
        %v6745 = vsel %vm6649, 1, 0
        %v6746 = vsel %vm6650, 1, 0
        %v6747 = vsel %vm6651, 1, 0
        %v6748 = vsel %vm6652, 1, 0
        %v6749 = vsel %vm6653, 1, 0
        %v6750 = vsel %vm6654, 1, 0
        %v6751 = vsel %vm6655, 1, 0
        %v6752 = vsel %vm6656, 1, 0
        %v6753 = vsel %vm6657, 1, 0
        %v6754 = vsel %vm6658, 1, 0
        %v6755 = vsel %vm6659, 1, 0
        %v6756 = vsel %vm6660, 1, 0
        %v6757 = vsel %vm6661, 1, 0
        %v6758 = vsel %vm6662, 1, 0
        %v6759 = vsel %vm6663, 1, 0
        %v6760 = vsel %vm6664, 1, 0
        %v6761 = vsel %vm6665, 1, 0
        %v6762 = vsel %vm6666, 1, 0
        %v6763 = vsel %vm6667, 1, 0
        %v6764 = vsel %vm6668, 1, 0
        %v6765 = vsel %vm6669, 1, 0
        %v6766 = vsel %vm6670, 1, 0
        %v6767 = vsel %vm6671, 1, 0
        %v6768 = vsel %vm6672, 1, 0
        %v6769 = vsel %vm6673, 1, 0
        %v6770 = vsel %vm6674, 1, 0
        %v6771 = vsel %vm6675, 1, 0
        %v6772 = vsel %vm6676, 1, 0
        %v6773 = vsel %vm6677, 1, 0
        %v6774 = vsel %vm6678, 1, 0
        %v6775 = vsel %vm6679, 1, 0
        %v6776 = vsel %vm6680, 1, 0
        %v6777 = vsel %vm6681, 1, 0
        %v6778 = vsel %vm6682, 1, 0
        %v6779 = vsel %vm6683, 1, 0
        %v6780 = vsel %vm6684, 1, 0
        %v6781 = vsel %vm6685, 1, 0
        %v6782 = vsel %vm6686, 1, 0
        %v6783 = vsel %vm6687, 1, 0
        %v6784 = vsel %vm6688, 1, 0
        %v6785 = vsel %vm6689, 1, 0
        %v6786 = vsel %vm6690, 1, 0
        %v6787 = vsel %vm6691, 1, 0
        %v6788 = vsel %vm6692, 1, 0
        %v6789 = vsel %vm6693, 1, 0
        %v6790 = vsel %vm6694, 1, 0
        %v6791 = vsel %vm6695, 1, 0
        %v6792 = vsel %vm6696, 1, 0
        %v6793 = vsel %vm6697, 1, 0
        %v6794 = vsel %vm6698, 1, 0
        %v6795 = vsel %vm6699, 1, 0
        %v6796 = vsel %vm6700, 1, 0
        %v6797 = vsel %vm6701, 1, 0
        %v6798 = vsel %vm6702, 1, 0
        %v6799 = vsel %vm6703, 1, 0
        %v6800 = vsel %vm6704, 1, 0
        %v6801 = vsel %vm6705, 1, 0
        %v6802 = vsel %vm6706, 1, 0
        %v6803 = vsel %vm6707, 1, 0
        %v6804 = vsel %vm6708, 1, 0
        %v6805 = vsel %vm6709, 1, 0
        %v6806 = vsel %vm6710, 1, 0
        %v6807 = vsel %vm6711, 1, 0
        %v6808 = vsel %vm6712, 1, 0
        %v6809 = vsel %vm6713, 1, 0
        %v6810 = vsel %vm6714, 1, 0
        %v6811 = vsel %vm6715, 1, 0
        %v6812 = vsel %vm6716, 1, 0
        %v6813 = vsel %vm6717, 1, 0
        %v6814 = vsel %vm6718, 1, 0
        %v6815 = vsel %vm6719, 1, 0
        %v6816 = vsel %vm6720, 1, 0
        %v6817 = vsel %vm6721, 1, 0
        %v6818 = vsel %vm6722, 1, 0
        %v6819 = vsel %vm6723, 1, 0
        %v6820 = vcvt.s32.f32 %v6724
        %v6821 = vcvt.s32.f32 %v6725
        %v6822 = vcvt.s32.f32 %v6726
        %v6823 = vcvt.s32.f32 %v6727
        %v6824 = vcvt.s32.f32 %v6728
        %v6825 = vcvt.s32.f32 %v6729
        %v6826 = vcvt.s32.f32 %v6730
        %v6827 = vcvt.s32.f32 %v6731
        %v6828 = vcvt.s32.f32 %v6732
        %v6829 = vcvt.s32.f32 %v6733
        %v6830 = vcvt.s32.f32 %v6734
        %v6831 = vcvt.s32.f32 %v6735
        %v6832 = vcvt.s32.f32 %v6736
        %v6833 = vcvt.s32.f32 %v6737
        %v6834 = vcvt.s32.f32 %v6738
        %v6835 = vcvt.s32.f32 %v6739
        %v6836 = vcvt.s32.f32 %v6740
        %v6837 = vcvt.s32.f32 %v6741
        %v6838 = vcvt.s32.f32 %v6742
        %v6839 = vcvt.s32.f32 %v6743
        %v6840 = vcvt.s32.f32 %v6744
        %v6841 = vcvt.s32.f32 %v6745
        %v6842 = vcvt.s32.f32 %v6746
        %v6843 = vcvt.s32.f32 %v6747
        %v6844 = vcvt.s32.f32 %v6748
        %v6845 = vcvt.s32.f32 %v6749
        %v6846 = vcvt.s32.f32 %v6750
        %v6847 = vcvt.s32.f32 %v6751
        %v6848 = vcvt.s32.f32 %v6752
        %v6849 = vcvt.s32.f32 %v6753
        %v6850 = vcvt.s32.f32 %v6754
        %v6851 = vcvt.s32.f32 %v6755
        %v6852 = vcvt.s32.f32 %v6756
        %v6853 = vcvt.s32.f32 %v6757
        %v6854 = vcvt.s32.f32 %v6758
        %v6855 = vcvt.s32.f32 %v6759
        %v6856 = vcvt.s32.f32 %v6760
        %v6857 = vcvt.s32.f32 %v6761
        %v6858 = vcvt.s32.f32 %v6762
        %v6859 = vcvt.s32.f32 %v6763
        %v6860 = vcvt.s32.f32 %v6764
        %v6861 = vcvt.s32.f32 %v6765
        %v6862 = vcvt.s32.f32 %v6766
        %v6863 = vcvt.s32.f32 %v6767
        %v6864 = vcvt.s32.f32 %v6768
        %v6865 = vcvt.s32.f32 %v6769
        %v6866 = vcvt.s32.f32 %v6770
        %v6867 = vcvt.s32.f32 %v6771
        %v6868 = vcvt.s32.f32 %v6772
        %v6869 = vcvt.s32.f32 %v6773
        %v6870 = vcvt.s32.f32 %v6774
        %v6871 = vcvt.s32.f32 %v6775
        %v6872 = vcvt.s32.f32 %v6776
        %v6873 = vcvt.s32.f32 %v6777
        %v6874 = vcvt.s32.f32 %v6778
        %v6875 = vcvt.s32.f32 %v6779
        %v6876 = vcvt.s32.f32 %v6780
        %v6877 = vcvt.s32.f32 %v6781
        %v6878 = vcvt.s32.f32 %v6782
        %v6879 = vcvt.s32.f32 %v6783
        %v6880 = vcvt.s32.f32 %v6784
        %v6881 = vcvt.s32.f32 %v6785
        %v6882 = vcvt.s32.f32 %v6786
        %v6883 = vcvt.s32.f32 %v6787
        %v6884 = vcvt.s32.f32 %v6788
        %v6885 = vcvt.s32.f32 %v6789
        %v6886 = vcvt.s32.f32 %v6790
        %v6887 = vcvt.s32.f32 %v6791
        %v6888 = vcvt.s32.f32 %v6792
        %v6889 = vcvt.s32.f32 %v6793
        %v6890 = vcvt.s32.f32 %v6794
        %v6891 = vcvt.s32.f32 %v6795
        %v6892 = vcvt.s32.f32 %v6796
        %v6893 = vcvt.s32.f32 %v6797
        %v6894 = vcvt.s32.f32 %v6798
        %v6895 = vcvt.s32.f32 %v6799
        %v6896 = vcvt.s32.f32 %v6800
        %v6897 = vcvt.s32.f32 %v6801
        %v6898 = vcvt.s32.f32 %v6802
        %v6899 = vcvt.s32.f32 %v6803
        %v6900 = vcvt.s32.f32 %v6804
        %v6901 = vcvt.s32.f32 %v6805
        %v6902 = vcvt.s32.f32 %v6806
        %v6903 = vcvt.s32.f32 %v6807
        %v6904 = vcvt.s32.f32 %v6808
        %v6905 = vcvt.s32.f32 %v6809
        %v6906 = vcvt.s32.f32 %v6810
        %v6907 = vcvt.s32.f32 %v6811
        %v6908 = vcvt.s32.f32 %v6812
        %v6909 = vcvt.s32.f32 %v6813
        %v6910 = vcvt.s32.f32 %v6814
        %v6911 = vcvt.s32.f32 %v6815
        %v6912 = vcvt.s32.f32 %v6816
        %v6913 = vcvt.s32.f32 %v6817
        %v6914 = vcvt.s32.f32 %v6818
        %v6915 = vcvt.s32.f32 %v6819
        %s6916 = scalar_lea.vmem [#allocation2], 1792
        %v6917 = vld [vmem:[%s6916] sm:$0xff]
        %v6918 = vld [vmem:[%s6916 + $0x8] sm:$0xff]
        %v6919 = vld [vmem:[%s6916 + $0x10] sm:$0xff]
        %v6920 = vld [vmem:[%s6916 + $0x18] sm:$0xff]
        %v6921 = vld [vmem:[%s6916 + $0x20] sm:$0xff]
        %v6922 = vld [vmem:[%s6916 + $0x28] sm:$0xff]
        %v6923 = vld [vmem:[%s6916 + $0x30] sm:$0xff]
        %v6924 = vld [vmem:[%s6916 + $0x38] sm:$0xff]
        %v6925 = vld [vmem:[%s6916 + $0x40] sm:$0xff]
        %v6926 = vld [vmem:[%s6916 + $0x48] sm:$0xff]
        %v6927 = vld [vmem:[%s6916 + $0x50] sm:$0xff]
        %v6928 = vld [vmem:[%s6916 + $0x58] sm:$0xff]
        %v6929 = vld [vmem:[%s6916 + $0x60] sm:$0xff]
        %v6930 = vld [vmem:[%s6916 + $0x68] sm:$0xff]
        %v6931 = vld [vmem:[%s6916 + $0x70] sm:$0xff]
        %v6932 = vld [vmem:[%s6916 + $0x78] sm:$0xff]
        %v6933 = vld [vmem:[%s6916 + $0x80] sm:$0xff]
        %v6934 = vld [vmem:[%s6916 + $0x88] sm:$0xff]
        %v6935 = vld [vmem:[%s6916 + $0x90] sm:$0xff]
        %v6936 = vld [vmem:[%s6916 + $0x98] sm:$0xff]
        %v6937 = vld [vmem:[%s6916 + $0xa0] sm:$0xff]
        %v6938 = vld [vmem:[%s6916 + $0xa8] sm:$0xff]
        %v6939 = vld [vmem:[%s6916 + $0xb0] sm:$0xff]
        %v6940 = vld [vmem:[%s6916 + $0xb8] sm:$0xff]
        %v6941 = vld [vmem:[%s6916 + $0xc0] sm:$0xff]
        %v6942 = vld [vmem:[%s6916 + $0xc8] sm:$0xff]
        %v6943 = vld [vmem:[%s6916 + $0xd0] sm:$0xff]
        %v6944 = vld [vmem:[%s6916 + $0xd8] sm:$0xff]
        %v6945 = vld [vmem:[%s6916 + $0xe0] sm:$0xff]
        %v6946 = vld [vmem:[%s6916 + $0xe8] sm:$0xff]
        %v6947 = vld [vmem:[%s6916 + $0xf0] sm:$0xff]
        %v6948 = vld [vmem:[%s6916 + $0xf8] sm:$0xff]
        %6949 = vmatpush.msra.mxu0 %v533
        %6950 = vmatpush.msra.mxu0 %v532
        %6951 = vmatpush.msra.mxu0 %v531
        %6952 = vmatpush.msra.mxu0 %v530
        %6953 = vmatpush.msra.mxu0 %v529
        %6954 = vmatpush.msra.mxu0 %v528
        %6955 = vmatpush.msra.mxu0 %v527
        %6956 = vmatpush.msra.mxu0 %v526
        %6957 = vmatpush.msra.mxu0 %v525
        %6958 = vmatpush.msra.mxu0 %v524
        %6959 = vmatpush.msra.mxu0 %v523
        %6960 = vmatpush.msra.mxu0 %v522
        %6961 = vmatpush.msra.mxu0 %v521
        %6962 = vmatpush.msra.mxu0 %v520
        %6963 = vmatpush.msra.mxu0 %v519
        %6964 = vmatpush.msra.mxu0 %v518
        %6965 = vmatmul.f32.gmra.mxu0 %v6820
        %v6966 = vpop.f32.mrf.mxu0
        %v6967 = vadd.f32 0.0, %v6966
        %6968 = vmatmul.f32.gmra.mxu0 %v6823
        %v6969 = vpop.f32.mrf.mxu0
        %v6970 = vadd.f32 0.0, %v6969
        %6971 = vmatmul.f32.gmra.mxu0 %v6826
        %v6972 = vpop.f32.mrf.mxu0
        %v6973 = vadd.f32 0.0, %v6972
        %6974 = vmatmul.f32.gmra.mxu0 %v6829
        %v6975 = vpop.f32.mrf.mxu0
        %v6976 = vadd.f32 0.0, %v6975
        %6977 = vmatmul.f32.gmra.mxu0 %v6832
        %v6978 = vpop.f32.mrf.mxu0
        %v6979 = vadd.f32 0.0, %v6978
        %6980 = vmatmul.f32.gmra.mxu0 %v6835
        %v6981 = vpop.f32.mrf.mxu0
        %v6982 = vadd.f32 0.0, %v6981
        %6983 = vmatmul.f32.gmra.mxu0 %v6838
        %v6984 = vpop.f32.mrf.mxu0
        %v6985 = vadd.f32 0.0, %v6984
        %6986 = vmatmul.f32.gmra.mxu0 %v6841
        %v6987 = vpop.f32.mrf.mxu0
        %v6988 = vadd.f32 0.0, %v6987
        %6989 = vmatmul.f32.gmra.mxu0 %v6844
        %v6990 = vpop.f32.mrf.mxu0
        %v6991 = vadd.f32 0.0, %v6990
        %6992 = vmatmul.f32.gmra.mxu0 %v6847
        %v6993 = vpop.f32.mrf.mxu0
        %v6994 = vadd.f32 0.0, %v6993
        %6995 = vmatmul.f32.gmra.mxu0 %v6850
        %v6996 = vpop.f32.mrf.mxu0
        %v6997 = vadd.f32 0.0, %v6996
        %6998 = vmatmul.f32.gmra.mxu0 %v6853
        %v6999 = vpop.f32.mrf.mxu0
        %v7000 = vadd.f32 0.0, %v6999
        %7001 = vmatmul.f32.gmra.mxu0 %v6856
        %v7002 = vpop.f32.mrf.mxu0
        %v7003 = vadd.f32 0.0, %v7002
        %7004 = vmatmul.f32.gmra.mxu0 %v6859
        %v7005 = vpop.f32.mrf.mxu0
        %v7006 = vadd.f32 0.0, %v7005
        %7007 = vmatmul.f32.gmra.mxu0 %v6862
        %v7008 = vpop.f32.mrf.mxu0
        %v7009 = vadd.f32 0.0, %v7008
        %7010 = vmatmul.f32.gmra.mxu0 %v6865
        %v7011 = vpop.f32.mrf.mxu0
        %v7012 = vadd.f32 0.0, %v7011
        %7013 = vmatmul.f32.gmra.mxu0 %v6868
        %v7014 = vpop.f32.mrf.mxu0
        %v7015 = vadd.f32 0.0, %v7014
        %7016 = vmatmul.f32.gmra.mxu0 %v6871
        %v7017 = vpop.f32.mrf.mxu0
        %v7018 = vadd.f32 0.0, %v7017
        %7019 = vmatmul.f32.gmra.mxu0 %v6874
        %v7020 = vpop.f32.mrf.mxu0
        %v7021 = vadd.f32 0.0, %v7020
        %7022 = vmatmul.f32.gmra.mxu0 %v6877
        %v7023 = vpop.f32.mrf.mxu0
        %v7024 = vadd.f32 0.0, %v7023
        %7025 = vmatmul.f32.gmra.mxu0 %v6880
        %v7026 = vpop.f32.mrf.mxu0
        %v7027 = vadd.f32 0.0, %v7026
        %7028 = vmatmul.f32.gmra.mxu0 %v6883
        %v7029 = vpop.f32.mrf.mxu0
        %v7030 = vadd.f32 0.0, %v7029
        %7031 = vmatmul.f32.gmra.mxu0 %v6886
        %v7032 = vpop.f32.mrf.mxu0
        %v7033 = vadd.f32 0.0, %v7032
        %7034 = vmatmul.f32.gmra.mxu0 %v6889
        %v7035 = vpop.f32.mrf.mxu0
        %v7036 = vadd.f32 0.0, %v7035
        %7037 = vmatmul.f32.gmra.mxu0 %v6892
        %v7038 = vpop.f32.mrf.mxu0
        %v7039 = vadd.f32 0.0, %v7038
        %7040 = vmatmul.f32.gmra.mxu0 %v6895
        %v7041 = vpop.f32.mrf.mxu0
        %v7042 = vadd.f32 0.0, %v7041
        %7043 = vmatmul.f32.gmra.mxu0 %v6898
        %v7044 = vpop.f32.mrf.mxu0
        %v7045 = vadd.f32 0.0, %v7044
        %7046 = vmatmul.f32.gmra.mxu0 %v6901
        %v7047 = vpop.f32.mrf.mxu0
        %v7048 = vadd.f32 0.0, %v7047
        %7049 = vmatmul.f32.gmra.mxu0 %v6904
        %v7050 = vpop.f32.mrf.mxu0
        %v7051 = vadd.f32 0.0, %v7050
        %7052 = vmatmul.f32.gmra.mxu0 %v6907
        %v7053 = vpop.f32.mrf.mxu0
        %v7054 = vadd.f32 0.0, %v7053
        %7055 = vmatmul.f32.gmra.mxu0 %v6910
        %v7056 = vpop.f32.mrf.mxu0
        %v7057 = vadd.f32 0.0, %v7056
        %7058 = vmatmul.f32.gmra.mxu0 %v6913
        %v7059 = vpop.f32.mrf.mxu0
        %v7060 = vadd.f32 0.0, %v7059
        %7061 = vdwg.mxu0
        %7062 = vmatpush.msra.mxu0 %v549
        %7063 = vmatpush.msra.mxu0 %v548
        %7064 = vmatpush.msra.mxu0 %v547
        %7065 = vmatpush.msra.mxu0 %v546
        %7066 = vmatpush.msra.mxu0 %v545
        %7067 = vmatpush.msra.mxu0 %v544
        %7068 = vmatpush.msra.mxu0 %v543
        %7069 = vmatpush.msra.mxu0 %v542
        %7070 = vmatpush.msra.mxu0 %v541
        %7071 = vmatpush.msra.mxu0 %v540
        %7072 = vmatpush.msra.mxu0 %v539
        %7073 = vmatpush.msra.mxu0 %v538
        %7074 = vmatpush.msra.mxu0 %v537
        %7075 = vmatpush.msra.mxu0 %v536
        %7076 = vmatpush.msra.mxu0 %v535
        %7077 = vmatpush.msra.mxu0 %v534
        %7078 = vmatmul.f32.gmra.mxu0 %v6821
        %v7079 = vpop.f32.mrf.mxu0
        %v7080 = vadd.f32 %v6967, %v7079
        %7081 = vmatmul.f32.gmra.mxu0 %v6824
        %v7082 = vpop.f32.mrf.mxu0
        %v7083 = vadd.f32 %v6970, %v7082
        %7084 = vmatmul.f32.gmra.mxu0 %v6827
        %v7085 = vpop.f32.mrf.mxu0
        %v7086 = vadd.f32 %v6973, %v7085
        %7087 = vmatmul.f32.gmra.mxu0 %v6830
        %v7088 = vpop.f32.mrf.mxu0
        %v7089 = vadd.f32 %v6976, %v7088
        %7090 = vmatmul.f32.gmra.mxu0 %v6833
        %v7091 = vpop.f32.mrf.mxu0
        %v7092 = vadd.f32 %v6979, %v7091
        %7093 = vmatmul.f32.gmra.mxu0 %v6836
        %v7094 = vpop.f32.mrf.mxu0
        %v7095 = vadd.f32 %v6982, %v7094
        %7096 = vmatmul.f32.gmra.mxu0 %v6839
        %v7097 = vpop.f32.mrf.mxu0
        %v7098 = vadd.f32 %v6985, %v7097
        %7099 = vmatmul.f32.gmra.mxu0 %v6842
        %v7100 = vpop.f32.mrf.mxu0
        %v7101 = vadd.f32 %v6988, %v7100
        %7102 = vmatmul.f32.gmra.mxu0 %v6845
        %v7103 = vpop.f32.mrf.mxu0
        %v7104 = vadd.f32 %v6991, %v7103
        %7105 = vmatmul.f32.gmra.mxu0 %v6848
        %v7106 = vpop.f32.mrf.mxu0
        %v7107 = vadd.f32 %v6994, %v7106
        %7108 = vmatmul.f32.gmra.mxu0 %v6851
        %v7109 = vpop.f32.mrf.mxu0
        %v7110 = vadd.f32 %v6997, %v7109
        %7111 = vmatmul.f32.gmra.mxu0 %v6854
        %v7112 = vpop.f32.mrf.mxu0
        %v7113 = vadd.f32 %v7000, %v7112
        %7114 = vmatmul.f32.gmra.mxu0 %v6857
        %v7115 = vpop.f32.mrf.mxu0
        %v7116 = vadd.f32 %v7003, %v7115
        %7117 = vmatmul.f32.gmra.mxu0 %v6860
        %v7118 = vpop.f32.mrf.mxu0
        %v7119 = vadd.f32 %v7006, %v7118
        %7120 = vmatmul.f32.gmra.mxu0 %v6863
        %v7121 = vpop.f32.mrf.mxu0
        %v7122 = vadd.f32 %v7009, %v7121
        %7123 = vmatmul.f32.gmra.mxu0 %v6866
        %v7124 = vpop.f32.mrf.mxu0
        %v7125 = vadd.f32 %v7012, %v7124
        %7126 = vmatmul.f32.gmra.mxu0 %v6869
        %v7127 = vpop.f32.mrf.mxu0
        %v7128 = vadd.f32 %v7015, %v7127
        %7129 = vmatmul.f32.gmra.mxu0 %v6872
        %v7130 = vpop.f32.mrf.mxu0
        %v7131 = vadd.f32 %v7018, %v7130
        %7132 = vmatmul.f32.gmra.mxu0 %v6875
        %v7133 = vpop.f32.mrf.mxu0
        %v7134 = vadd.f32 %v7021, %v7133
        %7135 = vmatmul.f32.gmra.mxu0 %v6878
        %v7136 = vpop.f32.mrf.mxu0
        %v7137 = vadd.f32 %v7024, %v7136
        %7138 = vmatmul.f32.gmra.mxu0 %v6881
        %v7139 = vpop.f32.mrf.mxu0
        %v7140 = vadd.f32 %v7027, %v7139
        %7141 = vmatmul.f32.gmra.mxu0 %v6884
        %v7142 = vpop.f32.mrf.mxu0
        %v7143 = vadd.f32 %v7030, %v7142
        %7144 = vmatmul.f32.gmra.mxu0 %v6887
        %v7145 = vpop.f32.mrf.mxu0
        %v7146 = vadd.f32 %v7033, %v7145
        %7147 = vmatmul.f32.gmra.mxu0 %v6890
        %v7148 = vpop.f32.mrf.mxu0
        %v7149 = vadd.f32 %v7036, %v7148
        %7150 = vmatmul.f32.gmra.mxu0 %v6893
        %v7151 = vpop.f32.mrf.mxu0
        %v7152 = vadd.f32 %v7039, %v7151
        %7153 = vmatmul.f32.gmra.mxu0 %v6896
        %v7154 = vpop.f32.mrf.mxu0
        %v7155 = vadd.f32 %v7042, %v7154
        %7156 = vmatmul.f32.gmra.mxu0 %v6899
        %v7157 = vpop.f32.mrf.mxu0
        %v7158 = vadd.f32 %v7045, %v7157
        %7159 = vmatmul.f32.gmra.mxu0 %v6902
        %v7160 = vpop.f32.mrf.mxu0
        %v7161 = vadd.f32 %v7048, %v7160
        %7162 = vmatmul.f32.gmra.mxu0 %v6905
        %v7163 = vpop.f32.mrf.mxu0
        %v7164 = vadd.f32 %v7051, %v7163
        %7165 = vmatmul.f32.gmra.mxu0 %v6908
        %v7166 = vpop.f32.mrf.mxu0
        %v7167 = vadd.f32 %v7054, %v7166
        %7168 = vmatmul.f32.gmra.mxu0 %v6911
        %v7169 = vpop.f32.mrf.mxu0
        %v7170 = vadd.f32 %v7057, %v7169
        %7171 = vmatmul.f32.gmra.mxu0 %v6914
        %v7172 = vpop.f32.mrf.mxu0
        %v7173 = vadd.f32 %v7060, %v7172
        %7174 = vdwg.mxu0
        %7175 = vmatpush.msra.mxu0 %v565
        %7176 = vmatpush.msra.mxu0 %v564
        %7177 = vmatpush.msra.mxu0 %v563
        %7178 = vmatpush.msra.mxu0 %v562
        %7179 = vmatpush.msra.mxu0 %v561
        %7180 = vmatpush.msra.mxu0 %v560
        %7181 = vmatpush.msra.mxu0 %v559
        %7182 = vmatpush.msra.mxu0 %v558
        %7183 = vmatpush.msra.mxu0 %v557
        %7184 = vmatpush.msra.mxu0 %v556
        %7185 = vmatpush.msra.mxu0 %v555
        %7186 = vmatpush.msra.mxu0 %v554
        %7187 = vmatpush.msra.mxu0 %v553
        %7188 = vmatpush.msra.mxu0 %v552
        %7189 = vmatpush.msra.mxu0 %v551
        %7190 = vmatpush.msra.mxu0 %v550
        %7191 = vmatmul.f32.gmra.mxu0 %v6822
        %v7192 = vpop.f32.mrf.mxu0
        %v7193 = vadd.f32 %v7080, %v7192
        %7194 = vmatmul.f32.gmra.mxu0 %v6825
        %v7195 = vpop.f32.mrf.mxu0
        %v7196 = vadd.f32 %v7083, %v7195
        %7197 = vmatmul.f32.gmra.mxu0 %v6828
        %v7198 = vpop.f32.mrf.mxu0
        %v7199 = vadd.f32 %v7086, %v7198
        %7200 = vmatmul.f32.gmra.mxu0 %v6831
        %v7201 = vpop.f32.mrf.mxu0
        %v7202 = vadd.f32 %v7089, %v7201
        %7203 = vmatmul.f32.gmra.mxu0 %v6834
        %v7204 = vpop.f32.mrf.mxu0
        %v7205 = vadd.f32 %v7092, %v7204
        %7206 = vmatmul.f32.gmra.mxu0 %v6837
        %v7207 = vpop.f32.mrf.mxu0
        %v7208 = vadd.f32 %v7095, %v7207
        %7209 = vmatmul.f32.gmra.mxu0 %v6840
        %v7210 = vpop.f32.mrf.mxu0
        %v7211 = vadd.f32 %v7098, %v7210
        %7212 = vmatmul.f32.gmra.mxu0 %v6843
        %v7213 = vpop.f32.mrf.mxu0
        %v7214 = vadd.f32 %v7101, %v7213
        %7215 = vmatmul.f32.gmra.mxu0 %v6846
        %v7216 = vpop.f32.mrf.mxu0
        %v7217 = vadd.f32 %v7104, %v7216
        %7218 = vmatmul.f32.gmra.mxu0 %v6849
        %v7219 = vpop.f32.mrf.mxu0
        %v7220 = vadd.f32 %v7107, %v7219
        %7221 = vmatmul.f32.gmra.mxu0 %v6852
        %v7222 = vpop.f32.mrf.mxu0
        %v7223 = vadd.f32 %v7110, %v7222
        %7224 = vmatmul.f32.gmra.mxu0 %v6855
        %v7225 = vpop.f32.mrf.mxu0
        %v7226 = vadd.f32 %v7113, %v7225
        %7227 = vmatmul.f32.gmra.mxu0 %v6858
        %v7228 = vpop.f32.mrf.mxu0
        %v7229 = vadd.f32 %v7116, %v7228
        %7230 = vmatmul.f32.gmra.mxu0 %v6861
        %v7231 = vpop.f32.mrf.mxu0
        %v7232 = vadd.f32 %v7119, %v7231
        %7233 = vmatmul.f32.gmra.mxu0 %v6864
        %v7234 = vpop.f32.mrf.mxu0
        %v7235 = vadd.f32 %v7122, %v7234
        %7236 = vmatmul.f32.gmra.mxu0 %v6867
        %v7237 = vpop.f32.mrf.mxu0
        %v7238 = vadd.f32 %v7125, %v7237
        %7239 = vmatmul.f32.gmra.mxu0 %v6870
        %v7240 = vpop.f32.mrf.mxu0
        %v7241 = vadd.f32 %v7128, %v7240
        %7242 = vmatmul.f32.gmra.mxu0 %v6873
        %v7243 = vpop.f32.mrf.mxu0
        %v7244 = vadd.f32 %v7131, %v7243
        %7245 = vmatmul.f32.gmra.mxu0 %v6876
        %v7246 = vpop.f32.mrf.mxu0
        %v7247 = vadd.f32 %v7134, %v7246
        %7248 = vmatmul.f32.gmra.mxu0 %v6879
        %v7249 = vpop.f32.mrf.mxu0
        %v7250 = vadd.f32 %v7137, %v7249
        %7251 = vmatmul.f32.gmra.mxu0 %v6882
        %v7252 = vpop.f32.mrf.mxu0
        %v7253 = vadd.f32 %v7140, %v7252
        %7254 = vmatmul.f32.gmra.mxu0 %v6885
        %v7255 = vpop.f32.mrf.mxu0
        %v7256 = vadd.f32 %v7143, %v7255
        %7257 = vmatmul.f32.gmra.mxu0 %v6888
        %v7258 = vpop.f32.mrf.mxu0
        %v7259 = vadd.f32 %v7146, %v7258
        %7260 = vmatmul.f32.gmra.mxu0 %v6891
        %v7261 = vpop.f32.mrf.mxu0
        %v7262 = vadd.f32 %v7149, %v7261
        %7263 = vmatmul.f32.gmra.mxu0 %v6894
        %v7264 = vpop.f32.mrf.mxu0
        %v7265 = vadd.f32 %v7152, %v7264
        %7266 = vmatmul.f32.gmra.mxu0 %v6897
        %v7267 = vpop.f32.mrf.mxu0
        %v7268 = vadd.f32 %v7155, %v7267
        %7269 = vmatmul.f32.gmra.mxu0 %v6900
        %v7270 = vpop.f32.mrf.mxu0
        %v7271 = vadd.f32 %v7158, %v7270
        %7272 = vmatmul.f32.gmra.mxu0 %v6903
        %v7273 = vpop.f32.mrf.mxu0
        %v7274 = vadd.f32 %v7161, %v7273
        %7275 = vmatmul.f32.gmra.mxu0 %v6906
        %v7276 = vpop.f32.mrf.mxu0
        %v7277 = vadd.f32 %v7164, %v7276
        %7278 = vmatmul.f32.gmra.mxu0 %v6909
        %v7279 = vpop.f32.mrf.mxu0
        %v7280 = vadd.f32 %v7167, %v7279
        %7281 = vmatmul.f32.gmra.mxu0 %v6912
        %v7282 = vpop.f32.mrf.mxu0
        %v7283 = vadd.f32 %v7170, %v7282
        %7284 = vmatmul.f32.gmra.mxu0 %v6915
        %v7285 = vpop.f32.mrf.mxu0
        %v7286 = vadd.f32 %v7173, %v7285
        %7287 = vdwg.mxu0
        %v7288 = vadd.f32 %v6917, %v7193
        %v7289 = vadd.f32 %v6918, %v7196
        %v7290 = vadd.f32 %v6919, %v7199
        %v7291 = vadd.f32 %v6920, %v7202
        %v7292 = vadd.f32 %v6921, %v7205
        %v7293 = vadd.f32 %v6922, %v7208
        %v7294 = vadd.f32 %v6923, %v7211
        %v7295 = vadd.f32 %v6924, %v7214
        %v7296 = vadd.f32 %v6925, %v7217
        %v7297 = vadd.f32 %v6926, %v7220
        %v7298 = vadd.f32 %v6927, %v7223
        %v7299 = vadd.f32 %v6928, %v7226
        %v7300 = vadd.f32 %v6929, %v7229
        %v7301 = vadd.f32 %v6930, %v7232
        %v7302 = vadd.f32 %v6931, %v7235
        %v7303 = vadd.f32 %v6932, %v7238
        %v7304 = vadd.f32 %v6933, %v7241
        %v7305 = vadd.f32 %v6934, %v7244
        %v7306 = vadd.f32 %v6935, %v7247
        %v7307 = vadd.f32 %v6936, %v7250
        %v7308 = vadd.f32 %v6937, %v7253
        %v7309 = vadd.f32 %v6938, %v7256
        %v7310 = vadd.f32 %v6939, %v7259
        %v7311 = vadd.f32 %v6940, %v7262
        %v7312 = vadd.f32 %v6941, %v7265
        %v7313 = vadd.f32 %v6942, %v7268
        %v7314 = vadd.f32 %v6943, %v7271
        %v7315 = vadd.f32 %v6944, %v7274
        %v7316 = vadd.f32 %v6945, %v7277
        %v7317 = vadd.f32 %v6946, %v7280
        %v7318 = vadd.f32 %v6947, %v7283
        %v7319 = vadd.f32 %v6948, %v7286
        %7320 = vst [vmem:[%s6916] sm:$0xff] %v7288
        %7321 = vst [vmem:[%s6916 + $0x8] sm:$0xff] %v7289
        %7322 = vst [vmem:[%s6916 + $0x10] sm:$0xff] %v7290
        %7323 = vst [vmem:[%s6916 + $0x18] sm:$0xff] %v7291
        %7324 = vst [vmem:[%s6916 + $0x20] sm:$0xff] %v7292
        %7325 = vst [vmem:[%s6916 + $0x28] sm:$0xff] %v7293
        %7326 = vst [vmem:[%s6916 + $0x30] sm:$0xff] %v7294
        %7327 = vst [vmem:[%s6916 + $0x38] sm:$0xff] %v7295
        %7328 = vst [vmem:[%s6916 + $0x40] sm:$0xff] %v7296
        %7329 = vst [vmem:[%s6916 + $0x48] sm:$0xff] %v7297
        %7330 = vst [vmem:[%s6916 + $0x50] sm:$0xff] %v7298
        %7331 = vst [vmem:[%s6916 + $0x58] sm:$0xff] %v7299
        %7332 = vst [vmem:[%s6916 + $0x60] sm:$0xff] %v7300
        %7333 = vst [vmem:[%s6916 + $0x68] sm:$0xff] %v7301
        %7334 = vst [vmem:[%s6916 + $0x70] sm:$0xff] %v7302
        %7335 = vst [vmem:[%s6916 + $0x78] sm:$0xff] %v7303
        %7336 = vst [vmem:[%s6916 + $0x80] sm:$0xff] %v7304
        %7337 = vst [vmem:[%s6916 + $0x88] sm:$0xff] %v7305
        %7338 = vst [vmem:[%s6916 + $0x90] sm:$0xff] %v7306
        %7339 = vst [vmem:[%s6916 + $0x98] sm:$0xff] %v7307
        %7340 = vst [vmem:[%s6916 + $0xa0] sm:$0xff] %v7308
        %7341 = vst [vmem:[%s6916 + $0xa8] sm:$0xff] %v7309
        %7342 = vst [vmem:[%s6916 + $0xb0] sm:$0xff] %v7310
        %7343 = vst [vmem:[%s6916 + $0xb8] sm:$0xff] %v7311
        %7344 = vst [vmem:[%s6916 + $0xc0] sm:$0xff] %v7312
        %7345 = vst [vmem:[%s6916 + $0xc8] sm:$0xff] %v7313
        %7346 = vst [vmem:[%s6916 + $0xd0] sm:$0xff] %v7314
        %7347 = vst [vmem:[%s6916 + $0xd8] sm:$0xff] %v7315
        %7348 = vst [vmem:[%s6916 + $0xe0] sm:$0xff] %v7316
        %7349 = vst [vmem:[%s6916 + $0xe8] sm:$0xff] %v7317
        %7350 = vst [vmem:[%s6916 + $0xf0] sm:$0xff] %v7318
        %7351 = vst [vmem:[%s6916 + $0xf8] sm:$0xff] %v7319
        // Predicated region
        $region37: #{tpu_custom_call.1} parent=31 // pred_check
          %p7352 = pneg %p225
        $region38: #{tpu_custom_call.1} parent=31 // pred_check_branch
          %7354 = sbr.rel (%p7352) target = $region40
        $region39: #{tpu_custom_call.1} parent=31 // pred_region
          %v7355 = vld [vmem:[#allocation2] sm:$0xff]
          %v7356 = vld [vmem:[#allocation2 + $0x8] sm:$0xff]
          %v7357 = vld [vmem:[#allocation2 + $0x10] sm:$0xff]
          %v7358 = vld [vmem:[#allocation2 + $0x18] sm:$0xff]
          %v7359 = vld [vmem:[#allocation2 + $0x20] sm:$0xff]
          %v7360 = vld [vmem:[#allocation2 + $0x28] sm:$0xff]
          %v7361 = vld [vmem:[#allocation2 + $0x30] sm:$0xff]
          %v7362 = vld [vmem:[#allocation2 + $0x38] sm:$0xff]
          %v7363 = vld [vmem:[#allocation2 + $0x40] sm:$0xff]
          %v7364 = vld [vmem:[#allocation2 + $0x48] sm:$0xff]
          %v7365 = vld [vmem:[#allocation2 + $0x50] sm:$0xff]
          %v7366 = vld [vmem:[#allocation2 + $0x58] sm:$0xff]
          %v7367 = vld [vmem:[#allocation2 + $0x60] sm:$0xff]
          %v7368 = vld [vmem:[#allocation2 + $0x68] sm:$0xff]
          %v7369 = vld [vmem:[#allocation2 + $0x70] sm:$0xff]
          %v7370 = vld [vmem:[#allocation2 + $0x78] sm:$0xff]
          %v7371 = vld [vmem:[#allocation2 + $0x80] sm:$0xff]
          %v7372 = vld [vmem:[#allocation2 + $0x88] sm:$0xff]
          %v7373 = vld [vmem:[#allocation2 + $0x90] sm:$0xff]
          %v7374 = vld [vmem:[#allocation2 + $0x98] sm:$0xff]
          %v7375 = vld [vmem:[#allocation2 + $0xa0] sm:$0xff]
          %v7376 = vld [vmem:[#allocation2 + $0xa8] sm:$0xff]
          %v7377 = vld [vmem:[#allocation2 + $0xb0] sm:$0xff]
          %v7378 = vld [vmem:[#allocation2 + $0xb8] sm:$0xff]
          %v7379 = vld [vmem:[#allocation2 + $0xc0] sm:$0xff]
          %v7380 = vld [vmem:[#allocation2 + $0xc8] sm:$0xff]
          %v7381 = vld [vmem:[#allocation2 + $0xd0] sm:$0xff]
          %v7382 = vld [vmem:[#allocation2 + $0xd8] sm:$0xff]
          %v7383 = vld [vmem:[#allocation2 + $0xe0] sm:$0xff]
          %v7384 = vld [vmem:[#allocation2 + $0xe8] sm:$0xff]
          %v7385 = vld [vmem:[#allocation2 + $0xf0] sm:$0xff]
          %v7386 = vld [vmem:[#allocation2 + $0xf8] sm:$0xff]
          %vm7387 = vcmp.gt.f32.partialorder %v7355, 0.5
          %vm7388 = vcmp.gt.f32.partialorder %v7356, 0.5
          %vm7389 = vcmp.gt.f32.partialorder %v7357, 0.5
          %vm7390 = vcmp.gt.f32.partialorder %v7358, 0.5
          %vm7391 = vcmp.gt.f32.partialorder %v7359, 0.5
          %vm7392 = vcmp.gt.f32.partialorder %v7360, 0.5
          %vm7393 = vcmp.gt.f32.partialorder %v7361, 0.5
          %vm7394 = vcmp.gt.f32.partialorder %v7362, 0.5
          %vm7395 = vcmp.gt.f32.partialorder %v7363, 0.5
          %vm7396 = vcmp.gt.f32.partialorder %v7364, 0.5
          %vm7397 = vcmp.gt.f32.partialorder %v7365, 0.5
          %vm7398 = vcmp.gt.f32.partialorder %v7366, 0.5
          %vm7399 = vcmp.gt.f32.partialorder %v7367, 0.5
          %vm7400 = vcmp.gt.f32.partialorder %v7368, 0.5
          %vm7401 = vcmp.gt.f32.partialorder %v7369, 0.5
          %vm7402 = vcmp.gt.f32.partialorder %v7370, 0.5
          %vm7403 = vcmp.gt.f32.partialorder %v7371, 0.5
          %vm7404 = vcmp.gt.f32.partialorder %v7372, 0.5
          %vm7405 = vcmp.gt.f32.partialorder %v7373, 0.5
          %vm7406 = vcmp.gt.f32.partialorder %v7374, 0.5
          %vm7407 = vcmp.gt.f32.partialorder %v7375, 0.5
          %vm7408 = vcmp.gt.f32.partialorder %v7376, 0.5
          %vm7409 = vcmp.gt.f32.partialorder %v7377, 0.5
          %vm7410 = vcmp.gt.f32.partialorder %v7378, 0.5
          %vm7411 = vcmp.gt.f32.partialorder %v7379, 0.5
          %vm7412 = vcmp.gt.f32.partialorder %v7380, 0.5
          %vm7413 = vcmp.gt.f32.partialorder %v7381, 0.5
          %vm7414 = vcmp.gt.f32.partialorder %v7382, 0.5
          %vm7415 = vcmp.gt.f32.partialorder %v7383, 0.5
          %vm7416 = vcmp.gt.f32.partialorder %v7384, 0.5
          %vm7417 = vcmp.gt.f32.partialorder %v7385, 0.5
          %vm7418 = vcmp.gt.f32.partialorder %v7386, 0.5
          %v7419 = vsel %vm7387, 1, 0
          %v7420 = vsel %vm7388, 1, 0
          %v7421 = vsel %vm7389, 1, 0
          %v7422 = vsel %vm7390, 1, 0
          %v7423 = vsel %vm7391, 1, 0
          %v7424 = vsel %vm7392, 1, 0
          %v7425 = vsel %vm7393, 1, 0
          %v7426 = vsel %vm7394, 1, 0
          %v7427 = vsel %vm7395, 1, 0
          %v7428 = vsel %vm7396, 1, 0
          %v7429 = vsel %vm7397, 1, 0
          %v7430 = vsel %vm7398, 1, 0
          %v7431 = vsel %vm7399, 1, 0
          %v7432 = vsel %vm7400, 1, 0
          %v7433 = vsel %vm7401, 1, 0
          %v7434 = vsel %vm7402, 1, 0
          %v7435 = vsel %vm7403, 1, 0
          %v7436 = vsel %vm7404, 1, 0
          %v7437 = vsel %vm7405, 1, 0
          %v7438 = vsel %vm7406, 1, 0
          %v7439 = vsel %vm7407, 1, 0
          %v7440 = vsel %vm7408, 1, 0
          %v7441 = vsel %vm7409, 1, 0
          %v7442 = vsel %vm7410, 1, 0
          %v7443 = vsel %vm7411, 1, 0
          %v7444 = vsel %vm7412, 1, 0
          %v7445 = vsel %vm7413, 1, 0
          %v7446 = vsel %vm7414, 1, 0
          %v7447 = vsel %vm7415, 1, 0
          %v7448 = vsel %vm7416, 1, 0
          %v7449 = vsel %vm7417, 1, 0
          %v7450 = vsel %vm7418, 1, 0
          %7451 = vset.pattern.permute.xlu0 32
          %7452 = vperm.xlu0 %7451, %v7419
          %v7453 = vpop.permute.xlu0 %7452
          %7454 = vset.pattern.permute.xlu0 32
          %7455 = vperm.xlu0 %7454, %v7420
          %v7456 = vpop.permute.xlu0 %7455
          %7457 = vset.pattern.permute.xlu0 32
          %7458 = vperm.xlu0 %7457, %v7421
          %v7459 = vpop.permute.xlu0 %7458
          %7460 = vset.pattern.permute.xlu0 32
          %7461 = vperm.xlu0 %7460, %v7422
          %v7462 = vpop.permute.xlu0 %7461
          %7463 = vset.pattern.permute.xlu0 32
          %7464 = vperm.xlu0 %7463, %v7423
          %v7465 = vpop.permute.xlu0 %7464
          %7466 = vset.pattern.permute.xlu0 32
          %7467 = vperm.xlu0 %7466, %v7424
          %v7468 = vpop.permute.xlu0 %7467
          %7469 = vset.pattern.permute.xlu0 32
          %7470 = vperm.xlu0 %7469, %v7425
          %v7471 = vpop.permute.xlu0 %7470
          %7472 = vset.pattern.permute.xlu0 32
          %7473 = vperm.xlu0 %7472, %v7426
          %v7474 = vpop.permute.xlu0 %7473
          %7475 = vset.pattern.permute.xlu0 32
          %7476 = vperm.xlu0 %7475, %v7427
          %v7477 = vpop.permute.xlu0 %7476
          %7478 = vset.pattern.permute.xlu0 32
          %7479 = vperm.xlu0 %7478, %v7428
          %v7480 = vpop.permute.xlu0 %7479
          %7481 = vset.pattern.permute.xlu0 32
          %7482 = vperm.xlu0 %7481, %v7429
          %v7483 = vpop.permute.xlu0 %7482
          %7484 = vset.pattern.permute.xlu0 32
          %7485 = vperm.xlu0 %7484, %v7430
          %v7486 = vpop.permute.xlu0 %7485
          %7487 = vset.pattern.permute.xlu0 32
          %7488 = vperm.xlu0 %7487, %v7431
          %v7489 = vpop.permute.xlu0 %7488
          %7490 = vset.pattern.permute.xlu0 32
          %7491 = vperm.xlu0 %7490, %v7432
          %v7492 = vpop.permute.xlu0 %7491
          %7493 = vset.pattern.permute.xlu0 32
          %7494 = vperm.xlu0 %7493, %v7433
          %v7495 = vpop.permute.xlu0 %7494
          %7496 = vset.pattern.permute.xlu0 32
          %7497 = vperm.xlu0 %7496, %v7434
          %v7498 = vpop.permute.xlu0 %7497
          %7499 = vset.pattern.permute.xlu0 32
          %7500 = vperm.xlu0 %7499, %v7435
          %v7501 = vpop.permute.xlu0 %7500
          %7502 = vset.pattern.permute.xlu0 32
          %7503 = vperm.xlu0 %7502, %v7436
          %v7504 = vpop.permute.xlu0 %7503
          %7505 = vset.pattern.permute.xlu0 32
          %7506 = vperm.xlu0 %7505, %v7437
          %v7507 = vpop.permute.xlu0 %7506
          %7508 = vset.pattern.permute.xlu0 32
          %7509 = vperm.xlu0 %7508, %v7438
          %v7510 = vpop.permute.xlu0 %7509
          %7511 = vset.pattern.permute.xlu0 32
          %7512 = vperm.xlu0 %7511, %v7439
          %v7513 = vpop.permute.xlu0 %7512
          %7514 = vset.pattern.permute.xlu0 32
          %7515 = vperm.xlu0 %7514, %v7440
          %v7516 = vpop.permute.xlu0 %7515
          %7517 = vset.pattern.permute.xlu0 32
          %7518 = vperm.xlu0 %7517, %v7441
          %v7519 = vpop.permute.xlu0 %7518
          %7520 = vset.pattern.permute.xlu0 32
          %7521 = vperm.xlu0 %7520, %v7442
          %v7522 = vpop.permute.xlu0 %7521
          %7523 = vset.pattern.permute.xlu0 32
          %7524 = vperm.xlu0 %7523, %v7443
          %v7525 = vpop.permute.xlu0 %7524
          %7526 = vset.pattern.permute.xlu0 32
          %7527 = vperm.xlu0 %7526, %v7444
          %v7528 = vpop.permute.xlu0 %7527
          %7529 = vset.pattern.permute.xlu0 32
          %7530 = vperm.xlu0 %7529, %v7445
          %v7531 = vpop.permute.xlu0 %7530
          %7532 = vset.pattern.permute.xlu0 32
          %7533 = vperm.xlu0 %7532, %v7446
          %v7534 = vpop.permute.xlu0 %7533
          %7535 = vset.pattern.permute.xlu0 32
          %7536 = vperm.xlu0 %7535, %v7447
          %v7537 = vpop.permute.xlu0 %7536
          %7538 = vset.pattern.permute.xlu0 32
          %7539 = vperm.xlu0 %7538, %v7448
          %v7540 = vpop.permute.xlu0 %7539
          %7541 = vset.pattern.permute.xlu0 32
          %7542 = vperm.xlu0 %7541, %v7449
          %v7543 = vpop.permute.xlu0 %7542
          %7544 = vset.pattern.permute.xlu0 32
          %7545 = vperm.xlu0 %7544, %v7450
          %v7546 = vpop.permute.xlu0 %7545
          %vm7547 = vcmp.eq.s32.totalorder %v7453, 1
          %vm7548 = vcmp.eq.s32.totalorder %v7456, 1
          %vm7549 = vcmp.eq.s32.totalorder %v7459, 1
          %vm7550 = vcmp.eq.s32.totalorder %v7462, 1
          %vm7551 = vcmp.eq.s32.totalorder %v7465, 1
          %vm7552 = vcmp.eq.s32.totalorder %v7468, 1
          %vm7553 = vcmp.eq.s32.totalorder %v7471, 1
          %vm7554 = vcmp.eq.s32.totalorder %v7474, 1
          %vm7555 = vcmp.eq.s32.totalorder %v7477, 1
          %vm7556 = vcmp.eq.s32.totalorder %v7480, 1
          %vm7557 = vcmp.eq.s32.totalorder %v7483, 1
          %vm7558 = vcmp.eq.s32.totalorder %v7486, 1
          %vm7559 = vcmp.eq.s32.totalorder %v7489, 1
          %vm7560 = vcmp.eq.s32.totalorder %v7492, 1
          %vm7561 = vcmp.eq.s32.totalorder %v7495, 1
          %vm7562 = vcmp.eq.s32.totalorder %v7498, 1
          %vm7563 = vcmp.eq.s32.totalorder %v7501, 1
          %vm7564 = vcmp.eq.s32.totalorder %v7504, 1
          %vm7565 = vcmp.eq.s32.totalorder %v7507, 1
          %vm7566 = vcmp.eq.s32.totalorder %v7510, 1
          %vm7567 = vcmp.eq.s32.totalorder %v7513, 1
          %vm7568 = vcmp.eq.s32.totalorder %v7516, 1
          %vm7569 = vcmp.eq.s32.totalorder %v7519, 1
          %vm7570 = vcmp.eq.s32.totalorder %v7522, 1
          %vm7571 = vcmp.eq.s32.totalorder %v7525, 1
          %vm7572 = vcmp.eq.s32.totalorder %v7528, 1
          %vm7573 = vcmp.eq.s32.totalorder %v7531, 1
          %vm7574 = vcmp.eq.s32.totalorder %v7534, 1
          %vm7575 = vcmp.eq.s32.totalorder %v7537, 1
          %vm7576 = vcmp.eq.s32.totalorder %v7540, 1
          %vm7577 = vcmp.eq.s32.totalorder %v7543, 1
          %vm7578 = vcmp.eq.s32.totalorder %v7546, 1
          %v7579 = vsel %vm7547, %v7355, -1000.0
          %v7580 = vsel %vm7548, %v7356, -1000.0
          %v7581 = vsel %vm7549, %v7357, -1000.0
          %v7582 = vsel %vm7550, %v7358, -1000.0
          %v7583 = vsel %vm7551, %v7359, -1000.0
          %v7584 = vsel %vm7552, %v7360, -1000.0
          %v7585 = vsel %vm7553, %v7361, -1000.0
          %v7586 = vsel %vm7554, %v7362, -1000.0
          %v7587 = vsel %vm7555, %v7363, -1000.0
          %v7588 = vsel %vm7556, %v7364, -1000.0
          %v7589 = vsel %vm7557, %v7365, -1000.0
          %v7590 = vsel %vm7558, %v7366, -1000.0
          %v7591 = vsel %vm7559, %v7367, -1000.0
          %v7592 = vsel %vm7560, %v7368, -1000.0
          %v7593 = vsel %vm7561, %v7369, -1000.0
          %v7594 = vsel %vm7562, %v7370, -1000.0
          %v7595 = vsel %vm7563, %v7371, -1000.0
          %v7596 = vsel %vm7564, %v7372, -1000.0
          %v7597 = vsel %vm7565, %v7373, -1000.0
          %v7598 = vsel %vm7566, %v7374, -1000.0
          %v7599 = vsel %vm7567, %v7375, -1000.0
          %v7600 = vsel %vm7568, %v7376, -1000.0
          %v7601 = vsel %vm7569, %v7377, -1000.0
          %v7602 = vsel %vm7570, %v7378, -1000.0
          %v7603 = vsel %vm7571, %v7379, -1000.0
          %v7604 = vsel %vm7572, %v7380, -1000.0
          %v7605 = vsel %vm7573, %v7381, -1000.0
          %v7606 = vsel %vm7574, %v7382, -1000.0
          %v7607 = vsel %vm7575, %v7383, -1000.0
          %v7608 = vsel %vm7576, %v7384, -1000.0
          %v7609 = vsel %vm7577, %v7385, -1000.0
          %v7610 = vsel %vm7578, %v7386, -1000.0
          %v7611 = vld [vmem:[%s1804] sm:$0xff]
          %v7612 = vld [vmem:[%s1804 + $0x8] sm:$0xff]
          %v7613 = vld [vmem:[%s1804 + $0x10] sm:$0xff]
          %v7614 = vld [vmem:[%s1804 + $0x18] sm:$0xff]
          %v7615 = vld [vmem:[%s1804 + $0x20] sm:$0xff]
          %v7616 = vld [vmem:[%s1804 + $0x28] sm:$0xff]
          %v7617 = vld [vmem:[%s1804 + $0x30] sm:$0xff]
          %v7618 = vld [vmem:[%s1804 + $0x38] sm:$0xff]
          %v7619 = vld [vmem:[%s1804 + $0x40] sm:$0xff]
          %v7620 = vld [vmem:[%s1804 + $0x48] sm:$0xff]
          %v7621 = vld [vmem:[%s1804 + $0x50] sm:$0xff]
          %v7622 = vld [vmem:[%s1804 + $0x58] sm:$0xff]
          %v7623 = vld [vmem:[%s1804 + $0x60] sm:$0xff]
          %v7624 = vld [vmem:[%s1804 + $0x68] sm:$0xff]
          %v7625 = vld [vmem:[%s1804 + $0x70] sm:$0xff]
          %v7626 = vld [vmem:[%s1804 + $0x78] sm:$0xff]
          %v7627 = vld [vmem:[%s1804 + $0x80] sm:$0xff]
          %v7628 = vld [vmem:[%s1804 + $0x88] sm:$0xff]
          %v7629 = vld [vmem:[%s1804 + $0x90] sm:$0xff]
          %v7630 = vld [vmem:[%s1804 + $0x98] sm:$0xff]
          %v7631 = vld [vmem:[%s1804 + $0xa0] sm:$0xff]
          %v7632 = vld [vmem:[%s1804 + $0xa8] sm:$0xff]
          %v7633 = vld [vmem:[%s1804 + $0xb0] sm:$0xff]
          %v7634 = vld [vmem:[%s1804 + $0xb8] sm:$0xff]
          %v7635 = vld [vmem:[%s1804 + $0xc0] sm:$0xff]
          %v7636 = vld [vmem:[%s1804 + $0xc8] sm:$0xff]
          %v7637 = vld [vmem:[%s1804 + $0xd0] sm:$0xff]
          %v7638 = vld [vmem:[%s1804 + $0xd8] sm:$0xff]
          %v7639 = vld [vmem:[%s1804 + $0xe0] sm:$0xff]
          %v7640 = vld [vmem:[%s1804 + $0xe8] sm:$0xff]
          %v7641 = vld [vmem:[%s1804 + $0xf0] sm:$0xff]
          %v7642 = vld [vmem:[%s1804 + $0xf8] sm:$0xff]
          %vm7643 = vcmp.gt.f32.partialorder %v7611, 0.5
          %vm7644 = vcmp.gt.f32.partialorder %v7612, 0.5
          %vm7645 = vcmp.gt.f32.partialorder %v7613, 0.5
          %vm7646 = vcmp.gt.f32.partialorder %v7614, 0.5
          %vm7647 = vcmp.gt.f32.partialorder %v7615, 0.5
          %vm7648 = vcmp.gt.f32.partialorder %v7616, 0.5
          %vm7649 = vcmp.gt.f32.partialorder %v7617, 0.5
          %vm7650 = vcmp.gt.f32.partialorder %v7618, 0.5
          %vm7651 = vcmp.gt.f32.partialorder %v7619, 0.5
          %vm7652 = vcmp.gt.f32.partialorder %v7620, 0.5
          %vm7653 = vcmp.gt.f32.partialorder %v7621, 0.5
          %vm7654 = vcmp.gt.f32.partialorder %v7622, 0.5
          %vm7655 = vcmp.gt.f32.partialorder %v7623, 0.5
          %vm7656 = vcmp.gt.f32.partialorder %v7624, 0.5
          %vm7657 = vcmp.gt.f32.partialorder %v7625, 0.5
          %vm7658 = vcmp.gt.f32.partialorder %v7626, 0.5
          %vm7659 = vcmp.gt.f32.partialorder %v7627, 0.5
          %vm7660 = vcmp.gt.f32.partialorder %v7628, 0.5
          %vm7661 = vcmp.gt.f32.partialorder %v7629, 0.5
          %vm7662 = vcmp.gt.f32.partialorder %v7630, 0.5
          %vm7663 = vcmp.gt.f32.partialorder %v7631, 0.5
          %vm7664 = vcmp.gt.f32.partialorder %v7632, 0.5
          %vm7665 = vcmp.gt.f32.partialorder %v7633, 0.5
          %vm7666 = vcmp.gt.f32.partialorder %v7634, 0.5
          %vm7667 = vcmp.gt.f32.partialorder %v7635, 0.5
          %vm7668 = vcmp.gt.f32.partialorder %v7636, 0.5
          %vm7669 = vcmp.gt.f32.partialorder %v7637, 0.5
          %vm7670 = vcmp.gt.f32.partialorder %v7638, 0.5
          %vm7671 = vcmp.gt.f32.partialorder %v7639, 0.5
          %vm7672 = vcmp.gt.f32.partialorder %v7640, 0.5
          %vm7673 = vcmp.gt.f32.partialorder %v7641, 0.5
          %vm7674 = vcmp.gt.f32.partialorder %v7642, 0.5
          %v7675 = vsel %vm7643, 1, 0
          %v7676 = vsel %vm7644, 1, 0
          %v7677 = vsel %vm7645, 1, 0
          %v7678 = vsel %vm7646, 1, 0
          %v7679 = vsel %vm7647, 1, 0
          %v7680 = vsel %vm7648, 1, 0
          %v7681 = vsel %vm7649, 1, 0
          %v7682 = vsel %vm7650, 1, 0
          %v7683 = vsel %vm7651, 1, 0
          %v7684 = vsel %vm7652, 1, 0
          %v7685 = vsel %vm7653, 1, 0
          %v7686 = vsel %vm7654, 1, 0
          %v7687 = vsel %vm7655, 1, 0
          %v7688 = vsel %vm7656, 1, 0
          %v7689 = vsel %vm7657, 1, 0
          %v7690 = vsel %vm7658, 1, 0
          %v7691 = vsel %vm7659, 1, 0
          %v7692 = vsel %vm7660, 1, 0
          %v7693 = vsel %vm7661, 1, 0
          %v7694 = vsel %vm7662, 1, 0
          %v7695 = vsel %vm7663, 1, 0
          %v7696 = vsel %vm7664, 1, 0
          %v7697 = vsel %vm7665, 1, 0
          %v7698 = vsel %vm7666, 1, 0
          %v7699 = vsel %vm7667, 1, 0
          %v7700 = vsel %vm7668, 1, 0
          %v7701 = vsel %vm7669, 1, 0
          %v7702 = vsel %vm7670, 1, 0
          %v7703 = vsel %vm7671, 1, 0
          %v7704 = vsel %vm7672, 1, 0
          %v7705 = vsel %vm7673, 1, 0
          %v7706 = vsel %vm7674, 1, 0
          %7707 = vset.pattern.permute.xlu0 32
          %7708 = vperm.xlu0 %7707, %v7675
          %v7709 = vpop.permute.xlu0 %7708
          %7710 = vset.pattern.permute.xlu0 32
          %7711 = vperm.xlu0 %7710, %v7676
          %v7712 = vpop.permute.xlu0 %7711
          %7713 = vset.pattern.permute.xlu0 32
          %7714 = vperm.xlu0 %7713, %v7677
          %v7715 = vpop.permute.xlu0 %7714
          %7716 = vset.pattern.permute.xlu0 32
          %7717 = vperm.xlu0 %7716, %v7678
          %v7718 = vpop.permute.xlu0 %7717
          %7719 = vset.pattern.permute.xlu0 32
          %7720 = vperm.xlu0 %7719, %v7679
          %v7721 = vpop.permute.xlu0 %7720
          %7722 = vset.pattern.permute.xlu0 32
          %7723 = vperm.xlu0 %7722, %v7680
          %v7724 = vpop.permute.xlu0 %7723
          %7725 = vset.pattern.permute.xlu0 32
          %7726 = vperm.xlu0 %7725, %v7681
          %v7727 = vpop.permute.xlu0 %7726
          %7728 = vset.pattern.permute.xlu0 32
          %7729 = vperm.xlu0 %7728, %v7682
          %v7730 = vpop.permute.xlu0 %7729
          %7731 = vset.pattern.permute.xlu0 32
          %7732 = vperm.xlu0 %7731, %v7683
          %v7733 = vpop.permute.xlu0 %7732
          %7734 = vset.pattern.permute.xlu0 32
          %7735 = vperm.xlu0 %7734, %v7684
          %v7736 = vpop.permute.xlu0 %7735
          %7737 = vset.pattern.permute.xlu0 32
          %7738 = vperm.xlu0 %7737, %v7685
          %v7739 = vpop.permute.xlu0 %7738
          %7740 = vset.pattern.permute.xlu0 32
          %7741 = vperm.xlu0 %7740, %v7686
          %v7742 = vpop.permute.xlu0 %7741
          %7743 = vset.pattern.permute.xlu0 32
          %7744 = vperm.xlu0 %7743, %v7687
          %v7745 = vpop.permute.xlu0 %7744
          %7746 = vset.pattern.permute.xlu0 32
          %7747 = vperm.xlu0 %7746, %v7688
          %v7748 = vpop.permute.xlu0 %7747
          %7749 = vset.pattern.permute.xlu0 32
          %7750 = vperm.xlu0 %7749, %v7689
          %v7751 = vpop.permute.xlu0 %7750
          %7752 = vset.pattern.permute.xlu0 32
          %7753 = vperm.xlu0 %7752, %v7690
          %v7754 = vpop.permute.xlu0 %7753
          %7755 = vset.pattern.permute.xlu0 32
          %7756 = vperm.xlu0 %7755, %v7691
          %v7757 = vpop.permute.xlu0 %7756
          %7758 = vset.pattern.permute.xlu0 32
          %7759 = vperm.xlu0 %7758, %v7692
          %v7760 = vpop.permute.xlu0 %7759
          %7761 = vset.pattern.permute.xlu0 32
          %7762 = vperm.xlu0 %7761, %v7693
          %v7763 = vpop.permute.xlu0 %7762
          %7764 = vset.pattern.permute.xlu0 32
          %7765 = vperm.xlu0 %7764, %v7694
          %v7766 = vpop.permute.xlu0 %7765
          %7767 = vset.pattern.permute.xlu0 32
          %7768 = vperm.xlu0 %7767, %v7695
          %v7769 = vpop.permute.xlu0 %7768
          %7770 = vset.pattern.permute.xlu0 32
          %7771 = vperm.xlu0 %7770, %v7696
          %v7772 = vpop.permute.xlu0 %7771
          %7773 = vset.pattern.permute.xlu0 32
          %7774 = vperm.xlu0 %7773, %v7697
          %v7775 = vpop.permute.xlu0 %7774
          %7776 = vset.pattern.permute.xlu0 32
          %7777 = vperm.xlu0 %7776, %v7698
          %v7778 = vpop.permute.xlu0 %7777
          %7779 = vset.pattern.permute.xlu0 32
          %7780 = vperm.xlu0 %7779, %v7699
          %v7781 = vpop.permute.xlu0 %7780
          %7782 = vset.pattern.permute.xlu0 32
          %7783 = vperm.xlu0 %7782, %v7700
          %v7784 = vpop.permute.xlu0 %7783
          %7785 = vset.pattern.permute.xlu0 32
          %7786 = vperm.xlu0 %7785, %v7701
          %v7787 = vpop.permute.xlu0 %7786
          %7788 = vset.pattern.permute.xlu0 32
          %7789 = vperm.xlu0 %7788, %v7702
          %v7790 = vpop.permute.xlu0 %7789
          %7791 = vset.pattern.permute.xlu0 32
          %7792 = vperm.xlu0 %7791, %v7703
          %v7793 = vpop.permute.xlu0 %7792
          %7794 = vset.pattern.permute.xlu0 32
          %7795 = vperm.xlu0 %7794, %v7704
          %v7796 = vpop.permute.xlu0 %7795
          %7797 = vset.pattern.permute.xlu0 32
          %7798 = vperm.xlu0 %7797, %v7705
          %v7799 = vpop.permute.xlu0 %7798
          %7800 = vset.pattern.permute.xlu0 32
          %7801 = vperm.xlu0 %7800, %v7706
          %v7802 = vpop.permute.xlu0 %7801
          %vm7803 = vcmp.eq.s32.totalorder %v7709, 1
          %vm7804 = vcmp.eq.s32.totalorder %v7712, 1
          %vm7805 = vcmp.eq.s32.totalorder %v7715, 1
          %vm7806 = vcmp.eq.s32.totalorder %v7718, 1
          %vm7807 = vcmp.eq.s32.totalorder %v7721, 1
          %vm7808 = vcmp.eq.s32.totalorder %v7724, 1
          %vm7809 = vcmp.eq.s32.totalorder %v7727, 1
          %vm7810 = vcmp.eq.s32.totalorder %v7730, 1
          %vm7811 = vcmp.eq.s32.totalorder %v7733, 1
          %vm7812 = vcmp.eq.s32.totalorder %v7736, 1
          %vm7813 = vcmp.eq.s32.totalorder %v7739, 1
          %vm7814 = vcmp.eq.s32.totalorder %v7742, 1
          %vm7815 = vcmp.eq.s32.totalorder %v7745, 1
          %vm7816 = vcmp.eq.s32.totalorder %v7748, 1
          %vm7817 = vcmp.eq.s32.totalorder %v7751, 1
          %vm7818 = vcmp.eq.s32.totalorder %v7754, 1
          %vm7819 = vcmp.eq.s32.totalorder %v7757, 1
          %vm7820 = vcmp.eq.s32.totalorder %v7760, 1
          %vm7821 = vcmp.eq.s32.totalorder %v7763, 1
          %vm7822 = vcmp.eq.s32.totalorder %v7766, 1
          %vm7823 = vcmp.eq.s32.totalorder %v7769, 1
          %vm7824 = vcmp.eq.s32.totalorder %v7772, 1
          %vm7825 = vcmp.eq.s32.totalorder %v7775, 1
          %vm7826 = vcmp.eq.s32.totalorder %v7778, 1
          %vm7827 = vcmp.eq.s32.totalorder %v7781, 1
          %vm7828 = vcmp.eq.s32.totalorder %v7784, 1
          %vm7829 = vcmp.eq.s32.totalorder %v7787, 1
          %vm7830 = vcmp.eq.s32.totalorder %v7790, 1
          %vm7831 = vcmp.eq.s32.totalorder %v7793, 1
          %vm7832 = vcmp.eq.s32.totalorder %v7796, 1
          %vm7833 = vcmp.eq.s32.totalorder %v7799, 1
          %vm7834 = vcmp.eq.s32.totalorder %v7802, 1
          %v7835 = vsel %vm7803, %v7611, -1000.0
          %v7836 = vsel %vm7804, %v7612, -1000.0
          %v7837 = vsel %vm7805, %v7613, -1000.0
          %v7838 = vsel %vm7806, %v7614, -1000.0
          %v7839 = vsel %vm7807, %v7615, -1000.0
          %v7840 = vsel %vm7808, %v7616, -1000.0
          %v7841 = vsel %vm7809, %v7617, -1000.0
          %v7842 = vsel %vm7810, %v7618, -1000.0
          %v7843 = vsel %vm7811, %v7619, -1000.0
          %v7844 = vsel %vm7812, %v7620, -1000.0
          %v7845 = vsel %vm7813, %v7621, -1000.0
          %v7846 = vsel %vm7814, %v7622, -1000.0
          %v7847 = vsel %vm7815, %v7623, -1000.0
          %v7848 = vsel %vm7816, %v7624, -1000.0
          %v7849 = vsel %vm7817, %v7625, -1000.0
          %v7850 = vsel %vm7818, %v7626, -1000.0
          %v7851 = vsel %vm7819, %v7627, -1000.0
          %v7852 = vsel %vm7820, %v7628, -1000.0
          %v7853 = vsel %vm7821, %v7629, -1000.0
          %v7854 = vsel %vm7822, %v7630, -1000.0
          %v7855 = vsel %vm7823, %v7631, -1000.0
          %v7856 = vsel %vm7824, %v7632, -1000.0
          %v7857 = vsel %vm7825, %v7633, -1000.0
          %v7858 = vsel %vm7826, %v7634, -1000.0
          %v7859 = vsel %vm7827, %v7635, -1000.0
          %v7860 = vsel %vm7828, %v7636, -1000.0
          %v7861 = vsel %vm7829, %v7637, -1000.0
          %v7862 = vsel %vm7830, %v7638, -1000.0
          %v7863 = vsel %vm7831, %v7639, -1000.0
          %v7864 = vsel %vm7832, %v7640, -1000.0
          %v7865 = vsel %vm7833, %v7641, -1000.0
          %v7866 = vsel %vm7834, %v7642, -1000.0
          %v7867 = vmax.f32 %v7579, %v7835
          %v7868 = vmax.f32 %v7580, %v7836
          %v7869 = vmax.f32 %v7581, %v7837
          %v7870 = vmax.f32 %v7582, %v7838
          %v7871 = vmax.f32 %v7583, %v7839
          %v7872 = vmax.f32 %v7584, %v7840
          %v7873 = vmax.f32 %v7585, %v7841
          %v7874 = vmax.f32 %v7586, %v7842
          %v7875 = vmax.f32 %v7587, %v7843
          %v7876 = vmax.f32 %v7588, %v7844
          %v7877 = vmax.f32 %v7589, %v7845
          %v7878 = vmax.f32 %v7590, %v7846
          %v7879 = vmax.f32 %v7591, %v7847
          %v7880 = vmax.f32 %v7592, %v7848
          %v7881 = vmax.f32 %v7593, %v7849
          %v7882 = vmax.f32 %v7594, %v7850
          %v7883 = vmax.f32 %v7595, %v7851
          %v7884 = vmax.f32 %v7596, %v7852
          %v7885 = vmax.f32 %v7597, %v7853
          %v7886 = vmax.f32 %v7598, %v7854
          %v7887 = vmax.f32 %v7599, %v7855
          %v7888 = vmax.f32 %v7600, %v7856
          %v7889 = vmax.f32 %v7601, %v7857
          %v7890 = vmax.f32 %v7602, %v7858
          %v7891 = vmax.f32 %v7603, %v7859
          %v7892 = vmax.f32 %v7604, %v7860
          %v7893 = vmax.f32 %v7605, %v7861
          %v7894 = vmax.f32 %v7606, %v7862
          %v7895 = vmax.f32 %v7607, %v7863
          %v7896 = vmax.f32 %v7608, %v7864
          %v7897 = vmax.f32 %v7609, %v7865
          %v7898 = vmax.f32 %v7610, %v7866
          %v7899 = vld [vmem:[%s2656] sm:$0xff]
          %v7900 = vld [vmem:[%s2656 + $0x8] sm:$0xff]
          %v7901 = vld [vmem:[%s2656 + $0x10] sm:$0xff]
          %v7902 = vld [vmem:[%s2656 + $0x18] sm:$0xff]
          %v7903 = vld [vmem:[%s2656 + $0x20] sm:$0xff]
          %v7904 = vld [vmem:[%s2656 + $0x28] sm:$0xff]
          %v7905 = vld [vmem:[%s2656 + $0x30] sm:$0xff]
          %v7906 = vld [vmem:[%s2656 + $0x38] sm:$0xff]
          %v7907 = vld [vmem:[%s2656 + $0x40] sm:$0xff]
          %v7908 = vld [vmem:[%s2656 + $0x48] sm:$0xff]
          %v7909 = vld [vmem:[%s2656 + $0x50] sm:$0xff]
          %v7910 = vld [vmem:[%s2656 + $0x58] sm:$0xff]
          %v7911 = vld [vmem:[%s2656 + $0x60] sm:$0xff]
          %v7912 = vld [vmem:[%s2656 + $0x68] sm:$0xff]
          %v7913 = vld [vmem:[%s2656 + $0x70] sm:$0xff]
          %v7914 = vld [vmem:[%s2656 + $0x78] sm:$0xff]
          %v7915 = vld [vmem:[%s2656 + $0x80] sm:$0xff]
          %v7916 = vld [vmem:[%s2656 + $0x88] sm:$0xff]
          %v7917 = vld [vmem:[%s2656 + $0x90] sm:$0xff]
          %v7918 = vld [vmem:[%s2656 + $0x98] sm:$0xff]
          %v7919 = vld [vmem:[%s2656 + $0xa0] sm:$0xff]
          %v7920 = vld [vmem:[%s2656 + $0xa8] sm:$0xff]
          %v7921 = vld [vmem:[%s2656 + $0xb0] sm:$0xff]
          %v7922 = vld [vmem:[%s2656 + $0xb8] sm:$0xff]
          %v7923 = vld [vmem:[%s2656 + $0xc0] sm:$0xff]
          %v7924 = vld [vmem:[%s2656 + $0xc8] sm:$0xff]
          %v7925 = vld [vmem:[%s2656 + $0xd0] sm:$0xff]
          %v7926 = vld [vmem:[%s2656 + $0xd8] sm:$0xff]
          %v7927 = vld [vmem:[%s2656 + $0xe0] sm:$0xff]
          %v7928 = vld [vmem:[%s2656 + $0xe8] sm:$0xff]
          %v7929 = vld [vmem:[%s2656 + $0xf0] sm:$0xff]
          %v7930 = vld [vmem:[%s2656 + $0xf8] sm:$0xff]
          %vm7931 = vcmp.gt.f32.partialorder %v7899, 0.5
          %vm7932 = vcmp.gt.f32.partialorder %v7900, 0.5
          %vm7933 = vcmp.gt.f32.partialorder %v7901, 0.5
          %vm7934 = vcmp.gt.f32.partialorder %v7902, 0.5
          %vm7935 = vcmp.gt.f32.partialorder %v7903, 0.5
          %vm7936 = vcmp.gt.f32.partialorder %v7904, 0.5
          %vm7937 = vcmp.gt.f32.partialorder %v7905, 0.5
          %vm7938 = vcmp.gt.f32.partialorder %v7906, 0.5
          %vm7939 = vcmp.gt.f32.partialorder %v7907, 0.5
          %vm7940 = vcmp.gt.f32.partialorder %v7908, 0.5
          %vm7941 = vcmp.gt.f32.partialorder %v7909, 0.5
          %vm7942 = vcmp.gt.f32.partialorder %v7910, 0.5
          %vm7943 = vcmp.gt.f32.partialorder %v7911, 0.5
          %vm7944 = vcmp.gt.f32.partialorder %v7912, 0.5
          %vm7945 = vcmp.gt.f32.partialorder %v7913, 0.5
          %vm7946 = vcmp.gt.f32.partialorder %v7914, 0.5
          %vm7947 = vcmp.gt.f32.partialorder %v7915, 0.5
          %vm7948 = vcmp.gt.f32.partialorder %v7916, 0.5
          %vm7949 = vcmp.gt.f32.partialorder %v7917, 0.5
          %vm7950 = vcmp.gt.f32.partialorder %v7918, 0.5
          %vm7951 = vcmp.gt.f32.partialorder %v7919, 0.5
          %vm7952 = vcmp.gt.f32.partialorder %v7920, 0.5
          %vm7953 = vcmp.gt.f32.partialorder %v7921, 0.5
          %vm7954 = vcmp.gt.f32.partialorder %v7922, 0.5
          %vm7955 = vcmp.gt.f32.partialorder %v7923, 0.5
          %vm7956 = vcmp.gt.f32.partialorder %v7924, 0.5
          %vm7957 = vcmp.gt.f32.partialorder %v7925, 0.5
          %vm7958 = vcmp.gt.f32.partialorder %v7926, 0.5
          %vm7959 = vcmp.gt.f32.partialorder %v7927, 0.5
          %vm7960 = vcmp.gt.f32.partialorder %v7928, 0.5
          %vm7961 = vcmp.gt.f32.partialorder %v7929, 0.5
          %vm7962 = vcmp.gt.f32.partialorder %v7930, 0.5
          %v7963 = vsel %vm7931, 1, 0
          %v7964 = vsel %vm7932, 1, 0
          %v7965 = vsel %vm7933, 1, 0
          %v7966 = vsel %vm7934, 1, 0
          %v7967 = vsel %vm7935, 1, 0
          %v7968 = vsel %vm7936, 1, 0
          %v7969 = vsel %vm7937, 1, 0
          %v7970 = vsel %vm7938, 1, 0
          %v7971 = vsel %vm7939, 1, 0
          %v7972 = vsel %vm7940, 1, 0
          %v7973 = vsel %vm7941, 1, 0
          %v7974 = vsel %vm7942, 1, 0
          %v7975 = vsel %vm7943, 1, 0
          %v7976 = vsel %vm7944, 1, 0
          %v7977 = vsel %vm7945, 1, 0
          %v7978 = vsel %vm7946, 1, 0
          %v7979 = vsel %vm7947, 1, 0
          %v7980 = vsel %vm7948, 1, 0
          %v7981 = vsel %vm7949, 1, 0
          %v7982 = vsel %vm7950, 1, 0
          %v7983 = vsel %vm7951, 1, 0
          %v7984 = vsel %vm7952, 1, 0
          %v7985 = vsel %vm7953, 1, 0
          %v7986 = vsel %vm7954, 1, 0
          %v7987 = vsel %vm7955, 1, 0
          %v7988 = vsel %vm7956, 1, 0
          %v7989 = vsel %vm7957, 1, 0
          %v7990 = vsel %vm7958, 1, 0
          %v7991 = vsel %vm7959, 1, 0
          %v7992 = vsel %vm7960, 1, 0
          %v7993 = vsel %vm7961, 1, 0
          %v7994 = vsel %vm7962, 1, 0
          %7995 = vset.pattern.permute.xlu0 32
          %7996 = vperm.xlu0 %7995, %v7963
          %v7997 = vpop.permute.xlu0 %7996
          %7998 = vset.pattern.permute.xlu0 32
          %7999 = vperm.xlu0 %7998, %v7964
          %v8000 = vpop.permute.xlu0 %7999
          %8001 = vset.pattern.permute.xlu0 32
          %8002 = vperm.xlu0 %8001, %v7965
          %v8003 = vpop.permute.xlu0 %8002
          %8004 = vset.pattern.permute.xlu0 32
          %8005 = vperm.xlu0 %8004, %v7966
          %v8006 = vpop.permute.xlu0 %8005
          %8007 = vset.pattern.permute.xlu0 32
          %8008 = vperm.xlu0 %8007, %v7967
          %v8009 = vpop.permute.xlu0 %8008
          %8010 = vset.pattern.permute.xlu0 32
          %8011 = vperm.xlu0 %8010, %v7968
          %v8012 = vpop.permute.xlu0 %8011
          %8013 = vset.pattern.permute.xlu0 32
          %8014 = vperm.xlu0 %8013, %v7969
          %v8015 = vpop.permute.xlu0 %8014
          %8016 = vset.pattern.permute.xlu0 32
          %8017 = vperm.xlu0 %8016, %v7970
          %v8018 = vpop.permute.xlu0 %8017
          %8019 = vset.pattern.permute.xlu0 32
          %8020 = vperm.xlu0 %8019, %v7971
          %v8021 = vpop.permute.xlu0 %8020
          %8022 = vset.pattern.permute.xlu0 32
          %8023 = vperm.xlu0 %8022, %v7972
          %v8024 = vpop.permute.xlu0 %8023
          %8025 = vset.pattern.permute.xlu0 32
          %8026 = vperm.xlu0 %8025, %v7973
          %v8027 = vpop.permute.xlu0 %8026
          %8028 = vset.pattern.permute.xlu0 32
          %8029 = vperm.xlu0 %8028, %v7974
          %v8030 = vpop.permute.xlu0 %8029
          %8031 = vset.pattern.permute.xlu0 32
          %8032 = vperm.xlu0 %8031, %v7975
          %v8033 = vpop.permute.xlu0 %8032
          %8034 = vset.pattern.permute.xlu0 32
          %8035 = vperm.xlu0 %8034, %v7976
          %v8036 = vpop.permute.xlu0 %8035
          %8037 = vset.pattern.permute.xlu0 32
          %8038 = vperm.xlu0 %8037, %v7977
          %v8039 = vpop.permute.xlu0 %8038
          %8040 = vset.pattern.permute.xlu0 32
          %8041 = vperm.xlu0 %8040, %v7978
          %v8042 = vpop.permute.xlu0 %8041
          %8043 = vset.pattern.permute.xlu0 32
          %8044 = vperm.xlu0 %8043, %v7979
          %v8045 = vpop.permute.xlu0 %8044
          %8046 = vset.pattern.permute.xlu0 32
          %8047 = vperm.xlu0 %8046, %v7980
          %v8048 = vpop.permute.xlu0 %8047
          %8049 = vset.pattern.permute.xlu0 32
          %8050 = vperm.xlu0 %8049, %v7981
          %v8051 = vpop.permute.xlu0 %8050
          %8052 = vset.pattern.permute.xlu0 32
          %8053 = vperm.xlu0 %8052, %v7982
          %v8054 = vpop.permute.xlu0 %8053
          %8055 = vset.pattern.permute.xlu0 32
          %8056 = vperm.xlu0 %8055, %v7983
          %v8057 = vpop.permute.xlu0 %8056
          %8058 = vset.pattern.permute.xlu0 32
          %8059 = vperm.xlu0 %8058, %v7984
          %v8060 = vpop.permute.xlu0 %8059
          %8061 = vset.pattern.permute.xlu0 32
          %8062 = vperm.xlu0 %8061, %v7985
          %v8063 = vpop.permute.xlu0 %8062
          %8064 = vset.pattern.permute.xlu0 32
          %8065 = vperm.xlu0 %8064, %v7986
          %v8066 = vpop.permute.xlu0 %8065
          %8067 = vset.pattern.permute.xlu0 32
          %8068 = vperm.xlu0 %8067, %v7987
          %v8069 = vpop.permute.xlu0 %8068
          %8070 = vset.pattern.permute.xlu0 32
          %8071 = vperm.xlu0 %8070, %v7988
          %v8072 = vpop.permute.xlu0 %8071
          %8073 = vset.pattern.permute.xlu0 32
          %8074 = vperm.xlu0 %8073, %v7989
          %v8075 = vpop.permute.xlu0 %8074
          %8076 = vset.pattern.permute.xlu0 32
          %8077 = vperm.xlu0 %8076, %v7990
          %v8078 = vpop.permute.xlu0 %8077
          %8079 = vset.pattern.permute.xlu0 32
          %8080 = vperm.xlu0 %8079, %v7991
          %v8081 = vpop.permute.xlu0 %8080
          %8082 = vset.pattern.permute.xlu0 32
          %8083 = vperm.xlu0 %8082, %v7992
          %v8084 = vpop.permute.xlu0 %8083
          %8085 = vset.pattern.permute.xlu0 32
          %8086 = vperm.xlu0 %8085, %v7993
          %v8087 = vpop.permute.xlu0 %8086
          %8088 = vset.pattern.permute.xlu0 32
          %8089 = vperm.xlu0 %8088, %v7994
          %v8090 = vpop.permute.xlu0 %8089
          %vm8091 = vcmp.eq.s32.totalorder %v7997, 1
          %vm8092 = vcmp.eq.s32.totalorder %v8000, 1
          %vm8093 = vcmp.eq.s32.totalorder %v8003, 1
          %vm8094 = vcmp.eq.s32.totalorder %v8006, 1
          %vm8095 = vcmp.eq.s32.totalorder %v8009, 1
          %vm8096 = vcmp.eq.s32.totalorder %v8012, 1
          %vm8097 = vcmp.eq.s32.totalorder %v8015, 1
          %vm8098 = vcmp.eq.s32.totalorder %v8018, 1
          %vm8099 = vcmp.eq.s32.totalorder %v8021, 1
          %vm8100 = vcmp.eq.s32.totalorder %v8024, 1
          %vm8101 = vcmp.eq.s32.totalorder %v8027, 1
          %vm8102 = vcmp.eq.s32.totalorder %v8030, 1
          %vm8103 = vcmp.eq.s32.totalorder %v8033, 1
          %vm8104 = vcmp.eq.s32.totalorder %v8036, 1
          %vm8105 = vcmp.eq.s32.totalorder %v8039, 1
          %vm8106 = vcmp.eq.s32.totalorder %v8042, 1
          %vm8107 = vcmp.eq.s32.totalorder %v8045, 1
          %vm8108 = vcmp.eq.s32.totalorder %v8048, 1
          %vm8109 = vcmp.eq.s32.totalorder %v8051, 1
          %vm8110 = vcmp.eq.s32.totalorder %v8054, 1
          %vm8111 = vcmp.eq.s32.totalorder %v8057, 1
          %vm8112 = vcmp.eq.s32.totalorder %v8060, 1
          %vm8113 = vcmp.eq.s32.totalorder %v8063, 1
          %vm8114 = vcmp.eq.s32.totalorder %v8066, 1
          %vm8115 = vcmp.eq.s32.totalorder %v8069, 1
          %vm8116 = vcmp.eq.s32.totalorder %v8072, 1
          %vm8117 = vcmp.eq.s32.totalorder %v8075, 1
          %vm8118 = vcmp.eq.s32.totalorder %v8078, 1
          %vm8119 = vcmp.eq.s32.totalorder %v8081, 1
          %vm8120 = vcmp.eq.s32.totalorder %v8084, 1
          %vm8121 = vcmp.eq.s32.totalorder %v8087, 1
          %vm8122 = vcmp.eq.s32.totalorder %v8090, 1
          %v8123 = vsel %vm8091, %v7899, -1000.0
          %v8124 = vsel %vm8092, %v7900, -1000.0
          %v8125 = vsel %vm8093, %v7901, -1000.0
          %v8126 = vsel %vm8094, %v7902, -1000.0
          %v8127 = vsel %vm8095, %v7903, -1000.0
          %v8128 = vsel %vm8096, %v7904, -1000.0
          %v8129 = vsel %vm8097, %v7905, -1000.0
          %v8130 = vsel %vm8098, %v7906, -1000.0
          %v8131 = vsel %vm8099, %v7907, -1000.0
          %v8132 = vsel %vm8100, %v7908, -1000.0
          %v8133 = vsel %vm8101, %v7909, -1000.0
          %v8134 = vsel %vm8102, %v7910, -1000.0
          %v8135 = vsel %vm8103, %v7911, -1000.0
          %v8136 = vsel %vm8104, %v7912, -1000.0
          %v8137 = vsel %vm8105, %v7913, -1000.0
          %v8138 = vsel %vm8106, %v7914, -1000.0
          %v8139 = vsel %vm8107, %v7915, -1000.0
          %v8140 = vsel %vm8108, %v7916, -1000.0
          %v8141 = vsel %vm8109, %v7917, -1000.0
          %v8142 = vsel %vm8110, %v7918, -1000.0
          %v8143 = vsel %vm8111, %v7919, -1000.0
          %v8144 = vsel %vm8112, %v7920, -1000.0
          %v8145 = vsel %vm8113, %v7921, -1000.0
          %v8146 = vsel %vm8114, %v7922, -1000.0
          %v8147 = vsel %vm8115, %v7923, -1000.0
          %v8148 = vsel %vm8116, %v7924, -1000.0
          %v8149 = vsel %vm8117, %v7925, -1000.0
          %v8150 = vsel %vm8118, %v7926, -1000.0
          %v8151 = vsel %vm8119, %v7927, -1000.0
          %v8152 = vsel %vm8120, %v7928, -1000.0
          %v8153 = vsel %vm8121, %v7929, -1000.0
          %v8154 = vsel %vm8122, %v7930, -1000.0
          %v8155 = vmax.f32 %v7867, %v8123
          %v8156 = vmax.f32 %v7868, %v8124
          %v8157 = vmax.f32 %v7869, %v8125
          %v8158 = vmax.f32 %v7870, %v8126
          %v8159 = vmax.f32 %v7871, %v8127
          %v8160 = vmax.f32 %v7872, %v8128
          %v8161 = vmax.f32 %v7873, %v8129
          %v8162 = vmax.f32 %v7874, %v8130
          %v8163 = vmax.f32 %v7875, %v8131
          %v8164 = vmax.f32 %v7876, %v8132
          %v8165 = vmax.f32 %v7877, %v8133
          %v8166 = vmax.f32 %v7878, %v8134
          %v8167 = vmax.f32 %v7879, %v8135
          %v8168 = vmax.f32 %v7880, %v8136
          %v8169 = vmax.f32 %v7881, %v8137
          %v8170 = vmax.f32 %v7882, %v8138
          %v8171 = vmax.f32 %v7883, %v8139
          %v8172 = vmax.f32 %v7884, %v8140
          %v8173 = vmax.f32 %v7885, %v8141
          %v8174 = vmax.f32 %v7886, %v8142
          %v8175 = vmax.f32 %v7887, %v8143
          %v8176 = vmax.f32 %v7888, %v8144
          %v8177 = vmax.f32 %v7889, %v8145
          %v8178 = vmax.f32 %v7890, %v8146
          %v8179 = vmax.f32 %v7891, %v8147
          %v8180 = vmax.f32 %v7892, %v8148
          %v8181 = vmax.f32 %v7893, %v8149
          %v8182 = vmax.f32 %v7894, %v8150
          %v8183 = vmax.f32 %v7895, %v8151
          %v8184 = vmax.f32 %v7896, %v8152
          %v8185 = vmax.f32 %v7897, %v8153
          %v8186 = vmax.f32 %v7898, %v8154
          %v8187 = vld [vmem:[%s3508] sm:$0xff]
          %v8188 = vld [vmem:[%s3508 + $0x8] sm:$0xff]
          %v8189 = vld [vmem:[%s3508 + $0x10] sm:$0xff]
          %v8190 = vld [vmem:[%s3508 + $0x18] sm:$0xff]
          %v8191 = vld [vmem:[%s3508 + $0x20] sm:$0xff]
          %v8192 = vld [vmem:[%s3508 + $0x28] sm:$0xff]
          %v8193 = vld [vmem:[%s3508 + $0x30] sm:$0xff]
          %v8194 = vld [vmem:[%s3508 + $0x38] sm:$0xff]
          %v8195 = vld [vmem:[%s3508 + $0x40] sm:$0xff]
          %v8196 = vld [vmem:[%s3508 + $0x48] sm:$0xff]
          %v8197 = vld [vmem:[%s3508 + $0x50] sm:$0xff]
          %v8198 = vld [vmem:[%s3508 + $0x58] sm:$0xff]
          %v8199 = vld [vmem:[%s3508 + $0x60] sm:$0xff]
          %v8200 = vld [vmem:[%s3508 + $0x68] sm:$0xff]
          %v8201 = vld [vmem:[%s3508 + $0x70] sm:$0xff]
          %v8202 = vld [vmem:[%s3508 + $0x78] sm:$0xff]
          %v8203 = vld [vmem:[%s3508 + $0x80] sm:$0xff]
          %v8204 = vld [vmem:[%s3508 + $0x88] sm:$0xff]
          %v8205 = vld [vmem:[%s3508 + $0x90] sm:$0xff]
          %v8206 = vld [vmem:[%s3508 + $0x98] sm:$0xff]
          %v8207 = vld [vmem:[%s3508 + $0xa0] sm:$0xff]
          %v8208 = vld [vmem:[%s3508 + $0xa8] sm:$0xff]
          %v8209 = vld [vmem:[%s3508 + $0xb0] sm:$0xff]
          %v8210 = vld [vmem:[%s3508 + $0xb8] sm:$0xff]
          %v8211 = vld [vmem:[%s3508 + $0xc0] sm:$0xff]
          %v8212 = vld [vmem:[%s3508 + $0xc8] sm:$0xff]
          %v8213 = vld [vmem:[%s3508 + $0xd0] sm:$0xff]
          %v8214 = vld [vmem:[%s3508 + $0xd8] sm:$0xff]
          %v8215 = vld [vmem:[%s3508 + $0xe0] sm:$0xff]
          %v8216 = vld [vmem:[%s3508 + $0xe8] sm:$0xff]
          %v8217 = vld [vmem:[%s3508 + $0xf0] sm:$0xff]
          %v8218 = vld [vmem:[%s3508 + $0xf8] sm:$0xff]
          %vm8219 = vcmp.gt.f32.partialorder %v8187, 0.5
          %vm8220 = vcmp.gt.f32.partialorder %v8188, 0.5
          %vm8221 = vcmp.gt.f32.partialorder %v8189, 0.5
          %vm8222 = vcmp.gt.f32.partialorder %v8190, 0.5
          %vm8223 = vcmp.gt.f32.partialorder %v8191, 0.5
          %vm8224 = vcmp.gt.f32.partialorder %v8192, 0.5
          %vm8225 = vcmp.gt.f32.partialorder %v8193, 0.5
          %vm8226 = vcmp.gt.f32.partialorder %v8194, 0.5
          %vm8227 = vcmp.gt.f32.partialorder %v8195, 0.5
          %vm8228 = vcmp.gt.f32.partialorder %v8196, 0.5
          %vm8229 = vcmp.gt.f32.partialorder %v8197, 0.5
          %vm8230 = vcmp.gt.f32.partialorder %v8198, 0.5
          %vm8231 = vcmp.gt.f32.partialorder %v8199, 0.5
          %vm8232 = vcmp.gt.f32.partialorder %v8200, 0.5
          %vm8233 = vcmp.gt.f32.partialorder %v8201, 0.5
          %vm8234 = vcmp.gt.f32.partialorder %v8202, 0.5
          %vm8235 = vcmp.gt.f32.partialorder %v8203, 0.5
          %vm8236 = vcmp.gt.f32.partialorder %v8204, 0.5
          %vm8237 = vcmp.gt.f32.partialorder %v8205, 0.5
          %vm8238 = vcmp.gt.f32.partialorder %v8206, 0.5
          %vm8239 = vcmp.gt.f32.partialorder %v8207, 0.5
          %vm8240 = vcmp.gt.f32.partialorder %v8208, 0.5
          %vm8241 = vcmp.gt.f32.partialorder %v8209, 0.5
          %vm8242 = vcmp.gt.f32.partialorder %v8210, 0.5
          %vm8243 = vcmp.gt.f32.partialorder %v8211, 0.5
          %vm8244 = vcmp.gt.f32.partialorder %v8212, 0.5
          %vm8245 = vcmp.gt.f32.partialorder %v8213, 0.5
          %vm8246 = vcmp.gt.f32.partialorder %v8214, 0.5
          %vm8247 = vcmp.gt.f32.partialorder %v8215, 0.5
          %vm8248 = vcmp.gt.f32.partialorder %v8216, 0.5
          %vm8249 = vcmp.gt.f32.partialorder %v8217, 0.5
          %vm8250 = vcmp.gt.f32.partialorder %v8218, 0.5
          %v8251 = vsel %vm8219, 1, 0
          %v8252 = vsel %vm8220, 1, 0
          %v8253 = vsel %vm8221, 1, 0
          %v8254 = vsel %vm8222, 1, 0
          %v8255 = vsel %vm8223, 1, 0
          %v8256 = vsel %vm8224, 1, 0
          %v8257 = vsel %vm8225, 1, 0
          %v8258 = vsel %vm8226, 1, 0
          %v8259 = vsel %vm8227, 1, 0
          %v8260 = vsel %vm8228, 1, 0
          %v8261 = vsel %vm8229, 1, 0
          %v8262 = vsel %vm8230, 1, 0
          %v8263 = vsel %vm8231, 1, 0
          %v8264 = vsel %vm8232, 1, 0
          %v8265 = vsel %vm8233, 1, 0
          %v8266 = vsel %vm8234, 1, 0
          %v8267 = vsel %vm8235, 1, 0
          %v8268 = vsel %vm8236, 1, 0
          %v8269 = vsel %vm8237, 1, 0
          %v8270 = vsel %vm8238, 1, 0
          %v8271 = vsel %vm8239, 1, 0
          %v8272 = vsel %vm8240, 1, 0
          %v8273 = vsel %vm8241, 1, 0
          %v8274 = vsel %vm8242, 1, 0
          %v8275 = vsel %vm8243, 1, 0
          %v8276 = vsel %vm8244, 1, 0
          %v8277 = vsel %vm8245, 1, 0
          %v8278 = vsel %vm8246, 1, 0
          %v8279 = vsel %vm8247, 1, 0
          %v8280 = vsel %vm8248, 1, 0
          %v8281 = vsel %vm8249, 1, 0
          %v8282 = vsel %vm8250, 1, 0
          %8283 = vset.pattern.permute.xlu0 32
          %8284 = vperm.xlu0 %8283, %v8251
          %v8285 = vpop.permute.xlu0 %8284
          %8286 = vset.pattern.permute.xlu0 32
          %8287 = vperm.xlu0 %8286, %v8252
          %v8288 = vpop.permute.xlu0 %8287
          %8289 = vset.pattern.permute.xlu0 32
          %8290 = vperm.xlu0 %8289, %v8253
          %v8291 = vpop.permute.xlu0 %8290
          %8292 = vset.pattern.permute.xlu0 32
          %8293 = vperm.xlu0 %8292, %v8254
          %v8294 = vpop.permute.xlu0 %8293
          %8295 = vset.pattern.permute.xlu0 32
          %8296 = vperm.xlu0 %8295, %v8255
          %v8297 = vpop.permute.xlu0 %8296
          %8298 = vset.pattern.permute.xlu0 32
          %8299 = vperm.xlu0 %8298, %v8256
          %v8300 = vpop.permute.xlu0 %8299
          %8301 = vset.pattern.permute.xlu0 32
          %8302 = vperm.xlu0 %8301, %v8257
          %v8303 = vpop.permute.xlu0 %8302
          %8304 = vset.pattern.permute.xlu0 32
          %8305 = vperm.xlu0 %8304, %v8258
          %v8306 = vpop.permute.xlu0 %8305
          %8307 = vset.pattern.permute.xlu0 32
          %8308 = vperm.xlu0 %8307, %v8259
          %v8309 = vpop.permute.xlu0 %8308
          %8310 = vset.pattern.permute.xlu0 32
          %8311 = vperm.xlu0 %8310, %v8260
          %v8312 = vpop.permute.xlu0 %8311
          %8313 = vset.pattern.permute.xlu0 32
          %8314 = vperm.xlu0 %8313, %v8261
          %v8315 = vpop.permute.xlu0 %8314
          %8316 = vset.pattern.permute.xlu0 32
          %8317 = vperm.xlu0 %8316, %v8262
          %v8318 = vpop.permute.xlu0 %8317
          %8319 = vset.pattern.permute.xlu0 32
          %8320 = vperm.xlu0 %8319, %v8263
          %v8321 = vpop.permute.xlu0 %8320
          %8322 = vset.pattern.permute.xlu0 32
          %8323 = vperm.xlu0 %8322, %v8264
          %v8324 = vpop.permute.xlu0 %8323
          %8325 = vset.pattern.permute.xlu0 32
          %8326 = vperm.xlu0 %8325, %v8265
          %v8327 = vpop.permute.xlu0 %8326
          %8328 = vset.pattern.permute.xlu0 32
          %8329 = vperm.xlu0 %8328, %v8266
          %v8330 = vpop.permute.xlu0 %8329
          %8331 = vset.pattern.permute.xlu0 32
          %8332 = vperm.xlu0 %8331, %v8267
          %v8333 = vpop.permute.xlu0 %8332
          %8334 = vset.pattern.permute.xlu0 32
          %8335 = vperm.xlu0 %8334, %v8268
          %v8336 = vpop.permute.xlu0 %8335
          %8337 = vset.pattern.permute.xlu0 32
          %8338 = vperm.xlu0 %8337, %v8269
          %v8339 = vpop.permute.xlu0 %8338
          %8340 = vset.pattern.permute.xlu0 32
          %8341 = vperm.xlu0 %8340, %v8270
          %v8342 = vpop.permute.xlu0 %8341
          %8343 = vset.pattern.permute.xlu0 32
          %8344 = vperm.xlu0 %8343, %v8271
          %v8345 = vpop.permute.xlu0 %8344
          %8346 = vset.pattern.permute.xlu0 32
          %8347 = vperm.xlu0 %8346, %v8272
          %v8348 = vpop.permute.xlu0 %8347
          %8349 = vset.pattern.permute.xlu0 32
          %8350 = vperm.xlu0 %8349, %v8273
          %v8351 = vpop.permute.xlu0 %8350
          %8352 = vset.pattern.permute.xlu0 32
          %8353 = vperm.xlu0 %8352, %v8274
          %v8354 = vpop.permute.xlu0 %8353
          %8355 = vset.pattern.permute.xlu0 32
          %8356 = vperm.xlu0 %8355, %v8275
          %v8357 = vpop.permute.xlu0 %8356
          %8358 = vset.pattern.permute.xlu0 32
          %8359 = vperm.xlu0 %8358, %v8276
          %v8360 = vpop.permute.xlu0 %8359
          %8361 = vset.pattern.permute.xlu0 32
          %8362 = vperm.xlu0 %8361, %v8277
          %v8363 = vpop.permute.xlu0 %8362
          %8364 = vset.pattern.permute.xlu0 32
          %8365 = vperm.xlu0 %8364, %v8278
          %v8366 = vpop.permute.xlu0 %8365
          %8367 = vset.pattern.permute.xlu0 32
          %8368 = vperm.xlu0 %8367, %v8279
          %v8369 = vpop.permute.xlu0 %8368
          %8370 = vset.pattern.permute.xlu0 32
          %8371 = vperm.xlu0 %8370, %v8280
          %v8372 = vpop.permute.xlu0 %8371
          %8373 = vset.pattern.permute.xlu0 32
          %8374 = vperm.xlu0 %8373, %v8281
          %v8375 = vpop.permute.xlu0 %8374
          %8376 = vset.pattern.permute.xlu0 32
          %8377 = vperm.xlu0 %8376, %v8282
          %v8378 = vpop.permute.xlu0 %8377
          %vm8379 = vcmp.eq.s32.totalorder %v8285, 1
          %vm8380 = vcmp.eq.s32.totalorder %v8288, 1
          %vm8381 = vcmp.eq.s32.totalorder %v8291, 1
          %vm8382 = vcmp.eq.s32.totalorder %v8294, 1
          %vm8383 = vcmp.eq.s32.totalorder %v8297, 1
          %vm8384 = vcmp.eq.s32.totalorder %v8300, 1
          %vm8385 = vcmp.eq.s32.totalorder %v8303, 1
          %vm8386 = vcmp.eq.s32.totalorder %v8306, 1
          %vm8387 = vcmp.eq.s32.totalorder %v8309, 1
          %vm8388 = vcmp.eq.s32.totalorder %v8312, 1
          %vm8389 = vcmp.eq.s32.totalorder %v8315, 1
          %vm8390 = vcmp.eq.s32.totalorder %v8318, 1
          %vm8391 = vcmp.eq.s32.totalorder %v8321, 1
          %vm8392 = vcmp.eq.s32.totalorder %v8324, 1
          %vm8393 = vcmp.eq.s32.totalorder %v8327, 1
          %vm8394 = vcmp.eq.s32.totalorder %v8330, 1
          %vm8395 = vcmp.eq.s32.totalorder %v8333, 1
          %vm8396 = vcmp.eq.s32.totalorder %v8336, 1
          %vm8397 = vcmp.eq.s32.totalorder %v8339, 1
          %vm8398 = vcmp.eq.s32.totalorder %v8342, 1
          %vm8399 = vcmp.eq.s32.totalorder %v8345, 1
          %vm8400 = vcmp.eq.s32.totalorder %v8348, 1
          %vm8401 = vcmp.eq.s32.totalorder %v8351, 1
          %vm8402 = vcmp.eq.s32.totalorder %v8354, 1
          %vm8403 = vcmp.eq.s32.totalorder %v8357, 1
          %vm8404 = vcmp.eq.s32.totalorder %v8360, 1
          %vm8405 = vcmp.eq.s32.totalorder %v8363, 1
          %vm8406 = vcmp.eq.s32.totalorder %v8366, 1
          %vm8407 = vcmp.eq.s32.totalorder %v8369, 1
          %vm8408 = vcmp.eq.s32.totalorder %v8372, 1
          %vm8409 = vcmp.eq.s32.totalorder %v8375, 1
          %vm8410 = vcmp.eq.s32.totalorder %v8378, 1
          %v8411 = vsel %vm8379, %v8187, -1000.0
          %v8412 = vsel %vm8380, %v8188, -1000.0
          %v8413 = vsel %vm8381, %v8189, -1000.0
          %v8414 = vsel %vm8382, %v8190, -1000.0
          %v8415 = vsel %vm8383, %v8191, -1000.0
          %v8416 = vsel %vm8384, %v8192, -1000.0
          %v8417 = vsel %vm8385, %v8193, -1000.0
          %v8418 = vsel %vm8386, %v8194, -1000.0
          %v8419 = vsel %vm8387, %v8195, -1000.0
          %v8420 = vsel %vm8388, %v8196, -1000.0
          %v8421 = vsel %vm8389, %v8197, -1000.0
          %v8422 = vsel %vm8390, %v8198, -1000.0
          %v8423 = vsel %vm8391, %v8199, -1000.0
          %v8424 = vsel %vm8392, %v8200, -1000.0
          %v8425 = vsel %vm8393, %v8201, -1000.0
          %v8426 = vsel %vm8394, %v8202, -1000.0
          %v8427 = vsel %vm8395, %v8203, -1000.0
          %v8428 = vsel %vm8396, %v8204, -1000.0
          %v8429 = vsel %vm8397, %v8205, -1000.0
          %v8430 = vsel %vm8398, %v8206, -1000.0
          %v8431 = vsel %vm8399, %v8207, -1000.0
          %v8432 = vsel %vm8400, %v8208, -1000.0
          %v8433 = vsel %vm8401, %v8209, -1000.0
          %v8434 = vsel %vm8402, %v8210, -1000.0
          %v8435 = vsel %vm8403, %v8211, -1000.0
          %v8436 = vsel %vm8404, %v8212, -1000.0
          %v8437 = vsel %vm8405, %v8213, -1000.0
          %v8438 = vsel %vm8406, %v8214, -1000.0
          %v8439 = vsel %vm8407, %v8215, -1000.0
          %v8440 = vsel %vm8408, %v8216, -1000.0
          %v8441 = vsel %vm8409, %v8217, -1000.0
          %v8442 = vsel %vm8410, %v8218, -1000.0
          %v8443 = vmax.f32 %v8155, %v8411
          %v8444 = vmax.f32 %v8156, %v8412
          %v8445 = vmax.f32 %v8157, %v8413
          %v8446 = vmax.f32 %v8158, %v8414
          %v8447 = vmax.f32 %v8159, %v8415
          %v8448 = vmax.f32 %v8160, %v8416
          %v8449 = vmax.f32 %v8161, %v8417
          %v8450 = vmax.f32 %v8162, %v8418
          %v8451 = vmax.f32 %v8163, %v8419
          %v8452 = vmax.f32 %v8164, %v8420
          %v8453 = vmax.f32 %v8165, %v8421
          %v8454 = vmax.f32 %v8166, %v8422
          %v8455 = vmax.f32 %v8167, %v8423
          %v8456 = vmax.f32 %v8168, %v8424
          %v8457 = vmax.f32 %v8169, %v8425
          %v8458 = vmax.f32 %v8170, %v8426
          %v8459 = vmax.f32 %v8171, %v8427
          %v8460 = vmax.f32 %v8172, %v8428
          %v8461 = vmax.f32 %v8173, %v8429
          %v8462 = vmax.f32 %v8174, %v8430
          %v8463 = vmax.f32 %v8175, %v8431
          %v8464 = vmax.f32 %v8176, %v8432
          %v8465 = vmax.f32 %v8177, %v8433
          %v8466 = vmax.f32 %v8178, %v8434
          %v8467 = vmax.f32 %v8179, %v8435
          %v8468 = vmax.f32 %v8180, %v8436
          %v8469 = vmax.f32 %v8181, %v8437
          %v8470 = vmax.f32 %v8182, %v8438
          %v8471 = vmax.f32 %v8183, %v8439
          %v8472 = vmax.f32 %v8184, %v8440
          %v8473 = vmax.f32 %v8185, %v8441
          %v8474 = vmax.f32 %v8186, %v8442
          %v8475 = vld [vmem:[%s4360] sm:$0xff]
          %v8476 = vld [vmem:[%s4360 + $0x8] sm:$0xff]
          %v8477 = vld [vmem:[%s4360 + $0x10] sm:$0xff]
          %v8478 = vld [vmem:[%s4360 + $0x18] sm:$0xff]
          %v8479 = vld [vmem:[%s4360 + $0x20] sm:$0xff]
          %v8480 = vld [vmem:[%s4360 + $0x28] sm:$0xff]
          %v8481 = vld [vmem:[%s4360 + $0x30] sm:$0xff]
          %v8482 = vld [vmem:[%s4360 + $0x38] sm:$0xff]
          %v8483 = vld [vmem:[%s4360 + $0x40] sm:$0xff]
          %v8484 = vld [vmem:[%s4360 + $0x48] sm:$0xff]
          %v8485 = vld [vmem:[%s4360 + $0x50] sm:$0xff]
          %v8486 = vld [vmem:[%s4360 + $0x58] sm:$0xff]
          %v8487 = vld [vmem:[%s4360 + $0x60] sm:$0xff]
          %v8488 = vld [vmem:[%s4360 + $0x68] sm:$0xff]
          %v8489 = vld [vmem:[%s4360 + $0x70] sm:$0xff]
          %v8490 = vld [vmem:[%s4360 + $0x78] sm:$0xff]
          %v8491 = vld [vmem:[%s4360 + $0x80] sm:$0xff]
          %v8492 = vld [vmem:[%s4360 + $0x88] sm:$0xff]
          %v8493 = vld [vmem:[%s4360 + $0x90] sm:$0xff]
          %v8494 = vld [vmem:[%s4360 + $0x98] sm:$0xff]
          %v8495 = vld [vmem:[%s4360 + $0xa0] sm:$0xff]
          %v8496 = vld [vmem:[%s4360 + $0xa8] sm:$0xff]
          %v8497 = vld [vmem:[%s4360 + $0xb0] sm:$0xff]
          %v8498 = vld [vmem:[%s4360 + $0xb8] sm:$0xff]
          %v8499 = vld [vmem:[%s4360 + $0xc0] sm:$0xff]
          %v8500 = vld [vmem:[%s4360 + $0xc8] sm:$0xff]
          %v8501 = vld [vmem:[%s4360 + $0xd0] sm:$0xff]
          %v8502 = vld [vmem:[%s4360 + $0xd8] sm:$0xff]
          %v8503 = vld [vmem:[%s4360 + $0xe0] sm:$0xff]
          %v8504 = vld [vmem:[%s4360 + $0xe8] sm:$0xff]
          %v8505 = vld [vmem:[%s4360 + $0xf0] sm:$0xff]
          %v8506 = vld [vmem:[%s4360 + $0xf8] sm:$0xff]
          %vm8507 = vcmp.gt.f32.partialorder %v8475, 0.5
          %vm8508 = vcmp.gt.f32.partialorder %v8476, 0.5
          %vm8509 = vcmp.gt.f32.partialorder %v8477, 0.5
          %vm8510 = vcmp.gt.f32.partialorder %v8478, 0.5
          %vm8511 = vcmp.gt.f32.partialorder %v8479, 0.5
          %vm8512 = vcmp.gt.f32.partialorder %v8480, 0.5
          %vm8513 = vcmp.gt.f32.partialorder %v8481, 0.5
          %vm8514 = vcmp.gt.f32.partialorder %v8482, 0.5
          %vm8515 = vcmp.gt.f32.partialorder %v8483, 0.5
          %vm8516 = vcmp.gt.f32.partialorder %v8484, 0.5
          %vm8517 = vcmp.gt.f32.partialorder %v8485, 0.5
          %vm8518 = vcmp.gt.f32.partialorder %v8486, 0.5
          %vm8519 = vcmp.gt.f32.partialorder %v8487, 0.5
          %vm8520 = vcmp.gt.f32.partialorder %v8488, 0.5
          %vm8521 = vcmp.gt.f32.partialorder %v8489, 0.5
          %vm8522 = vcmp.gt.f32.partialorder %v8490, 0.5
          %vm8523 = vcmp.gt.f32.partialorder %v8491, 0.5
          %vm8524 = vcmp.gt.f32.partialorder %v8492, 0.5
          %vm8525 = vcmp.gt.f32.partialorder %v8493, 0.5
          %vm8526 = vcmp.gt.f32.partialorder %v8494, 0.5
          %vm8527 = vcmp.gt.f32.partialorder %v8495, 0.5
          %vm8528 = vcmp.gt.f32.partialorder %v8496, 0.5
          %vm8529 = vcmp.gt.f32.partialorder %v8497, 0.5
          %vm8530 = vcmp.gt.f32.partialorder %v8498, 0.5
          %vm8531 = vcmp.gt.f32.partialorder %v8499, 0.5
          %vm8532 = vcmp.gt.f32.partialorder %v8500, 0.5
          %vm8533 = vcmp.gt.f32.partialorder %v8501, 0.5
          %vm8534 = vcmp.gt.f32.partialorder %v8502, 0.5
          %vm8535 = vcmp.gt.f32.partialorder %v8503, 0.5
          %vm8536 = vcmp.gt.f32.partialorder %v8504, 0.5
          %vm8537 = vcmp.gt.f32.partialorder %v8505, 0.5
          %vm8538 = vcmp.gt.f32.partialorder %v8506, 0.5
          %v8539 = vsel %vm8507, 1, 0
          %v8540 = vsel %vm8508, 1, 0
          %v8541 = vsel %vm8509, 1, 0
          %v8542 = vsel %vm8510, 1, 0
          %v8543 = vsel %vm8511, 1, 0
          %v8544 = vsel %vm8512, 1, 0
          %v8545 = vsel %vm8513, 1, 0
          %v8546 = vsel %vm8514, 1, 0
          %v8547 = vsel %vm8515, 1, 0
          %v8548 = vsel %vm8516, 1, 0
          %v8549 = vsel %vm8517, 1, 0
          %v8550 = vsel %vm8518, 1, 0
          %v8551 = vsel %vm8519, 1, 0
          %v8552 = vsel %vm8520, 1, 0
          %v8553 = vsel %vm8521, 1, 0
          %v8554 = vsel %vm8522, 1, 0
          %v8555 = vsel %vm8523, 1, 0
          %v8556 = vsel %vm8524, 1, 0
          %v8557 = vsel %vm8525, 1, 0
          %v8558 = vsel %vm8526, 1, 0
          %v8559 = vsel %vm8527, 1, 0
          %v8560 = vsel %vm8528, 1, 0
          %v8561 = vsel %vm8529, 1, 0
          %v8562 = vsel %vm8530, 1, 0
          %v8563 = vsel %vm8531, 1, 0
          %v8564 = vsel %vm8532, 1, 0
          %v8565 = vsel %vm8533, 1, 0
          %v8566 = vsel %vm8534, 1, 0
          %v8567 = vsel %vm8535, 1, 0
          %v8568 = vsel %vm8536, 1, 0
          %v8569 = vsel %vm8537, 1, 0
          %v8570 = vsel %vm8538, 1, 0
          %8571 = vset.pattern.permute.xlu0 32
          %8572 = vperm.xlu0 %8571, %v8539
          %v8573 = vpop.permute.xlu0 %8572
          %8574 = vset.pattern.permute.xlu0 32
          %8575 = vperm.xlu0 %8574, %v8540
          %v8576 = vpop.permute.xlu0 %8575
          %8577 = vset.pattern.permute.xlu0 32
          %8578 = vperm.xlu0 %8577, %v8541
          %v8579 = vpop.permute.xlu0 %8578
          %8580 = vset.pattern.permute.xlu0 32
          %8581 = vperm.xlu0 %8580, %v8542
          %v8582 = vpop.permute.xlu0 %8581
          %8583 = vset.pattern.permute.xlu0 32
          %8584 = vperm.xlu0 %8583, %v8543
          %v8585 = vpop.permute.xlu0 %8584
          %8586 = vset.pattern.permute.xlu0 32
          %8587 = vperm.xlu0 %8586, %v8544
          %v8588 = vpop.permute.xlu0 %8587
          %8589 = vset.pattern.permute.xlu0 32
          %8590 = vperm.xlu0 %8589, %v8545
          %v8591 = vpop.permute.xlu0 %8590
          %8592 = vset.pattern.permute.xlu0 32
          %8593 = vperm.xlu0 %8592, %v8546
          %v8594 = vpop.permute.xlu0 %8593
          %8595 = vset.pattern.permute.xlu0 32
          %8596 = vperm.xlu0 %8595, %v8547
          %v8597 = vpop.permute.xlu0 %8596
          %8598 = vset.pattern.permute.xlu0 32
          %8599 = vperm.xlu0 %8598, %v8548
          %v8600 = vpop.permute.xlu0 %8599
          %8601 = vset.pattern.permute.xlu0 32
          %8602 = vperm.xlu0 %8601, %v8549
          %v8603 = vpop.permute.xlu0 %8602
          %8604 = vset.pattern.permute.xlu0 32
          %8605 = vperm.xlu0 %8604, %v8550
          %v8606 = vpop.permute.xlu0 %8605
          %8607 = vset.pattern.permute.xlu0 32
          %8608 = vperm.xlu0 %8607, %v8551
          %v8609 = vpop.permute.xlu0 %8608
          %8610 = vset.pattern.permute.xlu0 32
          %8611 = vperm.xlu0 %8610, %v8552
          %v8612 = vpop.permute.xlu0 %8611
          %8613 = vset.pattern.permute.xlu0 32
          %8614 = vperm.xlu0 %8613, %v8553
          %v8615 = vpop.permute.xlu0 %8614
          %8616 = vset.pattern.permute.xlu0 32
          %8617 = vperm.xlu0 %8616, %v8554
          %v8618 = vpop.permute.xlu0 %8617
          %8619 = vset.pattern.permute.xlu0 32
          %8620 = vperm.xlu0 %8619, %v8555
          %v8621 = vpop.permute.xlu0 %8620
          %8622 = vset.pattern.permute.xlu0 32
          %8623 = vperm.xlu0 %8622, %v8556
          %v8624 = vpop.permute.xlu0 %8623
          %8625 = vset.pattern.permute.xlu0 32
          %8626 = vperm.xlu0 %8625, %v8557
          %v8627 = vpop.permute.xlu0 %8626
          %8628 = vset.pattern.permute.xlu0 32
          %8629 = vperm.xlu0 %8628, %v8558
          %v8630 = vpop.permute.xlu0 %8629
          %8631 = vset.pattern.permute.xlu0 32
          %8632 = vperm.xlu0 %8631, %v8559
          %v8633 = vpop.permute.xlu0 %8632
          %8634 = vset.pattern.permute.xlu0 32
          %8635 = vperm.xlu0 %8634, %v8560
          %v8636 = vpop.permute.xlu0 %8635
          %8637 = vset.pattern.permute.xlu0 32
          %8638 = vperm.xlu0 %8637, %v8561
          %v8639 = vpop.permute.xlu0 %8638
          %8640 = vset.pattern.permute.xlu0 32
          %8641 = vperm.xlu0 %8640, %v8562
          %v8642 = vpop.permute.xlu0 %8641
          %8643 = vset.pattern.permute.xlu0 32
          %8644 = vperm.xlu0 %8643, %v8563
          %v8645 = vpop.permute.xlu0 %8644
          %8646 = vset.pattern.permute.xlu0 32
          %8647 = vperm.xlu0 %8646, %v8564
          %v8648 = vpop.permute.xlu0 %8647
          %8649 = vset.pattern.permute.xlu0 32
          %8650 = vperm.xlu0 %8649, %v8565
          %v8651 = vpop.permute.xlu0 %8650
          %8652 = vset.pattern.permute.xlu0 32
          %8653 = vperm.xlu0 %8652, %v8566
          %v8654 = vpop.permute.xlu0 %8653
          %8655 = vset.pattern.permute.xlu0 32
          %8656 = vperm.xlu0 %8655, %v8567
          %v8657 = vpop.permute.xlu0 %8656
          %8658 = vset.pattern.permute.xlu0 32
          %8659 = vperm.xlu0 %8658, %v8568
          %v8660 = vpop.permute.xlu0 %8659
          %8661 = vset.pattern.permute.xlu0 32
          %8662 = vperm.xlu0 %8661, %v8569
          %v8663 = vpop.permute.xlu0 %8662
          %8664 = vset.pattern.permute.xlu0 32
          %8665 = vperm.xlu0 %8664, %v8570
          %v8666 = vpop.permute.xlu0 %8665
          %vm8667 = vcmp.eq.s32.totalorder %v8573, 1
          %vm8668 = vcmp.eq.s32.totalorder %v8576, 1
          %vm8669 = vcmp.eq.s32.totalorder %v8579, 1
          %vm8670 = vcmp.eq.s32.totalorder %v8582, 1
          %vm8671 = vcmp.eq.s32.totalorder %v8585, 1
          %vm8672 = vcmp.eq.s32.totalorder %v8588, 1
          %vm8673 = vcmp.eq.s32.totalorder %v8591, 1
          %vm8674 = vcmp.eq.s32.totalorder %v8594, 1
          %vm8675 = vcmp.eq.s32.totalorder %v8597, 1
          %vm8676 = vcmp.eq.s32.totalorder %v8600, 1
          %vm8677 = vcmp.eq.s32.totalorder %v8603, 1
          %vm8678 = vcmp.eq.s32.totalorder %v8606, 1
          %vm8679 = vcmp.eq.s32.totalorder %v8609, 1
          %vm8680 = vcmp.eq.s32.totalorder %v8612, 1
          %vm8681 = vcmp.eq.s32.totalorder %v8615, 1
          %vm8682 = vcmp.eq.s32.totalorder %v8618, 1
          %vm8683 = vcmp.eq.s32.totalorder %v8621, 1
          %vm8684 = vcmp.eq.s32.totalorder %v8624, 1
          %vm8685 = vcmp.eq.s32.totalorder %v8627, 1
          %vm8686 = vcmp.eq.s32.totalorder %v8630, 1
          %vm8687 = vcmp.eq.s32.totalorder %v8633, 1
          %vm8688 = vcmp.eq.s32.totalorder %v8636, 1
          %vm8689 = vcmp.eq.s32.totalorder %v8639, 1
          %vm8690 = vcmp.eq.s32.totalorder %v8642, 1
          %vm8691 = vcmp.eq.s32.totalorder %v8645, 1
          %vm8692 = vcmp.eq.s32.totalorder %v8648, 1
          %vm8693 = vcmp.eq.s32.totalorder %v8651, 1
          %vm8694 = vcmp.eq.s32.totalorder %v8654, 1
          %vm8695 = vcmp.eq.s32.totalorder %v8657, 1
          %vm8696 = vcmp.eq.s32.totalorder %v8660, 1
          %vm8697 = vcmp.eq.s32.totalorder %v8663, 1
          %vm8698 = vcmp.eq.s32.totalorder %v8666, 1
          %v8699 = vsel %vm8667, %v8475, -1000.0
          %v8700 = vsel %vm8668, %v8476, -1000.0
          %v8701 = vsel %vm8669, %v8477, -1000.0
          %v8702 = vsel %vm8670, %v8478, -1000.0
          %v8703 = vsel %vm8671, %v8479, -1000.0
          %v8704 = vsel %vm8672, %v8480, -1000.0
          %v8705 = vsel %vm8673, %v8481, -1000.0
          %v8706 = vsel %vm8674, %v8482, -1000.0
          %v8707 = vsel %vm8675, %v8483, -1000.0
          %v8708 = vsel %vm8676, %v8484, -1000.0
          %v8709 = vsel %vm8677, %v8485, -1000.0
          %v8710 = vsel %vm8678, %v8486, -1000.0
          %v8711 = vsel %vm8679, %v8487, -1000.0
          %v8712 = vsel %vm8680, %v8488, -1000.0
          %v8713 = vsel %vm8681, %v8489, -1000.0
          %v8714 = vsel %vm8682, %v8490, -1000.0
          %v8715 = vsel %vm8683, %v8491, -1000.0
          %v8716 = vsel %vm8684, %v8492, -1000.0
          %v8717 = vsel %vm8685, %v8493, -1000.0
          %v8718 = vsel %vm8686, %v8494, -1000.0
          %v8719 = vsel %vm8687, %v8495, -1000.0
          %v8720 = vsel %vm8688, %v8496, -1000.0
          %v8721 = vsel %vm8689, %v8497, -1000.0
          %v8722 = vsel %vm8690, %v8498, -1000.0
          %v8723 = vsel %vm8691, %v8499, -1000.0
          %v8724 = vsel %vm8692, %v8500, -1000.0
          %v8725 = vsel %vm8693, %v8501, -1000.0
          %v8726 = vsel %vm8694, %v8502, -1000.0
          %v8727 = vsel %vm8695, %v8503, -1000.0
          %v8728 = vsel %vm8696, %v8504, -1000.0
          %v8729 = vsel %vm8697, %v8505, -1000.0
          %v8730 = vsel %vm8698, %v8506, -1000.0
          %v8731 = vmax.f32 %v8443, %v8699
          %v8732 = vmax.f32 %v8444, %v8700
          %v8733 = vmax.f32 %v8445, %v8701
          %v8734 = vmax.f32 %v8446, %v8702
          %v8735 = vmax.f32 %v8447, %v8703
          %v8736 = vmax.f32 %v8448, %v8704
          %v8737 = vmax.f32 %v8449, %v8705
          %v8738 = vmax.f32 %v8450, %v8706
          %v8739 = vmax.f32 %v8451, %v8707
          %v8740 = vmax.f32 %v8452, %v8708
          %v8741 = vmax.f32 %v8453, %v8709
          %v8742 = vmax.f32 %v8454, %v8710
          %v8743 = vmax.f32 %v8455, %v8711
          %v8744 = vmax.f32 %v8456, %v8712
          %v8745 = vmax.f32 %v8457, %v8713
          %v8746 = vmax.f32 %v8458, %v8714
          %v8747 = vmax.f32 %v8459, %v8715
          %v8748 = vmax.f32 %v8460, %v8716
          %v8749 = vmax.f32 %v8461, %v8717
          %v8750 = vmax.f32 %v8462, %v8718
          %v8751 = vmax.f32 %v8463, %v8719
          %v8752 = vmax.f32 %v8464, %v8720
          %v8753 = vmax.f32 %v8465, %v8721
          %v8754 = vmax.f32 %v8466, %v8722
          %v8755 = vmax.f32 %v8467, %v8723
          %v8756 = vmax.f32 %v8468, %v8724
          %v8757 = vmax.f32 %v8469, %v8725
          %v8758 = vmax.f32 %v8470, %v8726
          %v8759 = vmax.f32 %v8471, %v8727
          %v8760 = vmax.f32 %v8472, %v8728
          %v8761 = vmax.f32 %v8473, %v8729
          %v8762 = vmax.f32 %v8474, %v8730
          %v8763 = vld [vmem:[%s5212] sm:$0xff]
          %v8764 = vld [vmem:[%s5212 + $0x8] sm:$0xff]
          %v8765 = vld [vmem:[%s5212 + $0x10] sm:$0xff]
          %v8766 = vld [vmem:[%s5212 + $0x18] sm:$0xff]
          %v8767 = vld [vmem:[%s5212 + $0x20] sm:$0xff]
          %v8768 = vld [vmem:[%s5212 + $0x28] sm:$0xff]
          %v8769 = vld [vmem:[%s5212 + $0x30] sm:$0xff]
          %v8770 = vld [vmem:[%s5212 + $0x38] sm:$0xff]
          %v8771 = vld [vmem:[%s5212 + $0x40] sm:$0xff]
          %v8772 = vld [vmem:[%s5212 + $0x48] sm:$0xff]
          %v8773 = vld [vmem:[%s5212 + $0x50] sm:$0xff]
          %v8774 = vld [vmem:[%s5212 + $0x58] sm:$0xff]
          %v8775 = vld [vmem:[%s5212 + $0x60] sm:$0xff]
          %v8776 = vld [vmem:[%s5212 + $0x68] sm:$0xff]
          %v8777 = vld [vmem:[%s5212 + $0x70] sm:$0xff]
          %v8778 = vld [vmem:[%s5212 + $0x78] sm:$0xff]
          %v8779 = vld [vmem:[%s5212 + $0x80] sm:$0xff]
          %v8780 = vld [vmem:[%s5212 + $0x88] sm:$0xff]
          %v8781 = vld [vmem:[%s5212 + $0x90] sm:$0xff]
          %v8782 = vld [vmem:[%s5212 + $0x98] sm:$0xff]
          %v8783 = vld [vmem:[%s5212 + $0xa0] sm:$0xff]
          %v8784 = vld [vmem:[%s5212 + $0xa8] sm:$0xff]
          %v8785 = vld [vmem:[%s5212 + $0xb0] sm:$0xff]
          %v8786 = vld [vmem:[%s5212 + $0xb8] sm:$0xff]
          %v8787 = vld [vmem:[%s5212 + $0xc0] sm:$0xff]
          %v8788 = vld [vmem:[%s5212 + $0xc8] sm:$0xff]
          %v8789 = vld [vmem:[%s5212 + $0xd0] sm:$0xff]
          %v8790 = vld [vmem:[%s5212 + $0xd8] sm:$0xff]
          %v8791 = vld [vmem:[%s5212 + $0xe0] sm:$0xff]
          %v8792 = vld [vmem:[%s5212 + $0xe8] sm:$0xff]
          %v8793 = vld [vmem:[%s5212 + $0xf0] sm:$0xff]
          %v8794 = vld [vmem:[%s5212 + $0xf8] sm:$0xff]
          %vm8795 = vcmp.gt.f32.partialorder %v8763, 0.5
          %vm8796 = vcmp.gt.f32.partialorder %v8764, 0.5
          %vm8797 = vcmp.gt.f32.partialorder %v8765, 0.5
          %vm8798 = vcmp.gt.f32.partialorder %v8766, 0.5
          %vm8799 = vcmp.gt.f32.partialorder %v8767, 0.5
          %vm8800 = vcmp.gt.f32.partialorder %v8768, 0.5
          %vm8801 = vcmp.gt.f32.partialorder %v8769, 0.5
          %vm8802 = vcmp.gt.f32.partialorder %v8770, 0.5
          %vm8803 = vcmp.gt.f32.partialorder %v8771, 0.5
          %vm8804 = vcmp.gt.f32.partialorder %v8772, 0.5
          %vm8805 = vcmp.gt.f32.partialorder %v8773, 0.5
          %vm8806 = vcmp.gt.f32.partialorder %v8774, 0.5
          %vm8807 = vcmp.gt.f32.partialorder %v8775, 0.5
          %vm8808 = vcmp.gt.f32.partialorder %v8776, 0.5
          %vm8809 = vcmp.gt.f32.partialorder %v8777, 0.5
          %vm8810 = vcmp.gt.f32.partialorder %v8778, 0.5
          %vm8811 = vcmp.gt.f32.partialorder %v8779, 0.5
          %vm8812 = vcmp.gt.f32.partialorder %v8780, 0.5
          %vm8813 = vcmp.gt.f32.partialorder %v8781, 0.5
          %vm8814 = vcmp.gt.f32.partialorder %v8782, 0.5
          %vm8815 = vcmp.gt.f32.partialorder %v8783, 0.5
          %vm8816 = vcmp.gt.f32.partialorder %v8784, 0.5
          %vm8817 = vcmp.gt.f32.partialorder %v8785, 0.5
          %vm8818 = vcmp.gt.f32.partialorder %v8786, 0.5
          %vm8819 = vcmp.gt.f32.partialorder %v8787, 0.5
          %vm8820 = vcmp.gt.f32.partialorder %v8788, 0.5
          %vm8821 = vcmp.gt.f32.partialorder %v8789, 0.5
          %vm8822 = vcmp.gt.f32.partialorder %v8790, 0.5
          %vm8823 = vcmp.gt.f32.partialorder %v8791, 0.5
          %vm8824 = vcmp.gt.f32.partialorder %v8792, 0.5
          %vm8825 = vcmp.gt.f32.partialorder %v8793, 0.5
          %vm8826 = vcmp.gt.f32.partialorder %v8794, 0.5
          %v8827 = vsel %vm8795, 1, 0
          %v8828 = vsel %vm8796, 1, 0
          %v8829 = vsel %vm8797, 1, 0
          %v8830 = vsel %vm8798, 1, 0
          %v8831 = vsel %vm8799, 1, 0
          %v8832 = vsel %vm8800, 1, 0
          %v8833 = vsel %vm8801, 1, 0
          %v8834 = vsel %vm8802, 1, 0
          %v8835 = vsel %vm8803, 1, 0
          %v8836 = vsel %vm8804, 1, 0
          %v8837 = vsel %vm8805, 1, 0
          %v8838 = vsel %vm8806, 1, 0
          %v8839 = vsel %vm8807, 1, 0
          %v8840 = vsel %vm8808, 1, 0
          %v8841 = vsel %vm8809, 1, 0
          %v8842 = vsel %vm8810, 1, 0
          %v8843 = vsel %vm8811, 1, 0
          %v8844 = vsel %vm8812, 1, 0
          %v8845 = vsel %vm8813, 1, 0
          %v8846 = vsel %vm8814, 1, 0
          %v8847 = vsel %vm8815, 1, 0
          %v8848 = vsel %vm8816, 1, 0
          %v8849 = vsel %vm8817, 1, 0
          %v8850 = vsel %vm8818, 1, 0
          %v8851 = vsel %vm8819, 1, 0
          %v8852 = vsel %vm8820, 1, 0
          %v8853 = vsel %vm8821, 1, 0
          %v8854 = vsel %vm8822, 1, 0
          %v8855 = vsel %vm8823, 1, 0
          %v8856 = vsel %vm8824, 1, 0
          %v8857 = vsel %vm8825, 1, 0
          %v8858 = vsel %vm8826, 1, 0
          %8859 = vset.pattern.permute.xlu0 32
          %8860 = vperm.xlu0 %8859, %v8827
          %v8861 = vpop.permute.xlu0 %8860
          %8862 = vset.pattern.permute.xlu0 32
          %8863 = vperm.xlu0 %8862, %v8828
          %v8864 = vpop.permute.xlu0 %8863
          %8865 = vset.pattern.permute.xlu0 32
          %8866 = vperm.xlu0 %8865, %v8829
          %v8867 = vpop.permute.xlu0 %8866
          %8868 = vset.pattern.permute.xlu0 32
          %8869 = vperm.xlu0 %8868, %v8830
          %v8870 = vpop.permute.xlu0 %8869
          %8871 = vset.pattern.permute.xlu0 32
          %8872 = vperm.xlu0 %8871, %v8831
          %v8873 = vpop.permute.xlu0 %8872
          %8874 = vset.pattern.permute.xlu0 32
          %8875 = vperm.xlu0 %8874, %v8832
          %v8876 = vpop.permute.xlu0 %8875
          %8877 = vset.pattern.permute.xlu0 32
          %8878 = vperm.xlu0 %8877, %v8833
          %v8879 = vpop.permute.xlu0 %8878
          %8880 = vset.pattern.permute.xlu0 32
          %8881 = vperm.xlu0 %8880, %v8834
          %v8882 = vpop.permute.xlu0 %8881
          %8883 = vset.pattern.permute.xlu0 32
          %8884 = vperm.xlu0 %8883, %v8835
          %v8885 = vpop.permute.xlu0 %8884
          %8886 = vset.pattern.permute.xlu0 32
          %8887 = vperm.xlu0 %8886, %v8836
          %v8888 = vpop.permute.xlu0 %8887
          %8889 = vset.pattern.permute.xlu0 32
          %8890 = vperm.xlu0 %8889, %v8837
          %v8891 = vpop.permute.xlu0 %8890
          %8892 = vset.pattern.permute.xlu0 32
          %8893 = vperm.xlu0 %8892, %v8838
          %v8894 = vpop.permute.xlu0 %8893
          %8895 = vset.pattern.permute.xlu0 32
          %8896 = vperm.xlu0 %8895, %v8839
          %v8897 = vpop.permute.xlu0 %8896
          %8898 = vset.pattern.permute.xlu0 32
          %8899 = vperm.xlu0 %8898, %v8840
          %v8900 = vpop.permute.xlu0 %8899
          %8901 = vset.pattern.permute.xlu0 32
          %8902 = vperm.xlu0 %8901, %v8841
          %v8903 = vpop.permute.xlu0 %8902
          %8904 = vset.pattern.permute.xlu0 32
          %8905 = vperm.xlu0 %8904, %v8842
          %v8906 = vpop.permute.xlu0 %8905
          %8907 = vset.pattern.permute.xlu0 32
          %8908 = vperm.xlu0 %8907, %v8843
          %v8909 = vpop.permute.xlu0 %8908
          %8910 = vset.pattern.permute.xlu0 32
          %8911 = vperm.xlu0 %8910, %v8844
          %v8912 = vpop.permute.xlu0 %8911
          %8913 = vset.pattern.permute.xlu0 32
          %8914 = vperm.xlu0 %8913, %v8845
          %v8915 = vpop.permute.xlu0 %8914
          %8916 = vset.pattern.permute.xlu0 32
          %8917 = vperm.xlu0 %8916, %v8846
          %v8918 = vpop.permute.xlu0 %8917
          %8919 = vset.pattern.permute.xlu0 32
          %8920 = vperm.xlu0 %8919, %v8847
          %v8921 = vpop.permute.xlu0 %8920
          %8922 = vset.pattern.permute.xlu0 32
          %8923 = vperm.xlu0 %8922, %v8848
          %v8924 = vpop.permute.xlu0 %8923
          %8925 = vset.pattern.permute.xlu0 32
          %8926 = vperm.xlu0 %8925, %v8849
          %v8927 = vpop.permute.xlu0 %8926
          %8928 = vset.pattern.permute.xlu0 32
          %8929 = vperm.xlu0 %8928, %v8850
          %v8930 = vpop.permute.xlu0 %8929
          %8931 = vset.pattern.permute.xlu0 32
          %8932 = vperm.xlu0 %8931, %v8851
          %v8933 = vpop.permute.xlu0 %8932
          %8934 = vset.pattern.permute.xlu0 32
          %8935 = vperm.xlu0 %8934, %v8852
          %v8936 = vpop.permute.xlu0 %8935
          %8937 = vset.pattern.permute.xlu0 32
          %8938 = vperm.xlu0 %8937, %v8853
          %v8939 = vpop.permute.xlu0 %8938
          %8940 = vset.pattern.permute.xlu0 32
          %8941 = vperm.xlu0 %8940, %v8854
          %v8942 = vpop.permute.xlu0 %8941
          %8943 = vset.pattern.permute.xlu0 32
          %8944 = vperm.xlu0 %8943, %v8855
          %v8945 = vpop.permute.xlu0 %8944
          %8946 = vset.pattern.permute.xlu0 32
          %8947 = vperm.xlu0 %8946, %v8856
          %v8948 = vpop.permute.xlu0 %8947
          %8949 = vset.pattern.permute.xlu0 32
          %8950 = vperm.xlu0 %8949, %v8857
          %v8951 = vpop.permute.xlu0 %8950
          %8952 = vset.pattern.permute.xlu0 32
          %8953 = vperm.xlu0 %8952, %v8858
          %v8954 = vpop.permute.xlu0 %8953
          %vm8955 = vcmp.eq.s32.totalorder %v8861, 1
          %vm8956 = vcmp.eq.s32.totalorder %v8864, 1
          %vm8957 = vcmp.eq.s32.totalorder %v8867, 1
          %vm8958 = vcmp.eq.s32.totalorder %v8870, 1
          %vm8959 = vcmp.eq.s32.totalorder %v8873, 1
          %vm8960 = vcmp.eq.s32.totalorder %v8876, 1
          %vm8961 = vcmp.eq.s32.totalorder %v8879, 1
          %vm8962 = vcmp.eq.s32.totalorder %v8882, 1
          %vm8963 = vcmp.eq.s32.totalorder %v8885, 1
          %vm8964 = vcmp.eq.s32.totalorder %v8888, 1
          %vm8965 = vcmp.eq.s32.totalorder %v8891, 1
          %vm8966 = vcmp.eq.s32.totalorder %v8894, 1
          %vm8967 = vcmp.eq.s32.totalorder %v8897, 1
          %vm8968 = vcmp.eq.s32.totalorder %v8900, 1
          %vm8969 = vcmp.eq.s32.totalorder %v8903, 1
          %vm8970 = vcmp.eq.s32.totalorder %v8906, 1
          %vm8971 = vcmp.eq.s32.totalorder %v8909, 1
          %vm8972 = vcmp.eq.s32.totalorder %v8912, 1
          %vm8973 = vcmp.eq.s32.totalorder %v8915, 1
          %vm8974 = vcmp.eq.s32.totalorder %v8918, 1
          %vm8975 = vcmp.eq.s32.totalorder %v8921, 1
          %vm8976 = vcmp.eq.s32.totalorder %v8924, 1
          %vm8977 = vcmp.eq.s32.totalorder %v8927, 1
          %vm8978 = vcmp.eq.s32.totalorder %v8930, 1
          %vm8979 = vcmp.eq.s32.totalorder %v8933, 1
          %vm8980 = vcmp.eq.s32.totalorder %v8936, 1
          %vm8981 = vcmp.eq.s32.totalorder %v8939, 1
          %vm8982 = vcmp.eq.s32.totalorder %v8942, 1
          %vm8983 = vcmp.eq.s32.totalorder %v8945, 1
          %vm8984 = vcmp.eq.s32.totalorder %v8948, 1
          %vm8985 = vcmp.eq.s32.totalorder %v8951, 1
          %vm8986 = vcmp.eq.s32.totalorder %v8954, 1
          %v8987 = vsel %vm8955, %v8763, -1000.0
          %v8988 = vsel %vm8956, %v8764, -1000.0
          %v8989 = vsel %vm8957, %v8765, -1000.0
          %v8990 = vsel %vm8958, %v8766, -1000.0
          %v8991 = vsel %vm8959, %v8767, -1000.0
          %v8992 = vsel %vm8960, %v8768, -1000.0
          %v8993 = vsel %vm8961, %v8769, -1000.0
          %v8994 = vsel %vm8962, %v8770, -1000.0
          %v8995 = vsel %vm8963, %v8771, -1000.0
          %v8996 = vsel %vm8964, %v8772, -1000.0
          %v8997 = vsel %vm8965, %v8773, -1000.0
          %v8998 = vsel %vm8966, %v8774, -1000.0
          %v8999 = vsel %vm8967, %v8775, -1000.0
          %v9000 = vsel %vm8968, %v8776, -1000.0
          %v9001 = vsel %vm8969, %v8777, -1000.0
          %v9002 = vsel %vm8970, %v8778, -1000.0
          %v9003 = vsel %vm8971, %v8779, -1000.0
          %v9004 = vsel %vm8972, %v8780, -1000.0
          %v9005 = vsel %vm8973, %v8781, -1000.0
          %v9006 = vsel %vm8974, %v8782, -1000.0
          %v9007 = vsel %vm8975, %v8783, -1000.0
          %v9008 = vsel %vm8976, %v8784, -1000.0
          %v9009 = vsel %vm8977, %v8785, -1000.0
          %v9010 = vsel %vm8978, %v8786, -1000.0
          %v9011 = vsel %vm8979, %v8787, -1000.0
          %v9012 = vsel %vm8980, %v8788, -1000.0
          %v9013 = vsel %vm8981, %v8789, -1000.0
          %v9014 = vsel %vm8982, %v8790, -1000.0
          %v9015 = vsel %vm8983, %v8791, -1000.0
          %v9016 = vsel %vm8984, %v8792, -1000.0
          %v9017 = vsel %vm8985, %v8793, -1000.0
          %v9018 = vsel %vm8986, %v8794, -1000.0
          %v9019 = vmax.f32 %v8731, %v8987
          %v9020 = vmax.f32 %v8732, %v8988
          %v9021 = vmax.f32 %v8733, %v8989
          %v9022 = vmax.f32 %v8734, %v8990
          %v9023 = vmax.f32 %v8735, %v8991
          %v9024 = vmax.f32 %v8736, %v8992
          %v9025 = vmax.f32 %v8737, %v8993
          %v9026 = vmax.f32 %v8738, %v8994
          %v9027 = vmax.f32 %v8739, %v8995
          %v9028 = vmax.f32 %v8740, %v8996
          %v9029 = vmax.f32 %v8741, %v8997
          %v9030 = vmax.f32 %v8742, %v8998
          %v9031 = vmax.f32 %v8743, %v8999
          %v9032 = vmax.f32 %v8744, %v9000
          %v9033 = vmax.f32 %v8745, %v9001
          %v9034 = vmax.f32 %v8746, %v9002
          %v9035 = vmax.f32 %v8747, %v9003
          %v9036 = vmax.f32 %v8748, %v9004
          %v9037 = vmax.f32 %v8749, %v9005
          %v9038 = vmax.f32 %v8750, %v9006
          %v9039 = vmax.f32 %v8751, %v9007
          %v9040 = vmax.f32 %v8752, %v9008
          %v9041 = vmax.f32 %v8753, %v9009
          %v9042 = vmax.f32 %v8754, %v9010
          %v9043 = vmax.f32 %v8755, %v9011
          %v9044 = vmax.f32 %v8756, %v9012
          %v9045 = vmax.f32 %v8757, %v9013
          %v9046 = vmax.f32 %v8758, %v9014
          %v9047 = vmax.f32 %v8759, %v9015
          %v9048 = vmax.f32 %v8760, %v9016
          %v9049 = vmax.f32 %v8761, %v9017
          %v9050 = vmax.f32 %v8762, %v9018
          %v9051 = vld [vmem:[%s6064] sm:$0xff]
          %v9052 = vld [vmem:[%s6064 + $0x8] sm:$0xff]
          %v9053 = vld [vmem:[%s6064 + $0x10] sm:$0xff]
          %v9054 = vld [vmem:[%s6064 + $0x18] sm:$0xff]
          %v9055 = vld [vmem:[%s6064 + $0x20] sm:$0xff]
          %v9056 = vld [vmem:[%s6064 + $0x28] sm:$0xff]
          %v9057 = vld [vmem:[%s6064 + $0x30] sm:$0xff]
          %v9058 = vld [vmem:[%s6064 + $0x38] sm:$0xff]
          %v9059 = vld [vmem:[%s6064 + $0x40] sm:$0xff]
          %v9060 = vld [vmem:[%s6064 + $0x48] sm:$0xff]
          %v9061 = vld [vmem:[%s6064 + $0x50] sm:$0xff]
          %v9062 = vld [vmem:[%s6064 + $0x58] sm:$0xff]
          %v9063 = vld [vmem:[%s6064 + $0x60] sm:$0xff]
          %v9064 = vld [vmem:[%s6064 + $0x68] sm:$0xff]
          %v9065 = vld [vmem:[%s6064 + $0x70] sm:$0xff]
          %v9066 = vld [vmem:[%s6064 + $0x78] sm:$0xff]
          %v9067 = vld [vmem:[%s6064 + $0x80] sm:$0xff]
          %v9068 = vld [vmem:[%s6064 + $0x88] sm:$0xff]
          %v9069 = vld [vmem:[%s6064 + $0x90] sm:$0xff]
          %v9070 = vld [vmem:[%s6064 + $0x98] sm:$0xff]
          %v9071 = vld [vmem:[%s6064 + $0xa0] sm:$0xff]
          %v9072 = vld [vmem:[%s6064 + $0xa8] sm:$0xff]
          %v9073 = vld [vmem:[%s6064 + $0xb0] sm:$0xff]
          %v9074 = vld [vmem:[%s6064 + $0xb8] sm:$0xff]
          %v9075 = vld [vmem:[%s6064 + $0xc0] sm:$0xff]
          %v9076 = vld [vmem:[%s6064 + $0xc8] sm:$0xff]
          %v9077 = vld [vmem:[%s6064 + $0xd0] sm:$0xff]
          %v9078 = vld [vmem:[%s6064 + $0xd8] sm:$0xff]
          %v9079 = vld [vmem:[%s6064 + $0xe0] sm:$0xff]
          %v9080 = vld [vmem:[%s6064 + $0xe8] sm:$0xff]
          %v9081 = vld [vmem:[%s6064 + $0xf0] sm:$0xff]
          %v9082 = vld [vmem:[%s6064 + $0xf8] sm:$0xff]
          %vm9083 = vcmp.gt.f32.partialorder %v9051, 0.5
          %vm9084 = vcmp.gt.f32.partialorder %v9052, 0.5
          %vm9085 = vcmp.gt.f32.partialorder %v9053, 0.5
          %vm9086 = vcmp.gt.f32.partialorder %v9054, 0.5
          %vm9087 = vcmp.gt.f32.partialorder %v9055, 0.5
          %vm9088 = vcmp.gt.f32.partialorder %v9056, 0.5
          %vm9089 = vcmp.gt.f32.partialorder %v9057, 0.5
          %vm9090 = vcmp.gt.f32.partialorder %v9058, 0.5
          %vm9091 = vcmp.gt.f32.partialorder %v9059, 0.5
          %vm9092 = vcmp.gt.f32.partialorder %v9060, 0.5
          %vm9093 = vcmp.gt.f32.partialorder %v9061, 0.5
          %vm9094 = vcmp.gt.f32.partialorder %v9062, 0.5
          %vm9095 = vcmp.gt.f32.partialorder %v9063, 0.5
          %vm9096 = vcmp.gt.f32.partialorder %v9064, 0.5
          %vm9097 = vcmp.gt.f32.partialorder %v9065, 0.5
          %vm9098 = vcmp.gt.f32.partialorder %v9066, 0.5
          %vm9099 = vcmp.gt.f32.partialorder %v9067, 0.5
          %vm9100 = vcmp.gt.f32.partialorder %v9068, 0.5
          %vm9101 = vcmp.gt.f32.partialorder %v9069, 0.5
          %vm9102 = vcmp.gt.f32.partialorder %v9070, 0.5
          %vm9103 = vcmp.gt.f32.partialorder %v9071, 0.5
          %vm9104 = vcmp.gt.f32.partialorder %v9072, 0.5
          %vm9105 = vcmp.gt.f32.partialorder %v9073, 0.5
          %vm9106 = vcmp.gt.f32.partialorder %v9074, 0.5
          %vm9107 = vcmp.gt.f32.partialorder %v9075, 0.5
          %vm9108 = vcmp.gt.f32.partialorder %v9076, 0.5
          %vm9109 = vcmp.gt.f32.partialorder %v9077, 0.5
          %vm9110 = vcmp.gt.f32.partialorder %v9078, 0.5
          %vm9111 = vcmp.gt.f32.partialorder %v9079, 0.5
          %vm9112 = vcmp.gt.f32.partialorder %v9080, 0.5
          %vm9113 = vcmp.gt.f32.partialorder %v9081, 0.5
          %vm9114 = vcmp.gt.f32.partialorder %v9082, 0.5
          %v9115 = vsel %vm9083, 1, 0
          %v9116 = vsel %vm9084, 1, 0
          %v9117 = vsel %vm9085, 1, 0
          %v9118 = vsel %vm9086, 1, 0
          %v9119 = vsel %vm9087, 1, 0
          %v9120 = vsel %vm9088, 1, 0
          %v9121 = vsel %vm9089, 1, 0
          %v9122 = vsel %vm9090, 1, 0
          %v9123 = vsel %vm9091, 1, 0
          %v9124 = vsel %vm9092, 1, 0
          %v9125 = vsel %vm9093, 1, 0
          %v9126 = vsel %vm9094, 1, 0
          %v9127 = vsel %vm9095, 1, 0
          %v9128 = vsel %vm9096, 1, 0
          %v9129 = vsel %vm9097, 1, 0
          %v9130 = vsel %vm9098, 1, 0
          %v9131 = vsel %vm9099, 1, 0
          %v9132 = vsel %vm9100, 1, 0
          %v9133 = vsel %vm9101, 1, 0
          %v9134 = vsel %vm9102, 1, 0
          %v9135 = vsel %vm9103, 1, 0
          %v9136 = vsel %vm9104, 1, 0
          %v9137 = vsel %vm9105, 1, 0
          %v9138 = vsel %vm9106, 1, 0
          %v9139 = vsel %vm9107, 1, 0
          %v9140 = vsel %vm9108, 1, 0
          %v9141 = vsel %vm9109, 1, 0
          %v9142 = vsel %vm9110, 1, 0
          %v9143 = vsel %vm9111, 1, 0
          %v9144 = vsel %vm9112, 1, 0
          %v9145 = vsel %vm9113, 1, 0
          %v9146 = vsel %vm9114, 1, 0
          %9147 = vset.pattern.permute.xlu0 32
          %9148 = vperm.xlu0 %9147, %v9115
          %v9149 = vpop.permute.xlu0 %9148
          %9150 = vset.pattern.permute.xlu0 32
          %9151 = vperm.xlu0 %9150, %v9116
          %v9152 = vpop.permute.xlu0 %9151
          %9153 = vset.pattern.permute.xlu0 32
          %9154 = vperm.xlu0 %9153, %v9117
          %v9155 = vpop.permute.xlu0 %9154
          %9156 = vset.pattern.permute.xlu0 32
          %9157 = vperm.xlu0 %9156, %v9118
          %v9158 = vpop.permute.xlu0 %9157
          %9159 = vset.pattern.permute.xlu0 32
          %9160 = vperm.xlu0 %9159, %v9119
          %v9161 = vpop.permute.xlu0 %9160
          %9162 = vset.pattern.permute.xlu0 32
          %9163 = vperm.xlu0 %9162, %v9120
          %v9164 = vpop.permute.xlu0 %9163
          %9165 = vset.pattern.permute.xlu0 32
          %9166 = vperm.xlu0 %9165, %v9121
          %v9167 = vpop.permute.xlu0 %9166
          %9168 = vset.pattern.permute.xlu0 32
          %9169 = vperm.xlu0 %9168, %v9122
          %v9170 = vpop.permute.xlu0 %9169
          %9171 = vset.pattern.permute.xlu0 32
          %9172 = vperm.xlu0 %9171, %v9123
          %v9173 = vpop.permute.xlu0 %9172
          %9174 = vset.pattern.permute.xlu0 32
          %9175 = vperm.xlu0 %9174, %v9124
          %v9176 = vpop.permute.xlu0 %9175
          %9177 = vset.pattern.permute.xlu0 32
          %9178 = vperm.xlu0 %9177, %v9125
          %v9179 = vpop.permute.xlu0 %9178
          %9180 = vset.pattern.permute.xlu0 32
          %9181 = vperm.xlu0 %9180, %v9126
          %v9182 = vpop.permute.xlu0 %9181
          %9183 = vset.pattern.permute.xlu0 32
          %9184 = vperm.xlu0 %9183, %v9127
          %v9185 = vpop.permute.xlu0 %9184
          %9186 = vset.pattern.permute.xlu0 32
          %9187 = vperm.xlu0 %9186, %v9128
          %v9188 = vpop.permute.xlu0 %9187
          %9189 = vset.pattern.permute.xlu0 32
          %9190 = vperm.xlu0 %9189, %v9129
          %v9191 = vpop.permute.xlu0 %9190
          %9192 = vset.pattern.permute.xlu0 32
          %9193 = vperm.xlu0 %9192, %v9130
          %v9194 = vpop.permute.xlu0 %9193
          %9195 = vset.pattern.permute.xlu0 32
          %9196 = vperm.xlu0 %9195, %v9131
          %v9197 = vpop.permute.xlu0 %9196
          %9198 = vset.pattern.permute.xlu0 32
          %9199 = vperm.xlu0 %9198, %v9132
          %v9200 = vpop.permute.xlu0 %9199
          %9201 = vset.pattern.permute.xlu0 32
          %9202 = vperm.xlu0 %9201, %v9133
          %v9203 = vpop.permute.xlu0 %9202
          %9204 = vset.pattern.permute.xlu0 32
          %9205 = vperm.xlu0 %9204, %v9134
          %v9206 = vpop.permute.xlu0 %9205
          %9207 = vset.pattern.permute.xlu0 32
          %9208 = vperm.xlu0 %9207, %v9135
          %v9209 = vpop.permute.xlu0 %9208
          %9210 = vset.pattern.permute.xlu0 32
          %9211 = vperm.xlu0 %9210, %v9136
          %v9212 = vpop.permute.xlu0 %9211
          %9213 = vset.pattern.permute.xlu0 32
          %9214 = vperm.xlu0 %9213, %v9137
          %v9215 = vpop.permute.xlu0 %9214
          %9216 = vset.pattern.permute.xlu0 32
          %9217 = vperm.xlu0 %9216, %v9138
          %v9218 = vpop.permute.xlu0 %9217
          %9219 = vset.pattern.permute.xlu0 32
          %9220 = vperm.xlu0 %9219, %v9139
          %v9221 = vpop.permute.xlu0 %9220
          %9222 = vset.pattern.permute.xlu0 32
          %9223 = vperm.xlu0 %9222, %v9140
          %v9224 = vpop.permute.xlu0 %9223
          %9225 = vset.pattern.permute.xlu0 32
          %9226 = vperm.xlu0 %9225, %v9141
          %v9227 = vpop.permute.xlu0 %9226
          %9228 = vset.pattern.permute.xlu0 32
          %9229 = vperm.xlu0 %9228, %v9142
          %v9230 = vpop.permute.xlu0 %9229
          %9231 = vset.pattern.permute.xlu0 32
          %9232 = vperm.xlu0 %9231, %v9143
          %v9233 = vpop.permute.xlu0 %9232
          %9234 = vset.pattern.permute.xlu0 32
          %9235 = vperm.xlu0 %9234, %v9144
          %v9236 = vpop.permute.xlu0 %9235
          %9237 = vset.pattern.permute.xlu0 32
          %9238 = vperm.xlu0 %9237, %v9145
          %v9239 = vpop.permute.xlu0 %9238
          %9240 = vset.pattern.permute.xlu0 32
          %9241 = vperm.xlu0 %9240, %v9146
          %v9242 = vpop.permute.xlu0 %9241
          %vm9243 = vcmp.eq.s32.totalorder %v9149, 1
          %vm9244 = vcmp.eq.s32.totalorder %v9152, 1
          %vm9245 = vcmp.eq.s32.totalorder %v9155, 1
          %vm9246 = vcmp.eq.s32.totalorder %v9158, 1
          %vm9247 = vcmp.eq.s32.totalorder %v9161, 1
          %vm9248 = vcmp.eq.s32.totalorder %v9164, 1
          %vm9249 = vcmp.eq.s32.totalorder %v9167, 1
          %vm9250 = vcmp.eq.s32.totalorder %v9170, 1
          %vm9251 = vcmp.eq.s32.totalorder %v9173, 1
          %vm9252 = vcmp.eq.s32.totalorder %v9176, 1
          %vm9253 = vcmp.eq.s32.totalorder %v9179, 1
          %vm9254 = vcmp.eq.s32.totalorder %v9182, 1
          %vm9255 = vcmp.eq.s32.totalorder %v9185, 1
          %vm9256 = vcmp.eq.s32.totalorder %v9188, 1
          %vm9257 = vcmp.eq.s32.totalorder %v9191, 1
          %vm9258 = vcmp.eq.s32.totalorder %v9194, 1
          %vm9259 = vcmp.eq.s32.totalorder %v9197, 1
          %vm9260 = vcmp.eq.s32.totalorder %v9200, 1
          %vm9261 = vcmp.eq.s32.totalorder %v9203, 1
          %vm9262 = vcmp.eq.s32.totalorder %v9206, 1
          %vm9263 = vcmp.eq.s32.totalorder %v9209, 1
          %vm9264 = vcmp.eq.s32.totalorder %v9212, 1
          %vm9265 = vcmp.eq.s32.totalorder %v9215, 1
          %vm9266 = vcmp.eq.s32.totalorder %v9218, 1
          %vm9267 = vcmp.eq.s32.totalorder %v9221, 1
          %vm9268 = vcmp.eq.s32.totalorder %v9224, 1
          %vm9269 = vcmp.eq.s32.totalorder %v9227, 1
          %vm9270 = vcmp.eq.s32.totalorder %v9230, 1
          %vm9271 = vcmp.eq.s32.totalorder %v9233, 1
          %vm9272 = vcmp.eq.s32.totalorder %v9236, 1
          %vm9273 = vcmp.eq.s32.totalorder %v9239, 1
          %vm9274 = vcmp.eq.s32.totalorder %v9242, 1
          %v9275 = vsel %vm9243, %v9051, -1000.0
          %v9276 = vsel %vm9244, %v9052, -1000.0
          %v9277 = vsel %vm9245, %v9053, -1000.0
          %v9278 = vsel %vm9246, %v9054, -1000.0
          %v9279 = vsel %vm9247, %v9055, -1000.0
          %v9280 = vsel %vm9248, %v9056, -1000.0
          %v9281 = vsel %vm9249, %v9057, -1000.0
          %v9282 = vsel %vm9250, %v9058, -1000.0
          %v9283 = vsel %vm9251, %v9059, -1000.0
          %v9284 = vsel %vm9252, %v9060, -1000.0
          %v9285 = vsel %vm9253, %v9061, -1000.0
          %v9286 = vsel %vm9254, %v9062, -1000.0
          %v9287 = vsel %vm9255, %v9063, -1000.0
          %v9288 = vsel %vm9256, %v9064, -1000.0
          %v9289 = vsel %vm9257, %v9065, -1000.0
          %v9290 = vsel %vm9258, %v9066, -1000.0
          %v9291 = vsel %vm9259, %v9067, -1000.0
          %v9292 = vsel %vm9260, %v9068, -1000.0
          %v9293 = vsel %vm9261, %v9069, -1000.0
          %v9294 = vsel %vm9262, %v9070, -1000.0
          %v9295 = vsel %vm9263, %v9071, -1000.0
          %v9296 = vsel %vm9264, %v9072, -1000.0
          %v9297 = vsel %vm9265, %v9073, -1000.0
          %v9298 = vsel %vm9266, %v9074, -1000.0
          %v9299 = vsel %vm9267, %v9075, -1000.0
          %v9300 = vsel %vm9268, %v9076, -1000.0
          %v9301 = vsel %vm9269, %v9077, -1000.0
          %v9302 = vsel %vm9270, %v9078, -1000.0
          %v9303 = vsel %vm9271, %v9079, -1000.0
          %v9304 = vsel %vm9272, %v9080, -1000.0
          %v9305 = vsel %vm9273, %v9081, -1000.0
          %v9306 = vsel %vm9274, %v9082, -1000.0
          %v9307 = vmax.f32 %v9019, %v9275
          %v9308 = vmax.f32 %v9020, %v9276
          %v9309 = vmax.f32 %v9021, %v9277
          %v9310 = vmax.f32 %v9022, %v9278
          %v9311 = vmax.f32 %v9023, %v9279
          %v9312 = vmax.f32 %v9024, %v9280
          %v9313 = vmax.f32 %v9025, %v9281
          %v9314 = vmax.f32 %v9026, %v9282
          %v9315 = vmax.f32 %v9027, %v9283
          %v9316 = vmax.f32 %v9028, %v9284
          %v9317 = vmax.f32 %v9029, %v9285
          %v9318 = vmax.f32 %v9030, %v9286
          %v9319 = vmax.f32 %v9031, %v9287
          %v9320 = vmax.f32 %v9032, %v9288
          %v9321 = vmax.f32 %v9033, %v9289
          %v9322 = vmax.f32 %v9034, %v9290
          %v9323 = vmax.f32 %v9035, %v9291
          %v9324 = vmax.f32 %v9036, %v9292
          %v9325 = vmax.f32 %v9037, %v9293
          %v9326 = vmax.f32 %v9038, %v9294
          %v9327 = vmax.f32 %v9039, %v9295
          %v9328 = vmax.f32 %v9040, %v9296
          %v9329 = vmax.f32 %v9041, %v9297
          %v9330 = vmax.f32 %v9042, %v9298
          %v9331 = vmax.f32 %v9043, %v9299
          %v9332 = vmax.f32 %v9044, %v9300
          %v9333 = vmax.f32 %v9045, %v9301
          %v9334 = vmax.f32 %v9046, %v9302
          %v9335 = vmax.f32 %v9047, %v9303
          %v9336 = vmax.f32 %v9048, %v9304
          %v9337 = vmax.f32 %v9049, %v9305
          %v9338 = vmax.f32 %v9050, %v9306
          %v9339 = vld [vmem:[%s6916] sm:$0xff]
          %v9340 = vld [vmem:[%s6916 + $0x8] sm:$0xff]
          %v9341 = vld [vmem:[%s6916 + $0x10] sm:$0xff]
          %v9342 = vld [vmem:[%s6916 + $0x18] sm:$0xff]
          %v9343 = vld [vmem:[%s6916 + $0x20] sm:$0xff]
          %v9344 = vld [vmem:[%s6916 + $0x28] sm:$0xff]
          %v9345 = vld [vmem:[%s6916 + $0x30] sm:$0xff]
          %v9346 = vld [vmem:[%s6916 + $0x38] sm:$0xff]
          %v9347 = vld [vmem:[%s6916 + $0x40] sm:$0xff]
          %v9348 = vld [vmem:[%s6916 + $0x48] sm:$0xff]
          %v9349 = vld [vmem:[%s6916 + $0x50] sm:$0xff]
          %v9350 = vld [vmem:[%s6916 + $0x58] sm:$0xff]
          %v9351 = vld [vmem:[%s6916 + $0x60] sm:$0xff]
          %v9352 = vld [vmem:[%s6916 + $0x68] sm:$0xff]
          %v9353 = vld [vmem:[%s6916 + $0x70] sm:$0xff]
          %v9354 = vld [vmem:[%s6916 + $0x78] sm:$0xff]
          %v9355 = vld [vmem:[%s6916 + $0x80] sm:$0xff]
          %v9356 = vld [vmem:[%s6916 + $0x88] sm:$0xff]
          %v9357 = vld [vmem:[%s6916 + $0x90] sm:$0xff]
          %v9358 = vld [vmem:[%s6916 + $0x98] sm:$0xff]
          %v9359 = vld [vmem:[%s6916 + $0xa0] sm:$0xff]
          %v9360 = vld [vmem:[%s6916 + $0xa8] sm:$0xff]
          %v9361 = vld [vmem:[%s6916 + $0xb0] sm:$0xff]
          %v9362 = vld [vmem:[%s6916 + $0xb8] sm:$0xff]
          %v9363 = vld [vmem:[%s6916 + $0xc0] sm:$0xff]
          %v9364 = vld [vmem:[%s6916 + $0xc8] sm:$0xff]
          %v9365 = vld [vmem:[%s6916 + $0xd0] sm:$0xff]
          %v9366 = vld [vmem:[%s6916 + $0xd8] sm:$0xff]
          %v9367 = vld [vmem:[%s6916 + $0xe0] sm:$0xff]
          %v9368 = vld [vmem:[%s6916 + $0xe8] sm:$0xff]
          %v9369 = vld [vmem:[%s6916 + $0xf0] sm:$0xff]
          %v9370 = vld [vmem:[%s6916 + $0xf8] sm:$0xff]
          %vm9371 = vcmp.gt.f32.partialorder %v9339, 0.5
          %vm9372 = vcmp.gt.f32.partialorder %v9340, 0.5
          %vm9373 = vcmp.gt.f32.partialorder %v9341, 0.5
          %vm9374 = vcmp.gt.f32.partialorder %v9342, 0.5
          %vm9375 = vcmp.gt.f32.partialorder %v9343, 0.5
          %vm9376 = vcmp.gt.f32.partialorder %v9344, 0.5
          %vm9377 = vcmp.gt.f32.partialorder %v9345, 0.5
          %vm9378 = vcmp.gt.f32.partialorder %v9346, 0.5
          %vm9379 = vcmp.gt.f32.partialorder %v9347, 0.5
          %vm9380 = vcmp.gt.f32.partialorder %v9348, 0.5
          %vm9381 = vcmp.gt.f32.partialorder %v9349, 0.5
          %vm9382 = vcmp.gt.f32.partialorder %v9350, 0.5
          %vm9383 = vcmp.gt.f32.partialorder %v9351, 0.5
          %vm9384 = vcmp.gt.f32.partialorder %v9352, 0.5
          %vm9385 = vcmp.gt.f32.partialorder %v9353, 0.5
          %vm9386 = vcmp.gt.f32.partialorder %v9354, 0.5
          %vm9387 = vcmp.gt.f32.partialorder %v9355, 0.5
          %vm9388 = vcmp.gt.f32.partialorder %v9356, 0.5
          %vm9389 = vcmp.gt.f32.partialorder %v9357, 0.5
          %vm9390 = vcmp.gt.f32.partialorder %v9358, 0.5
          %vm9391 = vcmp.gt.f32.partialorder %v9359, 0.5
          %vm9392 = vcmp.gt.f32.partialorder %v9360, 0.5
          %vm9393 = vcmp.gt.f32.partialorder %v9361, 0.5
          %vm9394 = vcmp.gt.f32.partialorder %v9362, 0.5
          %vm9395 = vcmp.gt.f32.partialorder %v9363, 0.5
          %vm9396 = vcmp.gt.f32.partialorder %v9364, 0.5
          %vm9397 = vcmp.gt.f32.partialorder %v9365, 0.5
          %vm9398 = vcmp.gt.f32.partialorder %v9366, 0.5
          %vm9399 = vcmp.gt.f32.partialorder %v9367, 0.5
          %vm9400 = vcmp.gt.f32.partialorder %v9368, 0.5
          %vm9401 = vcmp.gt.f32.partialorder %v9369, 0.5
          %vm9402 = vcmp.gt.f32.partialorder %v9370, 0.5
          %v9403 = vsel %vm9371, 1, 0
          %v9404 = vsel %vm9372, 1, 0
          %v9405 = vsel %vm9373, 1, 0
          %v9406 = vsel %vm9374, 1, 0
          %v9407 = vsel %vm9375, 1, 0
          %v9408 = vsel %vm9376, 1, 0
          %v9409 = vsel %vm9377, 1, 0
          %v9410 = vsel %vm9378, 1, 0
          %v9411 = vsel %vm9379, 1, 0
          %v9412 = vsel %vm9380, 1, 0
          %v9413 = vsel %vm9381, 1, 0
          %v9414 = vsel %vm9382, 1, 0
          %v9415 = vsel %vm9383, 1, 0
          %v9416 = vsel %vm9384, 1, 0
          %v9417 = vsel %vm9385, 1, 0
          %v9418 = vsel %vm9386, 1, 0
          %v9419 = vsel %vm9387, 1, 0
          %v9420 = vsel %vm9388, 1, 0
          %v9421 = vsel %vm9389, 1, 0
          %v9422 = vsel %vm9390, 1, 0
          %v9423 = vsel %vm9391, 1, 0
          %v9424 = vsel %vm9392, 1, 0
          %v9425 = vsel %vm9393, 1, 0
          %v9426 = vsel %vm9394, 1, 0
          %v9427 = vsel %vm9395, 1, 0
          %v9428 = vsel %vm9396, 1, 0
          %v9429 = vsel %vm9397, 1, 0
          %v9430 = vsel %vm9398, 1, 0
          %v9431 = vsel %vm9399, 1, 0
          %v9432 = vsel %vm9400, 1, 0
          %v9433 = vsel %vm9401, 1, 0
          %v9434 = vsel %vm9402, 1, 0
          %9435 = vset.pattern.permute.xlu0 32
          %9436 = vperm.xlu0 %9435, %v9403
          %v9437 = vpop.permute.xlu0 %9436
          %9438 = vset.pattern.permute.xlu0 32
          %9439 = vperm.xlu0 %9438, %v9404
          %v9440 = vpop.permute.xlu0 %9439
          %9441 = vset.pattern.permute.xlu0 32
          %9442 = vperm.xlu0 %9441, %v9405
          %v9443 = vpop.permute.xlu0 %9442
          %9444 = vset.pattern.permute.xlu0 32
          %9445 = vperm.xlu0 %9444, %v9406
          %v9446 = vpop.permute.xlu0 %9445
          %9447 = vset.pattern.permute.xlu0 32
          %9448 = vperm.xlu0 %9447, %v9407
          %v9449 = vpop.permute.xlu0 %9448
          %9450 = vset.pattern.permute.xlu0 32
          %9451 = vperm.xlu0 %9450, %v9408
          %v9452 = vpop.permute.xlu0 %9451
          %9453 = vset.pattern.permute.xlu0 32
          %9454 = vperm.xlu0 %9453, %v9409
          %v9455 = vpop.permute.xlu0 %9454
          %9456 = vset.pattern.permute.xlu0 32
          %9457 = vperm.xlu0 %9456, %v9410
          %v9458 = vpop.permute.xlu0 %9457
          %9459 = vset.pattern.permute.xlu0 32
          %9460 = vperm.xlu0 %9459, %v9411
          %v9461 = vpop.permute.xlu0 %9460
          %9462 = vset.pattern.permute.xlu0 32
          %9463 = vperm.xlu0 %9462, %v9412
          %v9464 = vpop.permute.xlu0 %9463
          %9465 = vset.pattern.permute.xlu0 32
          %9466 = vperm.xlu0 %9465, %v9413
          %v9467 = vpop.permute.xlu0 %9466
          %9468 = vset.pattern.permute.xlu0 32
          %9469 = vperm.xlu0 %9468, %v9414
          %v9470 = vpop.permute.xlu0 %9469
          %9471 = vset.pattern.permute.xlu0 32
          %9472 = vperm.xlu0 %9471, %v9415
          %v9473 = vpop.permute.xlu0 %9472
          %9474 = vset.pattern.permute.xlu0 32
          %9475 = vperm.xlu0 %9474, %v9416
          %v9476 = vpop.permute.xlu0 %9475
          %9477 = vset.pattern.permute.xlu0 32
          %9478 = vperm.xlu0 %9477, %v9417
          %v9479 = vpop.permute.xlu0 %9478
          %9480 = vset.pattern.permute.xlu0 32
          %9481 = vperm.xlu0 %9480, %v9418
          %v9482 = vpop.permute.xlu0 %9481
          %9483 = vset.pattern.permute.xlu0 32
          %9484 = vperm.xlu0 %9483, %v9419
          %v9485 = vpop.permute.xlu0 %9484
          %9486 = vset.pattern.permute.xlu0 32
          %9487 = vperm.xlu0 %9486, %v9420
          %v9488 = vpop.permute.xlu0 %9487
          %9489 = vset.pattern.permute.xlu0 32
          %9490 = vperm.xlu0 %9489, %v9421
          %v9491 = vpop.permute.xlu0 %9490
          %9492 = vset.pattern.permute.xlu0 32
          %9493 = vperm.xlu0 %9492, %v9422
          %v9494 = vpop.permute.xlu0 %9493
          %9495 = vset.pattern.permute.xlu0 32
          %9496 = vperm.xlu0 %9495, %v9423
          %v9497 = vpop.permute.xlu0 %9496
          %9498 = vset.pattern.permute.xlu0 32
          %9499 = vperm.xlu0 %9498, %v9424
          %v9500 = vpop.permute.xlu0 %9499
          %9501 = vset.pattern.permute.xlu0 32
          %9502 = vperm.xlu0 %9501, %v9425
          %v9503 = vpop.permute.xlu0 %9502
          %9504 = vset.pattern.permute.xlu0 32
          %9505 = vperm.xlu0 %9504, %v9426
          %v9506 = vpop.permute.xlu0 %9505
          %9507 = vset.pattern.permute.xlu0 32
          %9508 = vperm.xlu0 %9507, %v9427
          %v9509 = vpop.permute.xlu0 %9508
          %9510 = vset.pattern.permute.xlu0 32
          %9511 = vperm.xlu0 %9510, %v9428
          %v9512 = vpop.permute.xlu0 %9511
          %9513 = vset.pattern.permute.xlu0 32
          %9514 = vperm.xlu0 %9513, %v9429
          %v9515 = vpop.permute.xlu0 %9514
          %9516 = vset.pattern.permute.xlu0 32
          %9517 = vperm.xlu0 %9516, %v9430
          %v9518 = vpop.permute.xlu0 %9517
          %9519 = vset.pattern.permute.xlu0 32
          %9520 = vperm.xlu0 %9519, %v9431
          %v9521 = vpop.permute.xlu0 %9520
          %9522 = vset.pattern.permute.xlu0 32
          %9523 = vperm.xlu0 %9522, %v9432
          %v9524 = vpop.permute.xlu0 %9523
          %9525 = vset.pattern.permute.xlu0 32
          %9526 = vperm.xlu0 %9525, %v9433
          %v9527 = vpop.permute.xlu0 %9526
          %9528 = vset.pattern.permute.xlu0 32
          %9529 = vperm.xlu0 %9528, %v9434
          %v9530 = vpop.permute.xlu0 %9529
          %vm9531 = vcmp.eq.s32.totalorder %v9437, 1
          %vm9532 = vcmp.eq.s32.totalorder %v9440, 1
          %vm9533 = vcmp.eq.s32.totalorder %v9443, 1
          %vm9534 = vcmp.eq.s32.totalorder %v9446, 1
          %vm9535 = vcmp.eq.s32.totalorder %v9449, 1
          %vm9536 = vcmp.eq.s32.totalorder %v9452, 1
          %vm9537 = vcmp.eq.s32.totalorder %v9455, 1
          %vm9538 = vcmp.eq.s32.totalorder %v9458, 1
          %vm9539 = vcmp.eq.s32.totalorder %v9461, 1
          %vm9540 = vcmp.eq.s32.totalorder %v9464, 1
          %vm9541 = vcmp.eq.s32.totalorder %v9467, 1
          %vm9542 = vcmp.eq.s32.totalorder %v9470, 1
          %vm9543 = vcmp.eq.s32.totalorder %v9473, 1
          %vm9544 = vcmp.eq.s32.totalorder %v9476, 1
          %vm9545 = vcmp.eq.s32.totalorder %v9479, 1
          %vm9546 = vcmp.eq.s32.totalorder %v9482, 1
          %vm9547 = vcmp.eq.s32.totalorder %v9485, 1
          %vm9548 = vcmp.eq.s32.totalorder %v9488, 1
          %vm9549 = vcmp.eq.s32.totalorder %v9491, 1
          %vm9550 = vcmp.eq.s32.totalorder %v9494, 1
          %vm9551 = vcmp.eq.s32.totalorder %v9497, 1
          %vm9552 = vcmp.eq.s32.totalorder %v9500, 1
          %vm9553 = vcmp.eq.s32.totalorder %v9503, 1
          %vm9554 = vcmp.eq.s32.totalorder %v9506, 1
          %vm9555 = vcmp.eq.s32.totalorder %v9509, 1
          %vm9556 = vcmp.eq.s32.totalorder %v9512, 1
          %vm9557 = vcmp.eq.s32.totalorder %v9515, 1
          %vm9558 = vcmp.eq.s32.totalorder %v9518, 1
          %vm9559 = vcmp.eq.s32.totalorder %v9521, 1
          %vm9560 = vcmp.eq.s32.totalorder %v9524, 1
          %vm9561 = vcmp.eq.s32.totalorder %v9527, 1
          %vm9562 = vcmp.eq.s32.totalorder %v9530, 1
          %v9563 = vsel %vm9531, %v9339, -1000.0
          %v9564 = vsel %vm9532, %v9340, -1000.0
          %v9565 = vsel %vm9533, %v9341, -1000.0
          %v9566 = vsel %vm9534, %v9342, -1000.0
          %v9567 = vsel %vm9535, %v9343, -1000.0
          %v9568 = vsel %vm9536, %v9344, -1000.0
          %v9569 = vsel %vm9537, %v9345, -1000.0
          %v9570 = vsel %vm9538, %v9346, -1000.0
          %v9571 = vsel %vm9539, %v9347, -1000.0
          %v9572 = vsel %vm9540, %v9348, -1000.0
          %v9573 = vsel %vm9541, %v9349, -1000.0
          %v9574 = vsel %vm9542, %v9350, -1000.0
          %v9575 = vsel %vm9543, %v9351, -1000.0
          %v9576 = vsel %vm9544, %v9352, -1000.0
          %v9577 = vsel %vm9545, %v9353, -1000.0
          %v9578 = vsel %vm9546, %v9354, -1000.0
          %v9579 = vsel %vm9547, %v9355, -1000.0
          %v9580 = vsel %vm9548, %v9356, -1000.0
          %v9581 = vsel %vm9549, %v9357, -1000.0
          %v9582 = vsel %vm9550, %v9358, -1000.0
          %v9583 = vsel %vm9551, %v9359, -1000.0
          %v9584 = vsel %vm9552, %v9360, -1000.0
          %v9585 = vsel %vm9553, %v9361, -1000.0
          %v9586 = vsel %vm9554, %v9362, -1000.0
          %v9587 = vsel %vm9555, %v9363, -1000.0
          %v9588 = vsel %vm9556, %v9364, -1000.0
          %v9589 = vsel %vm9557, %v9365, -1000.0
          %v9590 = vsel %vm9558, %v9366, -1000.0
          %v9591 = vsel %vm9559, %v9367, -1000.0
          %v9592 = vsel %vm9560, %v9368, -1000.0
          %v9593 = vsel %vm9561, %v9369, -1000.0
          %v9594 = vsel %vm9562, %v9370, -1000.0
          %v9595 = vmax.f32 %v9307, %v9563
          %v9596 = vmax.f32 %v9308, %v9564
          %v9597 = vmax.f32 %v9309, %v9565
          %v9598 = vmax.f32 %v9310, %v9566
          %v9599 = vmax.f32 %v9311, %v9567
          %v9600 = vmax.f32 %v9312, %v9568
          %v9601 = vmax.f32 %v9313, %v9569
          %v9602 = vmax.f32 %v9314, %v9570
          %v9603 = vmax.f32 %v9315, %v9571
          %v9604 = vmax.f32 %v9316, %v9572
          %v9605 = vmax.f32 %v9317, %v9573
          %v9606 = vmax.f32 %v9318, %v9574
          %v9607 = vmax.f32 %v9319, %v9575
          %v9608 = vmax.f32 %v9320, %v9576
          %v9609 = vmax.f32 %v9321, %v9577
          %v9610 = vmax.f32 %v9322, %v9578
          %v9611 = vmax.f32 %v9323, %v9579
          %v9612 = vmax.f32 %v9324, %v9580
          %v9613 = vmax.f32 %v9325, %v9581
          %v9614 = vmax.f32 %v9326, %v9582
          %v9615 = vmax.f32 %v9327, %v9583
          %v9616 = vmax.f32 %v9328, %v9584
          %v9617 = vmax.f32 %v9329, %v9585
          %v9618 = vmax.f32 %v9330, %v9586
          %v9619 = vmax.f32 %v9331, %v9587
          %v9620 = vmax.f32 %v9332, %v9588
          %v9621 = vmax.f32 %v9333, %v9589
          %v9622 = vmax.f32 %v9334, %v9590
          %v9623 = vmax.f32 %v9335, %v9591
          %v9624 = vmax.f32 %v9336, %v9592
          %v9625 = vmax.f32 %v9337, %v9593
          %v9626 = vmax.f32 %v9338, %v9594
          %9627 = vst [vmem:[%s206] sm:$0xff] %v9595
          %9628 = vst [vmem:[%s206 + $0x8] sm:$0xff] %v9596
          %9629 = vst [vmem:[%s206 + $0x10] sm:$0xff] %v9597
          %9630 = vst [vmem:[%s206 + $0x18] sm:$0xff] %v9598
          %9631 = vst [vmem:[%s206 + $0x20] sm:$0xff] %v9599
          %9632 = vst [vmem:[%s206 + $0x28] sm:$0xff] %v9600
          %9633 = vst [vmem:[%s206 + $0x30] sm:$0xff] %v9601
          %9634 = vst [vmem:[%s206 + $0x38] sm:$0xff] %v9602
          %9635 = vst [vmem:[%s206 + $0x40] sm:$0xff] %v9603
          %9636 = vst [vmem:[%s206 + $0x48] sm:$0xff] %v9604
          %9637 = vst [vmem:[%s206 + $0x50] sm:$0xff] %v9605
          %9638 = vst [vmem:[%s206 + $0x58] sm:$0xff] %v9606
          %9639 = vst [vmem:[%s206 + $0x60] sm:$0xff] %v9607
          %9640 = vst [vmem:[%s206 + $0x68] sm:$0xff] %v9608
          %9641 = vst [vmem:[%s206 + $0x70] sm:$0xff] %v9609
          %9642 = vst [vmem:[%s206 + $0x78] sm:$0xff] %v9610
          %9643 = vst [vmem:[%s206 + $0x80] sm:$0xff] %v9611
          %9644 = vst [vmem:[%s206 + $0x88] sm:$0xff] %v9612
          %9645 = vst [vmem:[%s206 + $0x90] sm:$0xff] %v9613
          %9646 = vst [vmem:[%s206 + $0x98] sm:$0xff] %v9614
          %9647 = vst [vmem:[%s206 + $0xa0] sm:$0xff] %v9615
          %9648 = vst [vmem:[%s206 + $0xa8] sm:$0xff] %v9616
          %9649 = vst [vmem:[%s206 + $0xb0] sm:$0xff] %v9617
          %9650 = vst [vmem:[%s206 + $0xb8] sm:$0xff] %v9618
          %9651 = vst [vmem:[%s206 + $0xc0] sm:$0xff] %v9619
          %9652 = vst [vmem:[%s206 + $0xc8] sm:$0xff] %v9620
          %9653 = vst [vmem:[%s206 + $0xd0] sm:$0xff] %v9621
          %9654 = vst [vmem:[%s206 + $0xd8] sm:$0xff] %v9622
          %9655 = vst [vmem:[%s206 + $0xe0] sm:$0xff] %v9623
          %9656 = vst [vmem:[%s206 + $0xe8] sm:$0xff] %v9624
          %9657 = vst [vmem:[%s206 + $0xf0] sm:$0xff] %v9625
          %9658 = vst [vmem:[%s206 + $0xf8] sm:$0xff] %v9626
        $region40: #{tpu_custom_call.1} parent=31 // pred_fallthru
          _
        %s9659 = sand.u32 %s115, 1
        %s9660 = scalar_lea.sflag [#allocation4], %s9659
        %s9661 = sand.u32 %s115, 1
        %s9662 = smul.addr %s9661, 256
        %s9663 = scalar_lea.vmem [#allocation3], %s9662
        // Predicated region
        $region41: #{tpu_custom_call.1} parent=31 // pred_check
          %p9664 = pneg %p125
        $region42: #{tpu_custom_call.1} parent=31 // pred_check_branch
          %9666 = sbr.rel (%p9664) target = $region44
        $region43: #{tpu_custom_call.1} parent=31 // pred_region
          %s9667 = smul.u32 32, %s21
          %9669 = vsyncadd %s9660, 0
          %s9670 = smul.addr %s9667, 8
          %s9671 = scalar_lea.hbm %s3, %s9670
          %s9672 = sshll.u32 %s9663, 4
          %s9673 = int_to_ptr.vmem [resolvable:$true] %s9672
          %s9674 = sshll.u32 %s9671, 4
          %s9675 = int_to_ptr.hbm [resolvable:$true] %s9674
          %9680 = dma.vmem_to_hbm [thread:$0]  %s9673, 4096, %s9675, %s9660, 128, 128, 8
        $region44: #{tpu_custom_call.1} parent=31 // pred_fallthru
          _
      $region32: #{tpu_custom_call.1} parent=5 // pred_fallthru
        _
      %p9681 = scmp.le.s32.totalorder 2, %s12
      // Predicated region
      $region45: #{tpu_custom_call.1} parent=5 // pred_check
        %p9682 = pneg %p9681
      $region46: #{tpu_custom_call.1} parent=5 // pred_check_branch
        %9684 = sbr.rel (%p9682) target = $region48
      $region47: #{tpu_custom_call.1} parent=5 // pred_region
        %s9685 = ssub.s32 %s12, 2
        // Predicated region
        $region49: #{tpu_custom_call.1} parent=47 // pred_check
          %p9686 = pneg %p131
        $region50: #{tpu_custom_call.1} parent=47 // pred_check_branch
          %9688 = sbr.rel (%p9686) target = $region52
        $region51: #{tpu_custom_call.1} parent=47 // pred_region
          %s9689 = sand.u32 %s116, 1
          %s9690 = scalar_lea.sflag [#allocation4], %s9689
          %s9691 = sand.u32 %s116, 1
          %s9692 = smul.addr %s9691, 256
          %s9693 = scalar_lea.vmem [#allocation3], %s9692
          %9695 = dma.done %s9690, 4096
        $region52: #{tpu_custom_call.1} parent=47 // pred_fallthru
          _
      $region48: #{tpu_custom_call.1} parent=5 // pred_fallthru
        _
    $region6: #{tpu_custom_call.1} parent=1 // loop_footer
      %s16 = sadd.s32 1, %s12
    $region7: #{tpu_custom_call.1} parent=1 // loop_footer_branch
      %11 = sbr.rel target = $region3
    $region8: #{tpu_custom_call.1} parent=1 // loop_exit
      _
    %9696 = vsyncpa [#allocation4], 1
    %s9697 = scalar_lea.sflag [#allocation4], 1
    %9698 = vsyncpa %s9697, 1

</llo_original>
